<compile_context>
chip_gen: v5e
topology: v5e:2x2
jax: 0.10.0
libtpu: 0.0.40
codegen_flags: <defaults>
</compile_context>

<pallas_src>
import jax
import jax.numpy as jnp
import numpy as np
from jax import lax
from jax.experimental import pallas as pl
from jax.experimental.pallas import tpu as pltpu


# ----------------------------- fused Pallas kernel ---------------------------

def _make_fused_kernel(num_inputs, cins, H, W, cout):
    """One grid step == one batch element:
       conv1 (3x3, pad=1, folded-BN bias, ReLU) over the virtually channel-concatenated
       inputs, then conv2 (3x3, pad=1, folded-BN bias, ReLU); the conv1->conv2 hand-off
       stays in a padded VMEM scratch (no HBM round trip)."""

    def _write_padded(pad_ref, frame_f32, cin):
        # frame_f32: (H, W, cin). Interior rows are written once as full-width rows
        # (zero col | frame | zero col); only the two border rows get an extra zero store.
        zcol = jnp.zeros((H, 1, cin), jnp.float32)
        zrow = jnp.zeros((1, W + 2, cin), jnp.float32)
        pad_ref[0:1, :, :] = zrow
        pad_ref[H + 1:H + 2, :, :] = zrow
        pad_ref[1:H + 1, :, :] = jnp.concatenate([zcol, frame_f32, zcol], axis=1)

    def _im2col(pads_and_cins, col_ref):
        # Stage all 9 taps of every operand into one bf16 buffer so a single MXU dot
        # sees K = 9 * sum(cin) (instead of nine tiny-K dots).
        off = 0
        for pad_ref, cin in pads_and_cins:
            for ky in range(3):
                for kx in range(3):
                    patch = pad_ref[ky:ky + H, kx:kx + W, :]          # (H, W, cin) f32
                    col_ref[:, off:off + cin] = (
                        patch.reshape(H * W, cin).astype(jnp.bfloat16))
                    off += cin

    def kernel(*refs):
        ni = num_inputs
        x_refs = refs[:ni]                          # (1, H, W, cin_i) bf16, one batch elem
        w1_ref, b1_ref, w2_ref, b2_ref = refs[ni:ni + 4]
        o_ref = refs[ni + 4]                        # (1, H, W, cout)
        pad_refs = refs[ni + 5:2 * ni + 5]          # (H+2, W+2, cin_i) f32 scratch
        col1_ref = refs[2 * ni + 5]                 # (H*W, 9*sum(cin)) bf16 scratch
        pad_y_ref = refs[2 * ni + 6]                # (H+2, W+2, cout) f32 scratch
        col2_ref = refs[2 * ni + 7]                 # (H*W, 9*cout) bf16 scratch

        # --- conv1: halo + im2col + one MXU dot (K = 9*sum(cin)) + bias + ReLU ---------
        # Channel concat of [upsampled x, skip] is fused: each operand has its own padded
        # scratch and its own slice of the weight rows.
        for x_ref, pad_ref, cin in zip(x_refs, pad_refs, cins):
            _write_padded(pad_ref, x_ref[0].astype(jnp.float32), cin)
        _im2col(list(zip(pad_refs, cins)), col1_ref)
        y1 = jnp.dot(col1_ref[...], w1_ref[...], preferred_element_type=jnp.float32)
        y1 = jnp.maximum(y1 + b1_ref[...], 0.0)     # (H*W, cout) f32

        # --- conv1 -> conv2 hand-off stays resident in VMEM ----------------------------
        _write_padded(pad_y_ref, y1.reshape(H, W, cout), cout)

        # --- conv2: im2col + one MXU dot (K = 9*cout) + bias + ReLU --------------------
        _im2col([(pad_y_ref, cout)], col2_ref)
        y2 = jnp.dot(col2_ref[...], w2_ref[...], preferred_element_type=jnp.float32)
        y2 = jnp.maximum(y2 + b2_ref[...], 0.0)
        o_ref[...] = y2.reshape(1, H, W, cout).astype(o_ref.dtype)

    return kernel


def fused_double_conv3x3_bn_relu(inputs, w1, b1, w2, b2, *, out_dtype=jnp.float32):
    """ReLU(BN2(conv2_3x3(ReLU(BN1(conv1_3x3(concat(inputs))))))), inference BN folded.

    inputs: list of NHWC bf16 arrays sharing (N, H, W); their channels are virtually
            concatenated (the concat itself is fused into conv1 via split weight rows).
    w1: (9*sum(Cin_i), Cout) bf16, BN1 scale folded in.   b1: (1, Cout) f32.
    w2: (9*Cout, Cout)       bf16, BN2 scale folded in.   b2: (1, Cout) f32.
    """
    N, H, W, _ = inputs[0].shape
    cins = tuple(int(a.shape[-1]) for a in inputs)
    cout = int(w1.shape[1])
    assert w1.shape[0] == 9 * sum(cins)
    assert w2.shape == (9 * cout, cout)
    # Keeps the (H, W, C) <-> (H*W, C) reshapes layout-preserving (W multiple of the
    # sublane tile); holds for every TransUNet decoder stage.
    assert W % 8 == 0, "W must be a multiple of 8"

    ni = len(inputs)
    in_specs = (
        [pl.BlockSpec((1, H, W, c), lambda n: (n, 0, 0, 0)) for c in cins]
        + [pl.BlockSpec(tuple(w1.shape), lambda n: (0, 0)),
           pl.BlockSpec(tuple(b1.shape), lambda n: (0, 0)),
           pl.BlockSpec(tuple(w2.shape), lambda n: (0, 0)),
           pl.BlockSpec(tuple(b2.shape), lambda n: (0, 0))]
    )
    out_specs = pl.BlockSpec((1, H, W, cout), lambda n: (n, 0, 0, 0))
    scratch_shapes = (
        [pltpu.VMEM((H + 2, W + 2, c), jnp.float32) for c in cins]
        + [pltpu.VMEM((H * W, 9 * sum(cins)), jnp.bfloat16),
           pltpu.VMEM((H + 2, W + 2, cout), jnp.float32),
           pltpu.VMEM((H * W, 9 * cout), jnp.bfloat16)]
    )
    kernel = _make_fused_kernel(ni, cins, H, W, cout)
    return pl.pallas_call(
        kernel,
        out_shape=jax.ShapeDtypeStruct((N, H, W, cout), out_dtype),
        grid=(N,),
        in_specs=in_specs,
        out_specs=out_specs,
        scratch_shapes=scratch_shapes,
        compiler_params=pltpu.CompilerParams(
            dimension_semantics=("parallel",),        # batch axis is megacore-shardable
            vmem_limit_bytes=32 * 1024 * 1024),
    )(*inputs, w1, b1, w2, b2)


# ------------------------- Upsample (wrapper-side) ---------------------------

def _interp_matrix(n_in, n_out):
    """align_corners=True bilinear interpolation matrix, shape (n_out, n_in)."""
    if n_in == 1:
        return jnp.ones((n_out, 1), jnp.float32)
    src = jnp.arange(n_out, dtype=jnp.float32) * (n_in - 1) / (n_out - 1)
    i0 = jnp.clip(jnp.floor(src).astype(jnp.int32), 0, n_in - 1)
    i1 = jnp.clip(i0 + 1, 0, n_in - 1)
    w = src - i0.astype(jnp.float32)
    rows = jnp.arange(n_out)
    m = jnp.zeros((n_out, n_in), jnp.float32)
    m = m.at[rows, i0].add(1.0 - w)
    m = m.at[rows, i1].add(w)
    return m


def upsample_bilinear_2x_align_corners(x_nhwc):
    """nn.UpsamplingBilinear2d(scale_factor=2) as two separable matmuls (no gathers)."""
    N, H, W, C = x_nhwc.shape
    r_mat = _interp_matrix(H, 2 * H)
    c_mat = _interp_matrix(W, 2 * W)
    x = jnp.einsum('oh,nhwc->nowc', r_mat, x_nhwc)
    x = jnp.einsum('pw,nhwc->nhpc', c_mat, x)
    return x


# ----------------------------- parameter prep --------------------------------

def fold_bn(gamma, beta, mean, var, eps=1e-5):
    scale = gamma / jnp.sqrt(var + eps)
    return scale, beta - mean * scale


def prep_conv_params(w_oihw, gamma, beta, mean, var, cin_splits, eps=1e-5):
    """Fold inference BN scale into the conv weight and reshape to (9*sum(Cin), Cout) bf16
    with the (operand, ky, kx, cin) row order that matches the kernel's im2col."""
    scale, bias = fold_bn(gamma, beta, mean, var, eps)
    cout = w_oihw.shape[0]
    w_hwio = jnp.transpose(w_oihw, (2, 3, 1, 0)).astype(jnp.float32)
    w_hwio = w_hwio * scale[None, None, None, :]
    parts, off = [], 0
    for c in cin_splits:
        parts.append(w_hwio[:, :, off:off + c, :].reshape(9 * c, cout))
        off += c
    w2d = jnp.concatenate(parts, axis=0).astype(jnp.bfloat16)
    b2d = bias.reshape(1, cout).astype(jnp.float32)
    return w2d, b2d


def init_decoder_block_params(key, in_channels, out_channels, skip_channels):
    ks = jax.random.split(key, 4)
    cin1 = in_channels + skip_channels
    # PyTorch-layout conv weights (Cout, Cin, 3, 3) and BN parameters / running stats.
    w1 = jax.random.normal(ks[0], (out_channels, cin1, 3, 3), jnp.float32) * 0.1
    w2 = jax.random.normal(ks[1], (out_channels, out_channels, 3, 3), jnp.float32) * 0.1

    def bn_params(k):
        k1, k2, k3, k4 = jax.random.split(k, 4)
        g = 1.0 + 0.1 * jax.random.normal(k1, (out_channels,), jnp.float32)
        b = 0.1 * jax.random.normal(k2, (out_channels,), jnp.float32)
        m = 0.1 * jax.random.normal(k3, (out_channels,), jnp.float32)
        v = 0.5 + jnp.abs(jax.random.normal(k4, (out_channels,), jnp.float32))
        return g, b, m, v

    bn1 = bn_params(ks[2])
    bn2 = bn_params(ks[3])
    raw = dict(w1=w1, w2=w2, bn1=bn1, bn2=bn2, out_channels=out_channels)

    splits1 = (in_channels, skip_channels) if skip_channels > 0 else (in_channels,)
    w1k, b1k = prep_conv_params(w1, *bn1, cin_splits=splits1)
    w2k, b2k = prep_conv_params(w2, *bn2, cin_splits=(out_channels,))
    kparams = dict(w1=w1k, b1=b1k, w2=w2k, b2=b2k, cout=out_channels)
    return raw, kparams


# ----------------------------- DecoderBlock ----------------------------------

def decoder_block_forward(kparams, x_nchw, skip_nchw=None):
    # NCHW (PyTorch) -> NHWC (kernel layout); upsample in f32, then bf16 into the kernel.
    x = jnp.transpose(x_nchw, (0, 2, 3, 1)).astype(jnp.float32)
    x = upsample_bilinear_2x_align_corners(x)
    inputs = [x.astype(jnp.bfloat16)]
    if skip_nchw is not None:
        inputs.append(jnp.transpose(skip_nchw, (0, 2, 3, 1)).astype(jnp.bfloat16))
    # Single fused pallas_call: concat + conv1+BN+ReLU + conv2+BN+ReLU (hand-off in VMEM).
    y = fused_double_conv3x3_bn_relu(inputs, kparams["w1"], kparams["b1"],
                                     kparams["w2"], kparams["b2"])
    return jnp.transpose(y, (0, 3, 1, 2))             # back to NCHW


# ------------------------- pure-JAX f32 reference ----------------------------

def decoder_block_reference(raw, x_nchw, skip_nchw=None, eps=1e-5):
    x = jnp.transpose(x_nchw, (0, 2, 3, 1)).astype(jnp.float32)
    x = upsample_bilinear_2x_align_corners(x)
    x = jnp.transpose(x, (0, 3, 1, 2))
    if skip_nchw is not None:
        x = jnp.concatenate([x, skip_nchw.astype(jnp.float32)], axis=1)

    def conv_bn_relu(x, w, bn):
        g, b, m, v = bn
        y = lax.conv_general_dilated(x, w, (1, 1), ((1, 1), (1, 1)),
                                     dimension_numbers=('NCHW', 'OIHW', 'NCHW'))
        scale = g / jnp.sqrt(v + eps)
        y = y * scale[None, :, None, None] + (b - m * scale)[None, :, None, None]
        return jnp.maximum(y, 0.0)

    x = conv_bn_relu(x, raw["w1"], raw["bn1"])
    x = conv_bn_relu(x, raw["w2"], raw["bn2"])
    return x


# --------------------------------- main ---------------------------------------

if __name__ == "__main__":
    key = jax.random.PRNGKey(0)
    k_param, k_x, k_skip = jax.random.split(key, 3)

    N = 2
    in_channels, skip_channels, out_channels = 4, 4, 8
    H = W = 8  # pre-upsample spatial; the convs run at 16x16

    raw, kparams = init_decoder_block_params(k_param, in_channels, out_channels,
                                             skip_channels)
    x = jax.random.normal(k_x, (N, in_channels, H, W), jnp.float32)
    skip = jax.random.normal(k_skip, (N, skip_channels, 2 * H, 2 * W), jnp.float32)

    out = decoder_block_forward(kparams, x, skip)
    out = jax.block_until_ready(out)
    assert out.shape == (N, out_channels, 2 * H, 2 * W), out.shape

    # bf16-MXU kernel vs f32 reference: loose tolerance covers bf16 quantization only.
    ref = decoder_block_reference(raw, x, skip)
    np.testing.assert_allclose(np.asarray(out), np.asarray(ref), rtol=1e-1, atol=1e-1)
    print("KERNEL_OK")
</pallas_src>

<mosaic_0001>
module attributes {stable_mosaic.version = 11 : i64} {
  func.func @kernel(%arg0: i32, %arg1: memref<1x16x16x4xbf16, #tpu.memory_space<vmem>>, %arg2: memref<1x16x16x4xbf16, #tpu.memory_space<vmem>>, %arg3: memref<72x8xbf16, #tpu.memory_space<vmem>>, %arg4: memref<1x8xf32, #tpu.memory_space<vmem>>, %arg5: memref<72x8xbf16, #tpu.memory_space<vmem>>, %arg6: memref<1x8xf32, #tpu.memory_space<vmem>>, %arg7: memref<1x16x16x8xf32, #tpu.memory_space<vmem>>, %arg8: memref<18x18x4xf32, #tpu.memory_space<vmem>>, %arg9: memref<18x18x4xf32, #tpu.memory_space<vmem>>, %arg10: memref<256x72xbf16, #tpu.memory_space<vmem>>, %arg11: memref<18x18x8xf32, #tpu.memory_space<vmem>>, %arg12: memref<256x72xbf16, #tpu.memory_space<vmem>>) attributes {dimension_semantics = [#tpu.dimension_semantics<parallel>], iteration_bounds = array<i64: 2>, scalar_prefetch = 0 : i64, scratch_operands = 5 : i64, tpu.core_type = #tpu.core_type<tc>, window_params = [{transform_indices = @transform_0, window_bounds = array<i64: 1, 16, 16, 4>}, {transform_indices = @transform_1, window_bounds = array<i64: 1, 16, 16, 4>}, {pipeline_mode = #tpu.pipeline_mode<synchronous>, transform_indices = @transform_2, window_bounds = array<i64: 72, 8>}, {pipeline_mode = #tpu.pipeline_mode<synchronous>, transform_indices = @transform_3, window_bounds = array<i64: 1, 8>}, {pipeline_mode = #tpu.pipeline_mode<synchronous>, transform_indices = @transform_4, window_bounds = array<i64: 72, 8>}, {pipeline_mode = #tpu.pipeline_mode<synchronous>, transform_indices = @transform_5, window_bounds = array<i64: 1, 8>}, {transform_indices = @transform_6, window_bounds = array<i64: 1, 16, 16, 8>}]} {
    %c0 = arith.constant 0 : index
    %c0_0 = arith.constant 0 : index
    %c0_1 = arith.constant 0 : index
    %c0_2 = arith.constant 0 : index
    %0 = vector.load %arg1[%c0, %c0_0, %c0_1, %c0_2] : memref<1x16x16x4xbf16, #tpu.memory_space<vmem>>, vector<1x16x16x4xbf16>
    %1 = vector.shape_cast %0 : vector<1x16x16x4xbf16> to vector<16x16x4xbf16>
    %2 = arith.extf %1 : vector<16x16x4xbf16> to vector<16x16x4xf32>
    %cst = arith.constant 0.000000e+00 : f32
    %3 = vector.broadcast %cst : f32 to vector<16x1x4xf32>
    %cst_3 = arith.constant 0.000000e+00 : f32
    %4 = vector.broadcast %cst_3 : f32 to vector<1x18x4xf32>
    %c0_4 = arith.constant 0 : index
    %c0_5 = arith.constant 0 : index
    %c0_6 = arith.constant 0 : index
    %5 = vector.load %arg8[%c0_4, %c0_5, %c0_6] : memref<18x18x4xf32, #tpu.memory_space<vmem>>, vector<1x18x4xf32>
    tpu.vector_store %arg8[%c0_4, %c0_5, %c0_6], %4 {strides = array<i32>} : memref<18x18x4xf32, #tpu.memory_space<vmem>>, vector<1x18x4xf32>,
    %c17 = arith.constant 17 : index
    %c0_7 = arith.constant 0 : index
    %c0_8 = arith.constant 0 : index
    %6 = vector.load %arg8[%c17, %c0_7, %c0_8] : memref<18x18x4xf32, #tpu.memory_space<vmem>>, vector<1x18x4xf32>
    tpu.vector_store %arg8[%c17, %c0_7, %c0_8], %4 {strides = array<i32>} : memref<18x18x4xf32, #tpu.memory_space<vmem>>, vector<1x18x4xf32>,
    %7 = tpu.concatenate %3, %2, %3 in 1 : vector<16x1x4xf32>, vector<16x16x4xf32>, vector<16x1x4xf32> -> vector<16x18x4xf32>
    %c1 = arith.constant 1 : index
    %c0_9 = arith.constant 0 : index
    %c0_10 = arith.constant 0 : index
    %8 = vector.load %arg8[%c1, %c0_9, %c0_10] : memref<18x18x4xf32, #tpu.memory_space<vmem>>, vector<16x18x4xf32>
    tpu.vector_store %arg8[%c1, %c0_9, %c0_10], %7 {strides = array<i32>} : memref<18x18x4xf32, #tpu.memory_space<vmem>>, vector<16x18x4xf32>,
    %c0_11 = arith.constant 0 : index
    %c0_12 = arith.constant 0 : index
    %c0_13 = arith.constant 0 : index
    %c0_14 = arith.constant 0 : index
    %9 = vector.load %arg2[%c0_11, %c0_12, %c0_13, %c0_14] : memref<1x16x16x4xbf16, #tpu.memory_space<vmem>>, vector<1x16x16x4xbf16>
    %10 = vector.shape_cast %9 : vector<1x16x16x4xbf16> to vector<16x16x4xbf16>
    %11 = arith.extf %10 : vector<16x16x4xbf16> to vector<16x16x4xf32>
    %cst_15 = arith.constant 0.000000e+00 : f32
    %12 = vector.broadcast %cst_15 : f32 to vector<16x1x4xf32>
    %cst_16 = arith.constant 0.000000e+00 : f32
    %13 = vector.broadcast %cst_16 : f32 to vector<1x18x4xf32>
    %c0_17 = arith.constant 0 : index
    %c0_18 = arith.constant 0 : index
    %c0_19 = arith.constant 0 : index
    %14 = vector.load %arg9[%c0_17, %c0_18, %c0_19] : memref<18x18x4xf32, #tpu.memory_space<vmem>>, vector<1x18x4xf32>
    tpu.vector_store %arg9[%c0_17, %c0_18, %c0_19], %13 {strides = array<i32>} : memref<18x18x4xf32, #tpu.memory_space<vmem>>, vector<1x18x4xf32>,
    %c17_20 = arith.constant 17 : index
    %c0_21 = arith.constant 0 : index
    %c0_22 = arith.constant 0 : index
    %15 = vector.load %arg9[%c17_20, %c0_21, %c0_22] : memref<18x18x4xf32, #tpu.memory_space<vmem>>, vector<1x18x4xf32>
    tpu.vector_store %arg9[%c17_20, %c0_21, %c0_22], %13 {strides = array<i32>} : memref<18x18x4xf32, #tpu.memory_space<vmem>>, vector<1x18x4xf32>,
    %16 = tpu.concatenate %12, %11, %12 in 1 : vector<16x1x4xf32>, vector<16x16x4xf32>, vector<16x1x4xf32> -> vector<16x18x4xf32>
    %c1_23 = arith.constant 1 : index
    %c0_24 = arith.constant 0 : index
    %c0_25 = arith.constant 0 : index
    %17 = vector.load %arg9[%c1_23, %c0_24, %c0_25] : memref<18x18x4xf32, #tpu.memory_space<vmem>>, vector<16x18x4xf32>
    tpu.vector_store %arg9[%c1_23, %c0_24, %c0_25], %16 {strides = array<i32>} : memref<18x18x4xf32, #tpu.memory_space<vmem>>, vector<16x18x4xf32>,
    %c0_26 = arith.constant 0 : index
    %c0_27 = arith.constant 0 : index
    %c0_28 = arith.constant 0 : index
    %18 = vector.load %arg8[%c0_26, %c0_27, %c0_28] : memref<18x18x4xf32, #tpu.memory_space<vmem>>, vector<16x16x4xf32>
    %19 = vector.shape_cast %18 : vector<16x16x4xf32> to vector<256x4xf32>
    %20 = arith.truncf %19 : vector<256x4xf32> to vector<256x4xbf16>
    %c0_29 = arith.constant 0 : index
    %c0_30 = arith.constant 0 : index
    %21 = vector.load %arg10[%c0_29, %c0_30] : memref<256x72xbf16, #tpu.memory_space<vmem>>, vector<256x4xbf16>
    tpu.vector_store %arg10[%c0_29, %c0_30], %20 {strides = array<i32>} : memref<256x72xbf16, #tpu.memory_space<vmem>>, vector<256x4xbf16>,
    %c0_31 = arith.constant 0 : index
    %c1_32 = arith.constant 1 : index
    %c0_33 = arith.constant 0 : index
    %22 = vector.load %arg8[%c0_31, %c1_32, %c0_33] : memref<18x18x4xf32, #tpu.memory_space<vmem>>, vector<16x16x4xf32>
    %23 = vector.shape_cast %22 : vector<16x16x4xf32> to vector<256x4xf32>
    %24 = arith.truncf %23 : vector<256x4xf32> to vector<256x4xbf16>
    %c0_34 = arith.constant 0 : index
    %c4 = arith.constant 4 : index
    %25 = vector.load %arg10[%c0_34, %c4] : memref<256x72xbf16, #tpu.memory_space<vmem>>, vector<256x4xbf16>
    tpu.vector_store %arg10[%c0_34, %c4], %24 {strides = array<i32>} : memref<256x72xbf16, #tpu.memory_space<vmem>>, vector<256x4xbf16>,
    %c0_35 = arith.constant 0 : index
    %c2 = arith.constant 2 : index
    %c0_36 = arith.constant 0 : index
    %26 = vector.load %arg8[%c0_35, %c2, %c0_36] : memref<18x18x4xf32, #tpu.memory_space<vmem>>, vector<16x16x4xf32>
    %27 = vector.shape_cast %26 : vector<16x16x4xf32> to vector<256x4xf32>
    %28 = arith.truncf %27 : vector<256x4xf32> to vector<256x4xbf16>
    %c0_37 = arith.constant 0 : index
    %c8 = arith.constant 8 : index
    %29 = vector.load %arg10[%c0_37, %c8] : memref<256x72xbf16, #tpu.memory_space<vmem>>, vector<256x4xbf16>
    tpu.vector_store %arg10[%c0_37, %c8], %28 {strides = array<i32>} : memref<256x72xbf16, #tpu.memory_space<vmem>>, vector<256x4xbf16>,
    %c1_38 = arith.constant 1 : index
    %c0_39 = arith.constant 0 : index
    %c0_40 = arith.constant 0 : index
    %30 = vector.load %arg8[%c1_38, %c0_39, %c0_40] : memref<18x18x4xf32, #tpu.memory_space<vmem>>, vector<16x16x4xf32>
    %31 = vector.shape_cast %30 : vector<16x16x4xf32> to vector<256x4xf32>
    %32 = arith.truncf %31 : vector<256x4xf32> to vector<256x4xbf16>
    %c0_41 = arith.constant 0 : index
    %c12 = arith.constant 12 : index
    %33 = vector.load %arg10[%c0_41, %c12] : memref<256x72xbf16, #tpu.memory_space<vmem>>, vector<256x4xbf16>
    tpu.vector_store %arg10[%c0_41, %c12], %32 {strides = array<i32>} : memref<256x72xbf16, #tpu.memory_space<vmem>>, vector<256x4xbf16>,
    %c1_42 = arith.constant 1 : index
    %c1_43 = arith.constant 1 : index
    %c0_44 = arith.constant 0 : index
    %34 = vector.load %arg8[%c1_42, %c1_43, %c0_44] : memref<18x18x4xf32, #tpu.memory_space<vmem>>, vector<16x16x4xf32>
    %35 = vector.shape_cast %34 : vector<16x16x4xf32> to vector<256x4xf32>
    %36 = arith.truncf %35 : vector<256x4xf32> to vector<256x4xbf16>
    %c0_45 = arith.constant 0 : index
    %c16 = arith.constant 16 : index
    %37 = vector.load %arg10[%c0_45, %c16] : memref<256x72xbf16, #tpu.memory_space<vmem>>, vector<256x4xbf16>
    tpu.vector_store %arg10[%c0_45, %c16], %36 {strides = array<i32>} : memref<256x72xbf16, #tpu.memory_space<vmem>>, vector<256x4xbf16>,
    %c1_46 = arith.constant 1 : index
    %c2_47 = arith.constant 2 : index
    %c0_48 = arith.constant 0 : index
    %38 = vector.load %arg8[%c1_46, %c2_47, %c0_48] : memref<18x18x4xf32, #tpu.memory_space<vmem>>, vector<16x16x4xf32>
    %39 = vector.shape_cast %38 : vector<16x16x4xf32> to vector<256x4xf32>
    %40 = arith.truncf %39 : vector<256x4xf32> to vector<256x4xbf16>
    %c0_49 = arith.constant 0 : index
    %c20 = arith.constant 20 : index
    %41 = vector.load %arg10[%c0_49, %c20] : memref<256x72xbf16, #tpu.memory_space<vmem>>, vector<256x4xbf16>
    tpu.vector_store %arg10[%c0_49, %c20], %40 {strides = array<i32>} : memref<256x72xbf16, #tpu.memory_space<vmem>>, vector<256x4xbf16>,
    %c2_50 = arith.constant 2 : index
    %c0_51 = arith.constant 0 : index
    %c0_52 = arith.constant 0 : index
    %42 = vector.load %arg8[%c2_50, %c0_51, %c0_52] : memref<18x18x4xf32, #tpu.memory_space<vmem>>, vector<16x16x4xf32>
    %43 = vector.shape_cast %42 : vector<16x16x4xf32> to vector<256x4xf32>
    %44 = arith.truncf %43 : vector<256x4xf32> to vector<256x4xbf16>
    %c0_53 = arith.constant 0 : index
    %c24 = arith.constant 24 : index
    %45 = vector.load %arg10[%c0_53, %c24] : memref<256x72xbf16, #tpu.memory_space<vmem>>, vector<256x4xbf16>
    tpu.vector_store %arg10[%c0_53, %c24], %44 {strides = array<i32>} : memref<256x72xbf16, #tpu.memory_space<vmem>>, vector<256x4xbf16>,
    %c2_54 = arith.constant 2 : index
    %c1_55 = arith.constant 1 : index
    %c0_56 = arith.constant 0 : index
    %46 = vector.load %arg8[%c2_54, %c1_55, %c0_56] : memref<18x18x4xf32, #tpu.memory_space<vmem>>, vector<16x16x4xf32>
    %47 = vector.shape_cast %46 : vector<16x16x4xf32> to vector<256x4xf32>
    %48 = arith.truncf %47 : vector<256x4xf32> to vector<256x4xbf16>
    %c0_57 = arith.constant 0 : index
    %c28 = arith.constant 28 : index
    %49 = vector.load %arg10[%c0_57, %c28] : memref<256x72xbf16, #tpu.memory_space<vmem>>, vector<256x4xbf16>
    tpu.vector_store %arg10[%c0_57, %c28], %48 {strides = array<i32>} : memref<256x72xbf16, #tpu.memory_space<vmem>>, vector<256x4xbf16>,
    %c2_58 = arith.constant 2 : index
    %c2_59 = arith.constant 2 : index
    %c0_60 = arith.constant 0 : index
    %50 = vector.load %arg8[%c2_58, %c2_59, %c0_60] : memref<18x18x4xf32, #tpu.memory_space<vmem>>, vector<16x16x4xf32>
    %51 = vector.shape_cast %50 : vector<16x16x4xf32> to vector<256x4xf32>
    %52 = arith.truncf %51 : vector<256x4xf32> to vector<256x4xbf16>
    %c0_61 = arith.constant 0 : index
    %c32 = arith.constant 32 : index
    %53 = vector.load %arg10[%c0_61, %c32] : memref<256x72xbf16, #tpu.memory_space<vmem>>, vector<256x4xbf16>
    tpu.vector_store %arg10[%c0_61, %c32], %52 {strides = array<i32>} : memref<256x72xbf16, #tpu.memory_space<vmem>>, vector<256x4xbf16>,
    %c0_62 = arith.constant 0 : index
    %c0_63 = arith.constant 0 : index
    %c0_64 = arith.constant 0 : index
    %54 = vector.load %arg9[%c0_62, %c0_63, %c0_64] : memref<18x18x4xf32, #tpu.memory_space<vmem>>, vector<16x16x4xf32>
    %55 = vector.shape_cast %54 : vector<16x16x4xf32> to vector<256x4xf32>
    %56 = arith.truncf %55 : vector<256x4xf32> to vector<256x4xbf16>
    %c0_65 = arith.constant 0 : index
    %c36 = arith.constant 36 : index
    %57 = vector.load %arg10[%c0_65, %c36] : memref<256x72xbf16, #tpu.memory_space<vmem>>, vector<256x4xbf16>
    tpu.vector_store %arg10[%c0_65, %c36], %56 {strides = array<i32>} : memref<256x72xbf16, #tpu.memory_space<vmem>>, vector<256x4xbf16>,
    %c0_66 = arith.constant 0 : index
    %c1_67 = arith.constant 1 : index
    %c0_68 = arith.constant 0 : index
    %58 = vector.load %arg9[%c0_66, %c1_67, %c0_68] : memref<18x18x4xf32, #tpu.memory_space<vmem>>, vector<16x16x4xf32>
    %59 = vector.shape_cast %58 : vector<16x16x4xf32> to vector<256x4xf32>
    %60 = arith.truncf %59 : vector<256x4xf32> to vector<256x4xbf16>
    %c0_69 = arith.constant 0 : index
    %c40 = arith.constant 40 : index
    %61 = vector.load %arg10[%c0_69, %c40] : memref<256x72xbf16, #tpu.memory_space<vmem>>, vector<256x4xbf16>
    tpu.vector_store %arg10[%c0_69, %c40], %60 {strides = array<i32>} : memref<256x72xbf16, #tpu.memory_space<vmem>>, vector<256x4xbf16>,
    %c0_70 = arith.constant 0 : index
    %c2_71 = arith.constant 2 : index
    %c0_72 = arith.constant 0 : index
    %62 = vector.load %arg9[%c0_70, %c2_71, %c0_72] : memref<18x18x4xf32, #tpu.memory_space<vmem>>, vector<16x16x4xf32>
    %63 = vector.shape_cast %62 : vector<16x16x4xf32> to vector<256x4xf32>
    %64 = arith.truncf %63 : vector<256x4xf32> to vector<256x4xbf16>
    %c0_73 = arith.constant 0 : index
    %c44 = arith.constant 44 : index
    %65 = vector.load %arg10[%c0_73, %c44] : memref<256x72xbf16, #tpu.memory_space<vmem>>, vector<256x4xbf16>
    tpu.vector_store %arg10[%c0_73, %c44], %64 {strides = array<i32>} : memref<256x72xbf16, #tpu.memory_space<vmem>>, vector<256x4xbf16>,
    %c1_74 = arith.constant 1 : index
    %c0_75 = arith.constant 0 : index
    %c0_76 = arith.constant 0 : index
    %66 = vector.load %arg9[%c1_74, %c0_75, %c0_76] : memref<18x18x4xf32, #tpu.memory_space<vmem>>, vector<16x16x4xf32>
    %67 = vector.shape_cast %66 : vector<16x16x4xf32> to vector<256x4xf32>
    %68 = arith.truncf %67 : vector<256x4xf32> to vector<256x4xbf16>
    %c0_77 = arith.constant 0 : index
    %c48 = arith.constant 48 : index
    %69 = vector.load %arg10[%c0_77, %c48] : memref<256x72xbf16, #tpu.memory_space<vmem>>, vector<256x4xbf16>
    tpu.vector_store %arg10[%c0_77, %c48], %68 {strides = array<i32>} : memref<256x72xbf16, #tpu.memory_space<vmem>>, vector<256x4xbf16>,
    %c1_78 = arith.constant 1 : index
    %c1_79 = arith.constant 1 : index
    %c0_80 = arith.constant 0 : index
    %70 = vector.load %arg9[%c1_78, %c1_79, %c0_80] : memref<18x18x4xf32, #tpu.memory_space<vmem>>, vector<16x16x4xf32>
    %71 = vector.shape_cast %70 : vector<16x16x4xf32> to vector<256x4xf32>
    %72 = arith.truncf %71 : vector<256x4xf32> to vector<256x4xbf16>
    %c0_81 = arith.constant 0 : index
    %c52 = arith.constant 52 : index
    %73 = vector.load %arg10[%c0_81, %c52] : memref<256x72xbf16, #tpu.memory_space<vmem>>, vector<256x4xbf16>
    tpu.vector_store %arg10[%c0_81, %c52], %72 {strides = array<i32>} : memref<256x72xbf16, #tpu.memory_space<vmem>>, vector<256x4xbf16>,
    %c1_82 = arith.constant 1 : index
    %c2_83 = arith.constant 2 : index
    %c0_84 = arith.constant 0 : index
    %74 = vector.load %arg9[%c1_82, %c2_83, %c0_84] : memref<18x18x4xf32, #tpu.memory_space<vmem>>, vector<16x16x4xf32>
    %75 = vector.shape_cast %74 : vector<16x16x4xf32> to vector<256x4xf32>
    %76 = arith.truncf %75 : vector<256x4xf32> to vector<256x4xbf16>
    %c0_85 = arith.constant 0 : index
    %c56 = arith.constant 56 : index
    %77 = vector.load %arg10[%c0_85, %c56] : memref<256x72xbf16, #tpu.memory_space<vmem>>, vector<256x4xbf16>
    tpu.vector_store %arg10[%c0_85, %c56], %76 {strides = array<i32>} : memref<256x72xbf16, #tpu.memory_space<vmem>>, vector<256x4xbf16>,
    %c2_86 = arith.constant 2 : index
    %c0_87 = arith.constant 0 : index
    %c0_88 = arith.constant 0 : index
    %78 = vector.load %arg9[%c2_86, %c0_87, %c0_88] : memref<18x18x4xf32, #tpu.memory_space<vmem>>, vector<16x16x4xf32>
    %79 = vector.shape_cast %78 : vector<16x16x4xf32> to vector<256x4xf32>
    %80 = arith.truncf %79 : vector<256x4xf32> to vector<256x4xbf16>
    %c0_89 = arith.constant 0 : index
    %c60 = arith.constant 60 : index
    %81 = vector.load %arg10[%c0_89, %c60] : memref<256x72xbf16, #tpu.memory_space<vmem>>, vector<256x4xbf16>
    tpu.vector_store %arg10[%c0_89, %c60], %80 {strides = array<i32>} : memref<256x72xbf16, #tpu.memory_space<vmem>>, vector<256x4xbf16>,
    %c2_90 = arith.constant 2 : index
    %c1_91 = arith.constant 1 : index
    %c0_92 = arith.constant 0 : index
    %82 = vector.load %arg9[%c2_90, %c1_91, %c0_92] : memref<18x18x4xf32, #tpu.memory_space<vmem>>, vector<16x16x4xf32>
    %83 = vector.shape_cast %82 : vector<16x16x4xf32> to vector<256x4xf32>
    %84 = arith.truncf %83 : vector<256x4xf32> to vector<256x4xbf16>
    %c0_93 = arith.constant 0 : index
    %c64 = arith.constant 64 : index
    %85 = vector.load %arg10[%c0_93, %c64] : memref<256x72xbf16, #tpu.memory_space<vmem>>, vector<256x4xbf16>
    tpu.vector_store %arg10[%c0_93, %c64], %84 {strides = array<i32>} : memref<256x72xbf16, #tpu.memory_space<vmem>>, vector<256x4xbf16>,
    %c2_94 = arith.constant 2 : index
    %c2_95 = arith.constant 2 : index
    %c0_96 = arith.constant 0 : index
    %86 = vector.load %arg9[%c2_94, %c2_95, %c0_96] : memref<18x18x4xf32, #tpu.memory_space<vmem>>, vector<16x16x4xf32>
    %87 = vector.shape_cast %86 : vector<16x16x4xf32> to vector<256x4xf32>
    %88 = arith.truncf %87 : vector<256x4xf32> to vector<256x4xbf16>
    %c0_97 = arith.constant 0 : index
    %c68 = arith.constant 68 : index
    %89 = vector.load %arg10[%c0_97, %c68] : memref<256x72xbf16, #tpu.memory_space<vmem>>, vector<256x4xbf16>
    tpu.vector_store %arg10[%c0_97, %c68], %88 {strides = array<i32>} : memref<256x72xbf16, #tpu.memory_space<vmem>>, vector<256x4xbf16>,
    %c0_98 = arith.constant 0 : index
    %c0_99 = arith.constant 0 : index
    %90 = vector.load %arg10[%c0_98, %c0_99] : memref<256x72xbf16, #tpu.memory_space<vmem>>, vector<256x72xbf16>
    %c0_100 = arith.constant 0 : index
    %c0_101 = arith.constant 0 : index
    %91 = vector.load %arg3[%c0_100, %c0_101] : memref<72x8xbf16, #tpu.memory_space<vmem>>, vector<72x8xbf16>
    %cst_102 = arith.constant dense<0.000000e+00> : vector<256x8xf32>
    %92 = tpu.matmul %90, %91, %cst_102 {dimension_numbers = #tpu.dot_dimension_numbers<[1], [0], [0], [1], [0, 0, 1, 1], [], []>} : vector<256x72xbf16>, vector<72x8xbf16>, vector<256x8xf32> -> vector<256x8xf32>
    %c0_103 = arith.constant 0 : index
    %c0_104 = arith.constant 0 : index
    %93 = vector.load %arg4[%c0_103, %c0_104] : memref<1x8xf32, #tpu.memory_space<vmem>>, vector<1x8xf32>
    %94 = vector.broadcast %93 : vector<1x8xf32> to vector<256x8xf32>
    %95 = arith.addf %92, %94 : vector<256x8xf32>
    %cst_105 = arith.constant 0.000000e+00 : f32
    %96 = vector.broadcast %cst_105 : f32 to vector<256x8xf32>
    %97 = arith.maximumf %95, %96 : vector<256x8xf32>
    %98 = vector.shape_cast %97 : vector<256x8xf32> to vector<16x16x8xf32>
    %cst_106 = arith.constant 0.000000e+00 : f32
    %99 = vector.broadcast %cst_106 : f32 to vector<16x1x8xf32>
    %cst_107 = arith.constant 0.000000e+00 : f32
    %100 = vector.broadcast %cst_107 : f32 to vector<1x18x8xf32>
    %c0_108 = arith.constant 0 : index
    %c0_109 = arith.constant 0 : index
    %c0_110 = arith.constant 0 : index
    %101 = vector.load %arg11[%c0_108, %c0_109, %c0_110] : memref<18x18x8xf32, #tpu.memory_space<vmem>>, vector<1x18x8xf32>
    tpu.vector_store %arg11[%c0_108, %c0_109, %c0_110], %100 {strides = array<i32>} : memref<18x18x8xf32, #tpu.memory_space<vmem>>, vector<1x18x8xf32>,
    %c17_111 = arith.constant 17 : index
    %c0_112 = arith.constant 0 : index
    %c0_113 = arith.constant 0 : index
    %102 = vector.load %arg11[%c17_111, %c0_112, %c0_113] : memref<18x18x8xf32, #tpu.memory_space<vmem>>, vector<1x18x8xf32>
    tpu.vector_store %arg11[%c17_111, %c0_112, %c0_113], %100 {strides = array<i32>} : memref<18x18x8xf32, #tpu.memory_space<vmem>>, vector<1x18x8xf32>,
    %103 = tpu.concatenate %99, %98, %99 in 1 : vector<16x1x8xf32>, vector<16x16x8xf32>, vector<16x1x8xf32> -> vector<16x18x8xf32>
    %c1_114 = arith.constant 1 : index
    %c0_115 = arith.constant 0 : index
    %c0_116 = arith.constant 0 : index
    %104 = vector.load %arg11[%c1_114, %c0_115, %c0_116] : memref<18x18x8xf32, #tpu.memory_space<vmem>>, vector<16x18x8xf32>
    tpu.vector_store %arg11[%c1_114, %c0_115, %c0_116], %103 {strides = array<i32>} : memref<18x18x8xf32, #tpu.memory_space<vmem>>, vector<16x18x8xf32>,
    %c0_117 = arith.constant 0 : index
    %c0_118 = arith.constant 0 : index
    %c0_119 = arith.constant 0 : index
    %105 = vector.load %arg11[%c0_117, %c0_118, %c0_119] : memref<18x18x8xf32, #tpu.memory_space<vmem>>, vector<16x16x8xf32>
    %106 = vector.shape_cast %105 : vector<16x16x8xf32> to vector<256x8xf32>
    %107 = arith.truncf %106 : vector<256x8xf32> to vector<256x8xbf16>
    %c0_120 = arith.constant 0 : index
    %c0_121 = arith.constant 0 : index
    %108 = vector.load %arg12[%c0_120, %c0_121] : memref<256x72xbf16, #tpu.memory_space<vmem>>, vector<256x8xbf16>
    tpu.vector_store %arg12[%c0_120, %c0_121], %107 {strides = array<i32>} : memref<256x72xbf16, #tpu.memory_space<vmem>>, vector<256x8xbf16>,
    %c0_122 = arith.constant 0 : index
    %c1_123 = arith.constant 1 : index
    %c0_124 = arith.constant 0 : index
    %109 = vector.load %arg11[%c0_122, %c1_123, %c0_124] : memref<18x18x8xf32, #tpu.memory_space<vmem>>, vector<16x16x8xf32>
    %110 = vector.shape_cast %109 : vector<16x16x8xf32> to vector<256x8xf32>
    %111 = arith.truncf %110 : vector<256x8xf32> to vector<256x8xbf16>
    %c0_125 = arith.constant 0 : index
    %c8_126 = arith.constant 8 : index
    %112 = vector.load %arg12[%c0_125, %c8_126] : memref<256x72xbf16, #tpu.memory_space<vmem>>, vector<256x8xbf16>
    tpu.vector_store %arg12[%c0_125, %c8_126], %111 {strides = array<i32>} : memref<256x72xbf16, #tpu.memory_space<vmem>>, vector<256x8xbf16>,
    %c0_127 = arith.constant 0 : index
    %c2_128 = arith.constant 2 : index
    %c0_129 = arith.constant 0 : index
    %113 = vector.load %arg11[%c0_127, %c2_128, %c0_129] : memref<18x18x8xf32, #tpu.memory_space<vmem>>, vector<16x16x8xf32>
    %114 = vector.shape_cast %113 : vector<16x16x8xf32> to vector<256x8xf32>
    %115 = arith.truncf %114 : vector<256x8xf32> to vector<256x8xbf16>
    %c0_130 = arith.constant 0 : index
    %c16_131 = arith.constant 16 : index
    %116 = vector.load %arg12[%c0_130, %c16_131] : memref<256x72xbf16, #tpu.memory_space<vmem>>, vector<256x8xbf16>
    tpu.vector_store %arg12[%c0_130, %c16_131], %115 {strides = array<i32>} : memref<256x72xbf16, #tpu.memory_space<vmem>>, vector<256x8xbf16>,
    %c1_132 = arith.constant 1 : index
    %c0_133 = arith.constant 0 : index
    %c0_134 = arith.constant 0 : index
    %117 = vector.load %arg11[%c1_132, %c0_133, %c0_134] : memref<18x18x8xf32, #tpu.memory_space<vmem>>, vector<16x16x8xf32>
    %118 = vector.shape_cast %117 : vector<16x16x8xf32> to vector<256x8xf32>
    %119 = arith.truncf %118 : vector<256x8xf32> to vector<256x8xbf16>
    %c0_135 = arith.constant 0 : index
    %c24_136 = arith.constant 24 : index
    %120 = vector.load %arg12[%c0_135, %c24_136] : memref<256x72xbf16, #tpu.memory_space<vmem>>, vector<256x8xbf16>
    tpu.vector_store %arg12[%c0_135, %c24_136], %119 {strides = array<i32>} : memref<256x72xbf16, #tpu.memory_space<vmem>>, vector<256x8xbf16>,
    %c1_137 = arith.constant 1 : index
    %c1_138 = arith.constant 1 : index
    %c0_139 = arith.constant 0 : index
    %121 = vector.load %arg11[%c1_137, %c1_138, %c0_139] : memref<18x18x8xf32, #tpu.memory_space<vmem>>, vector<16x16x8xf32>
    %122 = vector.shape_cast %121 : vector<16x16x8xf32> to vector<256x8xf32>
    %123 = arith.truncf %122 : vector<256x8xf32> to vector<256x8xbf16>
    %c0_140 = arith.constant 0 : index
    %c32_141 = arith.constant 32 : index
    %124 = vector.load %arg12[%c0_140, %c32_141] : memref<256x72xbf16, #tpu.memory_space<vmem>>, vector<256x8xbf16>
    tpu.vector_store %arg12[%c0_140, %c32_141], %123 {strides = array<i32>} : memref<256x72xbf16, #tpu.memory_space<vmem>>, vector<256x8xbf16>,
    %c1_142 = arith.constant 1 : index
    %c2_143 = arith.constant 2 : index
    %c0_144 = arith.constant 0 : index
    %125 = vector.load %arg11[%c1_142, %c2_143, %c0_144] : memref<18x18x8xf32, #tpu.memory_space<vmem>>, vector<16x16x8xf32>
    %126 = vector.shape_cast %125 : vector<16x16x8xf32> to vector<256x8xf32>
    %127 = arith.truncf %126 : vector<256x8xf32> to vector<256x8xbf16>
    %c0_145 = arith.constant 0 : index
    %c40_146 = arith.constant 40 : index
    %128 = vector.load %arg12[%c0_145, %c40_146] : memref<256x72xbf16, #tpu.memory_space<vmem>>, vector<256x8xbf16>
    tpu.vector_store %arg12[%c0_145, %c40_146], %127 {strides = array<i32>} : memref<256x72xbf16, #tpu.memory_space<vmem>>, vector<256x8xbf16>,
    %c2_147 = arith.constant 2 : index
    %c0_148 = arith.constant 0 : index
    %c0_149 = arith.constant 0 : index
    %129 = vector.load %arg11[%c2_147, %c0_148, %c0_149] : memref<18x18x8xf32, #tpu.memory_space<vmem>>, vector<16x16x8xf32>
    %130 = vector.shape_cast %129 : vector<16x16x8xf32> to vector<256x8xf32>
    %131 = arith.truncf %130 : vector<256x8xf32> to vector<256x8xbf16>
    %c0_150 = arith.constant 0 : index
    %c48_151 = arith.constant 48 : index
    %132 = vector.load %arg12[%c0_150, %c48_151] : memref<256x72xbf16, #tpu.memory_space<vmem>>, vector<256x8xbf16>
    tpu.vector_store %arg12[%c0_150, %c48_151], %131 {strides = array<i32>} : memref<256x72xbf16, #tpu.memory_space<vmem>>, vector<256x8xbf16>,
    %c2_152 = arith.constant 2 : index
    %c1_153 = arith.constant 1 : index
    %c0_154 = arith.constant 0 : index
    %133 = vector.load %arg11[%c2_152, %c1_153, %c0_154] : memref<18x18x8xf32, #tpu.memory_space<vmem>>, vector<16x16x8xf32>
    %134 = vector.shape_cast %133 : vector<16x16x8xf32> to vector<256x8xf32>
    %135 = arith.truncf %134 : vector<256x8xf32> to vector<256x8xbf16>
    %c0_155 = arith.constant 0 : index
    %c56_156 = arith.constant 56 : index
    %136 = vector.load %arg12[%c0_155, %c56_156] : memref<256x72xbf16, #tpu.memory_space<vmem>>, vector<256x8xbf16>
    tpu.vector_store %arg12[%c0_155, %c56_156], %135 {strides = array<i32>} : memref<256x72xbf16, #tpu.memory_space<vmem>>, vector<256x8xbf16>,
    %c2_157 = arith.constant 2 : index
    %c2_158 = arith.constant 2 : index
    %c0_159 = arith.constant 0 : index
    %137 = vector.load %arg11[%c2_157, %c2_158, %c0_159] : memref<18x18x8xf32, #tpu.memory_space<vmem>>, vector<16x16x8xf32>
    %138 = vector.shape_cast %137 : vector<16x16x8xf32> to vector<256x8xf32>
    %139 = arith.truncf %138 : vector<256x8xf32> to vector<256x8xbf16>
    %c0_160 = arith.constant 0 : index
    %c64_161 = arith.constant 64 : index
    %140 = vector.load %arg12[%c0_160, %c64_161] : memref<256x72xbf16, #tpu.memory_space<vmem>>, vector<256x8xbf16>
    tpu.vector_store %arg12[%c0_160, %c64_161], %139 {strides = array<i32>} : memref<256x72xbf16, #tpu.memory_space<vmem>>, vector<256x8xbf16>,
    %c0_162 = arith.constant 0 : index
    %c0_163 = arith.constant 0 : index
    %141 = vector.load %arg12[%c0_162, %c0_163] : memref<256x72xbf16, #tpu.memory_space<vmem>>, vector<256x72xbf16>
    %c0_164 = arith.constant 0 : index
    %c0_165 = arith.constant 0 : index
    %142 = vector.load %arg5[%c0_164, %c0_165] : memref<72x8xbf16, #tpu.memory_space<vmem>>, vector<72x8xbf16>
    %cst_166 = arith.constant dense<0.000000e+00> : vector<256x8xf32>
    %143 = tpu.matmul %141, %142, %cst_166 {dimension_numbers = #tpu.dot_dimension_numbers<[1], [0], [0], [1], [0, 0, 1, 1], [], []>} : vector<256x72xbf16>, vector<72x8xbf16>, vector<256x8xf32> -> vector<256x8xf32>
    %c0_167 = arith.constant 0 : index
    %c0_168 = arith.constant 0 : index
    %144 = vector.load %arg6[%c0_167, %c0_168] : memref<1x8xf32, #tpu.memory_space<vmem>>, vector<1x8xf32>
    %145 = vector.broadcast %144 : vector<1x8xf32> to vector<256x8xf32>
    %146 = arith.addf %143, %145 : vector<256x8xf32>
    %cst_169 = arith.constant 0.000000e+00 : f32
    %147 = vector.broadcast %cst_169 : f32 to vector<256x8xf32>
    %148 = arith.maximumf %146, %147 : vector<256x8xf32>
    %149 = vector.shape_cast %148 : vector<256x8xf32> to vector<1x16x16x8xf32>
    %c0_170 = arith.constant 0 : index
    %c0_171 = arith.constant 0 : index
    %c0_172 = arith.constant 0 : index
    %c0_173 = arith.constant 0 : index
    %150 = vector.load %arg7[%c0_170, %c0_171, %c0_172, %c0_173] : memref<1x16x16x8xf32, #tpu.memory_space<vmem>>, vector<1x16x16x8xf32>
    tpu.vector_store %arg7[%c0_170, %c0_171, %c0_172, %c0_173], %149 {strides = array<i32>} : memref<1x16x16x8xf32, #tpu.memory_space<vmem>>, vector<1x16x16x8xf32>,
    return
  }
  func.func @transform_0(%arg0: i32) -> (i32, i32, i32, i32) {
    %c0_i32 = arith.constant 0 : i32
    %c0_i32_0 = arith.constant 0 : i32
    %c0_i32_1 = arith.constant 0 : i32
    %c0_i32_2 = arith.constant 0 : i32
    return %arg0, %c0_i32, %c0_i32_0, %c0_i32_1 : i32, i32, i32, i32
  }
  func.func @transform_1(%arg0: i32) -> (i32, i32, i32, i32) {
    %c0_i32 = arith.constant 0 : i32
    %c0_i32_0 = arith.constant 0 : i32
    %c0_i32_1 = arith.constant 0 : i32
    %c0_i32_2 = arith.constant 0 : i32
    return %arg0, %c0_i32, %c0_i32_0, %c0_i32_1 : i32, i32, i32, i32
  }
  func.func @transform_2(%arg0: i32) -> (i32, i32) {
    %c0_i32 = arith.constant 0 : i32
    %c0_i32_0 = arith.constant 0 : i32
    %c0_i32_1 = arith.constant 0 : i32
    return %c0_i32, %c0_i32_0 : i32, i32
  }
  func.func @transform_3(%arg0: i32) -> (i32, i32) {
    %c0_i32 = arith.constant 0 : i32
    %c0_i32_0 = arith.constant 0 : i32
    %c0_i32_1 = arith.constant 0 : i32
    return %c0_i32, %c0_i32_0 : i32, i32
  }
  func.func @transform_4(%arg0: i32) -> (i32, i32) {
    %c0_i32 = arith.constant 0 : i32
    %c0_i32_0 = arith.constant 0 : i32
    %c0_i32_1 = arith.constant 0 : i32
    return %c0_i32, %c0_i32_0 : i32, i32
  }
  func.func @transform_5(%arg0: i32) -> (i32, i32) {
    %c0_i32 = arith.constant 0 : i32
    %c0_i32_0 = arith.constant 0 : i32
    %c0_i32_1 = arith.constant 0 : i32
    return %c0_i32, %c0_i32_0 : i32, i32
  }
  func.func @transform_6(%arg0: i32) -> (i32, i32, i32, i32) {
    %c0_i32 = arith.constant 0 : i32
    %c0_i32_0 = arith.constant 0 : i32
    %c0_i32_1 = arith.constant 0 : i32
    %c0_i32_2 = arith.constant 0 : i32
    return %arg0, %c0_i32, %c0_i32_0, %c0_i32_1 : i32, i32, i32, i32
  }
}

</mosaic_0001>

<llo_original>
// kernel: tpu_custom_call.1
$region0: #{tpu_custom_call.1}
  #allocation0 [shape = 'u32[]', space=smem, size = 0x4, offset = 0x4, fixed_abs, tag = 'smem constant byte address 0x4 - core index']
  #allocation1 [shape = 'u32[72,128]{1,0:T(1,128)}', space=vmem, size = 0x9000, scoped, tag = 'internal scratch']
  #allocation2 [shape = 'f32[18,18,4]{2,1,0:T(8,128)}', space=vmem, size = 0x36000, scoped, tag = 'scratch operand']
  #allocation3 [shape = 'f32[18,18,4]{2,1,0:T(8,128)}', space=vmem, size = 0x36000, scoped, tag = 'scratch operand']
  #allocation4 [shape = 'bf16[256,72]{1,0:T(8,128)(2,1)}', space=vmem, size = 0x10000, scoped, tag = 'scratch operand']
  #allocation5 [shape = 'f32[18,18,8]{2,1,0:T(8,128)}', space=vmem, size = 0x36000, scoped, tag = 'scratch operand']
  #allocation6 [shape = 'bf16[256,72]{1,0:T(8,128)(2,1)}', space=vmem, size = 0x10000, scoped, tag = 'scratch operand']
  %s0 = inlined_call_operand.vmem [shape: bf16[2,16,16,4], index: 0, kind: input, shape index: {}]
  %s1 = inlined_call_operand.vmem [shape: bf16[2,16,16,4], index: 1, kind: input, shape index: {}]
  %s2 = inlined_call_operand.vmem [shape: bf16[72,8], index: 2, kind: input, shape index: {}]
  %s3 = inlined_call_operand.vmem [shape: f32[1,8], index: 3, kind: input, shape index: {}]
  %s4 = inlined_call_operand.vmem [shape: bf16[72,8], index: 4, kind: input, shape index: {}]
  %s5 = inlined_call_operand.vmem [shape: f32[1,8], index: 5, kind: input, shape index: {}]
  %s6 = inlined_call_operand.vmem [shape: f32[2,16,16,8], index: 6, kind: output, shape index: {}]
  %s7 = sld [smem:[#allocation0]]
  $region57: #{tpu_custom_call.1} parent=0
    _
  %s9 = ssub.s32 1, %s7
  %s10 = scalar_select 0, %s9, %s7
  loop: start=0, step=1, limit=4
  $region2: #{tpu_custom_call.1} parent=0 // loop_pre_header
    _
  $region3: #{tpu_custom_call.1} parent=0 // loop_header
    %s12 = sphi 0, %s16
    %p13 = scmp.ge.s32.totalorder %s12, 4
    %s22 = sphi 0, %s24
    %s25 = sphi 0, %s22
    %s26 = sphi 0, %s25
    %s42 = sphi 0, %s26
    %s48 = sphi 0, %s50
    %s51 = sphi 0, %s48
    %s52 = sphi 0, %s51
    %s68 = sphi 0, %s52
    %s72 = sphi 0, %s72
    %s74 = sphi 0, %s72
    %s75 = sphi 0, %s74
    %s89 = sphi 0, %s75
    %s93 = sphi 0, %s93
    %s95 = sphi 0, %s93
    %s96 = sphi 0, %s95
    %s110 = sphi 0, %s96
    %s114 = sphi 0, %s114
    %s116 = sphi 0, %s114
    %s117 = sphi 0, %s116
    %s131 = sphi 0, %s117
    %s135 = sphi 0, %s135
    %s137 = sphi 0, %s135
    %s138 = sphi 0, %s137
    %s152 = sphi 0, %s138
    %s158 = sphi 0, %s160
    %s161 = sphi 0, %s158
    %s162 = sphi 0, %s161
    %s178 = sphi 0, %s162
  $region4: #{tpu_custom_call.1} parent=0 // loop_header_branch
    %15 = sbr.rel (%p13) target = $region8
  $region5: #{tpu_custom_call.1} parent=0 // loop_body
    %s17 = ssub.s32 %s12, 1
    %s18 = ssub.s32 %s12, 2
    %s19 = sadd.s32 %s12, 1
    %s20 = ssub.s32 %s12, %s19
    %p21 = scmp.eq.s32.totalorder %s20, 0
    %s23 = sadd.s32 %s22, 1
    %s24 = scalar_select %p21, %s22, %s23
    %p27 = pneg %p21
    %p28 = scmp.eq.s32.totalorder %s12, 1
    %p29 = por %p27, %p28
    %p30 = scmp.ne.s32.totalorder %s22, %s25
    %p31 = scmp.eq.s32.totalorder %s12, 0
    %p32 = por %p30, %p31
    %p33 = scmp.ne.s32.totalorder %s22, %s25
    %p34 = scmp.eq.s32.totalorder %s17, 1
    %p35 = por %p33, %p34
    %p36 = scmp.ne.s32.totalorder %s25, %s26
    %p37 = scmp.eq.s32.totalorder %s17, 0
    %p38 = por %p36, %p37
    %p39 = scmp.ne.s32.totalorder %s25, %s26
    %p40 = scmp.eq.s32.totalorder %s18, 1
    %p41 = por %p39, %p40
    %p43 = scmp.ne.s32.totalorder %s26, %s42
    %p44 = scmp.eq.s32.totalorder %s18, 0
    %p45 = por %p43, %p44
    %s46 = ssub.s32 %s12, %s19
    %p47 = scmp.eq.s32.totalorder %s46, 0
    %s49 = sadd.s32 %s48, 1
    %s50 = scalar_select %p47, %s48, %s49
    %p53 = pneg %p47
    %p54 = scmp.eq.s32.totalorder %s12, 1
    %p55 = por %p53, %p54
    %p56 = scmp.ne.s32.totalorder %s48, %s51
    %p57 = scmp.eq.s32.totalorder %s12, 0
    %p58 = por %p56, %p57
    %p59 = scmp.ne.s32.totalorder %s48, %s51
    %p60 = scmp.eq.s32.totalorder %s17, 1
    %p61 = por %p59, %p60
    %p62 = scmp.ne.s32.totalorder %s51, %s52
    %p63 = scmp.eq.s32.totalorder %s17, 0
    %p64 = por %p62, %p63
    %p65 = scmp.ne.s32.totalorder %s51, %s52
    %p66 = scmp.eq.s32.totalorder %s18, 1
    %p67 = por %p65, %p66
    %p69 = scmp.ne.s32.totalorder %s52, %s68
    %p70 = scmp.eq.s32.totalorder %s18, 0
    %p71 = por %p69, %p70
    %s73 = sadd.s32 %s72, 1
    %p76 = scmp.eq.s32.totalorder %s12, 1
    %p77 = scmp.ne.s32.totalorder %s72, %s74
    %p78 = scmp.eq.s32.totalorder %s12, 0
    %p79 = por %p77, %p78
    %p80 = scmp.ne.s32.totalorder %s72, %s74
    %p81 = scmp.eq.s32.totalorder %s17, 1
    %p82 = por %p80, %p81
    %p83 = scmp.ne.s32.totalorder %s74, %s75
    %p84 = scmp.eq.s32.totalorder %s17, 0
    %p85 = por %p83, %p84
    %p86 = scmp.ne.s32.totalorder %s74, %s75
    %p87 = scmp.eq.s32.totalorder %s18, 1
    %p88 = por %p86, %p87
    %p90 = scmp.ne.s32.totalorder %s75, %s89
    %p91 = scmp.eq.s32.totalorder %s18, 0
    %p92 = por %p90, %p91
    %s94 = sadd.s32 %s93, 1
    %p97 = scmp.eq.s32.totalorder %s12, 1
    %p98 = scmp.ne.s32.totalorder %s93, %s95
    %p99 = scmp.eq.s32.totalorder %s12, 0
    %p100 = por %p98, %p99
    %p101 = scmp.ne.s32.totalorder %s93, %s95
    %p102 = scmp.eq.s32.totalorder %s17, 1
    %p103 = por %p101, %p102
    %p104 = scmp.ne.s32.totalorder %s95, %s96
    %p105 = scmp.eq.s32.totalorder %s17, 0
    %p106 = por %p104, %p105
    %p107 = scmp.ne.s32.totalorder %s95, %s96
    %p108 = scmp.eq.s32.totalorder %s18, 1
    %p109 = por %p107, %p108
    %p111 = scmp.ne.s32.totalorder %s96, %s110
    %p112 = scmp.eq.s32.totalorder %s18, 0
    %p113 = por %p111, %p112
    %s115 = sadd.s32 %s114, 1
    %p118 = scmp.eq.s32.totalorder %s12, 1
    %p119 = scmp.ne.s32.totalorder %s114, %s116
    %p120 = scmp.eq.s32.totalorder %s12, 0
    %p121 = por %p119, %p120
    %p122 = scmp.ne.s32.totalorder %s114, %s116
    %p123 = scmp.eq.s32.totalorder %s17, 1
    %p124 = por %p122, %p123
    %p125 = scmp.ne.s32.totalorder %s116, %s117
    %p126 = scmp.eq.s32.totalorder %s17, 0
    %p127 = por %p125, %p126
    %p128 = scmp.ne.s32.totalorder %s116, %s117
    %p129 = scmp.eq.s32.totalorder %s18, 1
    %p130 = por %p128, %p129
    %p132 = scmp.ne.s32.totalorder %s117, %s131
    %p133 = scmp.eq.s32.totalorder %s18, 0
    %p134 = por %p132, %p133
    %s136 = sadd.s32 %s135, 1
    %p139 = scmp.eq.s32.totalorder %s12, 1
    %p140 = scmp.ne.s32.totalorder %s135, %s137
    %p141 = scmp.eq.s32.totalorder %s12, 0
    %p142 = por %p140, %p141
    %p143 = scmp.ne.s32.totalorder %s135, %s137
    %p144 = scmp.eq.s32.totalorder %s17, 1
    %p145 = por %p143, %p144
    %p146 = scmp.ne.s32.totalorder %s137, %s138
    %p147 = scmp.eq.s32.totalorder %s17, 0
    %p148 = por %p146, %p147
    %p149 = scmp.ne.s32.totalorder %s137, %s138
    %p150 = scmp.eq.s32.totalorder %s18, 1
    %p151 = por %p149, %p150
    %p153 = scmp.ne.s32.totalorder %s138, %s152
    %p154 = scmp.eq.s32.totalorder %s18, 0
    %p155 = por %p153, %p154
    %s156 = ssub.s32 %s12, %s19
    %p157 = scmp.eq.s32.totalorder %s156, 0
    %s159 = sadd.s32 %s158, 1
    %s160 = scalar_select %p157, %s158, %s159
    %p163 = pneg %p157
    %p164 = scmp.eq.s32.totalorder %s12, 1
    %p165 = por %p163, %p164
    %p166 = scmp.ne.s32.totalorder %s158, %s161
    %p167 = scmp.eq.s32.totalorder %s12, 0
    %p168 = por %p166, %p167
    %p169 = scmp.ne.s32.totalorder %s158, %s161
    %p170 = scmp.eq.s32.totalorder %s17, 1
    %p171 = por %p169, %p170
    %p172 = scmp.ne.s32.totalorder %s161, %s162
    %p173 = scmp.eq.s32.totalorder %s17, 0
    %p174 = por %p172, %p173
    %p175 = scmp.ne.s32.totalorder %s161, %s162
    %p176 = scmp.eq.s32.totalorder %s18, 1
    %p177 = por %p175, %p176
    %p179 = scmp.ne.s32.totalorder %s162, %s178
    %p180 = scmp.eq.s32.totalorder %s18, 0
    %p181 = por %p179, %p180
    %p182 = scmp.le.s32.totalorder 1, %s12
    %p183 = scmp.lt.s32.totalorder %s12, 3
    %p184 = pnand %p182, %p183
    %p185 = pneg %p184
    // Predicated region
    $region9: #{tpu_custom_call.1} parent=5 // pred_check
      _
    $region10: #{tpu_custom_call.1} parent=5 // pred_check_branch
      %187 = sbr.rel (%p184) target = $region12
    $region11: #{tpu_custom_call.1} parent=5 // pred_region
      %s188 = ssub.s32 %s12, 1
      // Predicated region
      $region13: #{tpu_custom_call.1} parent=11 // pred_check
        %p189 = pneg %p85
      $region14: #{tpu_custom_call.1} parent=11 // pred_check_branch
        %191 = sbr.rel (%p189) target = $region16
      $region15: #{tpu_custom_call.1} parent=11 // pred_region
        _
      $region16: #{tpu_custom_call.1} parent=11 // pred_fallthru
        _
      // Predicated region
      $region17: #{tpu_custom_call.1} parent=11 // pred_check
        %p192 = pneg %p106
      $region18: #{tpu_custom_call.1} parent=11 // pred_check_branch
        %194 = sbr.rel (%p192) target = $region20
      $region19: #{tpu_custom_call.1} parent=11 // pred_region
        _
      $region20: #{tpu_custom_call.1} parent=11 // pred_fallthru
        _
      // Predicated region
      $region21: #{tpu_custom_call.1} parent=11 // pred_check
        %p195 = pneg %p127
      $region22: #{tpu_custom_call.1} parent=11 // pred_check_branch
        %197 = sbr.rel (%p195) target = $region24
      $region23: #{tpu_custom_call.1} parent=11 // pred_region
        _
      $region24: #{tpu_custom_call.1} parent=11 // pred_fallthru
        _
      // Predicated region
      $region25: #{tpu_custom_call.1} parent=11 // pred_check
        %p198 = pneg %p148
      $region26: #{tpu_custom_call.1} parent=11 // pred_check_branch
        %200 = sbr.rel (%p198) target = $region28
      $region27: #{tpu_custom_call.1} parent=11 // pred_region
        _
      $region28: #{tpu_custom_call.1} parent=11 // pred_fallthru
        _
    $region12: #{tpu_custom_call.1} parent=5 // pred_fallthru
      _
    %p201 = scmp.lt.s32.totalorder %s12, 2
    // Predicated region
    $region29: #{tpu_custom_call.1} parent=5 // pred_check
      %p202 = pneg %p201
    $region30: #{tpu_custom_call.1} parent=5 // pred_check_branch
      %204 = sbr.rel (%p202) target = $region32
    $region31: #{tpu_custom_call.1} parent=5 // pred_region
      // Predicated region
      $region33: #{tpu_custom_call.1} parent=31 // pred_check
        %p205 = pneg %p32
      $region34: #{tpu_custom_call.1} parent=31 // pred_check_branch
        %207 = sbr.rel (%p205) target = $region36
      $region35: #{tpu_custom_call.1} parent=31 // pred_region
        %p208 = scmp.lt.s32.totalorder %s12, 1
        %s209 = scalar_select %p208, %s12, 1
        %s210 = smul.addr %s209, 32
        %s211 = smul.addr %s210, 4
        %s212 = scalar_lea.vmem %s0, %s211
      $region36: #{tpu_custom_call.1} parent=31 // pred_fallthru
        _
      // Predicated region
      $region37: #{tpu_custom_call.1} parent=31 // pred_check
        %p213 = pneg %p58
      $region38: #{tpu_custom_call.1} parent=31 // pred_check_branch
        %215 = sbr.rel (%p213) target = $region40
      $region39: #{tpu_custom_call.1} parent=31 // pred_region
        %p216 = scmp.lt.s32.totalorder %s12, 1
        %s217 = scalar_select %p216, %s12, 1
        %s218 = smul.addr %s217, 32
        %s219 = smul.addr %s218, 4
        %s220 = scalar_lea.vmem %s1, %s219
      $region40: #{tpu_custom_call.1} parent=31 // pred_fallthru
        _
    $region32: #{tpu_custom_call.1} parent=5 // pred_fallthru
      _
    %p221 = scmp.le.s32.totalorder 1, %s12
    %p222 = scmp.lt.s32.totalorder %s12, 3
    %p223 = pnand %p221, %p222
    %p224 = pneg %p223
    // Predicated region
    $region41: #{tpu_custom_call.1} parent=5 // pred_check
      _
    $region42: #{tpu_custom_call.1} parent=5 // pred_check_branch
      %226 = sbr.rel (%p223) target = $region44
    $region43: #{tpu_custom_call.1} parent=5 // pred_region
      %s227 = ssub.s32 %s12, 1
      %p228 = scmp.lt.s32.totalorder %s17, 1
      %s229 = scalar_select %p228, %s17, 1
      %s230 = smul.addr %s229, 32
      %s231 = smul.addr %s230, 4
      %s232 = scalar_lea.vmem %s0, %s231
      %p233 = pneg %p38
      %p234 = pneg %p35
      %p235 = scmp.lt.s32.totalorder %s17, 1
      %s236 = scalar_select %p235, %s17, 1
      %s237 = smul.addr %s236, 32
      %s238 = smul.addr %s237, 4
      %s239 = scalar_lea.vmem %s1, %s238
      %p240 = pneg %p64
      %p241 = pneg %p61
      %p242 = pneg %p85
      %p243 = pneg %p82
      %p244 = pneg %p106
      %p245 = pneg %p103
      %p246 = pneg %p127
      %p247 = pneg %p124
      %p248 = pneg %p148
      %p249 = pneg %p145
      %p250 = pneg %p174
      %p251 = pneg %p171
      %p252 = scmp.lt.s32.totalorder %s17, 1
      %s253 = scalar_select %p252, %s17, 1
      %s254 = smul.addr %s253, 32
      %s255 = smul.addr %s254, 8
      %s256 = scalar_lea.vmem %s6, %s255
      %p257 = scmp.lt.s32.totalorder %s17, 1
      %s258 = scalar_select %p257, %s17, 1
      %s259 = smul.addr %s258, 32
      %s260 = smul.addr %s259, 4
      %s261 = scalar_lea.vmem %s0, %s260
      %p262 = scmp.lt.s32.totalorder %s17, 1
      %s263 = scalar_select %p262, %s17, 1
      %s264 = smul.addr %s263, 32
      %s265 = smul.addr %s264, 4
      %s266 = scalar_lea.vmem %s1, %s265
      %p267 = scmp.lt.s32.totalorder %s17, 1
      %s268 = scalar_select %p267, %s17, 1
      %s269 = smul.addr %s268, 32
      %s270 = smul.addr %s269, 8
      %s271 = scalar_lea.vmem %s6, %s270
      %v273 = vld [vmem:[%s261] sm:$0xf]
      %v274 = vld [vmem:[%s261 + $0x4] sm:$0xf]
      %v275 = vld [vmem:[%s261 + $0x8] sm:$0xf]
      %v276 = vld [vmem:[%s261 + $0xc] sm:$0xf]
      %v277 = vld [vmem:[%s261 + $0x10] sm:$0xf]
      %v278 = vld [vmem:[%s261 + $0x14] sm:$0xf]
      %v279 = vld [vmem:[%s261 + $0x18] sm:$0xf]
      %v280 = vld [vmem:[%s261 + $0x1c] sm:$0xf]
      %v281 = vld [vmem:[%s261 + $0x20] sm:$0xf]
      %v282 = vld [vmem:[%s261 + $0x24] sm:$0xf]
      %v283 = vld [vmem:[%s261 + $0x28] sm:$0xf]
      %v284 = vld [vmem:[%s261 + $0x2c] sm:$0xf]
      %v285 = vld [vmem:[%s261 + $0x30] sm:$0xf]
      %v286 = vld [vmem:[%s261 + $0x34] sm:$0xf]
      %v287 = vld [vmem:[%s261 + $0x38] sm:$0xf]
      %v288 = vld [vmem:[%s261 + $0x3c] sm:$0xf]
      %v289 = vld [vmem:[%s261 + $0x40] sm:$0xf]
      %v290 = vld [vmem:[%s261 + $0x44] sm:$0xf]
      %v291 = vld [vmem:[%s261 + $0x48] sm:$0xf]
      %v292 = vld [vmem:[%s261 + $0x4c] sm:$0xf]
      %v293 = vld [vmem:[%s261 + $0x50] sm:$0xf]
      %v294 = vld [vmem:[%s261 + $0x54] sm:$0xf]
      %v295 = vld [vmem:[%s261 + $0x58] sm:$0xf]
      %v296 = vld [vmem:[%s261 + $0x5c] sm:$0xf]
      %v297 = vld [vmem:[%s261 + $0x60] sm:$0xf]
      %v298 = vld [vmem:[%s261 + $0x64] sm:$0xf]
      %v299 = vld [vmem:[%s261 + $0x68] sm:$0xf]
      %v300 = vld [vmem:[%s261 + $0x6c] sm:$0xf]
      %v301 = vld [vmem:[%s261 + $0x70] sm:$0xf]
      %v302 = vld [vmem:[%s261 + $0x74] sm:$0xf]
      %v303 = vld [vmem:[%s261 + $0x78] sm:$0xf]
      %v304 = vld [vmem:[%s261 + $0x7c] sm:$0xf]
      %v305 = vunpack.c.l.bf16 %v273
      %v306 = vunpack.c.l.bf16 %v274
      %v307 = vunpack.c.l.bf16 %v275
      %v308 = vunpack.c.l.bf16 %v276
      %v309 = vunpack.c.l.bf16 %v277
      %v310 = vunpack.c.l.bf16 %v278
      %v311 = vunpack.c.l.bf16 %v279
      %v312 = vunpack.c.l.bf16 %v280
      %v313 = vunpack.c.l.bf16 %v281
      %v314 = vunpack.c.l.bf16 %v282
      %v315 = vunpack.c.l.bf16 %v283
      %v316 = vunpack.c.l.bf16 %v284
      %v317 = vunpack.c.l.bf16 %v285
      %v318 = vunpack.c.l.bf16 %v286
      %v319 = vunpack.c.l.bf16 %v287
      %v320 = vunpack.c.l.bf16 %v288
      %v321 = vunpack.c.l.bf16 %v289
      %v322 = vunpack.c.l.bf16 %v290
      %v323 = vunpack.c.l.bf16 %v291
      %v324 = vunpack.c.l.bf16 %v292
      %v325 = vunpack.c.l.bf16 %v293
      %v326 = vunpack.c.l.bf16 %v294
      %v327 = vunpack.c.l.bf16 %v295
      %v328 = vunpack.c.l.bf16 %v296
      %v329 = vunpack.c.l.bf16 %v297
      %v330 = vunpack.c.l.bf16 %v298
      %v331 = vunpack.c.l.bf16 %v299
      %v332 = vunpack.c.l.bf16 %v300
      %v333 = vunpack.c.l.bf16 %v301
      %v334 = vunpack.c.l.bf16 %v302
      %v335 = vunpack.c.l.bf16 %v303
      %v336 = vunpack.c.l.bf16 %v304
      %vm337 = vcmask 31744
      %338 = vst.msk [vmem:[#allocation2] sm:$0xff] %vm337, 0.0
      %339 = vst.msk [vmem:[#allocation2 + $0x8] sm:$0xff] %vm337, 0.0
      %vm340 = vcmask 25600
      %341 = vst.msk [vmem:[#allocation2 + $0x10] sm:$0x3] %vm340, 0.0
      %s342 = scalar_lea.vmem [#allocation2], 408
      %343 = vst.msk [vmem:[%s342] sm:$0xff] %vm337, 0.0
      %344 = vst.msk [vmem:[%s342 + $0x8] sm:$0xff] %vm337, 0.0
      %345 = vst.msk [vmem:[%s342 + $0x10] sm:$0x3] %vm340, 0.0
      %vm378 = vcmask 1040384
      %v379 = vrot.slane %v305, 7
      %v380 = vrot.slane %v306, 7
      %v381 = vsel %vm378, %v379, %v380
      %v382 = vrot.slane %v307, 7
      %v383 = vrot.slane %v308, 7
      %v384 = vsel %vm378, %v382, %v383
      %v385 = vrot.slane %v309, 7
      %v386 = vrot.slane %v310, 7
      %v387 = vsel %vm378, %v385, %v386
      %v388 = vrot.slane %v311, 7
      %v389 = vrot.slane %v312, 7
      %v390 = vsel %vm378, %v388, %v389
      %v391 = vrot.slane %v313, 7
      %v392 = vrot.slane %v314, 7
      %v393 = vsel %vm378, %v391, %v392
      %v394 = vrot.slane %v315, 7
      %v395 = vrot.slane %v316, 7
      %v396 = vsel %vm378, %v394, %v395
      %v397 = vrot.slane %v317, 7
      %v398 = vrot.slane %v318, 7
      %v399 = vsel %vm378, %v397, %v398
      %v400 = vrot.slane %v319, 7
      %v401 = vrot.slane %v320, 7
      %v402 = vsel %vm378, %v400, %v401
      %v403 = vrot.slane %v321, 7
      %v404 = vrot.slane %v322, 7
      %v405 = vsel %vm378, %v403, %v404
      %v406 = vrot.slane %v323, 7
      %v407 = vrot.slane %v324, 7
      %v408 = vsel %vm378, %v406, %v407
      %v409 = vrot.slane %v325, 7
      %v410 = vrot.slane %v326, 7
      %v411 = vsel %vm378, %v409, %v410
      %v412 = vrot.slane %v327, 7
      %v413 = vrot.slane %v328, 7
      %v414 = vsel %vm378, %v412, %v413
      %v415 = vrot.slane %v329, 7
      %v416 = vrot.slane %v330, 7
      %v417 = vsel %vm378, %v415, %v416
      %v418 = vrot.slane %v331, 7
      %v419 = vrot.slane %v332, 7
      %v420 = vsel %vm378, %v418, %v419
      %v421 = vrot.slane %v333, 7
      %v422 = vrot.slane %v334, 7
      %v423 = vsel %vm378, %v421, %v422
      %v424 = vrot.slane %v335, 7
      %v425 = vrot.slane %v336, 7
      %v426 = vsel %vm378, %v424, %v425
      %v475 = vsel %vm378, 0.0, %v379
      %v476 = vsel %vm378, 0.0, %v382
      %v477 = vsel %vm378, 0.0, %v385
      %v478 = vsel %vm378, 0.0, %v388
      %v479 = vsel %vm378, 0.0, %v391
      %v480 = vsel %vm378, 0.0, %v394
      %v481 = vsel %vm378, 0.0, %v397
      %v482 = vsel %vm378, 0.0, %v400
      %v483 = vsel %vm378, 0.0, %v403
      %v484 = vsel %vm378, 0.0, %v406
      %v485 = vsel %vm378, 0.0, %v409
      %v486 = vsel %vm378, 0.0, %v412
      %v487 = vsel %vm378, 0.0, %v415
      %v488 = vsel %vm378, 0.0, %v418
      %v489 = vsel %vm378, 0.0, %v421
      %v490 = vsel %vm378, 0.0, %v424
      %v491 = vsel %vm378, %v380, 0.0
      %v492 = vsel %vm378, %v383, 0.0
      %v493 = vsel %vm378, %v386, 0.0
      %v494 = vsel %vm378, %v389, 0.0
      %v495 = vsel %vm378, %v392, 0.0
      %v496 = vsel %vm378, %v395, 0.0
      %v497 = vsel %vm378, %v398, 0.0
      %v498 = vsel %vm378, %v401, 0.0
      %v499 = vsel %vm378, %v404, 0.0
      %v500 = vsel %vm378, %v407, 0.0
      %v501 = vsel %vm378, %v410, 0.0
      %v502 = vsel %vm378, %v413, 0.0
      %v503 = vsel %vm378, %v416, 0.0
      %v504 = vsel %vm378, %v419, 0.0
      %v505 = vsel %vm378, %v422, 0.0
      %v506 = vsel %vm378, %v425, 0.0
      %s507 = scalar_lea.vmem [#allocation2], 24
      %508 = vst.msk [vmem:[%s507] sm:$0xff] %vm337, %v475
      %509 = vst.msk [vmem:[%s507 + $0x8] sm:$0xff] %vm337, %v381
      %510 = vst.msk [vmem:[%s507 + $0x10] sm:$0x3] %vm340, %v491
      %511 = vst.msk [vmem:[%s507 + $0x18] sm:$0xff] %vm337, %v476
      %512 = vst.msk [vmem:[%s507 + $0x20] sm:$0xff] %vm337, %v384
      %513 = vst.msk [vmem:[%s507 + $0x28] sm:$0x3] %vm340, %v492
      %514 = vst.msk [vmem:[%s507 + $0x30] sm:$0xff] %vm337, %v477
      %515 = vst.msk [vmem:[%s507 + $0x38] sm:$0xff] %vm337, %v387
      %516 = vst.msk [vmem:[%s507 + $0x40] sm:$0x3] %vm340, %v493
      %517 = vst.msk [vmem:[%s507 + $0x48] sm:$0xff] %vm337, %v478
      %518 = vst.msk [vmem:[%s507 + $0x50] sm:$0xff] %vm337, %v390
      %519 = vst.msk [vmem:[%s507 + $0x58] sm:$0x3] %vm340, %v494
      %520 = vst.msk [vmem:[%s507 + $0x60] sm:$0xff] %vm337, %v479
      %521 = vst.msk [vmem:[%s507 + $0x68] sm:$0xff] %vm337, %v393
      %522 = vst.msk [vmem:[%s507 + $0x70] sm:$0x3] %vm340, %v495
      %523 = vst.msk [vmem:[%s507 + $0x78] sm:$0xff] %vm337, %v480
      %524 = vst.msk [vmem:[%s507 + $0x80] sm:$0xff] %vm337, %v396
      %525 = vst.msk [vmem:[%s507 + $0x88] sm:$0x3] %vm340, %v496
      %526 = vst.msk [vmem:[%s507 + $0x90] sm:$0xff] %vm337, %v481
      %527 = vst.msk [vmem:[%s507 + $0x98] sm:$0xff] %vm337, %v399
      %528 = vst.msk [vmem:[%s507 + $0xa0] sm:$0x3] %vm340, %v497
      %529 = vst.msk [vmem:[%s507 + $0xa8] sm:$0xff] %vm337, %v482
      %530 = vst.msk [vmem:[%s507 + $0xb0] sm:$0xff] %vm337, %v402
      %531 = vst.msk [vmem:[%s507 + $0xb8] sm:$0x3] %vm340, %v498
      %532 = vst.msk [vmem:[%s507 + $0xc0] sm:$0xff] %vm337, %v483
      %533 = vst.msk [vmem:[%s507 + $0xc8] sm:$0xff] %vm337, %v405
      %534 = vst.msk [vmem:[%s507 + $0xd0] sm:$0x3] %vm340, %v499
      %535 = vst.msk [vmem:[%s507 + $0xd8] sm:$0xff] %vm337, %v484
      %536 = vst.msk [vmem:[%s507 + $0xe0] sm:$0xff] %vm337, %v408
      %537 = vst.msk [vmem:[%s507 + $0xe8] sm:$0x3] %vm340, %v500
      %538 = vst.msk [vmem:[%s507 + $0xf0] sm:$0xff] %vm337, %v485
      %539 = vst.msk [vmem:[%s507 + $0xf8] sm:$0xff] %vm337, %v411
      %540 = vst.msk [vmem:[%s507 + $0x100] sm:$0x3] %vm340, %v501
      %541 = vst.msk [vmem:[%s507 + $0x108] sm:$0xff] %vm337, %v486
      %542 = vst.msk [vmem:[%s507 + $0x110] sm:$0xff] %vm337, %v414
      %543 = vst.msk [vmem:[%s507 + $0x118] sm:$0x3] %vm340, %v502
      %544 = vst.msk [vmem:[%s507 + $0x120] sm:$0xff] %vm337, %v487
      %545 = vst.msk [vmem:[%s507 + $0x128] sm:$0xff] %vm337, %v417
      %546 = vst.msk [vmem:[%s507 + $0x130] sm:$0x3] %vm340, %v503
      %547 = vst.msk [vmem:[%s507 + $0x138] sm:$0xff] %vm337, %v488
      %548 = vst.msk [vmem:[%s507 + $0x140] sm:$0xff] %vm337, %v420
      %549 = vst.msk [vmem:[%s507 + $0x148] sm:$0x3] %vm340, %v504
      %550 = vst.msk [vmem:[%s507 + $0x150] sm:$0xff] %vm337, %v489
      %551 = vst.msk [vmem:[%s507 + $0x158] sm:$0xff] %vm337, %v423
      %552 = vst.msk [vmem:[%s507 + $0x160] sm:$0x3] %vm340, %v505
      %553 = vst.msk [vmem:[%s507 + $0x168] sm:$0xff] %vm337, %v490
      %554 = vst.msk [vmem:[%s507 + $0x170] sm:$0xff] %vm337, %v426
      %555 = vst.msk [vmem:[%s507 + $0x178] sm:$0x3] %vm340, %v506
      %v556 = vld [vmem:[%s266] sm:$0xf]
      %v557 = vld [vmem:[%s266 + $0x4] sm:$0xf]
      %v558 = vld [vmem:[%s266 + $0x8] sm:$0xf]
      %v559 = vld [vmem:[%s266 + $0xc] sm:$0xf]
      %v560 = vld [vmem:[%s266 + $0x10] sm:$0xf]
      %v561 = vld [vmem:[%s266 + $0x14] sm:$0xf]
      %v562 = vld [vmem:[%s266 + $0x18] sm:$0xf]
      %v563 = vld [vmem:[%s266 + $0x1c] sm:$0xf]
      %v564 = vld [vmem:[%s266 + $0x20] sm:$0xf]
      %v565 = vld [vmem:[%s266 + $0x24] sm:$0xf]
      %v566 = vld [vmem:[%s266 + $0x28] sm:$0xf]
      %v567 = vld [vmem:[%s266 + $0x2c] sm:$0xf]
      %v568 = vld [vmem:[%s266 + $0x30] sm:$0xf]
      %v569 = vld [vmem:[%s266 + $0x34] sm:$0xf]
      %v570 = vld [vmem:[%s266 + $0x38] sm:$0xf]
      %v571 = vld [vmem:[%s266 + $0x3c] sm:$0xf]
      %v572 = vld [vmem:[%s266 + $0x40] sm:$0xf]
      %v573 = vld [vmem:[%s266 + $0x44] sm:$0xf]
      %v574 = vld [vmem:[%s266 + $0x48] sm:$0xf]
      %v575 = vld [vmem:[%s266 + $0x4c] sm:$0xf]
      %v576 = vld [vmem:[%s266 + $0x50] sm:$0xf]
      %v577 = vld [vmem:[%s266 + $0x54] sm:$0xf]
      %v578 = vld [vmem:[%s266 + $0x58] sm:$0xf]
      %v579 = vld [vmem:[%s266 + $0x5c] sm:$0xf]
      %v580 = vld [vmem:[%s266 + $0x60] sm:$0xf]
      %v581 = vld [vmem:[%s266 + $0x64] sm:$0xf]
      %v582 = vld [vmem:[%s266 + $0x68] sm:$0xf]
      %v583 = vld [vmem:[%s266 + $0x6c] sm:$0xf]
      %v584 = vld [vmem:[%s266 + $0x70] sm:$0xf]
      %v585 = vld [vmem:[%s266 + $0x74] sm:$0xf]
      %v586 = vld [vmem:[%s266 + $0x78] sm:$0xf]
      %v587 = vld [vmem:[%s266 + $0x7c] sm:$0xf]
      %v588 = vunpack.c.l.bf16 %v556
      %v589 = vunpack.c.l.bf16 %v557
      %v590 = vunpack.c.l.bf16 %v558
      %v591 = vunpack.c.l.bf16 %v559
      %v592 = vunpack.c.l.bf16 %v560
      %v593 = vunpack.c.l.bf16 %v561
      %v594 = vunpack.c.l.bf16 %v562
      %v595 = vunpack.c.l.bf16 %v563
      %v596 = vunpack.c.l.bf16 %v564
      %v597 = vunpack.c.l.bf16 %v565
      %v598 = vunpack.c.l.bf16 %v566
      %v599 = vunpack.c.l.bf16 %v567
      %v600 = vunpack.c.l.bf16 %v568
      %v601 = vunpack.c.l.bf16 %v569
      %v602 = vunpack.c.l.bf16 %v570
      %v603 = vunpack.c.l.bf16 %v571
      %v604 = vunpack.c.l.bf16 %v572
      %v605 = vunpack.c.l.bf16 %v573
      %v606 = vunpack.c.l.bf16 %v574
      %v607 = vunpack.c.l.bf16 %v575
      %v608 = vunpack.c.l.bf16 %v576
      %v609 = vunpack.c.l.bf16 %v577
      %v610 = vunpack.c.l.bf16 %v578
      %v611 = vunpack.c.l.bf16 %v579
      %v612 = vunpack.c.l.bf16 %v580
      %v613 = vunpack.c.l.bf16 %v581
      %v614 = vunpack.c.l.bf16 %v582
      %v615 = vunpack.c.l.bf16 %v583
      %v616 = vunpack.c.l.bf16 %v584
      %v617 = vunpack.c.l.bf16 %v585
      %v618 = vunpack.c.l.bf16 %v586
      %v619 = vunpack.c.l.bf16 %v587
      %620 = vst.msk [vmem:[#allocation3] sm:$0xff] %vm337, 0.0
      %621 = vst.msk [vmem:[#allocation3 + $0x8] sm:$0xff] %vm337, 0.0
      %622 = vst.msk [vmem:[#allocation3 + $0x10] sm:$0x3] %vm340, 0.0
      %s623 = scalar_lea.vmem [#allocation3], 408
      %624 = vst.msk [vmem:[%s623] sm:$0xff] %vm337, 0.0
      %625 = vst.msk [vmem:[%s623 + $0x8] sm:$0xff] %vm337, 0.0
      %626 = vst.msk [vmem:[%s623 + $0x10] sm:$0x3] %vm340, 0.0
      %v659 = vrot.slane %v588, 7
      %v660 = vrot.slane %v589, 7
      %v661 = vsel %vm378, %v659, %v660
      %v662 = vrot.slane %v590, 7
      %v663 = vrot.slane %v591, 7
      %v664 = vsel %vm378, %v662, %v663
      %v665 = vrot.slane %v592, 7
      %v666 = vrot.slane %v593, 7
      %v667 = vsel %vm378, %v665, %v666
      %v668 = vrot.slane %v594, 7
      %v669 = vrot.slane %v595, 7
      %v670 = vsel %vm378, %v668, %v669
      %v671 = vrot.slane %v596, 7
      %v672 = vrot.slane %v597, 7
      %v673 = vsel %vm378, %v671, %v672
      %v674 = vrot.slane %v598, 7
      %v675 = vrot.slane %v599, 7
      %v676 = vsel %vm378, %v674, %v675
      %v677 = vrot.slane %v600, 7
      %v678 = vrot.slane %v601, 7
      %v679 = vsel %vm378, %v677, %v678
      %v680 = vrot.slane %v602, 7
      %v681 = vrot.slane %v603, 7
      %v682 = vsel %vm378, %v680, %v681
      %v683 = vrot.slane %v604, 7
      %v684 = vrot.slane %v605, 7
      %v685 = vsel %vm378, %v683, %v684
      %v686 = vrot.slane %v606, 7
      %v687 = vrot.slane %v607, 7
      %v688 = vsel %vm378, %v686, %v687
      %v689 = vrot.slane %v608, 7
      %v690 = vrot.slane %v609, 7
      %v691 = vsel %vm378, %v689, %v690
      %v692 = vrot.slane %v610, 7
      %v693 = vrot.slane %v611, 7
      %v694 = vsel %vm378, %v692, %v693
      %v695 = vrot.slane %v612, 7
      %v696 = vrot.slane %v613, 7
      %v697 = vsel %vm378, %v695, %v696
      %v698 = vrot.slane %v614, 7
      %v699 = vrot.slane %v615, 7
      %v700 = vsel %vm378, %v698, %v699
      %v701 = vrot.slane %v616, 7
      %v702 = vrot.slane %v617, 7
      %v703 = vsel %vm378, %v701, %v702
      %v704 = vrot.slane %v618, 7
      %v705 = vrot.slane %v619, 7
      %v706 = vsel %vm378, %v704, %v705
      %v755 = vsel %vm378, 0.0, %v659
      %v756 = vsel %vm378, 0.0, %v662
      %v757 = vsel %vm378, 0.0, %v665
      %v758 = vsel %vm378, 0.0, %v668
      %v759 = vsel %vm378, 0.0, %v671
      %v760 = vsel %vm378, 0.0, %v674
      %v761 = vsel %vm378, 0.0, %v677
      %v762 = vsel %vm378, 0.0, %v680
      %v763 = vsel %vm378, 0.0, %v683
      %v764 = vsel %vm378, 0.0, %v686
      %v765 = vsel %vm378, 0.0, %v689
      %v766 = vsel %vm378, 0.0, %v692
      %v767 = vsel %vm378, 0.0, %v695
      %v768 = vsel %vm378, 0.0, %v698
      %v769 = vsel %vm378, 0.0, %v701
      %v770 = vsel %vm378, 0.0, %v704
      %v771 = vsel %vm378, %v660, 0.0
      %v772 = vsel %vm378, %v663, 0.0
      %v773 = vsel %vm378, %v666, 0.0
      %v774 = vsel %vm378, %v669, 0.0
      %v775 = vsel %vm378, %v672, 0.0
      %v776 = vsel %vm378, %v675, 0.0
      %v777 = vsel %vm378, %v678, 0.0
      %v778 = vsel %vm378, %v681, 0.0
      %v779 = vsel %vm378, %v684, 0.0
      %v780 = vsel %vm378, %v687, 0.0
      %v781 = vsel %vm378, %v690, 0.0
      %v782 = vsel %vm378, %v693, 0.0
      %v783 = vsel %vm378, %v696, 0.0
      %v784 = vsel %vm378, %v699, 0.0
      %v785 = vsel %vm378, %v702, 0.0
      %v786 = vsel %vm378, %v705, 0.0
      %s787 = scalar_lea.vmem [#allocation3], 24
      %788 = vst.msk [vmem:[%s787] sm:$0xff] %vm337, %v755
      %789 = vst.msk [vmem:[%s787 + $0x8] sm:$0xff] %vm337, %v661
      %790 = vst.msk [vmem:[%s787 + $0x10] sm:$0x3] %vm340, %v771
      %791 = vst.msk [vmem:[%s787 + $0x18] sm:$0xff] %vm337, %v756
      %792 = vst.msk [vmem:[%s787 + $0x20] sm:$0xff] %vm337, %v664
      %793 = vst.msk [vmem:[%s787 + $0x28] sm:$0x3] %vm340, %v772
      %794 = vst.msk [vmem:[%s787 + $0x30] sm:$0xff] %vm337, %v757
      %795 = vst.msk [vmem:[%s787 + $0x38] sm:$0xff] %vm337, %v667
      %796 = vst.msk [vmem:[%s787 + $0x40] sm:$0x3] %vm340, %v773
      %797 = vst.msk [vmem:[%s787 + $0x48] sm:$0xff] %vm337, %v758
      %798 = vst.msk [vmem:[%s787 + $0x50] sm:$0xff] %vm337, %v670
      %799 = vst.msk [vmem:[%s787 + $0x58] sm:$0x3] %vm340, %v774
      %800 = vst.msk [vmem:[%s787 + $0x60] sm:$0xff] %vm337, %v759
      %801 = vst.msk [vmem:[%s787 + $0x68] sm:$0xff] %vm337, %v673
      %802 = vst.msk [vmem:[%s787 + $0x70] sm:$0x3] %vm340, %v775
      %803 = vst.msk [vmem:[%s787 + $0x78] sm:$0xff] %vm337, %v760
      %804 = vst.msk [vmem:[%s787 + $0x80] sm:$0xff] %vm337, %v676
      %805 = vst.msk [vmem:[%s787 + $0x88] sm:$0x3] %vm340, %v776
      %806 = vst.msk [vmem:[%s787 + $0x90] sm:$0xff] %vm337, %v761
      %807 = vst.msk [vmem:[%s787 + $0x98] sm:$0xff] %vm337, %v679
      %808 = vst.msk [vmem:[%s787 + $0xa0] sm:$0x3] %vm340, %v777
      %809 = vst.msk [vmem:[%s787 + $0xa8] sm:$0xff] %vm337, %v762
      %810 = vst.msk [vmem:[%s787 + $0xb0] sm:$0xff] %vm337, %v682
      %811 = vst.msk [vmem:[%s787 + $0xb8] sm:$0x3] %vm340, %v778
      %812 = vst.msk [vmem:[%s787 + $0xc0] sm:$0xff] %vm337, %v763
      %813 = vst.msk [vmem:[%s787 + $0xc8] sm:$0xff] %vm337, %v685
      %814 = vst.msk [vmem:[%s787 + $0xd0] sm:$0x3] %vm340, %v779
      %815 = vst.msk [vmem:[%s787 + $0xd8] sm:$0xff] %vm337, %v764
      %816 = vst.msk [vmem:[%s787 + $0xe0] sm:$0xff] %vm337, %v688
      %817 = vst.msk [vmem:[%s787 + $0xe8] sm:$0x3] %vm340, %v780
      %818 = vst.msk [vmem:[%s787 + $0xf0] sm:$0xff] %vm337, %v765
      %819 = vst.msk [vmem:[%s787 + $0xf8] sm:$0xff] %vm337, %v691
      %820 = vst.msk [vmem:[%s787 + $0x100] sm:$0x3] %vm340, %v781
      %821 = vst.msk [vmem:[%s787 + $0x108] sm:$0xff] %vm337, %v766
      %822 = vst.msk [vmem:[%s787 + $0x110] sm:$0xff] %vm337, %v694
      %823 = vst.msk [vmem:[%s787 + $0x118] sm:$0x3] %vm340, %v782
      %824 = vst.msk [vmem:[%s787 + $0x120] sm:$0xff] %vm337, %v767
      %825 = vst.msk [vmem:[%s787 + $0x128] sm:$0xff] %vm337, %v697
      %826 = vst.msk [vmem:[%s787 + $0x130] sm:$0x3] %vm340, %v783
      %827 = vst.msk [vmem:[%s787 + $0x138] sm:$0xff] %vm337, %v768
      %828 = vst.msk [vmem:[%s787 + $0x140] sm:$0xff] %vm337, %v700
      %829 = vst.msk [vmem:[%s787 + $0x148] sm:$0x3] %vm340, %v784
      %830 = vst.msk [vmem:[%s787 + $0x150] sm:$0xff] %vm337, %v769
      %831 = vst.msk [vmem:[%s787 + $0x158] sm:$0xff] %vm337, %v703
      %832 = vst.msk [vmem:[%s787 + $0x160] sm:$0x3] %vm340, %v785
      %833 = vst.msk [vmem:[%s787 + $0x168] sm:$0xff] %vm337, %v770
      %834 = vst.msk [vmem:[%s787 + $0x170] sm:$0xff] %vm337, %v706
      %835 = vst.msk [vmem:[%s787 + $0x178] sm:$0x3] %vm340, %v786
      %v836 = vld [vmem:[#allocation2] sm:$0xff]
      %v837 = vld [vmem:[#allocation2 + $0x8] sm:$0xff]
      %v838 = vld [vmem:[#allocation2 + $0x18] sm:$0xff]
      %v839 = vld [vmem:[#allocation2 + $0x20] sm:$0xff]
      %v840 = vld [vmem:[#allocation2 + $0x30] sm:$0xff]
      %v841 = vld [vmem:[#allocation2 + $0x38] sm:$0xff]
      %v842 = vld [vmem:[#allocation2 + $0x48] sm:$0xff]
      %v843 = vld [vmem:[#allocation2 + $0x50] sm:$0xff]
      %v844 = vld [vmem:[#allocation2 + $0x60] sm:$0xff]
      %v845 = vld [vmem:[#allocation2 + $0x68] sm:$0xff]
      %v846 = vld [vmem:[#allocation2 + $0x78] sm:$0xff]
      %v847 = vld [vmem:[#allocation2 + $0x80] sm:$0xff]
      %v848 = vld [vmem:[#allocation2 + $0x90] sm:$0xff]
      %v849 = vld [vmem:[#allocation2 + $0x98] sm:$0xff]
      %v850 = vld [vmem:[#allocation2 + $0xa8] sm:$0xff]
      %v851 = vld [vmem:[#allocation2 + $0xb0] sm:$0xff]
      %v852 = vld [vmem:[#allocation2 + $0xc0] sm:$0xff]
      %v853 = vld [vmem:[#allocation2 + $0xc8] sm:$0xff]
      %v854 = vld [vmem:[#allocation2 + $0xd8] sm:$0xff]
      %v855 = vld [vmem:[#allocation2 + $0xe0] sm:$0xff]
      %v856 = vld [vmem:[#allocation2 + $0xf0] sm:$0xff]
      %v857 = vld [vmem:[#allocation2 + $0xf8] sm:$0xff]
      %v858 = vld [vmem:[#allocation2 + $0x108] sm:$0xff]
      %v859 = vld [vmem:[#allocation2 + $0x110] sm:$0xff]
      %v860 = vld [vmem:[#allocation2 + $0x120] sm:$0xff]
      %v861 = vld [vmem:[#allocation2 + $0x128] sm:$0xff]
      %v862 = vld [vmem:[#allocation2 + $0x138] sm:$0xff]
      %v863 = vld [vmem:[#allocation2 + $0x140] sm:$0xff]
      %v864 = vld [vmem:[#allocation2 + $0x150] sm:$0xff]
      %v865 = vld [vmem:[#allocation2 + $0x158] sm:$0xff]
      %v866 = vld [vmem:[#allocation2 + $0x168] sm:$0xff]
      %v867 = vld [vmem:[#allocation2 + $0x170] sm:$0xff]
      %v868 = vpack.c.bf16 %v836, %v836
      %v869 = vpack.c.bf16 %v837, %v837
      %v870 = vpack.c.bf16 %v838, %v838
      %v871 = vpack.c.bf16 %v839, %v839
      %v872 = vpack.c.bf16 %v840, %v840
      %v873 = vpack.c.bf16 %v841, %v841
      %v874 = vpack.c.bf16 %v842, %v842
      %v875 = vpack.c.bf16 %v843, %v843
      %v876 = vpack.c.bf16 %v844, %v844
      %v877 = vpack.c.bf16 %v845, %v845
      %v878 = vpack.c.bf16 %v846, %v846
      %v879 = vpack.c.bf16 %v847, %v847
      %v880 = vpack.c.bf16 %v848, %v848
      %v881 = vpack.c.bf16 %v849, %v849
      %v882 = vpack.c.bf16 %v850, %v850
      %v883 = vpack.c.bf16 %v851, %v851
      %v884 = vpack.c.bf16 %v852, %v852
      %v885 = vpack.c.bf16 %v853, %v853
      %v886 = vpack.c.bf16 %v854, %v854
      %v887 = vpack.c.bf16 %v855, %v855
      %v888 = vpack.c.bf16 %v856, %v856
      %v889 = vpack.c.bf16 %v857, %v857
      %v890 = vpack.c.bf16 %v858, %v858
      %v891 = vpack.c.bf16 %v859, %v859
      %v892 = vpack.c.bf16 %v860, %v860
      %v893 = vpack.c.bf16 %v861, %v861
      %v894 = vpack.c.bf16 %v862, %v862
      %v895 = vpack.c.bf16 %v863, %v863
      %v896 = vpack.c.bf16 %v864, %v864
      %v897 = vpack.c.bf16 %v865, %v865
      %v898 = vpack.c.bf16 %v866, %v866
      %v899 = vpack.c.bf16 %v867, %v867
      %vm900 = vcmask 27648
      %901 = vst.msk [vmem:[#allocation4] sm:$0xf] %vm900, %v868
      %902 = vst.msk [vmem:[#allocation4 + $0x4] sm:$0xf] %vm900, %v869
      %903 = vst.msk [vmem:[#allocation4 + $0x8] sm:$0xf] %vm900, %v870
      %904 = vst.msk [vmem:[#allocation4 + $0xc] sm:$0xf] %vm900, %v871
      %905 = vst.msk [vmem:[#allocation4 + $0x10] sm:$0xf] %vm900, %v872
      %906 = vst.msk [vmem:[#allocation4 + $0x14] sm:$0xf] %vm900, %v873
      %907 = vst.msk [vmem:[#allocation4 + $0x18] sm:$0xf] %vm900, %v874
      %908 = vst.msk [vmem:[#allocation4 + $0x1c] sm:$0xf] %vm900, %v875
      %909 = vst.msk [vmem:[#allocation4 + $0x20] sm:$0xf] %vm900, %v876
      %910 = vst.msk [vmem:[#allocation4 + $0x24] sm:$0xf] %vm900, %v877
      %911 = vst.msk [vmem:[#allocation4 + $0x28] sm:$0xf] %vm900, %v878
      %912 = vst.msk [vmem:[#allocation4 + $0x2c] sm:$0xf] %vm900, %v879
      %913 = vst.msk [vmem:[#allocation4 + $0x30] sm:$0xf] %vm900, %v880
      %914 = vst.msk [vmem:[#allocation4 + $0x34] sm:$0xf] %vm900, %v881
      %915 = vst.msk [vmem:[#allocation4 + $0x38] sm:$0xf] %vm900, %v882
      %916 = vst.msk [vmem:[#allocation4 + $0x3c] sm:$0xf] %vm900, %v883
      %917 = vst.msk [vmem:[#allocation4 + $0x40] sm:$0xf] %vm900, %v884
      %918 = vst.msk [vmem:[#allocation4 + $0x44] sm:$0xf] %vm900, %v885
      %919 = vst.msk [vmem:[#allocation4 + $0x48] sm:$0xf] %vm900, %v886
      %920 = vst.msk [vmem:[#allocation4 + $0x4c] sm:$0xf] %vm900, %v887
      %921 = vst.msk [vmem:[#allocation4 + $0x50] sm:$0xf] %vm900, %v888
      %922 = vst.msk [vmem:[#allocation4 + $0x54] sm:$0xf] %vm900, %v889
      %923 = vst.msk [vmem:[#allocation4 + $0x58] sm:$0xf] %vm900, %v890
      %924 = vst.msk [vmem:[#allocation4 + $0x5c] sm:$0xf] %vm900, %v891
      %925 = vst.msk [vmem:[#allocation4 + $0x60] sm:$0xf] %vm900, %v892
      %926 = vst.msk [vmem:[#allocation4 + $0x64] sm:$0xf] %vm900, %v893
      %927 = vst.msk [vmem:[#allocation4 + $0x68] sm:$0xf] %vm900, %v894
      %928 = vst.msk [vmem:[#allocation4 + $0x6c] sm:$0xf] %vm900, %v895
      %929 = vst.msk [vmem:[#allocation4 + $0x70] sm:$0xf] %vm900, %v896
      %930 = vst.msk [vmem:[#allocation4 + $0x74] sm:$0xf] %vm900, %v897
      %931 = vst.msk [vmem:[#allocation4 + $0x78] sm:$0xf] %vm900, %v898
      %932 = vst.msk [vmem:[#allocation4 + $0x7c] sm:$0xf] %vm900, %v899
      %v933 = vld [vmem:[#allocation2 + $0x1] sm:$0xff]
      %v934 = vld [vmem:[#allocation2 + $0x9] sm:$0xff]
      %v935 = vld [vmem:[#allocation2 + $0x19] sm:$0xff]
      %v936 = vld [vmem:[#allocation2 + $0x21] sm:$0xff]
      %v937 = vld [vmem:[#allocation2 + $0x31] sm:$0xff]
      %v938 = vld [vmem:[#allocation2 + $0x39] sm:$0xff]
      %v939 = vld [vmem:[#allocation2 + $0x49] sm:$0xff]
      %v940 = vld [vmem:[#allocation2 + $0x51] sm:$0xff]
      %v941 = vld [vmem:[#allocation2 + $0x61] sm:$0xff]
      %v942 = vld [vmem:[#allocation2 + $0x69] sm:$0xff]
      %v943 = vld [vmem:[#allocation2 + $0x79] sm:$0xff]
      %v944 = vld [vmem:[#allocation2 + $0x81] sm:$0xff]
      %v945 = vld [vmem:[#allocation2 + $0x91] sm:$0xff]
      %v946 = vld [vmem:[#allocation2 + $0x99] sm:$0xff]
      %v947 = vld [vmem:[#allocation2 + $0xa9] sm:$0xff]
      %v948 = vld [vmem:[#allocation2 + $0xb1] sm:$0xff]
      %v949 = vld [vmem:[#allocation2 + $0xc1] sm:$0xff]
      %v950 = vld [vmem:[#allocation2 + $0xc9] sm:$0xff]
      %v951 = vld [vmem:[#allocation2 + $0xd9] sm:$0xff]
      %v952 = vld [vmem:[#allocation2 + $0xe1] sm:$0xff]
      %v953 = vld [vmem:[#allocation2 + $0xf1] sm:$0xff]
      %v954 = vld [vmem:[#allocation2 + $0xf9] sm:$0xff]
      %v955 = vld [vmem:[#allocation2 + $0x109] sm:$0xff]
      %v956 = vld [vmem:[#allocation2 + $0x111] sm:$0xff]
      %v957 = vld [vmem:[#allocation2 + $0x121] sm:$0xff]
      %v958 = vld [vmem:[#allocation2 + $0x129] sm:$0xff]
      %v959 = vld [vmem:[#allocation2 + $0x139] sm:$0xff]
      %v960 = vld [vmem:[#allocation2 + $0x141] sm:$0xff]
      %v961 = vld [vmem:[#allocation2 + $0x151] sm:$0xff]
      %v962 = vld [vmem:[#allocation2 + $0x159] sm:$0xff]
      %v963 = vld [vmem:[#allocation2 + $0x169] sm:$0xff]
      %v964 = vld [vmem:[#allocation2 + $0x171] sm:$0xff]
      %v965 = vpack.c.bf16 %v933, %v933
      %v966 = vpack.c.bf16 %v934, %v934
      %v967 = vpack.c.bf16 %v935, %v935
      %v968 = vpack.c.bf16 %v936, %v936
      %v969 = vpack.c.bf16 %v937, %v937
      %v970 = vpack.c.bf16 %v938, %v938
      %v971 = vpack.c.bf16 %v939, %v939
      %v972 = vpack.c.bf16 %v940, %v940
      %v973 = vpack.c.bf16 %v941, %v941
      %v974 = vpack.c.bf16 %v942, %v942
      %v975 = vpack.c.bf16 %v943, %v943
      %v976 = vpack.c.bf16 %v944, %v944
      %v977 = vpack.c.bf16 %v945, %v945
      %v978 = vpack.c.bf16 %v946, %v946
      %v979 = vpack.c.bf16 %v947, %v947
      %v980 = vpack.c.bf16 %v948, %v948
      %v981 = vpack.c.bf16 %v949, %v949
      %v982 = vpack.c.bf16 %v950, %v950
      %v983 = vpack.c.bf16 %v951, %v951
      %v984 = vpack.c.bf16 %v952, %v952
      %v985 = vpack.c.bf16 %v953, %v953
      %v986 = vpack.c.bf16 %v954, %v954
      %v987 = vpack.c.bf16 %v955, %v955
      %v988 = vpack.c.bf16 %v956, %v956
      %v989 = vpack.c.bf16 %v957, %v957
      %v990 = vpack.c.bf16 %v958, %v958
      %v991 = vpack.c.bf16 %v959, %v959
      %v992 = vpack.c.bf16 %v960, %v960
      %v993 = vpack.c.bf16 %v961, %v961
      %v994 = vpack.c.bf16 %v962, %v962
      %v995 = vpack.c.bf16 %v963, %v963
      %v996 = vpack.c.bf16 %v964, %v964
      %1029 = vrot.lane.b32.xlu0 %v965, 4
      %v1030 = vpop.permute.xlu0 %1029
      %1031 = vrot.lane.b32.xlu0 %v966, 4
      %v1032 = vpop.permute.xlu0 %1031
      %1033 = vrot.lane.b32.xlu0 %v967, 4
      %v1034 = vpop.permute.xlu0 %1033
      %1035 = vrot.lane.b32.xlu0 %v968, 4
      %v1036 = vpop.permute.xlu0 %1035
      %1037 = vrot.lane.b32.xlu0 %v969, 4
      %v1038 = vpop.permute.xlu0 %1037
      %1039 = vrot.lane.b32.xlu0 %v970, 4
      %v1040 = vpop.permute.xlu0 %1039
      %1041 = vrot.lane.b32.xlu0 %v971, 4
      %v1042 = vpop.permute.xlu0 %1041
      %1043 = vrot.lane.b32.xlu0 %v972, 4
      %v1044 = vpop.permute.xlu0 %1043
      %1045 = vrot.lane.b32.xlu0 %v973, 4
      %v1046 = vpop.permute.xlu0 %1045
      %1047 = vrot.lane.b32.xlu0 %v974, 4
      %v1048 = vpop.permute.xlu0 %1047
      %1049 = vrot.lane.b32.xlu0 %v975, 4
      %v1050 = vpop.permute.xlu0 %1049
      %1051 = vrot.lane.b32.xlu0 %v976, 4
      %v1052 = vpop.permute.xlu0 %1051
      %1053 = vrot.lane.b32.xlu0 %v977, 4
      %v1054 = vpop.permute.xlu0 %1053
      %1055 = vrot.lane.b32.xlu0 %v978, 4
      %v1056 = vpop.permute.xlu0 %1055
      %1057 = vrot.lane.b32.xlu0 %v979, 4
      %v1058 = vpop.permute.xlu0 %1057
      %1059 = vrot.lane.b32.xlu0 %v980, 4
      %v1060 = vpop.permute.xlu0 %1059
      %1061 = vrot.lane.b32.xlu0 %v981, 4
      %v1062 = vpop.permute.xlu0 %1061
      %1063 = vrot.lane.b32.xlu0 %v982, 4
      %v1064 = vpop.permute.xlu0 %1063
      %1065 = vrot.lane.b32.xlu0 %v983, 4
      %v1066 = vpop.permute.xlu0 %1065
      %1067 = vrot.lane.b32.xlu0 %v984, 4
      %v1068 = vpop.permute.xlu0 %1067
      %1069 = vrot.lane.b32.xlu0 %v985, 4
      %v1070 = vpop.permute.xlu0 %1069
      %1071 = vrot.lane.b32.xlu0 %v986, 4
      %v1072 = vpop.permute.xlu0 %1071
      %1073 = vrot.lane.b32.xlu0 %v987, 4
      %v1074 = vpop.permute.xlu0 %1073
      %1075 = vrot.lane.b32.xlu0 %v988, 4
      %v1076 = vpop.permute.xlu0 %1075
      %1077 = vrot.lane.b32.xlu0 %v989, 4
      %v1078 = vpop.permute.xlu0 %1077
      %1079 = vrot.lane.b32.xlu0 %v990, 4
      %v1080 = vpop.permute.xlu0 %1079
      %1081 = vrot.lane.b32.xlu0 %v991, 4
      %v1082 = vpop.permute.xlu0 %1081
      %1083 = vrot.lane.b32.xlu0 %v992, 4
      %v1084 = vpop.permute.xlu0 %1083
      %1085 = vrot.lane.b32.xlu0 %v993, 4
      %v1086 = vpop.permute.xlu0 %1085
      %1087 = vrot.lane.b32.xlu0 %v994, 4
      %v1088 = vpop.permute.xlu0 %1087
      %1089 = vrot.lane.b32.xlu0 %v995, 4
      %v1090 = vpop.permute.xlu0 %1089
      %1091 = vrot.lane.b32.xlu0 %v996, 4
      %v1092 = vpop.permute.xlu0 %1091
      %vm1125 = vcmask 60448
      %1126 = vst.msk [vmem:[#allocation4] sm:$0xf] %vm1125, %v1030
      %1127 = vst.msk [vmem:[#allocation4 + $0x4] sm:$0xf] %vm1125, %v1032
      %1128 = vst.msk [vmem:[#allocation4 + $0x8] sm:$0xf] %vm1125, %v1034
      %1129 = vst.msk [vmem:[#allocation4 + $0xc] sm:$0xf] %vm1125, %v1036
      %1130 = vst.msk [vmem:[#allocation4 + $0x10] sm:$0xf] %vm1125, %v1038
      %1131 = vst.msk [vmem:[#allocation4 + $0x14] sm:$0xf] %vm1125, %v1040
      %1132 = vst.msk [vmem:[#allocation4 + $0x18] sm:$0xf] %vm1125, %v1042
      %1133 = vst.msk [vmem:[#allocation4 + $0x1c] sm:$0xf] %vm1125, %v1044
      %1134 = vst.msk [vmem:[#allocation4 + $0x20] sm:$0xf] %vm1125, %v1046
      %1135 = vst.msk [vmem:[#allocation4 + $0x24] sm:$0xf] %vm1125, %v1048
      %1136 = vst.msk [vmem:[#allocation4 + $0x28] sm:$0xf] %vm1125, %v1050
      %1137 = vst.msk [vmem:[#allocation4 + $0x2c] sm:$0xf] %vm1125, %v1052
      %1138 = vst.msk [vmem:[#allocation4 + $0x30] sm:$0xf] %vm1125, %v1054
      %1139 = vst.msk [vmem:[#allocation4 + $0x34] sm:$0xf] %vm1125, %v1056
      %1140 = vst.msk [vmem:[#allocation4 + $0x38] sm:$0xf] %vm1125, %v1058
      %1141 = vst.msk [vmem:[#allocation4 + $0x3c] sm:$0xf] %vm1125, %v1060
      %1142 = vst.msk [vmem:[#allocation4 + $0x40] sm:$0xf] %vm1125, %v1062
      %1143 = vst.msk [vmem:[#allocation4 + $0x44] sm:$0xf] %vm1125, %v1064
      %1144 = vst.msk [vmem:[#allocation4 + $0x48] sm:$0xf] %vm1125, %v1066
      %1145 = vst.msk [vmem:[#allocation4 + $0x4c] sm:$0xf] %vm1125, %v1068
      %1146 = vst.msk [vmem:[#allocation4 + $0x50] sm:$0xf] %vm1125, %v1070
      %1147 = vst.msk [vmem:[#allocation4 + $0x54] sm:$0xf] %vm1125, %v1072
      %1148 = vst.msk [vmem:[#allocation4 + $0x58] sm:$0xf] %vm1125, %v1074
      %1149 = vst.msk [vmem:[#allocation4 + $0x5c] sm:$0xf] %vm1125, %v1076
      %1150 = vst.msk [vmem:[#allocation4 + $0x60] sm:$0xf] %vm1125, %v1078
      %1151 = vst.msk [vmem:[#allocation4 + $0x64] sm:$0xf] %vm1125, %v1080
      %1152 = vst.msk [vmem:[#allocation4 + $0x68] sm:$0xf] %vm1125, %v1082
      %1153 = vst.msk [vmem:[#allocation4 + $0x6c] sm:$0xf] %vm1125, %v1084
      %1154 = vst.msk [vmem:[#allocation4 + $0x70] sm:$0xf] %vm1125, %v1086
      %1155 = vst.msk [vmem:[#allocation4 + $0x74] sm:$0xf] %vm1125, %v1088
      %1156 = vst.msk [vmem:[#allocation4 + $0x78] sm:$0xf] %vm1125, %v1090
      %1157 = vst.msk [vmem:[#allocation4 + $0x7c] sm:$0xf] %vm1125, %v1092
      %v1158 = vld [vmem:[#allocation2 + $0x2] sm:$0xff]
      %v1159 = vld [vmem:[#allocation2 + $0xa] sm:$0xff]
      %v1160 = vld [vmem:[#allocation2 + $0x1a] sm:$0xff]
      %v1161 = vld [vmem:[#allocation2 + $0x22] sm:$0xff]
      %v1162 = vld [vmem:[#allocation2 + $0x32] sm:$0xff]
      %v1163 = vld [vmem:[#allocation2 + $0x3a] sm:$0xff]
      %v1164 = vld [vmem:[#allocation2 + $0x4a] sm:$0xff]
      %v1165 = vld [vmem:[#allocation2 + $0x52] sm:$0xff]
      %v1166 = vld [vmem:[#allocation2 + $0x62] sm:$0xff]
      %v1167 = vld [vmem:[#allocation2 + $0x6a] sm:$0xff]
      %v1168 = vld [vmem:[#allocation2 + $0x7a] sm:$0xff]
      %v1169 = vld [vmem:[#allocation2 + $0x82] sm:$0xff]
      %v1170 = vld [vmem:[#allocation2 + $0x92] sm:$0xff]
      %v1171 = vld [vmem:[#allocation2 + $0x9a] sm:$0xff]
      %v1172 = vld [vmem:[#allocation2 + $0xaa] sm:$0xff]
      %v1173 = vld [vmem:[#allocation2 + $0xb2] sm:$0xff]
      %v1174 = vld [vmem:[#allocation2 + $0xc2] sm:$0xff]
      %v1175 = vld [vmem:[#allocation2 + $0xca] sm:$0xff]
      %v1176 = vld [vmem:[#allocation2 + $0xda] sm:$0xff]
      %v1177 = vld [vmem:[#allocation2 + $0xe2] sm:$0xff]
      %v1178 = vld [vmem:[#allocation2 + $0xf2] sm:$0xff]
      %v1179 = vld [vmem:[#allocation2 + $0xfa] sm:$0xff]
      %v1180 = vld [vmem:[#allocation2 + $0x10a] sm:$0xff]
      %v1181 = vld [vmem:[#allocation2 + $0x112] sm:$0xff]
      %v1182 = vld [vmem:[#allocation2 + $0x122] sm:$0xff]
      %v1183 = vld [vmem:[#allocation2 + $0x12a] sm:$0xff]
      %v1184 = vld [vmem:[#allocation2 + $0x13a] sm:$0xff]
      %v1185 = vld [vmem:[#allocation2 + $0x142] sm:$0xff]
      %v1186 = vld [vmem:[#allocation2 + $0x152] sm:$0xff]
      %v1187 = vld [vmem:[#allocation2 + $0x15a] sm:$0xff]
      %v1188 = vld [vmem:[#allocation2 + $0x16a] sm:$0xff]
      %v1189 = vld [vmem:[#allocation2 + $0x172] sm:$0xff]
      %v1190 = vpack.c.bf16 %v1158, %v1158
      %v1191 = vpack.c.bf16 %v1159, %v1159
      %v1192 = vpack.c.bf16 %v1160, %v1160
      %v1193 = vpack.c.bf16 %v1161, %v1161
      %v1194 = vpack.c.bf16 %v1162, %v1162
      %v1195 = vpack.c.bf16 %v1163, %v1163
      %v1196 = vpack.c.bf16 %v1164, %v1164
      %v1197 = vpack.c.bf16 %v1165, %v1165
      %v1198 = vpack.c.bf16 %v1166, %v1166
      %v1199 = vpack.c.bf16 %v1167, %v1167
      %v1200 = vpack.c.bf16 %v1168, %v1168
      %v1201 = vpack.c.bf16 %v1169, %v1169
      %v1202 = vpack.c.bf16 %v1170, %v1170
      %v1203 = vpack.c.bf16 %v1171, %v1171
      %v1204 = vpack.c.bf16 %v1172, %v1172
      %v1205 = vpack.c.bf16 %v1173, %v1173
      %v1206 = vpack.c.bf16 %v1174, %v1174
      %v1207 = vpack.c.bf16 %v1175, %v1175
      %v1208 = vpack.c.bf16 %v1176, %v1176
      %v1209 = vpack.c.bf16 %v1177, %v1177
      %v1210 = vpack.c.bf16 %v1178, %v1178
      %v1211 = vpack.c.bf16 %v1179, %v1179
      %v1212 = vpack.c.bf16 %v1180, %v1180
      %v1213 = vpack.c.bf16 %v1181, %v1181
      %v1214 = vpack.c.bf16 %v1182, %v1182
      %v1215 = vpack.c.bf16 %v1183, %v1183
      %v1216 = vpack.c.bf16 %v1184, %v1184
      %v1217 = vpack.c.bf16 %v1185, %v1185
      %v1218 = vpack.c.bf16 %v1186, %v1186
      %v1219 = vpack.c.bf16 %v1187, %v1187
      %v1220 = vpack.c.bf16 %v1188, %v1188
      %v1221 = vpack.c.bf16 %v1189, %v1189
      %1254 = vrot.lane.b32.xlu0 %v1190, 8
      %v1255 = vpop.permute.xlu0 %1254
      %1256 = vrot.lane.b32.xlu0 %v1191, 8
      %v1257 = vpop.permute.xlu0 %1256
      %1258 = vrot.lane.b32.xlu0 %v1192, 8
      %v1259 = vpop.permute.xlu0 %1258
      %1260 = vrot.lane.b32.xlu0 %v1193, 8
      %v1261 = vpop.permute.xlu0 %1260
      %1262 = vrot.lane.b32.xlu0 %v1194, 8
      %v1263 = vpop.permute.xlu0 %1262
      %1264 = vrot.lane.b32.xlu0 %v1195, 8
      %v1265 = vpop.permute.xlu0 %1264
      %1266 = vrot.lane.b32.xlu0 %v1196, 8
      %v1267 = vpop.permute.xlu0 %1266
      %1268 = vrot.lane.b32.xlu0 %v1197, 8
      %v1269 = vpop.permute.xlu0 %1268
      %1270 = vrot.lane.b32.xlu0 %v1198, 8
      %v1271 = vpop.permute.xlu0 %1270
      %1272 = vrot.lane.b32.xlu0 %v1199, 8
      %v1273 = vpop.permute.xlu0 %1272
      %1274 = vrot.lane.b32.xlu0 %v1200, 8
      %v1275 = vpop.permute.xlu0 %1274
      %1276 = vrot.lane.b32.xlu0 %v1201, 8
      %v1277 = vpop.permute.xlu0 %1276
      %1278 = vrot.lane.b32.xlu0 %v1202, 8
      %v1279 = vpop.permute.xlu0 %1278
      %1280 = vrot.lane.b32.xlu0 %v1203, 8
      %v1281 = vpop.permute.xlu0 %1280
      %1282 = vrot.lane.b32.xlu0 %v1204, 8
      %v1283 = vpop.permute.xlu0 %1282
      %1284 = vrot.lane.b32.xlu0 %v1205, 8
      %v1285 = vpop.permute.xlu0 %1284
      %1286 = vrot.lane.b32.xlu0 %v1206, 8
      %v1287 = vpop.permute.xlu0 %1286
      %1288 = vrot.lane.b32.xlu0 %v1207, 8
      %v1289 = vpop.permute.xlu0 %1288
      %1290 = vrot.lane.b32.xlu0 %v1208, 8
      %v1291 = vpop.permute.xlu0 %1290
      %1292 = vrot.lane.b32.xlu0 %v1209, 8
      %v1293 = vpop.permute.xlu0 %1292
      %1294 = vrot.lane.b32.xlu0 %v1210, 8
      %v1295 = vpop.permute.xlu0 %1294
      %1296 = vrot.lane.b32.xlu0 %v1211, 8
      %v1297 = vpop.permute.xlu0 %1296
      %1298 = vrot.lane.b32.xlu0 %v1212, 8
      %v1299 = vpop.permute.xlu0 %1298
      %1300 = vrot.lane.b32.xlu0 %v1213, 8
      %v1301 = vpop.permute.xlu0 %1300
      %1302 = vrot.lane.b32.xlu0 %v1214, 8
      %v1303 = vpop.permute.xlu0 %1302
      %1304 = vrot.lane.b32.xlu0 %v1215, 8
      %v1305 = vpop.permute.xlu0 %1304
      %1306 = vrot.lane.b32.xlu0 %v1216, 8
      %v1307 = vpop.permute.xlu0 %1306
      %1308 = vrot.lane.b32.xlu0 %v1217, 8
      %v1309 = vpop.permute.xlu0 %1308
      %1310 = vrot.lane.b32.xlu0 %v1218, 8
      %v1311 = vpop.permute.xlu0 %1310
      %1312 = vrot.lane.b32.xlu0 %v1219, 8
      %v1313 = vpop.permute.xlu0 %1312
      %1314 = vrot.lane.b32.xlu0 %v1220, 8
      %v1315 = vpop.permute.xlu0 %1314
      %1316 = vrot.lane.b32.xlu0 %v1221, 8
      %v1317 = vpop.permute.xlu0 %1316
      %vm1350 = vcmask 93248
      %1351 = vst.msk [vmem:[#allocation4] sm:$0xf] %vm1350, %v1255
      %1352 = vst.msk [vmem:[#allocation4 + $0x4] sm:$0xf] %vm1350, %v1257
      %1353 = vst.msk [vmem:[#allocation4 + $0x8] sm:$0xf] %vm1350, %v1259
      %1354 = vst.msk [vmem:[#allocation4 + $0xc] sm:$0xf] %vm1350, %v1261
      %1355 = vst.msk [vmem:[#allocation4 + $0x10] sm:$0xf] %vm1350, %v1263
      %1356 = vst.msk [vmem:[#allocation4 + $0x14] sm:$0xf] %vm1350, %v1265
      %1357 = vst.msk [vmem:[#allocation4 + $0x18] sm:$0xf] %vm1350, %v1267
      %1358 = vst.msk [vmem:[#allocation4 + $0x1c] sm:$0xf] %vm1350, %v1269
      %1359 = vst.msk [vmem:[#allocation4 + $0x20] sm:$0xf] %vm1350, %v1271
      %1360 = vst.msk [vmem:[#allocation4 + $0x24] sm:$0xf] %vm1350, %v1273
      %1361 = vst.msk [vmem:[#allocation4 + $0x28] sm:$0xf] %vm1350, %v1275
      %1362 = vst.msk [vmem:[#allocation4 + $0x2c] sm:$0xf] %vm1350, %v1277
      %1363 = vst.msk [vmem:[#allocation4 + $0x30] sm:$0xf] %vm1350, %v1279
      %1364 = vst.msk [vmem:[#allocation4 + $0x34] sm:$0xf] %vm1350, %v1281
      %1365 = vst.msk [vmem:[#allocation4 + $0x38] sm:$0xf] %vm1350, %v1283
      %1366 = vst.msk [vmem:[#allocation4 + $0x3c] sm:$0xf] %vm1350, %v1285
      %1367 = vst.msk [vmem:[#allocation4 + $0x40] sm:$0xf] %vm1350, %v1287
      %1368 = vst.msk [vmem:[#allocation4 + $0x44] sm:$0xf] %vm1350, %v1289
      %1369 = vst.msk [vmem:[#allocation4 + $0x48] sm:$0xf] %vm1350, %v1291
      %1370 = vst.msk [vmem:[#allocation4 + $0x4c] sm:$0xf] %vm1350, %v1293
      %1371 = vst.msk [vmem:[#allocation4 + $0x50] sm:$0xf] %vm1350, %v1295
      %1372 = vst.msk [vmem:[#allocation4 + $0x54] sm:$0xf] %vm1350, %v1297
      %1373 = vst.msk [vmem:[#allocation4 + $0x58] sm:$0xf] %vm1350, %v1299
      %1374 = vst.msk [vmem:[#allocation4 + $0x5c] sm:$0xf] %vm1350, %v1301
      %1375 = vst.msk [vmem:[#allocation4 + $0x60] sm:$0xf] %vm1350, %v1303
      %1376 = vst.msk [vmem:[#allocation4 + $0x64] sm:$0xf] %vm1350, %v1305
      %1377 = vst.msk [vmem:[#allocation4 + $0x68] sm:$0xf] %vm1350, %v1307
      %1378 = vst.msk [vmem:[#allocation4 + $0x6c] sm:$0xf] %vm1350, %v1309
      %1379 = vst.msk [vmem:[#allocation4 + $0x70] sm:$0xf] %vm1350, %v1311
      %1380 = vst.msk [vmem:[#allocation4 + $0x74] sm:$0xf] %vm1350, %v1313
      %1381 = vst.msk [vmem:[#allocation4 + $0x78] sm:$0xf] %vm1350, %v1315
      %1382 = vst.msk [vmem:[#allocation4 + $0x7c] sm:$0xf] %vm1350, %v1317
      %v1383 = vld [vmem:[%s507] sm:$0xff]
      %v1384 = vld [vmem:[%s507 + $0x8] sm:$0xff]
      %v1385 = vld [vmem:[%s507 + $0x18] sm:$0xff]
      %v1386 = vld [vmem:[%s507 + $0x20] sm:$0xff]
      %v1387 = vld [vmem:[%s507 + $0x30] sm:$0xff]
      %v1388 = vld [vmem:[%s507 + $0x38] sm:$0xff]
      %v1389 = vld [vmem:[%s507 + $0x48] sm:$0xff]
      %v1390 = vld [vmem:[%s507 + $0x50] sm:$0xff]
      %v1391 = vld [vmem:[%s507 + $0x60] sm:$0xff]
      %v1392 = vld [vmem:[%s507 + $0x68] sm:$0xff]
      %v1393 = vld [vmem:[%s507 + $0x78] sm:$0xff]
      %v1394 = vld [vmem:[%s507 + $0x80] sm:$0xff]
      %v1395 = vld [vmem:[%s507 + $0x90] sm:$0xff]
      %v1396 = vld [vmem:[%s507 + $0x98] sm:$0xff]
      %v1397 = vld [vmem:[%s507 + $0xa8] sm:$0xff]
      %v1398 = vld [vmem:[%s507 + $0xb0] sm:$0xff]
      %v1399 = vld [vmem:[%s507 + $0xc0] sm:$0xff]
      %v1400 = vld [vmem:[%s507 + $0xc8] sm:$0xff]
      %v1401 = vld [vmem:[%s507 + $0xd8] sm:$0xff]
      %v1402 = vld [vmem:[%s507 + $0xe0] sm:$0xff]
      %v1403 = vld [vmem:[%s507 + $0xf0] sm:$0xff]
      %v1404 = vld [vmem:[%s507 + $0xf8] sm:$0xff]
      %v1405 = vld [vmem:[%s507 + $0x108] sm:$0xff]
      %v1406 = vld [vmem:[%s507 + $0x110] sm:$0xff]
      %v1407 = vld [vmem:[%s507 + $0x120] sm:$0xff]
      %v1408 = vld [vmem:[%s507 + $0x128] sm:$0xff]
      %v1409 = vld [vmem:[%s507 + $0x138] sm:$0xff]
      %v1410 = vld [vmem:[%s507 + $0x140] sm:$0xff]
      %v1411 = vld [vmem:[%s507 + $0x150] sm:$0xff]
      %v1412 = vld [vmem:[%s507 + $0x158] sm:$0xff]
      %v1413 = vld [vmem:[%s507 + $0x168] sm:$0xff]
      %v1414 = vld [vmem:[%s507 + $0x170] sm:$0xff]
      %v1415 = vpack.c.bf16 %v1383, %v1383
      %v1416 = vpack.c.bf16 %v1384, %v1384
      %v1417 = vpack.c.bf16 %v1385, %v1385
      %v1418 = vpack.c.bf16 %v1386, %v1386
      %v1419 = vpack.c.bf16 %v1387, %v1387
      %v1420 = vpack.c.bf16 %v1388, %v1388
      %v1421 = vpack.c.bf16 %v1389, %v1389
      %v1422 = vpack.c.bf16 %v1390, %v1390
      %v1423 = vpack.c.bf16 %v1391, %v1391
      %v1424 = vpack.c.bf16 %v1392, %v1392
      %v1425 = vpack.c.bf16 %v1393, %v1393
      %v1426 = vpack.c.bf16 %v1394, %v1394
      %v1427 = vpack.c.bf16 %v1395, %v1395
      %v1428 = vpack.c.bf16 %v1396, %v1396
      %v1429 = vpack.c.bf16 %v1397, %v1397
      %v1430 = vpack.c.bf16 %v1398, %v1398
      %v1431 = vpack.c.bf16 %v1399, %v1399
      %v1432 = vpack.c.bf16 %v1400, %v1400
      %v1433 = vpack.c.bf16 %v1401, %v1401
      %v1434 = vpack.c.bf16 %v1402, %v1402
      %v1435 = vpack.c.bf16 %v1403, %v1403
      %v1436 = vpack.c.bf16 %v1404, %v1404
      %v1437 = vpack.c.bf16 %v1405, %v1405
      %v1438 = vpack.c.bf16 %v1406, %v1406
      %v1439 = vpack.c.bf16 %v1407, %v1407
      %v1440 = vpack.c.bf16 %v1408, %v1408
      %v1441 = vpack.c.bf16 %v1409, %v1409
      %v1442 = vpack.c.bf16 %v1410, %v1410
      %v1443 = vpack.c.bf16 %v1411, %v1411
      %v1444 = vpack.c.bf16 %v1412, %v1412
      %v1445 = vpack.c.bf16 %v1413, %v1413
      %v1446 = vpack.c.bf16 %v1414, %v1414
      %1479 = vrot.lane.b32.xlu0 %v1415, 12
      %v1480 = vpop.permute.xlu0 %1479
      %1481 = vrot.lane.b32.xlu0 %v1416, 12
      %v1482 = vpop.permute.xlu0 %1481
      %1483 = vrot.lane.b32.xlu0 %v1417, 12
      %v1484 = vpop.permute.xlu0 %1483
      %1485 = vrot.lane.b32.xlu0 %v1418, 12
      %v1486 = vpop.permute.xlu0 %1485
      %1487 = vrot.lane.b32.xlu0 %v1419, 12
      %v1488 = vpop.permute.xlu0 %1487
      %1489 = vrot.lane.b32.xlu0 %v1420, 12
      %v1490 = vpop.permute.xlu0 %1489
      %1491 = vrot.lane.b32.xlu0 %v1421, 12
      %v1492 = vpop.permute.xlu0 %1491
      %1493 = vrot.lane.b32.xlu0 %v1422, 12
      %v1494 = vpop.permute.xlu0 %1493
      %1495 = vrot.lane.b32.xlu0 %v1423, 12
      %v1496 = vpop.permute.xlu0 %1495
      %1497 = vrot.lane.b32.xlu0 %v1424, 12
      %v1498 = vpop.permute.xlu0 %1497
      %1499 = vrot.lane.b32.xlu0 %v1425, 12
      %v1500 = vpop.permute.xlu0 %1499
      %1501 = vrot.lane.b32.xlu0 %v1426, 12
      %v1502 = vpop.permute.xlu0 %1501
      %1503 = vrot.lane.b32.xlu0 %v1427, 12
      %v1504 = vpop.permute.xlu0 %1503
      %1505 = vrot.lane.b32.xlu0 %v1428, 12
      %v1506 = vpop.permute.xlu0 %1505
      %1507 = vrot.lane.b32.xlu0 %v1429, 12
      %v1508 = vpop.permute.xlu0 %1507
      %1509 = vrot.lane.b32.xlu0 %v1430, 12
      %v1510 = vpop.permute.xlu0 %1509
      %1511 = vrot.lane.b32.xlu0 %v1431, 12
      %v1512 = vpop.permute.xlu0 %1511
      %1513 = vrot.lane.b32.xlu0 %v1432, 12
      %v1514 = vpop.permute.xlu0 %1513
      %1515 = vrot.lane.b32.xlu0 %v1433, 12
      %v1516 = vpop.permute.xlu0 %1515
      %1517 = vrot.lane.b32.xlu0 %v1434, 12
      %v1518 = vpop.permute.xlu0 %1517
      %1519 = vrot.lane.b32.xlu0 %v1435, 12
      %v1520 = vpop.permute.xlu0 %1519
      %1521 = vrot.lane.b32.xlu0 %v1436, 12
      %v1522 = vpop.permute.xlu0 %1521
      %1523 = vrot.lane.b32.xlu0 %v1437, 12
      %v1524 = vpop.permute.xlu0 %1523
      %1525 = vrot.lane.b32.xlu0 %v1438, 12
      %v1526 = vpop.permute.xlu0 %1525
      %1527 = vrot.lane.b32.xlu0 %v1439, 12
      %v1528 = vpop.permute.xlu0 %1527
      %1529 = vrot.lane.b32.xlu0 %v1440, 12
      %v1530 = vpop.permute.xlu0 %1529
      %1531 = vrot.lane.b32.xlu0 %v1441, 12
      %v1532 = vpop.permute.xlu0 %1531
      %1533 = vrot.lane.b32.xlu0 %v1442, 12
      %v1534 = vpop.permute.xlu0 %1533
      %1535 = vrot.lane.b32.xlu0 %v1443, 12
      %v1536 = vpop.permute.xlu0 %1535
      %1537 = vrot.lane.b32.xlu0 %v1444, 12
      %v1538 = vpop.permute.xlu0 %1537
      %1539 = vrot.lane.b32.xlu0 %v1445, 12
      %v1540 = vpop.permute.xlu0 %1539
      %1541 = vrot.lane.b32.xlu0 %v1446, 12
      %v1542 = vpop.permute.xlu0 %1541
      %vm1575 = vcmask 126048
      %1576 = vst.msk [vmem:[#allocation4] sm:$0xf] %vm1575, %v1480
      %1577 = vst.msk [vmem:[#allocation4 + $0x4] sm:$0xf] %vm1575, %v1482
      %1578 = vst.msk [vmem:[#allocation4 + $0x8] sm:$0xf] %vm1575, %v1484
      %1579 = vst.msk [vmem:[#allocation4 + $0xc] sm:$0xf] %vm1575, %v1486
      %1580 = vst.msk [vmem:[#allocation4 + $0x10] sm:$0xf] %vm1575, %v1488
      %1581 = vst.msk [vmem:[#allocation4 + $0x14] sm:$0xf] %vm1575, %v1490
      %1582 = vst.msk [vmem:[#allocation4 + $0x18] sm:$0xf] %vm1575, %v1492
      %1583 = vst.msk [vmem:[#allocation4 + $0x1c] sm:$0xf] %vm1575, %v1494
      %1584 = vst.msk [vmem:[#allocation4 + $0x20] sm:$0xf] %vm1575, %v1496
      %1585 = vst.msk [vmem:[#allocation4 + $0x24] sm:$0xf] %vm1575, %v1498
      %1586 = vst.msk [vmem:[#allocation4 + $0x28] sm:$0xf] %vm1575, %v1500
      %1587 = vst.msk [vmem:[#allocation4 + $0x2c] sm:$0xf] %vm1575, %v1502
      %1588 = vst.msk [vmem:[#allocation4 + $0x30] sm:$0xf] %vm1575, %v1504
      %1589 = vst.msk [vmem:[#allocation4 + $0x34] sm:$0xf] %vm1575, %v1506
      %1590 = vst.msk [vmem:[#allocation4 + $0x38] sm:$0xf] %vm1575, %v1508
      %1591 = vst.msk [vmem:[#allocation4 + $0x3c] sm:$0xf] %vm1575, %v1510
      %1592 = vst.msk [vmem:[#allocation4 + $0x40] sm:$0xf] %vm1575, %v1512
      %1593 = vst.msk [vmem:[#allocation4 + $0x44] sm:$0xf] %vm1575, %v1514
      %1594 = vst.msk [vmem:[#allocation4 + $0x48] sm:$0xf] %vm1575, %v1516
      %1595 = vst.msk [vmem:[#allocation4 + $0x4c] sm:$0xf] %vm1575, %v1518
      %1596 = vst.msk [vmem:[#allocation4 + $0x50] sm:$0xf] %vm1575, %v1520
      %1597 = vst.msk [vmem:[#allocation4 + $0x54] sm:$0xf] %vm1575, %v1522
      %1598 = vst.msk [vmem:[#allocation4 + $0x58] sm:$0xf] %vm1575, %v1524
      %1599 = vst.msk [vmem:[#allocation4 + $0x5c] sm:$0xf] %vm1575, %v1526
      %1600 = vst.msk [vmem:[#allocation4 + $0x60] sm:$0xf] %vm1575, %v1528
      %1601 = vst.msk [vmem:[#allocation4 + $0x64] sm:$0xf] %vm1575, %v1530
      %1602 = vst.msk [vmem:[#allocation4 + $0x68] sm:$0xf] %vm1575, %v1532
      %1603 = vst.msk [vmem:[#allocation4 + $0x6c] sm:$0xf] %vm1575, %v1534
      %1604 = vst.msk [vmem:[#allocation4 + $0x70] sm:$0xf] %vm1575, %v1536
      %1605 = vst.msk [vmem:[#allocation4 + $0x74] sm:$0xf] %vm1575, %v1538
      %1606 = vst.msk [vmem:[#allocation4 + $0x78] sm:$0xf] %vm1575, %v1540
      %1607 = vst.msk [vmem:[#allocation4 + $0x7c] sm:$0xf] %vm1575, %v1542
      %v1608 = vld [vmem:[%s507 + $0x1] sm:$0xff]
      %v1609 = vld [vmem:[%s507 + $0x9] sm:$0xff]
      %v1610 = vld [vmem:[%s507 + $0x19] sm:$0xff]
      %v1611 = vld [vmem:[%s507 + $0x21] sm:$0xff]
      %v1612 = vld [vmem:[%s507 + $0x31] sm:$0xff]
      %v1613 = vld [vmem:[%s507 + $0x39] sm:$0xff]
      %v1614 = vld [vmem:[%s507 + $0x49] sm:$0xff]
      %v1615 = vld [vmem:[%s507 + $0x51] sm:$0xff]
      %v1616 = vld [vmem:[%s507 + $0x61] sm:$0xff]
      %v1617 = vld [vmem:[%s507 + $0x69] sm:$0xff]
      %v1618 = vld [vmem:[%s507 + $0x79] sm:$0xff]
      %v1619 = vld [vmem:[%s507 + $0x81] sm:$0xff]
      %v1620 = vld [vmem:[%s507 + $0x91] sm:$0xff]
      %v1621 = vld [vmem:[%s507 + $0x99] sm:$0xff]
      %v1622 = vld [vmem:[%s507 + $0xa9] sm:$0xff]
      %v1623 = vld [vmem:[%s507 + $0xb1] sm:$0xff]
      %v1624 = vld [vmem:[%s507 + $0xc1] sm:$0xff]
      %v1625 = vld [vmem:[%s507 + $0xc9] sm:$0xff]
      %v1626 = vld [vmem:[%s507 + $0xd9] sm:$0xff]
      %v1627 = vld [vmem:[%s507 + $0xe1] sm:$0xff]
      %v1628 = vld [vmem:[%s507 + $0xf1] sm:$0xff]
      %v1629 = vld [vmem:[%s507 + $0xf9] sm:$0xff]
      %v1630 = vld [vmem:[%s507 + $0x109] sm:$0xff]
      %v1631 = vld [vmem:[%s507 + $0x111] sm:$0xff]
      %v1632 = vld [vmem:[%s507 + $0x121] sm:$0xff]
      %v1633 = vld [vmem:[%s507 + $0x129] sm:$0xff]
      %v1634 = vld [vmem:[%s507 + $0x139] sm:$0xff]
      %v1635 = vld [vmem:[%s507 + $0x141] sm:$0xff]
      %v1636 = vld [vmem:[%s507 + $0x151] sm:$0xff]
      %v1637 = vld [vmem:[%s507 + $0x159] sm:$0xff]
      %v1638 = vld [vmem:[%s507 + $0x169] sm:$0xff]
      %v1639 = vld [vmem:[%s507 + $0x171] sm:$0xff]
      %v1640 = vpack.c.bf16 %v1608, %v1608
      %v1641 = vpack.c.bf16 %v1609, %v1609
      %v1642 = vpack.c.bf16 %v1610, %v1610
      %v1643 = vpack.c.bf16 %v1611, %v1611
      %v1644 = vpack.c.bf16 %v1612, %v1612
      %v1645 = vpack.c.bf16 %v1613, %v1613
      %v1646 = vpack.c.bf16 %v1614, %v1614
      %v1647 = vpack.c.bf16 %v1615, %v1615
      %v1648 = vpack.c.bf16 %v1616, %v1616
      %v1649 = vpack.c.bf16 %v1617, %v1617
      %v1650 = vpack.c.bf16 %v1618, %v1618
      %v1651 = vpack.c.bf16 %v1619, %v1619
      %v1652 = vpack.c.bf16 %v1620, %v1620
      %v1653 = vpack.c.bf16 %v1621, %v1621
      %v1654 = vpack.c.bf16 %v1622, %v1622
      %v1655 = vpack.c.bf16 %v1623, %v1623
      %v1656 = vpack.c.bf16 %v1624, %v1624
      %v1657 = vpack.c.bf16 %v1625, %v1625
      %v1658 = vpack.c.bf16 %v1626, %v1626
      %v1659 = vpack.c.bf16 %v1627, %v1627
      %v1660 = vpack.c.bf16 %v1628, %v1628
      %v1661 = vpack.c.bf16 %v1629, %v1629
      %v1662 = vpack.c.bf16 %v1630, %v1630
      %v1663 = vpack.c.bf16 %v1631, %v1631
      %v1664 = vpack.c.bf16 %v1632, %v1632
      %v1665 = vpack.c.bf16 %v1633, %v1633
      %v1666 = vpack.c.bf16 %v1634, %v1634
      %v1667 = vpack.c.bf16 %v1635, %v1635
      %v1668 = vpack.c.bf16 %v1636, %v1636
      %v1669 = vpack.c.bf16 %v1637, %v1637
      %v1670 = vpack.c.bf16 %v1638, %v1638
      %v1671 = vpack.c.bf16 %v1639, %v1639
      %1704 = vrot.lane.b32.xlu0 %v1640, 16
      %v1705 = vpop.permute.xlu0 %1704
      %1706 = vrot.lane.b32.xlu0 %v1641, 16
      %v1707 = vpop.permute.xlu0 %1706
      %1708 = vrot.lane.b32.xlu0 %v1642, 16
      %v1709 = vpop.permute.xlu0 %1708
      %1710 = vrot.lane.b32.xlu0 %v1643, 16
      %v1711 = vpop.permute.xlu0 %1710
      %1712 = vrot.lane.b32.xlu0 %v1644, 16
      %v1713 = vpop.permute.xlu0 %1712
      %1714 = vrot.lane.b32.xlu0 %v1645, 16
      %v1715 = vpop.permute.xlu0 %1714
      %1716 = vrot.lane.b32.xlu0 %v1646, 16
      %v1717 = vpop.permute.xlu0 %1716
      %1718 = vrot.lane.b32.xlu0 %v1647, 16
      %v1719 = vpop.permute.xlu0 %1718
      %1720 = vrot.lane.b32.xlu0 %v1648, 16
      %v1721 = vpop.permute.xlu0 %1720
      %1722 = vrot.lane.b32.xlu0 %v1649, 16
      %v1723 = vpop.permute.xlu0 %1722
      %1724 = vrot.lane.b32.xlu0 %v1650, 16
      %v1725 = vpop.permute.xlu0 %1724
      %1726 = vrot.lane.b32.xlu0 %v1651, 16
      %v1727 = vpop.permute.xlu0 %1726
      %1728 = vrot.lane.b32.xlu0 %v1652, 16
      %v1729 = vpop.permute.xlu0 %1728
      %1730 = vrot.lane.b32.xlu0 %v1653, 16
      %v1731 = vpop.permute.xlu0 %1730
      %1732 = vrot.lane.b32.xlu0 %v1654, 16
      %v1733 = vpop.permute.xlu0 %1732
      %1734 = vrot.lane.b32.xlu0 %v1655, 16
      %v1735 = vpop.permute.xlu0 %1734
      %1736 = vrot.lane.b32.xlu0 %v1656, 16
      %v1737 = vpop.permute.xlu0 %1736
      %1738 = vrot.lane.b32.xlu0 %v1657, 16
      %v1739 = vpop.permute.xlu0 %1738
      %1740 = vrot.lane.b32.xlu0 %v1658, 16
      %v1741 = vpop.permute.xlu0 %1740
      %1742 = vrot.lane.b32.xlu0 %v1659, 16
      %v1743 = vpop.permute.xlu0 %1742
      %1744 = vrot.lane.b32.xlu0 %v1660, 16
      %v1745 = vpop.permute.xlu0 %1744
      %1746 = vrot.lane.b32.xlu0 %v1661, 16
      %v1747 = vpop.permute.xlu0 %1746
      %1748 = vrot.lane.b32.xlu0 %v1662, 16
      %v1749 = vpop.permute.xlu0 %1748
      %1750 = vrot.lane.b32.xlu0 %v1663, 16
      %v1751 = vpop.permute.xlu0 %1750
      %1752 = vrot.lane.b32.xlu0 %v1664, 16
      %v1753 = vpop.permute.xlu0 %1752
      %1754 = vrot.lane.b32.xlu0 %v1665, 16
      %v1755 = vpop.permute.xlu0 %1754
      %1756 = vrot.lane.b32.xlu0 %v1666, 16
      %v1757 = vpop.permute.xlu0 %1756
      %1758 = vrot.lane.b32.xlu0 %v1667, 16
      %v1759 = vpop.permute.xlu0 %1758
      %1760 = vrot.lane.b32.xlu0 %v1668, 16
      %v1761 = vpop.permute.xlu0 %1760
      %1762 = vrot.lane.b32.xlu0 %v1669, 16
      %v1763 = vpop.permute.xlu0 %1762
      %1764 = vrot.lane.b32.xlu0 %v1670, 16
      %v1765 = vpop.permute.xlu0 %1764
      %1766 = vrot.lane.b32.xlu0 %v1671, 16
      %v1767 = vpop.permute.xlu0 %1766
      %vm1800 = vcmask 158848
      %1801 = vst.msk [vmem:[#allocation4] sm:$0xf] %vm1800, %v1705
      %1802 = vst.msk [vmem:[#allocation4 + $0x4] sm:$0xf] %vm1800, %v1707
      %1803 = vst.msk [vmem:[#allocation4 + $0x8] sm:$0xf] %vm1800, %v1709
      %1804 = vst.msk [vmem:[#allocation4 + $0xc] sm:$0xf] %vm1800, %v1711
      %1805 = vst.msk [vmem:[#allocation4 + $0x10] sm:$0xf] %vm1800, %v1713
      %1806 = vst.msk [vmem:[#allocation4 + $0x14] sm:$0xf] %vm1800, %v1715
      %1807 = vst.msk [vmem:[#allocation4 + $0x18] sm:$0xf] %vm1800, %v1717
      %1808 = vst.msk [vmem:[#allocation4 + $0x1c] sm:$0xf] %vm1800, %v1719
      %1809 = vst.msk [vmem:[#allocation4 + $0x20] sm:$0xf] %vm1800, %v1721
      %1810 = vst.msk [vmem:[#allocation4 + $0x24] sm:$0xf] %vm1800, %v1723
      %1811 = vst.msk [vmem:[#allocation4 + $0x28] sm:$0xf] %vm1800, %v1725
      %1812 = vst.msk [vmem:[#allocation4 + $0x2c] sm:$0xf] %vm1800, %v1727
      %1813 = vst.msk [vmem:[#allocation4 + $0x30] sm:$0xf] %vm1800, %v1729
      %1814 = vst.msk [vmem:[#allocation4 + $0x34] sm:$0xf] %vm1800, %v1731
      %1815 = vst.msk [vmem:[#allocation4 + $0x38] sm:$0xf] %vm1800, %v1733
      %1816 = vst.msk [vmem:[#allocation4 + $0x3c] sm:$0xf] %vm1800, %v1735
      %1817 = vst.msk [vmem:[#allocation4 + $0x40] sm:$0xf] %vm1800, %v1737
      %1818 = vst.msk [vmem:[#allocation4 + $0x44] sm:$0xf] %vm1800, %v1739
      %1819 = vst.msk [vmem:[#allocation4 + $0x48] sm:$0xf] %vm1800, %v1741
      %1820 = vst.msk [vmem:[#allocation4 + $0x4c] sm:$0xf] %vm1800, %v1743
      %1821 = vst.msk [vmem:[#allocation4 + $0x50] sm:$0xf] %vm1800, %v1745
      %1822 = vst.msk [vmem:[#allocation4 + $0x54] sm:$0xf] %vm1800, %v1747
      %1823 = vst.msk [vmem:[#allocation4 + $0x58] sm:$0xf] %vm1800, %v1749
      %1824 = vst.msk [vmem:[#allocation4 + $0x5c] sm:$0xf] %vm1800, %v1751
      %1825 = vst.msk [vmem:[#allocation4 + $0x60] sm:$0xf] %vm1800, %v1753
      %1826 = vst.msk [vmem:[#allocation4 + $0x64] sm:$0xf] %vm1800, %v1755
      %1827 = vst.msk [vmem:[#allocation4 + $0x68] sm:$0xf] %vm1800, %v1757
      %1828 = vst.msk [vmem:[#allocation4 + $0x6c] sm:$0xf] %vm1800, %v1759
      %1829 = vst.msk [vmem:[#allocation4 + $0x70] sm:$0xf] %vm1800, %v1761
      %1830 = vst.msk [vmem:[#allocation4 + $0x74] sm:$0xf] %vm1800, %v1763
      %1831 = vst.msk [vmem:[#allocation4 + $0x78] sm:$0xf] %vm1800, %v1765
      %1832 = vst.msk [vmem:[#allocation4 + $0x7c] sm:$0xf] %vm1800, %v1767
      %v1833 = vld [vmem:[%s507 + $0x2] sm:$0xff]
      %v1834 = vld [vmem:[%s507 + $0xa] sm:$0xff]
      %v1835 = vld [vmem:[%s507 + $0x1a] sm:$0xff]
      %v1836 = vld [vmem:[%s507 + $0x22] sm:$0xff]
      %v1837 = vld [vmem:[%s507 + $0x32] sm:$0xff]
      %v1838 = vld [vmem:[%s507 + $0x3a] sm:$0xff]
      %v1839 = vld [vmem:[%s507 + $0x4a] sm:$0xff]
      %v1840 = vld [vmem:[%s507 + $0x52] sm:$0xff]
      %v1841 = vld [vmem:[%s507 + $0x62] sm:$0xff]
      %v1842 = vld [vmem:[%s507 + $0x6a] sm:$0xff]
      %v1843 = vld [vmem:[%s507 + $0x7a] sm:$0xff]
      %v1844 = vld [vmem:[%s507 + $0x82] sm:$0xff]
      %v1845 = vld [vmem:[%s507 + $0x92] sm:$0xff]
      %v1846 = vld [vmem:[%s507 + $0x9a] sm:$0xff]
      %v1847 = vld [vmem:[%s507 + $0xaa] sm:$0xff]
      %v1848 = vld [vmem:[%s507 + $0xb2] sm:$0xff]
      %v1849 = vld [vmem:[%s507 + $0xc2] sm:$0xff]
      %v1850 = vld [vmem:[%s507 + $0xca] sm:$0xff]
      %v1851 = vld [vmem:[%s507 + $0xda] sm:$0xff]
      %v1852 = vld [vmem:[%s507 + $0xe2] sm:$0xff]
      %v1853 = vld [vmem:[%s507 + $0xf2] sm:$0xff]
      %v1854 = vld [vmem:[%s507 + $0xfa] sm:$0xff]
      %v1855 = vld [vmem:[%s507 + $0x10a] sm:$0xff]
      %v1856 = vld [vmem:[%s507 + $0x112] sm:$0xff]
      %v1857 = vld [vmem:[%s507 + $0x122] sm:$0xff]
      %v1858 = vld [vmem:[%s507 + $0x12a] sm:$0xff]
      %v1859 = vld [vmem:[%s507 + $0x13a] sm:$0xff]
      %v1860 = vld [vmem:[%s507 + $0x142] sm:$0xff]
      %v1861 = vld [vmem:[%s507 + $0x152] sm:$0xff]
      %v1862 = vld [vmem:[%s507 + $0x15a] sm:$0xff]
      %v1863 = vld [vmem:[%s507 + $0x16a] sm:$0xff]
      %v1864 = vld [vmem:[%s507 + $0x172] sm:$0xff]
      %v1865 = vpack.c.bf16 %v1833, %v1833
      %v1866 = vpack.c.bf16 %v1834, %v1834
      %v1867 = vpack.c.bf16 %v1835, %v1835
      %v1868 = vpack.c.bf16 %v1836, %v1836
      %v1869 = vpack.c.bf16 %v1837, %v1837
      %v1870 = vpack.c.bf16 %v1838, %v1838
      %v1871 = vpack.c.bf16 %v1839, %v1839
      %v1872 = vpack.c.bf16 %v1840, %v1840
      %v1873 = vpack.c.bf16 %v1841, %v1841
      %v1874 = vpack.c.bf16 %v1842, %v1842
      %v1875 = vpack.c.bf16 %v1843, %v1843
      %v1876 = vpack.c.bf16 %v1844, %v1844
      %v1877 = vpack.c.bf16 %v1845, %v1845
      %v1878 = vpack.c.bf16 %v1846, %v1846
      %v1879 = vpack.c.bf16 %v1847, %v1847
      %v1880 = vpack.c.bf16 %v1848, %v1848
      %v1881 = vpack.c.bf16 %v1849, %v1849
      %v1882 = vpack.c.bf16 %v1850, %v1850
      %v1883 = vpack.c.bf16 %v1851, %v1851
      %v1884 = vpack.c.bf16 %v1852, %v1852
      %v1885 = vpack.c.bf16 %v1853, %v1853
      %v1886 = vpack.c.bf16 %v1854, %v1854
      %v1887 = vpack.c.bf16 %v1855, %v1855
      %v1888 = vpack.c.bf16 %v1856, %v1856
      %v1889 = vpack.c.bf16 %v1857, %v1857
      %v1890 = vpack.c.bf16 %v1858, %v1858
      %v1891 = vpack.c.bf16 %v1859, %v1859
      %v1892 = vpack.c.bf16 %v1860, %v1860
      %v1893 = vpack.c.bf16 %v1861, %v1861
      %v1894 = vpack.c.bf16 %v1862, %v1862
      %v1895 = vpack.c.bf16 %v1863, %v1863
      %v1896 = vpack.c.bf16 %v1864, %v1864
      %1929 = vrot.lane.b32.xlu0 %v1865, 20
      %v1930 = vpop.permute.xlu0 %1929
      %1931 = vrot.lane.b32.xlu0 %v1866, 20
      %v1932 = vpop.permute.xlu0 %1931
      %1933 = vrot.lane.b32.xlu0 %v1867, 20
      %v1934 = vpop.permute.xlu0 %1933
      %1935 = vrot.lane.b32.xlu0 %v1868, 20
      %v1936 = vpop.permute.xlu0 %1935
      %1937 = vrot.lane.b32.xlu0 %v1869, 20
      %v1938 = vpop.permute.xlu0 %1937
      %1939 = vrot.lane.b32.xlu0 %v1870, 20
      %v1940 = vpop.permute.xlu0 %1939
      %1941 = vrot.lane.b32.xlu0 %v1871, 20
      %v1942 = vpop.permute.xlu0 %1941
      %1943 = vrot.lane.b32.xlu0 %v1872, 20
      %v1944 = vpop.permute.xlu0 %1943
      %1945 = vrot.lane.b32.xlu0 %v1873, 20
      %v1946 = vpop.permute.xlu0 %1945
      %1947 = vrot.lane.b32.xlu0 %v1874, 20
      %v1948 = vpop.permute.xlu0 %1947
      %1949 = vrot.lane.b32.xlu0 %v1875, 20
      %v1950 = vpop.permute.xlu0 %1949
      %1951 = vrot.lane.b32.xlu0 %v1876, 20
      %v1952 = vpop.permute.xlu0 %1951
      %1953 = vrot.lane.b32.xlu0 %v1877, 20
      %v1954 = vpop.permute.xlu0 %1953
      %1955 = vrot.lane.b32.xlu0 %v1878, 20
      %v1956 = vpop.permute.xlu0 %1955
      %1957 = vrot.lane.b32.xlu0 %v1879, 20
      %v1958 = vpop.permute.xlu0 %1957
      %1959 = vrot.lane.b32.xlu0 %v1880, 20
      %v1960 = vpop.permute.xlu0 %1959
      %1961 = vrot.lane.b32.xlu0 %v1881, 20
      %v1962 = vpop.permute.xlu0 %1961
      %1963 = vrot.lane.b32.xlu0 %v1882, 20
      %v1964 = vpop.permute.xlu0 %1963
      %1965 = vrot.lane.b32.xlu0 %v1883, 20
      %v1966 = vpop.permute.xlu0 %1965
      %1967 = vrot.lane.b32.xlu0 %v1884, 20
      %v1968 = vpop.permute.xlu0 %1967
      %1969 = vrot.lane.b32.xlu0 %v1885, 20
      %v1970 = vpop.permute.xlu0 %1969
      %1971 = vrot.lane.b32.xlu0 %v1886, 20
      %v1972 = vpop.permute.xlu0 %1971
      %1973 = vrot.lane.b32.xlu0 %v1887, 20
      %v1974 = vpop.permute.xlu0 %1973
      %1975 = vrot.lane.b32.xlu0 %v1888, 20
      %v1976 = vpop.permute.xlu0 %1975
      %1977 = vrot.lane.b32.xlu0 %v1889, 20
      %v1978 = vpop.permute.xlu0 %1977
      %1979 = vrot.lane.b32.xlu0 %v1890, 20
      %v1980 = vpop.permute.xlu0 %1979
      %1981 = vrot.lane.b32.xlu0 %v1891, 20
      %v1982 = vpop.permute.xlu0 %1981
      %1983 = vrot.lane.b32.xlu0 %v1892, 20
      %v1984 = vpop.permute.xlu0 %1983
      %1985 = vrot.lane.b32.xlu0 %v1893, 20
      %v1986 = vpop.permute.xlu0 %1985
      %1987 = vrot.lane.b32.xlu0 %v1894, 20
      %v1988 = vpop.permute.xlu0 %1987
      %1989 = vrot.lane.b32.xlu0 %v1895, 20
      %v1990 = vpop.permute.xlu0 %1989
      %1991 = vrot.lane.b32.xlu0 %v1896, 20
      %v1992 = vpop.permute.xlu0 %1991
      %vm2025 = vcmask 191648
      %2026 = vst.msk [vmem:[#allocation4] sm:$0xf] %vm2025, %v1930
      %2027 = vst.msk [vmem:[#allocation4 + $0x4] sm:$0xf] %vm2025, %v1932
      %2028 = vst.msk [vmem:[#allocation4 + $0x8] sm:$0xf] %vm2025, %v1934
      %2029 = vst.msk [vmem:[#allocation4 + $0xc] sm:$0xf] %vm2025, %v1936
      %2030 = vst.msk [vmem:[#allocation4 + $0x10] sm:$0xf] %vm2025, %v1938
      %2031 = vst.msk [vmem:[#allocation4 + $0x14] sm:$0xf] %vm2025, %v1940
      %2032 = vst.msk [vmem:[#allocation4 + $0x18] sm:$0xf] %vm2025, %v1942
      %2033 = vst.msk [vmem:[#allocation4 + $0x1c] sm:$0xf] %vm2025, %v1944
      %2034 = vst.msk [vmem:[#allocation4 + $0x20] sm:$0xf] %vm2025, %v1946
      %2035 = vst.msk [vmem:[#allocation4 + $0x24] sm:$0xf] %vm2025, %v1948
      %2036 = vst.msk [vmem:[#allocation4 + $0x28] sm:$0xf] %vm2025, %v1950
      %2037 = vst.msk [vmem:[#allocation4 + $0x2c] sm:$0xf] %vm2025, %v1952
      %2038 = vst.msk [vmem:[#allocation4 + $0x30] sm:$0xf] %vm2025, %v1954
      %2039 = vst.msk [vmem:[#allocation4 + $0x34] sm:$0xf] %vm2025, %v1956
      %2040 = vst.msk [vmem:[#allocation4 + $0x38] sm:$0xf] %vm2025, %v1958
      %2041 = vst.msk [vmem:[#allocation4 + $0x3c] sm:$0xf] %vm2025, %v1960
      %2042 = vst.msk [vmem:[#allocation4 + $0x40] sm:$0xf] %vm2025, %v1962
      %2043 = vst.msk [vmem:[#allocation4 + $0x44] sm:$0xf] %vm2025, %v1964
      %2044 = vst.msk [vmem:[#allocation4 + $0x48] sm:$0xf] %vm2025, %v1966
      %2045 = vst.msk [vmem:[#allocation4 + $0x4c] sm:$0xf] %vm2025, %v1968
      %2046 = vst.msk [vmem:[#allocation4 + $0x50] sm:$0xf] %vm2025, %v1970
      %2047 = vst.msk [vmem:[#allocation4 + $0x54] sm:$0xf] %vm2025, %v1972
      %2048 = vst.msk [vmem:[#allocation4 + $0x58] sm:$0xf] %vm2025, %v1974
      %2049 = vst.msk [vmem:[#allocation4 + $0x5c] sm:$0xf] %vm2025, %v1976
      %2050 = vst.msk [vmem:[#allocation4 + $0x60] sm:$0xf] %vm2025, %v1978
      %2051 = vst.msk [vmem:[#allocation4 + $0x64] sm:$0xf] %vm2025, %v1980
      %2052 = vst.msk [vmem:[#allocation4 + $0x68] sm:$0xf] %vm2025, %v1982
      %2053 = vst.msk [vmem:[#allocation4 + $0x6c] sm:$0xf] %vm2025, %v1984
      %2054 = vst.msk [vmem:[#allocation4 + $0x70] sm:$0xf] %vm2025, %v1986
      %2055 = vst.msk [vmem:[#allocation4 + $0x74] sm:$0xf] %vm2025, %v1988
      %2056 = vst.msk [vmem:[#allocation4 + $0x78] sm:$0xf] %vm2025, %v1990
      %2057 = vst.msk [vmem:[#allocation4 + $0x7c] sm:$0xf] %vm2025, %v1992
      %s2058 = scalar_lea.vmem [#allocation2], 48
      %v2059 = vld [vmem:[%s2058] sm:$0xff]
      %v2060 = vld [vmem:[%s2058 + $0x8] sm:$0xff]
      %v2061 = vld [vmem:[%s2058 + $0x18] sm:$0xff]
      %v2062 = vld [vmem:[%s2058 + $0x20] sm:$0xff]
      %v2063 = vld [vmem:[%s2058 + $0x30] sm:$0xff]
      %v2064 = vld [vmem:[%s2058 + $0x38] sm:$0xff]
      %v2065 = vld [vmem:[%s2058 + $0x48] sm:$0xff]
      %v2066 = vld [vmem:[%s2058 + $0x50] sm:$0xff]
      %v2067 = vld [vmem:[%s2058 + $0x60] sm:$0xff]
      %v2068 = vld [vmem:[%s2058 + $0x68] sm:$0xff]
      %v2069 = vld [vmem:[%s2058 + $0x78] sm:$0xff]
      %v2070 = vld [vmem:[%s2058 + $0x80] sm:$0xff]
      %v2071 = vld [vmem:[%s2058 + $0x90] sm:$0xff]
      %v2072 = vld [vmem:[%s2058 + $0x98] sm:$0xff]
      %v2073 = vld [vmem:[%s2058 + $0xa8] sm:$0xff]
      %v2074 = vld [vmem:[%s2058 + $0xb0] sm:$0xff]
      %v2075 = vld [vmem:[%s2058 + $0xc0] sm:$0xff]
      %v2076 = vld [vmem:[%s2058 + $0xc8] sm:$0xff]
      %v2077 = vld [vmem:[%s2058 + $0xd8] sm:$0xff]
      %v2078 = vld [vmem:[%s2058 + $0xe0] sm:$0xff]
      %v2079 = vld [vmem:[%s2058 + $0xf0] sm:$0xff]
      %v2080 = vld [vmem:[%s2058 + $0xf8] sm:$0xff]
      %v2081 = vld [vmem:[%s2058 + $0x108] sm:$0xff]
      %v2082 = vld [vmem:[%s2058 + $0x110] sm:$0xff]
      %v2083 = vld [vmem:[%s2058 + $0x120] sm:$0xff]
      %v2084 = vld [vmem:[%s2058 + $0x128] sm:$0xff]
      %v2085 = vld [vmem:[%s2058 + $0x138] sm:$0xff]
      %v2086 = vld [vmem:[%s2058 + $0x140] sm:$0xff]
      %v2087 = vld [vmem:[%s2058 + $0x150] sm:$0xff]
      %v2088 = vld [vmem:[%s2058 + $0x158] sm:$0xff]
      %v2089 = vld [vmem:[%s2058 + $0x168] sm:$0xff]
      %v2090 = vld [vmem:[%s2058 + $0x170] sm:$0xff]
      %v2091 = vpack.c.bf16 %v2059, %v2059
      %v2092 = vpack.c.bf16 %v2060, %v2060
      %v2093 = vpack.c.bf16 %v2061, %v2061
      %v2094 = vpack.c.bf16 %v2062, %v2062
      %v2095 = vpack.c.bf16 %v2063, %v2063
      %v2096 = vpack.c.bf16 %v2064, %v2064
      %v2097 = vpack.c.bf16 %v2065, %v2065
      %v2098 = vpack.c.bf16 %v2066, %v2066
      %v2099 = vpack.c.bf16 %v2067, %v2067
      %v2100 = vpack.c.bf16 %v2068, %v2068
      %v2101 = vpack.c.bf16 %v2069, %v2069
      %v2102 = vpack.c.bf16 %v2070, %v2070
      %v2103 = vpack.c.bf16 %v2071, %v2071
      %v2104 = vpack.c.bf16 %v2072, %v2072
      %v2105 = vpack.c.bf16 %v2073, %v2073
      %v2106 = vpack.c.bf16 %v2074, %v2074
      %v2107 = vpack.c.bf16 %v2075, %v2075
      %v2108 = vpack.c.bf16 %v2076, %v2076
      %v2109 = vpack.c.bf16 %v2077, %v2077
      %v2110 = vpack.c.bf16 %v2078, %v2078
      %v2111 = vpack.c.bf16 %v2079, %v2079
      %v2112 = vpack.c.bf16 %v2080, %v2080
      %v2113 = vpack.c.bf16 %v2081, %v2081
      %v2114 = vpack.c.bf16 %v2082, %v2082
      %v2115 = vpack.c.bf16 %v2083, %v2083
      %v2116 = vpack.c.bf16 %v2084, %v2084
      %v2117 = vpack.c.bf16 %v2085, %v2085
      %v2118 = vpack.c.bf16 %v2086, %v2086
      %v2119 = vpack.c.bf16 %v2087, %v2087
      %v2120 = vpack.c.bf16 %v2088, %v2088
      %v2121 = vpack.c.bf16 %v2089, %v2089
      %v2122 = vpack.c.bf16 %v2090, %v2090
      %2155 = vrot.lane.b32.xlu0 %v2091, 24
      %v2156 = vpop.permute.xlu0 %2155
      %2157 = vrot.lane.b32.xlu0 %v2092, 24
      %v2158 = vpop.permute.xlu0 %2157
      %2159 = vrot.lane.b32.xlu0 %v2093, 24
      %v2160 = vpop.permute.xlu0 %2159
      %2161 = vrot.lane.b32.xlu0 %v2094, 24
      %v2162 = vpop.permute.xlu0 %2161
      %2163 = vrot.lane.b32.xlu0 %v2095, 24
      %v2164 = vpop.permute.xlu0 %2163
      %2165 = vrot.lane.b32.xlu0 %v2096, 24
      %v2166 = vpop.permute.xlu0 %2165
      %2167 = vrot.lane.b32.xlu0 %v2097, 24
      %v2168 = vpop.permute.xlu0 %2167
      %2169 = vrot.lane.b32.xlu0 %v2098, 24
      %v2170 = vpop.permute.xlu0 %2169
      %2171 = vrot.lane.b32.xlu0 %v2099, 24
      %v2172 = vpop.permute.xlu0 %2171
      %2173 = vrot.lane.b32.xlu0 %v2100, 24
      %v2174 = vpop.permute.xlu0 %2173
      %2175 = vrot.lane.b32.xlu0 %v2101, 24
      %v2176 = vpop.permute.xlu0 %2175
      %2177 = vrot.lane.b32.xlu0 %v2102, 24
      %v2178 = vpop.permute.xlu0 %2177
      %2179 = vrot.lane.b32.xlu0 %v2103, 24
      %v2180 = vpop.permute.xlu0 %2179
      %2181 = vrot.lane.b32.xlu0 %v2104, 24
      %v2182 = vpop.permute.xlu0 %2181
      %2183 = vrot.lane.b32.xlu0 %v2105, 24
      %v2184 = vpop.permute.xlu0 %2183
      %2185 = vrot.lane.b32.xlu0 %v2106, 24
      %v2186 = vpop.permute.xlu0 %2185
      %2187 = vrot.lane.b32.xlu0 %v2107, 24
      %v2188 = vpop.permute.xlu0 %2187
      %2189 = vrot.lane.b32.xlu0 %v2108, 24
      %v2190 = vpop.permute.xlu0 %2189
      %2191 = vrot.lane.b32.xlu0 %v2109, 24
      %v2192 = vpop.permute.xlu0 %2191
      %2193 = vrot.lane.b32.xlu0 %v2110, 24
      %v2194 = vpop.permute.xlu0 %2193
      %2195 = vrot.lane.b32.xlu0 %v2111, 24
      %v2196 = vpop.permute.xlu0 %2195
      %2197 = vrot.lane.b32.xlu0 %v2112, 24
      %v2198 = vpop.permute.xlu0 %2197
      %2199 = vrot.lane.b32.xlu0 %v2113, 24
      %v2200 = vpop.permute.xlu0 %2199
      %2201 = vrot.lane.b32.xlu0 %v2114, 24
      %v2202 = vpop.permute.xlu0 %2201
      %2203 = vrot.lane.b32.xlu0 %v2115, 24
      %v2204 = vpop.permute.xlu0 %2203
      %2205 = vrot.lane.b32.xlu0 %v2116, 24
      %v2206 = vpop.permute.xlu0 %2205
      %2207 = vrot.lane.b32.xlu0 %v2117, 24
      %v2208 = vpop.permute.xlu0 %2207
      %2209 = vrot.lane.b32.xlu0 %v2118, 24
      %v2210 = vpop.permute.xlu0 %2209
      %2211 = vrot.lane.b32.xlu0 %v2119, 24
      %v2212 = vpop.permute.xlu0 %2211
      %2213 = vrot.lane.b32.xlu0 %v2120, 24
      %v2214 = vpop.permute.xlu0 %2213
      %2215 = vrot.lane.b32.xlu0 %v2121, 24
      %v2216 = vpop.permute.xlu0 %2215
      %2217 = vrot.lane.b32.xlu0 %v2122, 24
      %v2218 = vpop.permute.xlu0 %2217
      %vm2251 = vcmask 224448
      %2252 = vst.msk [vmem:[#allocation4] sm:$0xf] %vm2251, %v2156
      %2253 = vst.msk [vmem:[#allocation4 + $0x4] sm:$0xf] %vm2251, %v2158
      %2254 = vst.msk [vmem:[#allocation4 + $0x8] sm:$0xf] %vm2251, %v2160
      %2255 = vst.msk [vmem:[#allocation4 + $0xc] sm:$0xf] %vm2251, %v2162
      %2256 = vst.msk [vmem:[#allocation4 + $0x10] sm:$0xf] %vm2251, %v2164
      %2257 = vst.msk [vmem:[#allocation4 + $0x14] sm:$0xf] %vm2251, %v2166
      %2258 = vst.msk [vmem:[#allocation4 + $0x18] sm:$0xf] %vm2251, %v2168
      %2259 = vst.msk [vmem:[#allocation4 + $0x1c] sm:$0xf] %vm2251, %v2170
      %2260 = vst.msk [vmem:[#allocation4 + $0x20] sm:$0xf] %vm2251, %v2172
      %2261 = vst.msk [vmem:[#allocation4 + $0x24] sm:$0xf] %vm2251, %v2174
      %2262 = vst.msk [vmem:[#allocation4 + $0x28] sm:$0xf] %vm2251, %v2176
      %2263 = vst.msk [vmem:[#allocation4 + $0x2c] sm:$0xf] %vm2251, %v2178
      %2264 = vst.msk [vmem:[#allocation4 + $0x30] sm:$0xf] %vm2251, %v2180
      %2265 = vst.msk [vmem:[#allocation4 + $0x34] sm:$0xf] %vm2251, %v2182
      %2266 = vst.msk [vmem:[#allocation4 + $0x38] sm:$0xf] %vm2251, %v2184
      %2267 = vst.msk [vmem:[#allocation4 + $0x3c] sm:$0xf] %vm2251, %v2186
      %2268 = vst.msk [vmem:[#allocation4 + $0x40] sm:$0xf] %vm2251, %v2188
      %2269 = vst.msk [vmem:[#allocation4 + $0x44] sm:$0xf] %vm2251, %v2190
      %2270 = vst.msk [vmem:[#allocation4 + $0x48] sm:$0xf] %vm2251, %v2192
      %2271 = vst.msk [vmem:[#allocation4 + $0x4c] sm:$0xf] %vm2251, %v2194
      %2272 = vst.msk [vmem:[#allocation4 + $0x50] sm:$0xf] %vm2251, %v2196
      %2273 = vst.msk [vmem:[#allocation4 + $0x54] sm:$0xf] %vm2251, %v2198
      %2274 = vst.msk [vmem:[#allocation4 + $0x58] sm:$0xf] %vm2251, %v2200
      %2275 = vst.msk [vmem:[#allocation4 + $0x5c] sm:$0xf] %vm2251, %v2202
      %2276 = vst.msk [vmem:[#allocation4 + $0x60] sm:$0xf] %vm2251, %v2204
      %2277 = vst.msk [vmem:[#allocation4 + $0x64] sm:$0xf] %vm2251, %v2206
      %2278 = vst.msk [vmem:[#allocation4 + $0x68] sm:$0xf] %vm2251, %v2208
      %2279 = vst.msk [vmem:[#allocation4 + $0x6c] sm:$0xf] %vm2251, %v2210
      %2280 = vst.msk [vmem:[#allocation4 + $0x70] sm:$0xf] %vm2251, %v2212
      %2281 = vst.msk [vmem:[#allocation4 + $0x74] sm:$0xf] %vm2251, %v2214
      %2282 = vst.msk [vmem:[#allocation4 + $0x78] sm:$0xf] %vm2251, %v2216
      %2283 = vst.msk [vmem:[#allocation4 + $0x7c] sm:$0xf] %vm2251, %v2218
      %v2284 = vld [vmem:[%s2058 + $0x1] sm:$0xff]
      %v2285 = vld [vmem:[%s2058 + $0x9] sm:$0xff]
      %v2286 = vld [vmem:[%s2058 + $0x19] sm:$0xff]
      %v2287 = vld [vmem:[%s2058 + $0x21] sm:$0xff]
      %v2288 = vld [vmem:[%s2058 + $0x31] sm:$0xff]
      %v2289 = vld [vmem:[%s2058 + $0x39] sm:$0xff]
      %v2290 = vld [vmem:[%s2058 + $0x49] sm:$0xff]
      %v2291 = vld [vmem:[%s2058 + $0x51] sm:$0xff]
      %v2292 = vld [vmem:[%s2058 + $0x61] sm:$0xff]
      %v2293 = vld [vmem:[%s2058 + $0x69] sm:$0xff]
      %v2294 = vld [vmem:[%s2058 + $0x79] sm:$0xff]
      %v2295 = vld [vmem:[%s2058 + $0x81] sm:$0xff]
      %v2296 = vld [vmem:[%s2058 + $0x91] sm:$0xff]
      %v2297 = vld [vmem:[%s2058 + $0x99] sm:$0xff]
      %v2298 = vld [vmem:[%s2058 + $0xa9] sm:$0xff]
      %v2299 = vld [vmem:[%s2058 + $0xb1] sm:$0xff]
      %v2300 = vld [vmem:[%s2058 + $0xc1] sm:$0xff]
      %v2301 = vld [vmem:[%s2058 + $0xc9] sm:$0xff]
      %v2302 = vld [vmem:[%s2058 + $0xd9] sm:$0xff]
      %v2303 = vld [vmem:[%s2058 + $0xe1] sm:$0xff]
      %v2304 = vld [vmem:[%s2058 + $0xf1] sm:$0xff]
      %v2305 = vld [vmem:[%s2058 + $0xf9] sm:$0xff]
      %v2306 = vld [vmem:[%s2058 + $0x109] sm:$0xff]
      %v2307 = vld [vmem:[%s2058 + $0x111] sm:$0xff]
      %v2308 = vld [vmem:[%s2058 + $0x121] sm:$0xff]
      %v2309 = vld [vmem:[%s2058 + $0x129] sm:$0xff]
      %v2310 = vld [vmem:[%s2058 + $0x139] sm:$0xff]
      %v2311 = vld [vmem:[%s2058 + $0x141] sm:$0xff]
      %v2312 = vld [vmem:[%s2058 + $0x151] sm:$0xff]
      %v2313 = vld [vmem:[%s2058 + $0x159] sm:$0xff]
      %v2314 = vld [vmem:[%s2058 + $0x169] sm:$0xff]
      %v2315 = vld [vmem:[%s2058 + $0x171] sm:$0xff]
      %v2316 = vpack.c.bf16 %v2284, %v2284
      %v2317 = vpack.c.bf16 %v2285, %v2285
      %v2318 = vpack.c.bf16 %v2286, %v2286
      %v2319 = vpack.c.bf16 %v2287, %v2287
      %v2320 = vpack.c.bf16 %v2288, %v2288
      %v2321 = vpack.c.bf16 %v2289, %v2289
      %v2322 = vpack.c.bf16 %v2290, %v2290
      %v2323 = vpack.c.bf16 %v2291, %v2291
      %v2324 = vpack.c.bf16 %v2292, %v2292
      %v2325 = vpack.c.bf16 %v2293, %v2293
      %v2326 = vpack.c.bf16 %v2294, %v2294
      %v2327 = vpack.c.bf16 %v2295, %v2295
      %v2328 = vpack.c.bf16 %v2296, %v2296
      %v2329 = vpack.c.bf16 %v2297, %v2297
      %v2330 = vpack.c.bf16 %v2298, %v2298
      %v2331 = vpack.c.bf16 %v2299, %v2299
      %v2332 = vpack.c.bf16 %v2300, %v2300
      %v2333 = vpack.c.bf16 %v2301, %v2301
      %v2334 = vpack.c.bf16 %v2302, %v2302
      %v2335 = vpack.c.bf16 %v2303, %v2303
      %v2336 = vpack.c.bf16 %v2304, %v2304
      %v2337 = vpack.c.bf16 %v2305, %v2305
      %v2338 = vpack.c.bf16 %v2306, %v2306
      %v2339 = vpack.c.bf16 %v2307, %v2307
      %v2340 = vpack.c.bf16 %v2308, %v2308
      %v2341 = vpack.c.bf16 %v2309, %v2309
      %v2342 = vpack.c.bf16 %v2310, %v2310
      %v2343 = vpack.c.bf16 %v2311, %v2311
      %v2344 = vpack.c.bf16 %v2312, %v2312
      %v2345 = vpack.c.bf16 %v2313, %v2313
      %v2346 = vpack.c.bf16 %v2314, %v2314
      %v2347 = vpack.c.bf16 %v2315, %v2315
      %2380 = vrot.lane.b32.xlu0 %v2316, 28
      %v2381 = vpop.permute.xlu0 %2380
      %2382 = vrot.lane.b32.xlu0 %v2317, 28
      %v2383 = vpop.permute.xlu0 %2382
      %2384 = vrot.lane.b32.xlu0 %v2318, 28
      %v2385 = vpop.permute.xlu0 %2384
      %2386 = vrot.lane.b32.xlu0 %v2319, 28
      %v2387 = vpop.permute.xlu0 %2386
      %2388 = vrot.lane.b32.xlu0 %v2320, 28
      %v2389 = vpop.permute.xlu0 %2388
      %2390 = vrot.lane.b32.xlu0 %v2321, 28
      %v2391 = vpop.permute.xlu0 %2390
      %2392 = vrot.lane.b32.xlu0 %v2322, 28
      %v2393 = vpop.permute.xlu0 %2392
      %2394 = vrot.lane.b32.xlu0 %v2323, 28
      %v2395 = vpop.permute.xlu0 %2394
      %2396 = vrot.lane.b32.xlu0 %v2324, 28
      %v2397 = vpop.permute.xlu0 %2396
      %2398 = vrot.lane.b32.xlu0 %v2325, 28
      %v2399 = vpop.permute.xlu0 %2398
      %2400 = vrot.lane.b32.xlu0 %v2326, 28
      %v2401 = vpop.permute.xlu0 %2400
      %2402 = vrot.lane.b32.xlu0 %v2327, 28
      %v2403 = vpop.permute.xlu0 %2402
      %2404 = vrot.lane.b32.xlu0 %v2328, 28
      %v2405 = vpop.permute.xlu0 %2404
      %2406 = vrot.lane.b32.xlu0 %v2329, 28
      %v2407 = vpop.permute.xlu0 %2406
      %2408 = vrot.lane.b32.xlu0 %v2330, 28
      %v2409 = vpop.permute.xlu0 %2408
      %2410 = vrot.lane.b32.xlu0 %v2331, 28
      %v2411 = vpop.permute.xlu0 %2410
      %2412 = vrot.lane.b32.xlu0 %v2332, 28
      %v2413 = vpop.permute.xlu0 %2412
      %2414 = vrot.lane.b32.xlu0 %v2333, 28
      %v2415 = vpop.permute.xlu0 %2414
      %2416 = vrot.lane.b32.xlu0 %v2334, 28
      %v2417 = vpop.permute.xlu0 %2416
      %2418 = vrot.lane.b32.xlu0 %v2335, 28
      %v2419 = vpop.permute.xlu0 %2418
      %2420 = vrot.lane.b32.xlu0 %v2336, 28
      %v2421 = vpop.permute.xlu0 %2420
      %2422 = vrot.lane.b32.xlu0 %v2337, 28
      %v2423 = vpop.permute.xlu0 %2422
      %2424 = vrot.lane.b32.xlu0 %v2338, 28
      %v2425 = vpop.permute.xlu0 %2424
      %2426 = vrot.lane.b32.xlu0 %v2339, 28
      %v2427 = vpop.permute.xlu0 %2426
      %2428 = vrot.lane.b32.xlu0 %v2340, 28
      %v2429 = vpop.permute.xlu0 %2428
      %2430 = vrot.lane.b32.xlu0 %v2341, 28
      %v2431 = vpop.permute.xlu0 %2430
      %2432 = vrot.lane.b32.xlu0 %v2342, 28
      %v2433 = vpop.permute.xlu0 %2432
      %2434 = vrot.lane.b32.xlu0 %v2343, 28
      %v2435 = vpop.permute.xlu0 %2434
      %2436 = vrot.lane.b32.xlu0 %v2344, 28
      %v2437 = vpop.permute.xlu0 %2436
      %2438 = vrot.lane.b32.xlu0 %v2345, 28
      %v2439 = vpop.permute.xlu0 %2438
      %2440 = vrot.lane.b32.xlu0 %v2346, 28
      %v2441 = vpop.permute.xlu0 %2440
      %2442 = vrot.lane.b32.xlu0 %v2347, 28
      %v2443 = vpop.permute.xlu0 %2442
      %vm2476 = vcmask 257248
      %2477 = vst.msk [vmem:[#allocation4] sm:$0xf] %vm2476, %v2381
      %2478 = vst.msk [vmem:[#allocation4 + $0x4] sm:$0xf] %vm2476, %v2383
      %2479 = vst.msk [vmem:[#allocation4 + $0x8] sm:$0xf] %vm2476, %v2385
      %2480 = vst.msk [vmem:[#allocation4 + $0xc] sm:$0xf] %vm2476, %v2387
      %2481 = vst.msk [vmem:[#allocation4 + $0x10] sm:$0xf] %vm2476, %v2389
      %2482 = vst.msk [vmem:[#allocation4 + $0x14] sm:$0xf] %vm2476, %v2391
      %2483 = vst.msk [vmem:[#allocation4 + $0x18] sm:$0xf] %vm2476, %v2393
      %2484 = vst.msk [vmem:[#allocation4 + $0x1c] sm:$0xf] %vm2476, %v2395
      %2485 = vst.msk [vmem:[#allocation4 + $0x20] sm:$0xf] %vm2476, %v2397
      %2486 = vst.msk [vmem:[#allocation4 + $0x24] sm:$0xf] %vm2476, %v2399
      %2487 = vst.msk [vmem:[#allocation4 + $0x28] sm:$0xf] %vm2476, %v2401
      %2488 = vst.msk [vmem:[#allocation4 + $0x2c] sm:$0xf] %vm2476, %v2403
      %2489 = vst.msk [vmem:[#allocation4 + $0x30] sm:$0xf] %vm2476, %v2405
      %2490 = vst.msk [vmem:[#allocation4 + $0x34] sm:$0xf] %vm2476, %v2407
      %2491 = vst.msk [vmem:[#allocation4 + $0x38] sm:$0xf] %vm2476, %v2409
      %2492 = vst.msk [vmem:[#allocation4 + $0x3c] sm:$0xf] %vm2476, %v2411
      %2493 = vst.msk [vmem:[#allocation4 + $0x40] sm:$0xf] %vm2476, %v2413
      %2494 = vst.msk [vmem:[#allocation4 + $0x44] sm:$0xf] %vm2476, %v2415
      %2495 = vst.msk [vmem:[#allocation4 + $0x48] sm:$0xf] %vm2476, %v2417
      %2496 = vst.msk [vmem:[#allocation4 + $0x4c] sm:$0xf] %vm2476, %v2419
      %2497 = vst.msk [vmem:[#allocation4 + $0x50] sm:$0xf] %vm2476, %v2421
      %2498 = vst.msk [vmem:[#allocation4 + $0x54] sm:$0xf] %vm2476, %v2423
      %2499 = vst.msk [vmem:[#allocation4 + $0x58] sm:$0xf] %vm2476, %v2425
      %2500 = vst.msk [vmem:[#allocation4 + $0x5c] sm:$0xf] %vm2476, %v2427
      %2501 = vst.msk [vmem:[#allocation4 + $0x60] sm:$0xf] %vm2476, %v2429
      %2502 = vst.msk [vmem:[#allocation4 + $0x64] sm:$0xf] %vm2476, %v2431
      %2503 = vst.msk [vmem:[#allocation4 + $0x68] sm:$0xf] %vm2476, %v2433
      %2504 = vst.msk [vmem:[#allocation4 + $0x6c] sm:$0xf] %vm2476, %v2435
      %2505 = vst.msk [vmem:[#allocation4 + $0x70] sm:$0xf] %vm2476, %v2437
      %2506 = vst.msk [vmem:[#allocation4 + $0x74] sm:$0xf] %vm2476, %v2439
      %2507 = vst.msk [vmem:[#allocation4 + $0x78] sm:$0xf] %vm2476, %v2441
      %2508 = vst.msk [vmem:[#allocation4 + $0x7c] sm:$0xf] %vm2476, %v2443
      %v2509 = vld [vmem:[%s2058 + $0x2] sm:$0xff]
      %v2510 = vld [vmem:[%s2058 + $0xa] sm:$0xff]
      %v2511 = vld [vmem:[%s2058 + $0x1a] sm:$0xff]
      %v2512 = vld [vmem:[%s2058 + $0x22] sm:$0xff]
      %v2513 = vld [vmem:[%s2058 + $0x32] sm:$0xff]
      %v2514 = vld [vmem:[%s2058 + $0x3a] sm:$0xff]
      %v2515 = vld [vmem:[%s2058 + $0x4a] sm:$0xff]
      %v2516 = vld [vmem:[%s2058 + $0x52] sm:$0xff]
      %v2517 = vld [vmem:[%s2058 + $0x62] sm:$0xff]
      %v2518 = vld [vmem:[%s2058 + $0x6a] sm:$0xff]
      %v2519 = vld [vmem:[%s2058 + $0x7a] sm:$0xff]
      %v2520 = vld [vmem:[%s2058 + $0x82] sm:$0xff]
      %v2521 = vld [vmem:[%s2058 + $0x92] sm:$0xff]
      %v2522 = vld [vmem:[%s2058 + $0x9a] sm:$0xff]
      %v2523 = vld [vmem:[%s2058 + $0xaa] sm:$0xff]
      %v2524 = vld [vmem:[%s2058 + $0xb2] sm:$0xff]
      %v2525 = vld [vmem:[%s2058 + $0xc2] sm:$0xff]
      %v2526 = vld [vmem:[%s2058 + $0xca] sm:$0xff]
      %v2527 = vld [vmem:[%s2058 + $0xda] sm:$0xff]
      %v2528 = vld [vmem:[%s2058 + $0xe2] sm:$0xff]
      %v2529 = vld [vmem:[%s2058 + $0xf2] sm:$0xff]
      %v2530 = vld [vmem:[%s2058 + $0xfa] sm:$0xff]
      %v2531 = vld [vmem:[%s2058 + $0x10a] sm:$0xff]
      %v2532 = vld [vmem:[%s2058 + $0x112] sm:$0xff]
      %v2533 = vld [vmem:[%s2058 + $0x122] sm:$0xff]
      %v2534 = vld [vmem:[%s2058 + $0x12a] sm:$0xff]
      %v2535 = vld [vmem:[%s2058 + $0x13a] sm:$0xff]
      %v2536 = vld [vmem:[%s2058 + $0x142] sm:$0xff]
      %v2537 = vld [vmem:[%s2058 + $0x152] sm:$0xff]
      %v2538 = vld [vmem:[%s2058 + $0x15a] sm:$0xff]
      %v2539 = vld [vmem:[%s2058 + $0x16a] sm:$0xff]
      %v2540 = vld [vmem:[%s2058 + $0x172] sm:$0xff]
      %v2541 = vpack.c.bf16 %v2509, %v2509
      %v2542 = vpack.c.bf16 %v2510, %v2510
      %v2543 = vpack.c.bf16 %v2511, %v2511
      %v2544 = vpack.c.bf16 %v2512, %v2512
      %v2545 = vpack.c.bf16 %v2513, %v2513
      %v2546 = vpack.c.bf16 %v2514, %v2514
      %v2547 = vpack.c.bf16 %v2515, %v2515
      %v2548 = vpack.c.bf16 %v2516, %v2516
      %v2549 = vpack.c.bf16 %v2517, %v2517
      %v2550 = vpack.c.bf16 %v2518, %v2518
      %v2551 = vpack.c.bf16 %v2519, %v2519
      %v2552 = vpack.c.bf16 %v2520, %v2520
      %v2553 = vpack.c.bf16 %v2521, %v2521
      %v2554 = vpack.c.bf16 %v2522, %v2522
      %v2555 = vpack.c.bf16 %v2523, %v2523
      %v2556 = vpack.c.bf16 %v2524, %v2524
      %v2557 = vpack.c.bf16 %v2525, %v2525
      %v2558 = vpack.c.bf16 %v2526, %v2526
      %v2559 = vpack.c.bf16 %v2527, %v2527
      %v2560 = vpack.c.bf16 %v2528, %v2528
      %v2561 = vpack.c.bf16 %v2529, %v2529
      %v2562 = vpack.c.bf16 %v2530, %v2530
      %v2563 = vpack.c.bf16 %v2531, %v2531
      %v2564 = vpack.c.bf16 %v2532, %v2532
      %v2565 = vpack.c.bf16 %v2533, %v2533
      %v2566 = vpack.c.bf16 %v2534, %v2534
      %v2567 = vpack.c.bf16 %v2535, %v2535
      %v2568 = vpack.c.bf16 %v2536, %v2536
      %v2569 = vpack.c.bf16 %v2537, %v2537
      %v2570 = vpack.c.bf16 %v2538, %v2538
      %v2571 = vpack.c.bf16 %v2539, %v2539
      %v2572 = vpack.c.bf16 %v2540, %v2540
      %2605 = vrot.lane.b32.xlu0 %v2541, 32
      %v2606 = vpop.permute.xlu0 %2605
      %2607 = vrot.lane.b32.xlu0 %v2542, 32
      %v2608 = vpop.permute.xlu0 %2607
      %2609 = vrot.lane.b32.xlu0 %v2543, 32
      %v2610 = vpop.permute.xlu0 %2609
      %2611 = vrot.lane.b32.xlu0 %v2544, 32
      %v2612 = vpop.permute.xlu0 %2611
      %2613 = vrot.lane.b32.xlu0 %v2545, 32
      %v2614 = vpop.permute.xlu0 %2613
      %2615 = vrot.lane.b32.xlu0 %v2546, 32
      %v2616 = vpop.permute.xlu0 %2615
      %2617 = vrot.lane.b32.xlu0 %v2547, 32
      %v2618 = vpop.permute.xlu0 %2617
      %2619 = vrot.lane.b32.xlu0 %v2548, 32
      %v2620 = vpop.permute.xlu0 %2619
      %2621 = vrot.lane.b32.xlu0 %v2549, 32
      %v2622 = vpop.permute.xlu0 %2621
      %2623 = vrot.lane.b32.xlu0 %v2550, 32
      %v2624 = vpop.permute.xlu0 %2623
      %2625 = vrot.lane.b32.xlu0 %v2551, 32
      %v2626 = vpop.permute.xlu0 %2625
      %2627 = vrot.lane.b32.xlu0 %v2552, 32
      %v2628 = vpop.permute.xlu0 %2627
      %2629 = vrot.lane.b32.xlu0 %v2553, 32
      %v2630 = vpop.permute.xlu0 %2629
      %2631 = vrot.lane.b32.xlu0 %v2554, 32
      %v2632 = vpop.permute.xlu0 %2631
      %2633 = vrot.lane.b32.xlu0 %v2555, 32
      %v2634 = vpop.permute.xlu0 %2633
      %2635 = vrot.lane.b32.xlu0 %v2556, 32
      %v2636 = vpop.permute.xlu0 %2635
      %2637 = vrot.lane.b32.xlu0 %v2557, 32
      %v2638 = vpop.permute.xlu0 %2637
      %2639 = vrot.lane.b32.xlu0 %v2558, 32
      %v2640 = vpop.permute.xlu0 %2639
      %2641 = vrot.lane.b32.xlu0 %v2559, 32
      %v2642 = vpop.permute.xlu0 %2641
      %2643 = vrot.lane.b32.xlu0 %v2560, 32
      %v2644 = vpop.permute.xlu0 %2643
      %2645 = vrot.lane.b32.xlu0 %v2561, 32
      %v2646 = vpop.permute.xlu0 %2645
      %2647 = vrot.lane.b32.xlu0 %v2562, 32
      %v2648 = vpop.permute.xlu0 %2647
      %2649 = vrot.lane.b32.xlu0 %v2563, 32
      %v2650 = vpop.permute.xlu0 %2649
      %2651 = vrot.lane.b32.xlu0 %v2564, 32
      %v2652 = vpop.permute.xlu0 %2651
      %2653 = vrot.lane.b32.xlu0 %v2565, 32
      %v2654 = vpop.permute.xlu0 %2653
      %2655 = vrot.lane.b32.xlu0 %v2566, 32
      %v2656 = vpop.permute.xlu0 %2655
      %2657 = vrot.lane.b32.xlu0 %v2567, 32
      %v2658 = vpop.permute.xlu0 %2657
      %2659 = vrot.lane.b32.xlu0 %v2568, 32
      %v2660 = vpop.permute.xlu0 %2659
      %2661 = vrot.lane.b32.xlu0 %v2569, 32
      %v2662 = vpop.permute.xlu0 %2661
      %2663 = vrot.lane.b32.xlu0 %v2570, 32
      %v2664 = vpop.permute.xlu0 %2663
      %2665 = vrot.lane.b32.xlu0 %v2571, 32
      %v2666 = vpop.permute.xlu0 %2665
      %2667 = vrot.lane.b32.xlu0 %v2572, 32
      %v2668 = vpop.permute.xlu0 %2667
      %vm2701 = vcmask 290048
      %2702 = vst.msk [vmem:[#allocation4] sm:$0xf] %vm2701, %v2606
      %2703 = vst.msk [vmem:[#allocation4 + $0x4] sm:$0xf] %vm2701, %v2608
      %2704 = vst.msk [vmem:[#allocation4 + $0x8] sm:$0xf] %vm2701, %v2610
      %2705 = vst.msk [vmem:[#allocation4 + $0xc] sm:$0xf] %vm2701, %v2612
      %2706 = vst.msk [vmem:[#allocation4 + $0x10] sm:$0xf] %vm2701, %v2614
      %2707 = vst.msk [vmem:[#allocation4 + $0x14] sm:$0xf] %vm2701, %v2616
      %2708 = vst.msk [vmem:[#allocation4 + $0x18] sm:$0xf] %vm2701, %v2618
      %2709 = vst.msk [vmem:[#allocation4 + $0x1c] sm:$0xf] %vm2701, %v2620
      %2710 = vst.msk [vmem:[#allocation4 + $0x20] sm:$0xf] %vm2701, %v2622
      %2711 = vst.msk [vmem:[#allocation4 + $0x24] sm:$0xf] %vm2701, %v2624
      %2712 = vst.msk [vmem:[#allocation4 + $0x28] sm:$0xf] %vm2701, %v2626
      %2713 = vst.msk [vmem:[#allocation4 + $0x2c] sm:$0xf] %vm2701, %v2628
      %2714 = vst.msk [vmem:[#allocation4 + $0x30] sm:$0xf] %vm2701, %v2630
      %2715 = vst.msk [vmem:[#allocation4 + $0x34] sm:$0xf] %vm2701, %v2632
      %2716 = vst.msk [vmem:[#allocation4 + $0x38] sm:$0xf] %vm2701, %v2634
      %2717 = vst.msk [vmem:[#allocation4 + $0x3c] sm:$0xf] %vm2701, %v2636
      %2718 = vst.msk [vmem:[#allocation4 + $0x40] sm:$0xf] %vm2701, %v2638
      %2719 = vst.msk [vmem:[#allocation4 + $0x44] sm:$0xf] %vm2701, %v2640
      %2720 = vst.msk [vmem:[#allocation4 + $0x48] sm:$0xf] %vm2701, %v2642
      %2721 = vst.msk [vmem:[#allocation4 + $0x4c] sm:$0xf] %vm2701, %v2644
      %2722 = vst.msk [vmem:[#allocation4 + $0x50] sm:$0xf] %vm2701, %v2646
      %2723 = vst.msk [vmem:[#allocation4 + $0x54] sm:$0xf] %vm2701, %v2648
      %2724 = vst.msk [vmem:[#allocation4 + $0x58] sm:$0xf] %vm2701, %v2650
      %2725 = vst.msk [vmem:[#allocation4 + $0x5c] sm:$0xf] %vm2701, %v2652
      %2726 = vst.msk [vmem:[#allocation4 + $0x60] sm:$0xf] %vm2701, %v2654
      %2727 = vst.msk [vmem:[#allocation4 + $0x64] sm:$0xf] %vm2701, %v2656
      %2728 = vst.msk [vmem:[#allocation4 + $0x68] sm:$0xf] %vm2701, %v2658
      %2729 = vst.msk [vmem:[#allocation4 + $0x6c] sm:$0xf] %vm2701, %v2660
      %2730 = vst.msk [vmem:[#allocation4 + $0x70] sm:$0xf] %vm2701, %v2662
      %2731 = vst.msk [vmem:[#allocation4 + $0x74] sm:$0xf] %vm2701, %v2664
      %2732 = vst.msk [vmem:[#allocation4 + $0x78] sm:$0xf] %vm2701, %v2666
      %2733 = vst.msk [vmem:[#allocation4 + $0x7c] sm:$0xf] %vm2701, %v2668
      %v2734 = vld [vmem:[#allocation3] sm:$0xff]
      %v2735 = vld [vmem:[#allocation3 + $0x8] sm:$0xff]
      %v2736 = vld [vmem:[#allocation3 + $0x18] sm:$0xff]
      %v2737 = vld [vmem:[#allocation3 + $0x20] sm:$0xff]
      %v2738 = vld [vmem:[#allocation3 + $0x30] sm:$0xff]
      %v2739 = vld [vmem:[#allocation3 + $0x38] sm:$0xff]
      %v2740 = vld [vmem:[#allocation3 + $0x48] sm:$0xff]
      %v2741 = vld [vmem:[#allocation3 + $0x50] sm:$0xff]
      %v2742 = vld [vmem:[#allocation3 + $0x60] sm:$0xff]
      %v2743 = vld [vmem:[#allocation3 + $0x68] sm:$0xff]
      %v2744 = vld [vmem:[#allocation3 + $0x78] sm:$0xff]
      %v2745 = vld [vmem:[#allocation3 + $0x80] sm:$0xff]
      %v2746 = vld [vmem:[#allocation3 + $0x90] sm:$0xff]
      %v2747 = vld [vmem:[#allocation3 + $0x98] sm:$0xff]
      %v2748 = vld [vmem:[#allocation3 + $0xa8] sm:$0xff]
      %v2749 = vld [vmem:[#allocation3 + $0xb0] sm:$0xff]
      %v2750 = vld [vmem:[#allocation3 + $0xc0] sm:$0xff]
      %v2751 = vld [vmem:[#allocation3 + $0xc8] sm:$0xff]
      %v2752 = vld [vmem:[#allocation3 + $0xd8] sm:$0xff]
      %v2753 = vld [vmem:[#allocation3 + $0xe0] sm:$0xff]
      %v2754 = vld [vmem:[#allocation3 + $0xf0] sm:$0xff]
      %v2755 = vld [vmem:[#allocation3 + $0xf8] sm:$0xff]
      %v2756 = vld [vmem:[#allocation3 + $0x108] sm:$0xff]
      %v2757 = vld [vmem:[#allocation3 + $0x110] sm:$0xff]
      %v2758 = vld [vmem:[#allocation3 + $0x120] sm:$0xff]
      %v2759 = vld [vmem:[#allocation3 + $0x128] sm:$0xff]
      %v2760 = vld [vmem:[#allocation3 + $0x138] sm:$0xff]
      %v2761 = vld [vmem:[#allocation3 + $0x140] sm:$0xff]
      %v2762 = vld [vmem:[#allocation3 + $0x150] sm:$0xff]
      %v2763 = vld [vmem:[#allocation3 + $0x158] sm:$0xff]
      %v2764 = vld [vmem:[#allocation3 + $0x168] sm:$0xff]
      %v2765 = vld [vmem:[#allocation3 + $0x170] sm:$0xff]
      %v2766 = vpack.c.bf16 %v2734, %v2734
      %v2767 = vpack.c.bf16 %v2735, %v2735
      %v2768 = vpack.c.bf16 %v2736, %v2736
      %v2769 = vpack.c.bf16 %v2737, %v2737
      %v2770 = vpack.c.bf16 %v2738, %v2738
      %v2771 = vpack.c.bf16 %v2739, %v2739
      %v2772 = vpack.c.bf16 %v2740, %v2740
      %v2773 = vpack.c.bf16 %v2741, %v2741
      %v2774 = vpack.c.bf16 %v2742, %v2742
      %v2775 = vpack.c.bf16 %v2743, %v2743
      %v2776 = vpack.c.bf16 %v2744, %v2744
      %v2777 = vpack.c.bf16 %v2745, %v2745
      %v2778 = vpack.c.bf16 %v2746, %v2746
      %v2779 = vpack.c.bf16 %v2747, %v2747
      %v2780 = vpack.c.bf16 %v2748, %v2748
      %v2781 = vpack.c.bf16 %v2749, %v2749
      %v2782 = vpack.c.bf16 %v2750, %v2750
      %v2783 = vpack.c.bf16 %v2751, %v2751
      %v2784 = vpack.c.bf16 %v2752, %v2752
      %v2785 = vpack.c.bf16 %v2753, %v2753
      %v2786 = vpack.c.bf16 %v2754, %v2754
      %v2787 = vpack.c.bf16 %v2755, %v2755
      %v2788 = vpack.c.bf16 %v2756, %v2756
      %v2789 = vpack.c.bf16 %v2757, %v2757
      %v2790 = vpack.c.bf16 %v2758, %v2758
      %v2791 = vpack.c.bf16 %v2759, %v2759
      %v2792 = vpack.c.bf16 %v2760, %v2760
      %v2793 = vpack.c.bf16 %v2761, %v2761
      %v2794 = vpack.c.bf16 %v2762, %v2762
      %v2795 = vpack.c.bf16 %v2763, %v2763
      %v2796 = vpack.c.bf16 %v2764, %v2764
      %v2797 = vpack.c.bf16 %v2765, %v2765
      %2830 = vrot.lane.b32.xlu0 %v2766, 36
      %v2831 = vpop.permute.xlu0 %2830
      %2832 = vrot.lane.b32.xlu0 %v2767, 36
      %v2833 = vpop.permute.xlu0 %2832
      %2834 = vrot.lane.b32.xlu0 %v2768, 36
      %v2835 = vpop.permute.xlu0 %2834
      %2836 = vrot.lane.b32.xlu0 %v2769, 36
      %v2837 = vpop.permute.xlu0 %2836
      %2838 = vrot.lane.b32.xlu0 %v2770, 36
      %v2839 = vpop.permute.xlu0 %2838
      %2840 = vrot.lane.b32.xlu0 %v2771, 36
      %v2841 = vpop.permute.xlu0 %2840
      %2842 = vrot.lane.b32.xlu0 %v2772, 36
      %v2843 = vpop.permute.xlu0 %2842
      %2844 = vrot.lane.b32.xlu0 %v2773, 36
      %v2845 = vpop.permute.xlu0 %2844
      %2846 = vrot.lane.b32.xlu0 %v2774, 36
      %v2847 = vpop.permute.xlu0 %2846
      %2848 = vrot.lane.b32.xlu0 %v2775, 36
      %v2849 = vpop.permute.xlu0 %2848
      %2850 = vrot.lane.b32.xlu0 %v2776, 36
      %v2851 = vpop.permute.xlu0 %2850
      %2852 = vrot.lane.b32.xlu0 %v2777, 36
      %v2853 = vpop.permute.xlu0 %2852
      %2854 = vrot.lane.b32.xlu0 %v2778, 36
      %v2855 = vpop.permute.xlu0 %2854
      %2856 = vrot.lane.b32.xlu0 %v2779, 36
      %v2857 = vpop.permute.xlu0 %2856
      %2858 = vrot.lane.b32.xlu0 %v2780, 36
      %v2859 = vpop.permute.xlu0 %2858
      %2860 = vrot.lane.b32.xlu0 %v2781, 36
      %v2861 = vpop.permute.xlu0 %2860
      %2862 = vrot.lane.b32.xlu0 %v2782, 36
      %v2863 = vpop.permute.xlu0 %2862
      %2864 = vrot.lane.b32.xlu0 %v2783, 36
      %v2865 = vpop.permute.xlu0 %2864
      %2866 = vrot.lane.b32.xlu0 %v2784, 36
      %v2867 = vpop.permute.xlu0 %2866
      %2868 = vrot.lane.b32.xlu0 %v2785, 36
      %v2869 = vpop.permute.xlu0 %2868
      %2870 = vrot.lane.b32.xlu0 %v2786, 36
      %v2871 = vpop.permute.xlu0 %2870
      %2872 = vrot.lane.b32.xlu0 %v2787, 36
      %v2873 = vpop.permute.xlu0 %2872
      %2874 = vrot.lane.b32.xlu0 %v2788, 36
      %v2875 = vpop.permute.xlu0 %2874
      %2876 = vrot.lane.b32.xlu0 %v2789, 36
      %v2877 = vpop.permute.xlu0 %2876
      %2878 = vrot.lane.b32.xlu0 %v2790, 36
      %v2879 = vpop.permute.xlu0 %2878
      %2880 = vrot.lane.b32.xlu0 %v2791, 36
      %v2881 = vpop.permute.xlu0 %2880
      %2882 = vrot.lane.b32.xlu0 %v2792, 36
      %v2883 = vpop.permute.xlu0 %2882
      %2884 = vrot.lane.b32.xlu0 %v2793, 36
      %v2885 = vpop.permute.xlu0 %2884
      %2886 = vrot.lane.b32.xlu0 %v2794, 36
      %v2887 = vpop.permute.xlu0 %2886
      %2888 = vrot.lane.b32.xlu0 %v2795, 36
      %v2889 = vpop.permute.xlu0 %2888
      %2890 = vrot.lane.b32.xlu0 %v2796, 36
      %v2891 = vpop.permute.xlu0 %2890
      %2892 = vrot.lane.b32.xlu0 %v2797, 36
      %v2893 = vpop.permute.xlu0 %2892
      %vm2926 = vcmask 322848
      %2927 = vst.msk [vmem:[#allocation4] sm:$0xf] %vm2926, %v2831
      %2928 = vst.msk [vmem:[#allocation4 + $0x4] sm:$0xf] %vm2926, %v2833
      %2929 = vst.msk [vmem:[#allocation4 + $0x8] sm:$0xf] %vm2926, %v2835
      %2930 = vst.msk [vmem:[#allocation4 + $0xc] sm:$0xf] %vm2926, %v2837
      %2931 = vst.msk [vmem:[#allocation4 + $0x10] sm:$0xf] %vm2926, %v2839
      %2932 = vst.msk [vmem:[#allocation4 + $0x14] sm:$0xf] %vm2926, %v2841
      %2933 = vst.msk [vmem:[#allocation4 + $0x18] sm:$0xf] %vm2926, %v2843
      %2934 = vst.msk [vmem:[#allocation4 + $0x1c] sm:$0xf] %vm2926, %v2845
      %2935 = vst.msk [vmem:[#allocation4 + $0x20] sm:$0xf] %vm2926, %v2847
      %2936 = vst.msk [vmem:[#allocation4 + $0x24] sm:$0xf] %vm2926, %v2849
      %2937 = vst.msk [vmem:[#allocation4 + $0x28] sm:$0xf] %vm2926, %v2851
      %2938 = vst.msk [vmem:[#allocation4 + $0x2c] sm:$0xf] %vm2926, %v2853
      %2939 = vst.msk [vmem:[#allocation4 + $0x30] sm:$0xf] %vm2926, %v2855
      %2940 = vst.msk [vmem:[#allocation4 + $0x34] sm:$0xf] %vm2926, %v2857
      %2941 = vst.msk [vmem:[#allocation4 + $0x38] sm:$0xf] %vm2926, %v2859
      %2942 = vst.msk [vmem:[#allocation4 + $0x3c] sm:$0xf] %vm2926, %v2861
      %2943 = vst.msk [vmem:[#allocation4 + $0x40] sm:$0xf] %vm2926, %v2863
      %2944 = vst.msk [vmem:[#allocation4 + $0x44] sm:$0xf] %vm2926, %v2865
      %2945 = vst.msk [vmem:[#allocation4 + $0x48] sm:$0xf] %vm2926, %v2867
      %2946 = vst.msk [vmem:[#allocation4 + $0x4c] sm:$0xf] %vm2926, %v2869
      %2947 = vst.msk [vmem:[#allocation4 + $0x50] sm:$0xf] %vm2926, %v2871
      %2948 = vst.msk [vmem:[#allocation4 + $0x54] sm:$0xf] %vm2926, %v2873
      %2949 = vst.msk [vmem:[#allocation4 + $0x58] sm:$0xf] %vm2926, %v2875
      %2950 = vst.msk [vmem:[#allocation4 + $0x5c] sm:$0xf] %vm2926, %v2877
      %2951 = vst.msk [vmem:[#allocation4 + $0x60] sm:$0xf] %vm2926, %v2879
      %2952 = vst.msk [vmem:[#allocation4 + $0x64] sm:$0xf] %vm2926, %v2881
      %2953 = vst.msk [vmem:[#allocation4 + $0x68] sm:$0xf] %vm2926, %v2883
      %2954 = vst.msk [vmem:[#allocation4 + $0x6c] sm:$0xf] %vm2926, %v2885
      %2955 = vst.msk [vmem:[#allocation4 + $0x70] sm:$0xf] %vm2926, %v2887
      %2956 = vst.msk [vmem:[#allocation4 + $0x74] sm:$0xf] %vm2926, %v2889
      %2957 = vst.msk [vmem:[#allocation4 + $0x78] sm:$0xf] %vm2926, %v2891
      %2958 = vst.msk [vmem:[#allocation4 + $0x7c] sm:$0xf] %vm2926, %v2893
      %v2959 = vld [vmem:[#allocation3 + $0x1] sm:$0xff]
      %v2960 = vld [vmem:[#allocation3 + $0x9] sm:$0xff]
      %v2961 = vld [vmem:[#allocation3 + $0x19] sm:$0xff]
      %v2962 = vld [vmem:[#allocation3 + $0x21] sm:$0xff]
      %v2963 = vld [vmem:[#allocation3 + $0x31] sm:$0xff]
      %v2964 = vld [vmem:[#allocation3 + $0x39] sm:$0xff]
      %v2965 = vld [vmem:[#allocation3 + $0x49] sm:$0xff]
      %v2966 = vld [vmem:[#allocation3 + $0x51] sm:$0xff]
      %v2967 = vld [vmem:[#allocation3 + $0x61] sm:$0xff]
      %v2968 = vld [vmem:[#allocation3 + $0x69] sm:$0xff]
      %v2969 = vld [vmem:[#allocation3 + $0x79] sm:$0xff]
      %v2970 = vld [vmem:[#allocation3 + $0x81] sm:$0xff]
      %v2971 = vld [vmem:[#allocation3 + $0x91] sm:$0xff]
      %v2972 = vld [vmem:[#allocation3 + $0x99] sm:$0xff]
      %v2973 = vld [vmem:[#allocation3 + $0xa9] sm:$0xff]
      %v2974 = vld [vmem:[#allocation3 + $0xb1] sm:$0xff]
      %v2975 = vld [vmem:[#allocation3 + $0xc1] sm:$0xff]
      %v2976 = vld [vmem:[#allocation3 + $0xc9] sm:$0xff]
      %v2977 = vld [vmem:[#allocation3 + $0xd9] sm:$0xff]
      %v2978 = vld [vmem:[#allocation3 + $0xe1] sm:$0xff]
      %v2979 = vld [vmem:[#allocation3 + $0xf1] sm:$0xff]
      %v2980 = vld [vmem:[#allocation3 + $0xf9] sm:$0xff]
      %v2981 = vld [vmem:[#allocation3 + $0x109] sm:$0xff]
      %v2982 = vld [vmem:[#allocation3 + $0x111] sm:$0xff]
      %v2983 = vld [vmem:[#allocation3 + $0x121] sm:$0xff]
      %v2984 = vld [vmem:[#allocation3 + $0x129] sm:$0xff]
      %v2985 = vld [vmem:[#allocation3 + $0x139] sm:$0xff]
      %v2986 = vld [vmem:[#allocation3 + $0x141] sm:$0xff]
      %v2987 = vld [vmem:[#allocation3 + $0x151] sm:$0xff]
      %v2988 = vld [vmem:[#allocation3 + $0x159] sm:$0xff]
      %v2989 = vld [vmem:[#allocation3 + $0x169] sm:$0xff]
      %v2990 = vld [vmem:[#allocation3 + $0x171] sm:$0xff]
      %v2991 = vpack.c.bf16 %v2959, %v2959
      %v2992 = vpack.c.bf16 %v2960, %v2960
      %v2993 = vpack.c.bf16 %v2961, %v2961
      %v2994 = vpack.c.bf16 %v2962, %v2962
      %v2995 = vpack.c.bf16 %v2963, %v2963
      %v2996 = vpack.c.bf16 %v2964, %v2964
      %v2997 = vpack.c.bf16 %v2965, %v2965
      %v2998 = vpack.c.bf16 %v2966, %v2966
      %v2999 = vpack.c.bf16 %v2967, %v2967
      %v3000 = vpack.c.bf16 %v2968, %v2968
      %v3001 = vpack.c.bf16 %v2969, %v2969
      %v3002 = vpack.c.bf16 %v2970, %v2970
      %v3003 = vpack.c.bf16 %v2971, %v2971
      %v3004 = vpack.c.bf16 %v2972, %v2972
      %v3005 = vpack.c.bf16 %v2973, %v2973
      %v3006 = vpack.c.bf16 %v2974, %v2974
      %v3007 = vpack.c.bf16 %v2975, %v2975
      %v3008 = vpack.c.bf16 %v2976, %v2976
      %v3009 = vpack.c.bf16 %v2977, %v2977
      %v3010 = vpack.c.bf16 %v2978, %v2978
      %v3011 = vpack.c.bf16 %v2979, %v2979
      %v3012 = vpack.c.bf16 %v2980, %v2980
      %v3013 = vpack.c.bf16 %v2981, %v2981
      %v3014 = vpack.c.bf16 %v2982, %v2982
      %v3015 = vpack.c.bf16 %v2983, %v2983
      %v3016 = vpack.c.bf16 %v2984, %v2984
      %v3017 = vpack.c.bf16 %v2985, %v2985
      %v3018 = vpack.c.bf16 %v2986, %v2986
      %v3019 = vpack.c.bf16 %v2987, %v2987
      %v3020 = vpack.c.bf16 %v2988, %v2988
      %v3021 = vpack.c.bf16 %v2989, %v2989
      %v3022 = vpack.c.bf16 %v2990, %v2990
      %3055 = vrot.lane.b32.xlu0 %v2991, 40
      %v3056 = vpop.permute.xlu0 %3055
      %3057 = vrot.lane.b32.xlu0 %v2992, 40
      %v3058 = vpop.permute.xlu0 %3057
      %3059 = vrot.lane.b32.xlu0 %v2993, 40
      %v3060 = vpop.permute.xlu0 %3059
      %3061 = vrot.lane.b32.xlu0 %v2994, 40
      %v3062 = vpop.permute.xlu0 %3061
      %3063 = vrot.lane.b32.xlu0 %v2995, 40
      %v3064 = vpop.permute.xlu0 %3063
      %3065 = vrot.lane.b32.xlu0 %v2996, 40
      %v3066 = vpop.permute.xlu0 %3065
      %3067 = vrot.lane.b32.xlu0 %v2997, 40
      %v3068 = vpop.permute.xlu0 %3067
      %3069 = vrot.lane.b32.xlu0 %v2998, 40
      %v3070 = vpop.permute.xlu0 %3069
      %3071 = vrot.lane.b32.xlu0 %v2999, 40
      %v3072 = vpop.permute.xlu0 %3071
      %3073 = vrot.lane.b32.xlu0 %v3000, 40
      %v3074 = vpop.permute.xlu0 %3073
      %3075 = vrot.lane.b32.xlu0 %v3001, 40
      %v3076 = vpop.permute.xlu0 %3075
      %3077 = vrot.lane.b32.xlu0 %v3002, 40
      %v3078 = vpop.permute.xlu0 %3077
      %3079 = vrot.lane.b32.xlu0 %v3003, 40
      %v3080 = vpop.permute.xlu0 %3079
      %3081 = vrot.lane.b32.xlu0 %v3004, 40
      %v3082 = vpop.permute.xlu0 %3081
      %3083 = vrot.lane.b32.xlu0 %v3005, 40
      %v3084 = vpop.permute.xlu0 %3083
      %3085 = vrot.lane.b32.xlu0 %v3006, 40
      %v3086 = vpop.permute.xlu0 %3085
      %3087 = vrot.lane.b32.xlu0 %v3007, 40
      %v3088 = vpop.permute.xlu0 %3087
      %3089 = vrot.lane.b32.xlu0 %v3008, 40
      %v3090 = vpop.permute.xlu0 %3089
      %3091 = vrot.lane.b32.xlu0 %v3009, 40
      %v3092 = vpop.permute.xlu0 %3091
      %3093 = vrot.lane.b32.xlu0 %v3010, 40
      %v3094 = vpop.permute.xlu0 %3093
      %3095 = vrot.lane.b32.xlu0 %v3011, 40
      %v3096 = vpop.permute.xlu0 %3095
      %3097 = vrot.lane.b32.xlu0 %v3012, 40
      %v3098 = vpop.permute.xlu0 %3097
      %3099 = vrot.lane.b32.xlu0 %v3013, 40
      %v3100 = vpop.permute.xlu0 %3099
      %3101 = vrot.lane.b32.xlu0 %v3014, 40
      %v3102 = vpop.permute.xlu0 %3101
      %3103 = vrot.lane.b32.xlu0 %v3015, 40
      %v3104 = vpop.permute.xlu0 %3103
      %3105 = vrot.lane.b32.xlu0 %v3016, 40
      %v3106 = vpop.permute.xlu0 %3105
      %3107 = vrot.lane.b32.xlu0 %v3017, 40
      %v3108 = vpop.permute.xlu0 %3107
      %3109 = vrot.lane.b32.xlu0 %v3018, 40
      %v3110 = vpop.permute.xlu0 %3109
      %3111 = vrot.lane.b32.xlu0 %v3019, 40
      %v3112 = vpop.permute.xlu0 %3111
      %3113 = vrot.lane.b32.xlu0 %v3020, 40
      %v3114 = vpop.permute.xlu0 %3113
      %3115 = vrot.lane.b32.xlu0 %v3021, 40
      %v3116 = vpop.permute.xlu0 %3115
      %3117 = vrot.lane.b32.xlu0 %v3022, 40
      %v3118 = vpop.permute.xlu0 %3117
      %vm3151 = vcmask 355648
      %3152 = vst.msk [vmem:[#allocation4] sm:$0xf] %vm3151, %v3056
      %3153 = vst.msk [vmem:[#allocation4 + $0x4] sm:$0xf] %vm3151, %v3058
      %3154 = vst.msk [vmem:[#allocation4 + $0x8] sm:$0xf] %vm3151, %v3060
      %3155 = vst.msk [vmem:[#allocation4 + $0xc] sm:$0xf] %vm3151, %v3062
      %3156 = vst.msk [vmem:[#allocation4 + $0x10] sm:$0xf] %vm3151, %v3064
      %3157 = vst.msk [vmem:[#allocation4 + $0x14] sm:$0xf] %vm3151, %v3066
      %3158 = vst.msk [vmem:[#allocation4 + $0x18] sm:$0xf] %vm3151, %v3068
      %3159 = vst.msk [vmem:[#allocation4 + $0x1c] sm:$0xf] %vm3151, %v3070
      %3160 = vst.msk [vmem:[#allocation4 + $0x20] sm:$0xf] %vm3151, %v3072
      %3161 = vst.msk [vmem:[#allocation4 + $0x24] sm:$0xf] %vm3151, %v3074
      %3162 = vst.msk [vmem:[#allocation4 + $0x28] sm:$0xf] %vm3151, %v3076
      %3163 = vst.msk [vmem:[#allocation4 + $0x2c] sm:$0xf] %vm3151, %v3078
      %3164 = vst.msk [vmem:[#allocation4 + $0x30] sm:$0xf] %vm3151, %v3080
      %3165 = vst.msk [vmem:[#allocation4 + $0x34] sm:$0xf] %vm3151, %v3082
      %3166 = vst.msk [vmem:[#allocation4 + $0x38] sm:$0xf] %vm3151, %v3084
      %3167 = vst.msk [vmem:[#allocation4 + $0x3c] sm:$0xf] %vm3151, %v3086
      %3168 = vst.msk [vmem:[#allocation4 + $0x40] sm:$0xf] %vm3151, %v3088
      %3169 = vst.msk [vmem:[#allocation4 + $0x44] sm:$0xf] %vm3151, %v3090
      %3170 = vst.msk [vmem:[#allocation4 + $0x48] sm:$0xf] %vm3151, %v3092
      %3171 = vst.msk [vmem:[#allocation4 + $0x4c] sm:$0xf] %vm3151, %v3094
      %3172 = vst.msk [vmem:[#allocation4 + $0x50] sm:$0xf] %vm3151, %v3096
      %3173 = vst.msk [vmem:[#allocation4 + $0x54] sm:$0xf] %vm3151, %v3098
      %3174 = vst.msk [vmem:[#allocation4 + $0x58] sm:$0xf] %vm3151, %v3100
      %3175 = vst.msk [vmem:[#allocation4 + $0x5c] sm:$0xf] %vm3151, %v3102
      %3176 = vst.msk [vmem:[#allocation4 + $0x60] sm:$0xf] %vm3151, %v3104
      %3177 = vst.msk [vmem:[#allocation4 + $0x64] sm:$0xf] %vm3151, %v3106
      %3178 = vst.msk [vmem:[#allocation4 + $0x68] sm:$0xf] %vm3151, %v3108
      %3179 = vst.msk [vmem:[#allocation4 + $0x6c] sm:$0xf] %vm3151, %v3110
      %3180 = vst.msk [vmem:[#allocation4 + $0x70] sm:$0xf] %vm3151, %v3112
      %3181 = vst.msk [vmem:[#allocation4 + $0x74] sm:$0xf] %vm3151, %v3114
      %3182 = vst.msk [vmem:[#allocation4 + $0x78] sm:$0xf] %vm3151, %v3116
      %3183 = vst.msk [vmem:[#allocation4 + $0x7c] sm:$0xf] %vm3151, %v3118
      %v3184 = vld [vmem:[#allocation3 + $0x2] sm:$0xff]
      %v3185 = vld [vmem:[#allocation3 + $0xa] sm:$0xff]
      %v3186 = vld [vmem:[#allocation3 + $0x1a] sm:$0xff]
      %v3187 = vld [vmem:[#allocation3 + $0x22] sm:$0xff]
      %v3188 = vld [vmem:[#allocation3 + $0x32] sm:$0xff]
      %v3189 = vld [vmem:[#allocation3 + $0x3a] sm:$0xff]
      %v3190 = vld [vmem:[#allocation3 + $0x4a] sm:$0xff]
      %v3191 = vld [vmem:[#allocation3 + $0x52] sm:$0xff]
      %v3192 = vld [vmem:[#allocation3 + $0x62] sm:$0xff]
      %v3193 = vld [vmem:[#allocation3 + $0x6a] sm:$0xff]
      %v3194 = vld [vmem:[#allocation3 + $0x7a] sm:$0xff]
      %v3195 = vld [vmem:[#allocation3 + $0x82] sm:$0xff]
      %v3196 = vld [vmem:[#allocation3 + $0x92] sm:$0xff]
      %v3197 = vld [vmem:[#allocation3 + $0x9a] sm:$0xff]
      %v3198 = vld [vmem:[#allocation3 + $0xaa] sm:$0xff]
      %v3199 = vld [vmem:[#allocation3 + $0xb2] sm:$0xff]
      %v3200 = vld [vmem:[#allocation3 + $0xc2] sm:$0xff]
      %v3201 = vld [vmem:[#allocation3 + $0xca] sm:$0xff]
      %v3202 = vld [vmem:[#allocation3 + $0xda] sm:$0xff]
      %v3203 = vld [vmem:[#allocation3 + $0xe2] sm:$0xff]
      %v3204 = vld [vmem:[#allocation3 + $0xf2] sm:$0xff]
      %v3205 = vld [vmem:[#allocation3 + $0xfa] sm:$0xff]
      %v3206 = vld [vmem:[#allocation3 + $0x10a] sm:$0xff]
      %v3207 = vld [vmem:[#allocation3 + $0x112] sm:$0xff]
      %v3208 = vld [vmem:[#allocation3 + $0x122] sm:$0xff]
      %v3209 = vld [vmem:[#allocation3 + $0x12a] sm:$0xff]
      %v3210 = vld [vmem:[#allocation3 + $0x13a] sm:$0xff]
      %v3211 = vld [vmem:[#allocation3 + $0x142] sm:$0xff]
      %v3212 = vld [vmem:[#allocation3 + $0x152] sm:$0xff]
      %v3213 = vld [vmem:[#allocation3 + $0x15a] sm:$0xff]
      %v3214 = vld [vmem:[#allocation3 + $0x16a] sm:$0xff]
      %v3215 = vld [vmem:[#allocation3 + $0x172] sm:$0xff]
      %v3216 = vpack.c.bf16 %v3184, %v3184
      %v3217 = vpack.c.bf16 %v3185, %v3185
      %v3218 = vpack.c.bf16 %v3186, %v3186
      %v3219 = vpack.c.bf16 %v3187, %v3187
      %v3220 = vpack.c.bf16 %v3188, %v3188
      %v3221 = vpack.c.bf16 %v3189, %v3189
      %v3222 = vpack.c.bf16 %v3190, %v3190
      %v3223 = vpack.c.bf16 %v3191, %v3191
      %v3224 = vpack.c.bf16 %v3192, %v3192
      %v3225 = vpack.c.bf16 %v3193, %v3193
      %v3226 = vpack.c.bf16 %v3194, %v3194
      %v3227 = vpack.c.bf16 %v3195, %v3195
      %v3228 = vpack.c.bf16 %v3196, %v3196
      %v3229 = vpack.c.bf16 %v3197, %v3197
      %v3230 = vpack.c.bf16 %v3198, %v3198
      %v3231 = vpack.c.bf16 %v3199, %v3199
      %v3232 = vpack.c.bf16 %v3200, %v3200
      %v3233 = vpack.c.bf16 %v3201, %v3201
      %v3234 = vpack.c.bf16 %v3202, %v3202
      %v3235 = vpack.c.bf16 %v3203, %v3203
      %v3236 = vpack.c.bf16 %v3204, %v3204
      %v3237 = vpack.c.bf16 %v3205, %v3205
      %v3238 = vpack.c.bf16 %v3206, %v3206
      %v3239 = vpack.c.bf16 %v3207, %v3207
      %v3240 = vpack.c.bf16 %v3208, %v3208
      %v3241 = vpack.c.bf16 %v3209, %v3209
      %v3242 = vpack.c.bf16 %v3210, %v3210
      %v3243 = vpack.c.bf16 %v3211, %v3211
      %v3244 = vpack.c.bf16 %v3212, %v3212
      %v3245 = vpack.c.bf16 %v3213, %v3213
      %v3246 = vpack.c.bf16 %v3214, %v3214
      %v3247 = vpack.c.bf16 %v3215, %v3215
      %3280 = vrot.lane.b32.xlu0 %v3216, 44
      %v3281 = vpop.permute.xlu0 %3280
      %3282 = vrot.lane.b32.xlu0 %v3217, 44
      %v3283 = vpop.permute.xlu0 %3282
      %3284 = vrot.lane.b32.xlu0 %v3218, 44
      %v3285 = vpop.permute.xlu0 %3284
      %3286 = vrot.lane.b32.xlu0 %v3219, 44
      %v3287 = vpop.permute.xlu0 %3286
      %3288 = vrot.lane.b32.xlu0 %v3220, 44
      %v3289 = vpop.permute.xlu0 %3288
      %3290 = vrot.lane.b32.xlu0 %v3221, 44
      %v3291 = vpop.permute.xlu0 %3290
      %3292 = vrot.lane.b32.xlu0 %v3222, 44
      %v3293 = vpop.permute.xlu0 %3292
      %3294 = vrot.lane.b32.xlu0 %v3223, 44
      %v3295 = vpop.permute.xlu0 %3294
      %3296 = vrot.lane.b32.xlu0 %v3224, 44
      %v3297 = vpop.permute.xlu0 %3296
      %3298 = vrot.lane.b32.xlu0 %v3225, 44
      %v3299 = vpop.permute.xlu0 %3298
      %3300 = vrot.lane.b32.xlu0 %v3226, 44
      %v3301 = vpop.permute.xlu0 %3300
      %3302 = vrot.lane.b32.xlu0 %v3227, 44
      %v3303 = vpop.permute.xlu0 %3302
      %3304 = vrot.lane.b32.xlu0 %v3228, 44
      %v3305 = vpop.permute.xlu0 %3304
      %3306 = vrot.lane.b32.xlu0 %v3229, 44
      %v3307 = vpop.permute.xlu0 %3306
      %3308 = vrot.lane.b32.xlu0 %v3230, 44
      %v3309 = vpop.permute.xlu0 %3308
      %3310 = vrot.lane.b32.xlu0 %v3231, 44
      %v3311 = vpop.permute.xlu0 %3310
      %3312 = vrot.lane.b32.xlu0 %v3232, 44
      %v3313 = vpop.permute.xlu0 %3312
      %3314 = vrot.lane.b32.xlu0 %v3233, 44
      %v3315 = vpop.permute.xlu0 %3314
      %3316 = vrot.lane.b32.xlu0 %v3234, 44
      %v3317 = vpop.permute.xlu0 %3316
      %3318 = vrot.lane.b32.xlu0 %v3235, 44
      %v3319 = vpop.permute.xlu0 %3318
      %3320 = vrot.lane.b32.xlu0 %v3236, 44
      %v3321 = vpop.permute.xlu0 %3320
      %3322 = vrot.lane.b32.xlu0 %v3237, 44
      %v3323 = vpop.permute.xlu0 %3322
      %3324 = vrot.lane.b32.xlu0 %v3238, 44
      %v3325 = vpop.permute.xlu0 %3324
      %3326 = vrot.lane.b32.xlu0 %v3239, 44
      %v3327 = vpop.permute.xlu0 %3326
      %3328 = vrot.lane.b32.xlu0 %v3240, 44
      %v3329 = vpop.permute.xlu0 %3328
      %3330 = vrot.lane.b32.xlu0 %v3241, 44
      %v3331 = vpop.permute.xlu0 %3330
      %3332 = vrot.lane.b32.xlu0 %v3242, 44
      %v3333 = vpop.permute.xlu0 %3332
      %3334 = vrot.lane.b32.xlu0 %v3243, 44
      %v3335 = vpop.permute.xlu0 %3334
      %3336 = vrot.lane.b32.xlu0 %v3244, 44
      %v3337 = vpop.permute.xlu0 %3336
      %3338 = vrot.lane.b32.xlu0 %v3245, 44
      %v3339 = vpop.permute.xlu0 %3338
      %3340 = vrot.lane.b32.xlu0 %v3246, 44
      %v3341 = vpop.permute.xlu0 %3340
      %3342 = vrot.lane.b32.xlu0 %v3247, 44
      %v3343 = vpop.permute.xlu0 %3342
      %vm3376 = vcmask 388448
      %3377 = vst.msk [vmem:[#allocation4] sm:$0xf] %vm3376, %v3281
      %3378 = vst.msk [vmem:[#allocation4 + $0x4] sm:$0xf] %vm3376, %v3283
      %3379 = vst.msk [vmem:[#allocation4 + $0x8] sm:$0xf] %vm3376, %v3285
      %3380 = vst.msk [vmem:[#allocation4 + $0xc] sm:$0xf] %vm3376, %v3287
      %3381 = vst.msk [vmem:[#allocation4 + $0x10] sm:$0xf] %vm3376, %v3289
      %3382 = vst.msk [vmem:[#allocation4 + $0x14] sm:$0xf] %vm3376, %v3291
      %3383 = vst.msk [vmem:[#allocation4 + $0x18] sm:$0xf] %vm3376, %v3293
      %3384 = vst.msk [vmem:[#allocation4 + $0x1c] sm:$0xf] %vm3376, %v3295
      %3385 = vst.msk [vmem:[#allocation4 + $0x20] sm:$0xf] %vm3376, %v3297
      %3386 = vst.msk [vmem:[#allocation4 + $0x24] sm:$0xf] %vm3376, %v3299
      %3387 = vst.msk [vmem:[#allocation4 + $0x28] sm:$0xf] %vm3376, %v3301
      %3388 = vst.msk [vmem:[#allocation4 + $0x2c] sm:$0xf] %vm3376, %v3303
      %3389 = vst.msk [vmem:[#allocation4 + $0x30] sm:$0xf] %vm3376, %v3305
      %3390 = vst.msk [vmem:[#allocation4 + $0x34] sm:$0xf] %vm3376, %v3307
      %3391 = vst.msk [vmem:[#allocation4 + $0x38] sm:$0xf] %vm3376, %v3309
      %3392 = vst.msk [vmem:[#allocation4 + $0x3c] sm:$0xf] %vm3376, %v3311
      %3393 = vst.msk [vmem:[#allocation4 + $0x40] sm:$0xf] %vm3376, %v3313
      %3394 = vst.msk [vmem:[#allocation4 + $0x44] sm:$0xf] %vm3376, %v3315
      %3395 = vst.msk [vmem:[#allocation4 + $0x48] sm:$0xf] %vm3376, %v3317
      %3396 = vst.msk [vmem:[#allocation4 + $0x4c] sm:$0xf] %vm3376, %v3319
      %3397 = vst.msk [vmem:[#allocation4 + $0x50] sm:$0xf] %vm3376, %v3321
      %3398 = vst.msk [vmem:[#allocation4 + $0x54] sm:$0xf] %vm3376, %v3323
      %3399 = vst.msk [vmem:[#allocation4 + $0x58] sm:$0xf] %vm3376, %v3325
      %3400 = vst.msk [vmem:[#allocation4 + $0x5c] sm:$0xf] %vm3376, %v3327
      %3401 = vst.msk [vmem:[#allocation4 + $0x60] sm:$0xf] %vm3376, %v3329
      %3402 = vst.msk [vmem:[#allocation4 + $0x64] sm:$0xf] %vm3376, %v3331
      %3403 = vst.msk [vmem:[#allocation4 + $0x68] sm:$0xf] %vm3376, %v3333
      %3404 = vst.msk [vmem:[#allocation4 + $0x6c] sm:$0xf] %vm3376, %v3335
      %3405 = vst.msk [vmem:[#allocation4 + $0x70] sm:$0xf] %vm3376, %v3337
      %3406 = vst.msk [vmem:[#allocation4 + $0x74] sm:$0xf] %vm3376, %v3339
      %3407 = vst.msk [vmem:[#allocation4 + $0x78] sm:$0xf] %vm3376, %v3341
      %3408 = vst.msk [vmem:[#allocation4 + $0x7c] sm:$0xf] %vm3376, %v3343
      %v3409 = vld [vmem:[%s787] sm:$0xff]
      %v3410 = vld [vmem:[%s787 + $0x8] sm:$0xff]
      %v3411 = vld [vmem:[%s787 + $0x18] sm:$0xff]
      %v3412 = vld [vmem:[%s787 + $0x20] sm:$0xff]
      %v3413 = vld [vmem:[%s787 + $0x30] sm:$0xff]
      %v3414 = vld [vmem:[%s787 + $0x38] sm:$0xff]
      %v3415 = vld [vmem:[%s787 + $0x48] sm:$0xff]
      %v3416 = vld [vmem:[%s787 + $0x50] sm:$0xff]
      %v3417 = vld [vmem:[%s787 + $0x60] sm:$0xff]
      %v3418 = vld [vmem:[%s787 + $0x68] sm:$0xff]
      %v3419 = vld [vmem:[%s787 + $0x78] sm:$0xff]
      %v3420 = vld [vmem:[%s787 + $0x80] sm:$0xff]
      %v3421 = vld [vmem:[%s787 + $0x90] sm:$0xff]
      %v3422 = vld [vmem:[%s787 + $0x98] sm:$0xff]
      %v3423 = vld [vmem:[%s787 + $0xa8] sm:$0xff]
      %v3424 = vld [vmem:[%s787 + $0xb0] sm:$0xff]
      %v3425 = vld [vmem:[%s787 + $0xc0] sm:$0xff]
      %v3426 = vld [vmem:[%s787 + $0xc8] sm:$0xff]
      %v3427 = vld [vmem:[%s787 + $0xd8] sm:$0xff]
      %v3428 = vld [vmem:[%s787 + $0xe0] sm:$0xff]
      %v3429 = vld [vmem:[%s787 + $0xf0] sm:$0xff]
      %v3430 = vld [vmem:[%s787 + $0xf8] sm:$0xff]
      %v3431 = vld [vmem:[%s787 + $0x108] sm:$0xff]
      %v3432 = vld [vmem:[%s787 + $0x110] sm:$0xff]
      %v3433 = vld [vmem:[%s787 + $0x120] sm:$0xff]
      %v3434 = vld [vmem:[%s787 + $0x128] sm:$0xff]
      %v3435 = vld [vmem:[%s787 + $0x138] sm:$0xff]
      %v3436 = vld [vmem:[%s787 + $0x140] sm:$0xff]
      %v3437 = vld [vmem:[%s787 + $0x150] sm:$0xff]
      %v3438 = vld [vmem:[%s787 + $0x158] sm:$0xff]
      %v3439 = vld [vmem:[%s787 + $0x168] sm:$0xff]
      %v3440 = vld [vmem:[%s787 + $0x170] sm:$0xff]
      %v3441 = vpack.c.bf16 %v3409, %v3409
      %v3442 = vpack.c.bf16 %v3410, %v3410
      %v3443 = vpack.c.bf16 %v3411, %v3411
      %v3444 = vpack.c.bf16 %v3412, %v3412
      %v3445 = vpack.c.bf16 %v3413, %v3413
      %v3446 = vpack.c.bf16 %v3414, %v3414
      %v3447 = vpack.c.bf16 %v3415, %v3415
      %v3448 = vpack.c.bf16 %v3416, %v3416
      %v3449 = vpack.c.bf16 %v3417, %v3417
      %v3450 = vpack.c.bf16 %v3418, %v3418
      %v3451 = vpack.c.bf16 %v3419, %v3419
      %v3452 = vpack.c.bf16 %v3420, %v3420
      %v3453 = vpack.c.bf16 %v3421, %v3421
      %v3454 = vpack.c.bf16 %v3422, %v3422
      %v3455 = vpack.c.bf16 %v3423, %v3423
      %v3456 = vpack.c.bf16 %v3424, %v3424
      %v3457 = vpack.c.bf16 %v3425, %v3425
      %v3458 = vpack.c.bf16 %v3426, %v3426
      %v3459 = vpack.c.bf16 %v3427, %v3427
      %v3460 = vpack.c.bf16 %v3428, %v3428
      %v3461 = vpack.c.bf16 %v3429, %v3429
      %v3462 = vpack.c.bf16 %v3430, %v3430
      %v3463 = vpack.c.bf16 %v3431, %v3431
      %v3464 = vpack.c.bf16 %v3432, %v3432
      %v3465 = vpack.c.bf16 %v3433, %v3433
      %v3466 = vpack.c.bf16 %v3434, %v3434
      %v3467 = vpack.c.bf16 %v3435, %v3435
      %v3468 = vpack.c.bf16 %v3436, %v3436
      %v3469 = vpack.c.bf16 %v3437, %v3437
      %v3470 = vpack.c.bf16 %v3438, %v3438
      %v3471 = vpack.c.bf16 %v3439, %v3439
      %v3472 = vpack.c.bf16 %v3440, %v3440
      %3505 = vrot.lane.b32.xlu0 %v3441, 48
      %v3506 = vpop.permute.xlu0 %3505
      %3507 = vrot.lane.b32.xlu0 %v3442, 48
      %v3508 = vpop.permute.xlu0 %3507
      %3509 = vrot.lane.b32.xlu0 %v3443, 48
      %v3510 = vpop.permute.xlu0 %3509
      %3511 = vrot.lane.b32.xlu0 %v3444, 48
      %v3512 = vpop.permute.xlu0 %3511
      %3513 = vrot.lane.b32.xlu0 %v3445, 48
      %v3514 = vpop.permute.xlu0 %3513
      %3515 = vrot.lane.b32.xlu0 %v3446, 48
      %v3516 = vpop.permute.xlu0 %3515
      %3517 = vrot.lane.b32.xlu0 %v3447, 48
      %v3518 = vpop.permute.xlu0 %3517
      %3519 = vrot.lane.b32.xlu0 %v3448, 48
      %v3520 = vpop.permute.xlu0 %3519
      %3521 = vrot.lane.b32.xlu0 %v3449, 48
      %v3522 = vpop.permute.xlu0 %3521
      %3523 = vrot.lane.b32.xlu0 %v3450, 48
      %v3524 = vpop.permute.xlu0 %3523
      %3525 = vrot.lane.b32.xlu0 %v3451, 48
      %v3526 = vpop.permute.xlu0 %3525
      %3527 = vrot.lane.b32.xlu0 %v3452, 48
      %v3528 = vpop.permute.xlu0 %3527
      %3529 = vrot.lane.b32.xlu0 %v3453, 48
      %v3530 = vpop.permute.xlu0 %3529
      %3531 = vrot.lane.b32.xlu0 %v3454, 48
      %v3532 = vpop.permute.xlu0 %3531
      %3533 = vrot.lane.b32.xlu0 %v3455, 48
      %v3534 = vpop.permute.xlu0 %3533
      %3535 = vrot.lane.b32.xlu0 %v3456, 48
      %v3536 = vpop.permute.xlu0 %3535
      %3537 = vrot.lane.b32.xlu0 %v3457, 48
      %v3538 = vpop.permute.xlu0 %3537
      %3539 = vrot.lane.b32.xlu0 %v3458, 48
      %v3540 = vpop.permute.xlu0 %3539
      %3541 = vrot.lane.b32.xlu0 %v3459, 48
      %v3542 = vpop.permute.xlu0 %3541
      %3543 = vrot.lane.b32.xlu0 %v3460, 48
      %v3544 = vpop.permute.xlu0 %3543
      %3545 = vrot.lane.b32.xlu0 %v3461, 48
      %v3546 = vpop.permute.xlu0 %3545
      %3547 = vrot.lane.b32.xlu0 %v3462, 48
      %v3548 = vpop.permute.xlu0 %3547
      %3549 = vrot.lane.b32.xlu0 %v3463, 48
      %v3550 = vpop.permute.xlu0 %3549
      %3551 = vrot.lane.b32.xlu0 %v3464, 48
      %v3552 = vpop.permute.xlu0 %3551
      %3553 = vrot.lane.b32.xlu0 %v3465, 48
      %v3554 = vpop.permute.xlu0 %3553
      %3555 = vrot.lane.b32.xlu0 %v3466, 48
      %v3556 = vpop.permute.xlu0 %3555
      %3557 = vrot.lane.b32.xlu0 %v3467, 48
      %v3558 = vpop.permute.xlu0 %3557
      %3559 = vrot.lane.b32.xlu0 %v3468, 48
      %v3560 = vpop.permute.xlu0 %3559
      %3561 = vrot.lane.b32.xlu0 %v3469, 48
      %v3562 = vpop.permute.xlu0 %3561
      %3563 = vrot.lane.b32.xlu0 %v3470, 48
      %v3564 = vpop.permute.xlu0 %3563
      %3565 = vrot.lane.b32.xlu0 %v3471, 48
      %v3566 = vpop.permute.xlu0 %3565
      %3567 = vrot.lane.b32.xlu0 %v3472, 48
      %v3568 = vpop.permute.xlu0 %3567
      %vm3601 = vcmask 421248
      %3602 = vst.msk [vmem:[#allocation4] sm:$0xf] %vm3601, %v3506
      %3603 = vst.msk [vmem:[#allocation4 + $0x4] sm:$0xf] %vm3601, %v3508
      %3604 = vst.msk [vmem:[#allocation4 + $0x8] sm:$0xf] %vm3601, %v3510
      %3605 = vst.msk [vmem:[#allocation4 + $0xc] sm:$0xf] %vm3601, %v3512
      %3606 = vst.msk [vmem:[#allocation4 + $0x10] sm:$0xf] %vm3601, %v3514
      %3607 = vst.msk [vmem:[#allocation4 + $0x14] sm:$0xf] %vm3601, %v3516
      %3608 = vst.msk [vmem:[#allocation4 + $0x18] sm:$0xf] %vm3601, %v3518
      %3609 = vst.msk [vmem:[#allocation4 + $0x1c] sm:$0xf] %vm3601, %v3520
      %3610 = vst.msk [vmem:[#allocation4 + $0x20] sm:$0xf] %vm3601, %v3522
      %3611 = vst.msk [vmem:[#allocation4 + $0x24] sm:$0xf] %vm3601, %v3524
      %3612 = vst.msk [vmem:[#allocation4 + $0x28] sm:$0xf] %vm3601, %v3526
      %3613 = vst.msk [vmem:[#allocation4 + $0x2c] sm:$0xf] %vm3601, %v3528
      %3614 = vst.msk [vmem:[#allocation4 + $0x30] sm:$0xf] %vm3601, %v3530
      %3615 = vst.msk [vmem:[#allocation4 + $0x34] sm:$0xf] %vm3601, %v3532
      %3616 = vst.msk [vmem:[#allocation4 + $0x38] sm:$0xf] %vm3601, %v3534
      %3617 = vst.msk [vmem:[#allocation4 + $0x3c] sm:$0xf] %vm3601, %v3536
      %3618 = vst.msk [vmem:[#allocation4 + $0x40] sm:$0xf] %vm3601, %v3538
      %3619 = vst.msk [vmem:[#allocation4 + $0x44] sm:$0xf] %vm3601, %v3540
      %3620 = vst.msk [vmem:[#allocation4 + $0x48] sm:$0xf] %vm3601, %v3542
      %3621 = vst.msk [vmem:[#allocation4 + $0x4c] sm:$0xf] %vm3601, %v3544
      %3622 = vst.msk [vmem:[#allocation4 + $0x50] sm:$0xf] %vm3601, %v3546
      %3623 = vst.msk [vmem:[#allocation4 + $0x54] sm:$0xf] %vm3601, %v3548
      %3624 = vst.msk [vmem:[#allocation4 + $0x58] sm:$0xf] %vm3601, %v3550
      %3625 = vst.msk [vmem:[#allocation4 + $0x5c] sm:$0xf] %vm3601, %v3552
      %3626 = vst.msk [vmem:[#allocation4 + $0x60] sm:$0xf] %vm3601, %v3554
      %3627 = vst.msk [vmem:[#allocation4 + $0x64] sm:$0xf] %vm3601, %v3556
      %3628 = vst.msk [vmem:[#allocation4 + $0x68] sm:$0xf] %vm3601, %v3558
      %3629 = vst.msk [vmem:[#allocation4 + $0x6c] sm:$0xf] %vm3601, %v3560
      %3630 = vst.msk [vmem:[#allocation4 + $0x70] sm:$0xf] %vm3601, %v3562
      %3631 = vst.msk [vmem:[#allocation4 + $0x74] sm:$0xf] %vm3601, %v3564
      %3632 = vst.msk [vmem:[#allocation4 + $0x78] sm:$0xf] %vm3601, %v3566
      %3633 = vst.msk [vmem:[#allocation4 + $0x7c] sm:$0xf] %vm3601, %v3568
      %v3634 = vld [vmem:[%s787 + $0x1] sm:$0xff]
      %v3635 = vld [vmem:[%s787 + $0x9] sm:$0xff]
      %v3636 = vld [vmem:[%s787 + $0x19] sm:$0xff]
      %v3637 = vld [vmem:[%s787 + $0x21] sm:$0xff]
      %v3638 = vld [vmem:[%s787 + $0x31] sm:$0xff]
      %v3639 = vld [vmem:[%s787 + $0x39] sm:$0xff]
      %v3640 = vld [vmem:[%s787 + $0x49] sm:$0xff]
      %v3641 = vld [vmem:[%s787 + $0x51] sm:$0xff]
      %v3642 = vld [vmem:[%s787 + $0x61] sm:$0xff]
      %v3643 = vld [vmem:[%s787 + $0x69] sm:$0xff]
      %v3644 = vld [vmem:[%s787 + $0x79] sm:$0xff]
      %v3645 = vld [vmem:[%s787 + $0x81] sm:$0xff]
      %v3646 = vld [vmem:[%s787 + $0x91] sm:$0xff]
      %v3647 = vld [vmem:[%s787 + $0x99] sm:$0xff]
      %v3648 = vld [vmem:[%s787 + $0xa9] sm:$0xff]
      %v3649 = vld [vmem:[%s787 + $0xb1] sm:$0xff]
      %v3650 = vld [vmem:[%s787 + $0xc1] sm:$0xff]
      %v3651 = vld [vmem:[%s787 + $0xc9] sm:$0xff]
      %v3652 = vld [vmem:[%s787 + $0xd9] sm:$0xff]
      %v3653 = vld [vmem:[%s787 + $0xe1] sm:$0xff]
      %v3654 = vld [vmem:[%s787 + $0xf1] sm:$0xff]
      %v3655 = vld [vmem:[%s787 + $0xf9] sm:$0xff]
      %v3656 = vld [vmem:[%s787 + $0x109] sm:$0xff]
      %v3657 = vld [vmem:[%s787 + $0x111] sm:$0xff]
      %v3658 = vld [vmem:[%s787 + $0x121] sm:$0xff]
      %v3659 = vld [vmem:[%s787 + $0x129] sm:$0xff]
      %v3660 = vld [vmem:[%s787 + $0x139] sm:$0xff]
      %v3661 = vld [vmem:[%s787 + $0x141] sm:$0xff]
      %v3662 = vld [vmem:[%s787 + $0x151] sm:$0xff]
      %v3663 = vld [vmem:[%s787 + $0x159] sm:$0xff]
      %v3664 = vld [vmem:[%s787 + $0x169] sm:$0xff]
      %v3665 = vld [vmem:[%s787 + $0x171] sm:$0xff]
      %v3666 = vpack.c.bf16 %v3634, %v3634
      %v3667 = vpack.c.bf16 %v3635, %v3635
      %v3668 = vpack.c.bf16 %v3636, %v3636
      %v3669 = vpack.c.bf16 %v3637, %v3637
      %v3670 = vpack.c.bf16 %v3638, %v3638
      %v3671 = vpack.c.bf16 %v3639, %v3639
      %v3672 = vpack.c.bf16 %v3640, %v3640
      %v3673 = vpack.c.bf16 %v3641, %v3641
      %v3674 = vpack.c.bf16 %v3642, %v3642
      %v3675 = vpack.c.bf16 %v3643, %v3643
      %v3676 = vpack.c.bf16 %v3644, %v3644
      %v3677 = vpack.c.bf16 %v3645, %v3645
      %v3678 = vpack.c.bf16 %v3646, %v3646
      %v3679 = vpack.c.bf16 %v3647, %v3647
      %v3680 = vpack.c.bf16 %v3648, %v3648
      %v3681 = vpack.c.bf16 %v3649, %v3649
      %v3682 = vpack.c.bf16 %v3650, %v3650
      %v3683 = vpack.c.bf16 %v3651, %v3651
      %v3684 = vpack.c.bf16 %v3652, %v3652
      %v3685 = vpack.c.bf16 %v3653, %v3653
      %v3686 = vpack.c.bf16 %v3654, %v3654
      %v3687 = vpack.c.bf16 %v3655, %v3655
      %v3688 = vpack.c.bf16 %v3656, %v3656
      %v3689 = vpack.c.bf16 %v3657, %v3657
      %v3690 = vpack.c.bf16 %v3658, %v3658
      %v3691 = vpack.c.bf16 %v3659, %v3659
      %v3692 = vpack.c.bf16 %v3660, %v3660
      %v3693 = vpack.c.bf16 %v3661, %v3661
      %v3694 = vpack.c.bf16 %v3662, %v3662
      %v3695 = vpack.c.bf16 %v3663, %v3663
      %v3696 = vpack.c.bf16 %v3664, %v3664
      %v3697 = vpack.c.bf16 %v3665, %v3665
      %3730 = vrot.lane.b32.xlu0 %v3666, 52
      %v3731 = vpop.permute.xlu0 %3730
      %3732 = vrot.lane.b32.xlu0 %v3667, 52
      %v3733 = vpop.permute.xlu0 %3732
      %3734 = vrot.lane.b32.xlu0 %v3668, 52
      %v3735 = vpop.permute.xlu0 %3734
      %3736 = vrot.lane.b32.xlu0 %v3669, 52
      %v3737 = vpop.permute.xlu0 %3736
      %3738 = vrot.lane.b32.xlu0 %v3670, 52
      %v3739 = vpop.permute.xlu0 %3738
      %3740 = vrot.lane.b32.xlu0 %v3671, 52
      %v3741 = vpop.permute.xlu0 %3740
      %3742 = vrot.lane.b32.xlu0 %v3672, 52
      %v3743 = vpop.permute.xlu0 %3742
      %3744 = vrot.lane.b32.xlu0 %v3673, 52
      %v3745 = vpop.permute.xlu0 %3744
      %3746 = vrot.lane.b32.xlu0 %v3674, 52
      %v3747 = vpop.permute.xlu0 %3746
      %3748 = vrot.lane.b32.xlu0 %v3675, 52
      %v3749 = vpop.permute.xlu0 %3748
      %3750 = vrot.lane.b32.xlu0 %v3676, 52
      %v3751 = vpop.permute.xlu0 %3750
      %3752 = vrot.lane.b32.xlu0 %v3677, 52
      %v3753 = vpop.permute.xlu0 %3752
      %3754 = vrot.lane.b32.xlu0 %v3678, 52
      %v3755 = vpop.permute.xlu0 %3754
      %3756 = vrot.lane.b32.xlu0 %v3679, 52
      %v3757 = vpop.permute.xlu0 %3756
      %3758 = vrot.lane.b32.xlu0 %v3680, 52
      %v3759 = vpop.permute.xlu0 %3758
      %3760 = vrot.lane.b32.xlu0 %v3681, 52
      %v3761 = vpop.permute.xlu0 %3760
      %3762 = vrot.lane.b32.xlu0 %v3682, 52
      %v3763 = vpop.permute.xlu0 %3762
      %3764 = vrot.lane.b32.xlu0 %v3683, 52
      %v3765 = vpop.permute.xlu0 %3764
      %3766 = vrot.lane.b32.xlu0 %v3684, 52
      %v3767 = vpop.permute.xlu0 %3766
      %3768 = vrot.lane.b32.xlu0 %v3685, 52
      %v3769 = vpop.permute.xlu0 %3768
      %3770 = vrot.lane.b32.xlu0 %v3686, 52
      %v3771 = vpop.permute.xlu0 %3770
      %3772 = vrot.lane.b32.xlu0 %v3687, 52
      %v3773 = vpop.permute.xlu0 %3772
      %3774 = vrot.lane.b32.xlu0 %v3688, 52
      %v3775 = vpop.permute.xlu0 %3774
      %3776 = vrot.lane.b32.xlu0 %v3689, 52
      %v3777 = vpop.permute.xlu0 %3776
      %3778 = vrot.lane.b32.xlu0 %v3690, 52
      %v3779 = vpop.permute.xlu0 %3778
      %3780 = vrot.lane.b32.xlu0 %v3691, 52
      %v3781 = vpop.permute.xlu0 %3780
      %3782 = vrot.lane.b32.xlu0 %v3692, 52
      %v3783 = vpop.permute.xlu0 %3782
      %3784 = vrot.lane.b32.xlu0 %v3693, 52
      %v3785 = vpop.permute.xlu0 %3784
      %3786 = vrot.lane.b32.xlu0 %v3694, 52
      %v3787 = vpop.permute.xlu0 %3786
      %3788 = vrot.lane.b32.xlu0 %v3695, 52
      %v3789 = vpop.permute.xlu0 %3788
      %3790 = vrot.lane.b32.xlu0 %v3696, 52
      %v3791 = vpop.permute.xlu0 %3790
      %3792 = vrot.lane.b32.xlu0 %v3697, 52
      %v3793 = vpop.permute.xlu0 %3792
      %vm3826 = vcmask 454048
      %3827 = vst.msk [vmem:[#allocation4] sm:$0xf] %vm3826, %v3731
      %3828 = vst.msk [vmem:[#allocation4 + $0x4] sm:$0xf] %vm3826, %v3733
      %3829 = vst.msk [vmem:[#allocation4 + $0x8] sm:$0xf] %vm3826, %v3735
      %3830 = vst.msk [vmem:[#allocation4 + $0xc] sm:$0xf] %vm3826, %v3737
      %3831 = vst.msk [vmem:[#allocation4 + $0x10] sm:$0xf] %vm3826, %v3739
      %3832 = vst.msk [vmem:[#allocation4 + $0x14] sm:$0xf] %vm3826, %v3741
      %3833 = vst.msk [vmem:[#allocation4 + $0x18] sm:$0xf] %vm3826, %v3743
      %3834 = vst.msk [vmem:[#allocation4 + $0x1c] sm:$0xf] %vm3826, %v3745
      %3835 = vst.msk [vmem:[#allocation4 + $0x20] sm:$0xf] %vm3826, %v3747
      %3836 = vst.msk [vmem:[#allocation4 + $0x24] sm:$0xf] %vm3826, %v3749
      %3837 = vst.msk [vmem:[#allocation4 + $0x28] sm:$0xf] %vm3826, %v3751
      %3838 = vst.msk [vmem:[#allocation4 + $0x2c] sm:$0xf] %vm3826, %v3753
      %3839 = vst.msk [vmem:[#allocation4 + $0x30] sm:$0xf] %vm3826, %v3755
      %3840 = vst.msk [vmem:[#allocation4 + $0x34] sm:$0xf] %vm3826, %v3757
      %3841 = vst.msk [vmem:[#allocation4 + $0x38] sm:$0xf] %vm3826, %v3759
      %3842 = vst.msk [vmem:[#allocation4 + $0x3c] sm:$0xf] %vm3826, %v3761
      %3843 = vst.msk [vmem:[#allocation4 + $0x40] sm:$0xf] %vm3826, %v3763
      %3844 = vst.msk [vmem:[#allocation4 + $0x44] sm:$0xf] %vm3826, %v3765
      %3845 = vst.msk [vmem:[#allocation4 + $0x48] sm:$0xf] %vm3826, %v3767
      %3846 = vst.msk [vmem:[#allocation4 + $0x4c] sm:$0xf] %vm3826, %v3769
      %3847 = vst.msk [vmem:[#allocation4 + $0x50] sm:$0xf] %vm3826, %v3771
      %3848 = vst.msk [vmem:[#allocation4 + $0x54] sm:$0xf] %vm3826, %v3773
      %3849 = vst.msk [vmem:[#allocation4 + $0x58] sm:$0xf] %vm3826, %v3775
      %3850 = vst.msk [vmem:[#allocation4 + $0x5c] sm:$0xf] %vm3826, %v3777
      %3851 = vst.msk [vmem:[#allocation4 + $0x60] sm:$0xf] %vm3826, %v3779
      %3852 = vst.msk [vmem:[#allocation4 + $0x64] sm:$0xf] %vm3826, %v3781
      %3853 = vst.msk [vmem:[#allocation4 + $0x68] sm:$0xf] %vm3826, %v3783
      %3854 = vst.msk [vmem:[#allocation4 + $0x6c] sm:$0xf] %vm3826, %v3785
      %3855 = vst.msk [vmem:[#allocation4 + $0x70] sm:$0xf] %vm3826, %v3787
      %3856 = vst.msk [vmem:[#allocation4 + $0x74] sm:$0xf] %vm3826, %v3789
      %3857 = vst.msk [vmem:[#allocation4 + $0x78] sm:$0xf] %vm3826, %v3791
      %3858 = vst.msk [vmem:[#allocation4 + $0x7c] sm:$0xf] %vm3826, %v3793
      %v3859 = vld [vmem:[%s787 + $0x2] sm:$0xff]
      %v3860 = vld [vmem:[%s787 + $0xa] sm:$0xff]
      %v3861 = vld [vmem:[%s787 + $0x1a] sm:$0xff]
      %v3862 = vld [vmem:[%s787 + $0x22] sm:$0xff]
      %v3863 = vld [vmem:[%s787 + $0x32] sm:$0xff]
      %v3864 = vld [vmem:[%s787 + $0x3a] sm:$0xff]
      %v3865 = vld [vmem:[%s787 + $0x4a] sm:$0xff]
      %v3866 = vld [vmem:[%s787 + $0x52] sm:$0xff]
      %v3867 = vld [vmem:[%s787 + $0x62] sm:$0xff]
      %v3868 = vld [vmem:[%s787 + $0x6a] sm:$0xff]
      %v3869 = vld [vmem:[%s787 + $0x7a] sm:$0xff]
      %v3870 = vld [vmem:[%s787 + $0x82] sm:$0xff]
      %v3871 = vld [vmem:[%s787 + $0x92] sm:$0xff]
      %v3872 = vld [vmem:[%s787 + $0x9a] sm:$0xff]
      %v3873 = vld [vmem:[%s787 + $0xaa] sm:$0xff]
      %v3874 = vld [vmem:[%s787 + $0xb2] sm:$0xff]
      %v3875 = vld [vmem:[%s787 + $0xc2] sm:$0xff]
      %v3876 = vld [vmem:[%s787 + $0xca] sm:$0xff]
      %v3877 = vld [vmem:[%s787 + $0xda] sm:$0xff]
      %v3878 = vld [vmem:[%s787 + $0xe2] sm:$0xff]
      %v3879 = vld [vmem:[%s787 + $0xf2] sm:$0xff]
      %v3880 = vld [vmem:[%s787 + $0xfa] sm:$0xff]
      %v3881 = vld [vmem:[%s787 + $0x10a] sm:$0xff]
      %v3882 = vld [vmem:[%s787 + $0x112] sm:$0xff]
      %v3883 = vld [vmem:[%s787 + $0x122] sm:$0xff]
      %v3884 = vld [vmem:[%s787 + $0x12a] sm:$0xff]
      %v3885 = vld [vmem:[%s787 + $0x13a] sm:$0xff]
      %v3886 = vld [vmem:[%s787 + $0x142] sm:$0xff]
      %v3887 = vld [vmem:[%s787 + $0x152] sm:$0xff]
      %v3888 = vld [vmem:[%s787 + $0x15a] sm:$0xff]
      %v3889 = vld [vmem:[%s787 + $0x16a] sm:$0xff]
      %v3890 = vld [vmem:[%s787 + $0x172] sm:$0xff]
      %v3891 = vpack.c.bf16 %v3859, %v3859
      %v3892 = vpack.c.bf16 %v3860, %v3860
      %v3893 = vpack.c.bf16 %v3861, %v3861
      %v3894 = vpack.c.bf16 %v3862, %v3862
      %v3895 = vpack.c.bf16 %v3863, %v3863
      %v3896 = vpack.c.bf16 %v3864, %v3864
      %v3897 = vpack.c.bf16 %v3865, %v3865
      %v3898 = vpack.c.bf16 %v3866, %v3866
      %v3899 = vpack.c.bf16 %v3867, %v3867
      %v3900 = vpack.c.bf16 %v3868, %v3868
      %v3901 = vpack.c.bf16 %v3869, %v3869
      %v3902 = vpack.c.bf16 %v3870, %v3870
      %v3903 = vpack.c.bf16 %v3871, %v3871
      %v3904 = vpack.c.bf16 %v3872, %v3872
      %v3905 = vpack.c.bf16 %v3873, %v3873
      %v3906 = vpack.c.bf16 %v3874, %v3874
      %v3907 = vpack.c.bf16 %v3875, %v3875
      %v3908 = vpack.c.bf16 %v3876, %v3876
      %v3909 = vpack.c.bf16 %v3877, %v3877
      %v3910 = vpack.c.bf16 %v3878, %v3878
      %v3911 = vpack.c.bf16 %v3879, %v3879
      %v3912 = vpack.c.bf16 %v3880, %v3880
      %v3913 = vpack.c.bf16 %v3881, %v3881
      %v3914 = vpack.c.bf16 %v3882, %v3882
      %v3915 = vpack.c.bf16 %v3883, %v3883
      %v3916 = vpack.c.bf16 %v3884, %v3884
      %v3917 = vpack.c.bf16 %v3885, %v3885
      %v3918 = vpack.c.bf16 %v3886, %v3886
      %v3919 = vpack.c.bf16 %v3887, %v3887
      %v3920 = vpack.c.bf16 %v3888, %v3888
      %v3921 = vpack.c.bf16 %v3889, %v3889
      %v3922 = vpack.c.bf16 %v3890, %v3890
      %3955 = vrot.lane.b32.xlu0 %v3891, 56
      %v3956 = vpop.permute.xlu0 %3955
      %3957 = vrot.lane.b32.xlu0 %v3892, 56
      %v3958 = vpop.permute.xlu0 %3957
      %3959 = vrot.lane.b32.xlu0 %v3893, 56
      %v3960 = vpop.permute.xlu0 %3959
      %3961 = vrot.lane.b32.xlu0 %v3894, 56
      %v3962 = vpop.permute.xlu0 %3961
      %3963 = vrot.lane.b32.xlu0 %v3895, 56
      %v3964 = vpop.permute.xlu0 %3963
      %3965 = vrot.lane.b32.xlu0 %v3896, 56
      %v3966 = vpop.permute.xlu0 %3965
      %3967 = vrot.lane.b32.xlu0 %v3897, 56
      %v3968 = vpop.permute.xlu0 %3967
      %3969 = vrot.lane.b32.xlu0 %v3898, 56
      %v3970 = vpop.permute.xlu0 %3969
      %3971 = vrot.lane.b32.xlu0 %v3899, 56
      %v3972 = vpop.permute.xlu0 %3971
      %3973 = vrot.lane.b32.xlu0 %v3900, 56
      %v3974 = vpop.permute.xlu0 %3973
      %3975 = vrot.lane.b32.xlu0 %v3901, 56
      %v3976 = vpop.permute.xlu0 %3975
      %3977 = vrot.lane.b32.xlu0 %v3902, 56
      %v3978 = vpop.permute.xlu0 %3977
      %3979 = vrot.lane.b32.xlu0 %v3903, 56
      %v3980 = vpop.permute.xlu0 %3979
      %3981 = vrot.lane.b32.xlu0 %v3904, 56
      %v3982 = vpop.permute.xlu0 %3981
      %3983 = vrot.lane.b32.xlu0 %v3905, 56
      %v3984 = vpop.permute.xlu0 %3983
      %3985 = vrot.lane.b32.xlu0 %v3906, 56
      %v3986 = vpop.permute.xlu0 %3985
      %3987 = vrot.lane.b32.xlu0 %v3907, 56
      %v3988 = vpop.permute.xlu0 %3987
      %3989 = vrot.lane.b32.xlu0 %v3908, 56
      %v3990 = vpop.permute.xlu0 %3989
      %3991 = vrot.lane.b32.xlu0 %v3909, 56
      %v3992 = vpop.permute.xlu0 %3991
      %3993 = vrot.lane.b32.xlu0 %v3910, 56
      %v3994 = vpop.permute.xlu0 %3993
      %3995 = vrot.lane.b32.xlu0 %v3911, 56
      %v3996 = vpop.permute.xlu0 %3995
      %3997 = vrot.lane.b32.xlu0 %v3912, 56
      %v3998 = vpop.permute.xlu0 %3997
      %3999 = vrot.lane.b32.xlu0 %v3913, 56
      %v4000 = vpop.permute.xlu0 %3999
      %4001 = vrot.lane.b32.xlu0 %v3914, 56
      %v4002 = vpop.permute.xlu0 %4001
      %4003 = vrot.lane.b32.xlu0 %v3915, 56
      %v4004 = vpop.permute.xlu0 %4003
      %4005 = vrot.lane.b32.xlu0 %v3916, 56
      %v4006 = vpop.permute.xlu0 %4005
      %4007 = vrot.lane.b32.xlu0 %v3917, 56
      %v4008 = vpop.permute.xlu0 %4007
      %4009 = vrot.lane.b32.xlu0 %v3918, 56
      %v4010 = vpop.permute.xlu0 %4009
      %4011 = vrot.lane.b32.xlu0 %v3919, 56
      %v4012 = vpop.permute.xlu0 %4011
      %4013 = vrot.lane.b32.xlu0 %v3920, 56
      %v4014 = vpop.permute.xlu0 %4013
      %4015 = vrot.lane.b32.xlu0 %v3921, 56
      %v4016 = vpop.permute.xlu0 %4015
      %4017 = vrot.lane.b32.xlu0 %v3922, 56
      %v4018 = vpop.permute.xlu0 %4017
      %vm4051 = vcmask 486848
      %4052 = vst.msk [vmem:[#allocation4] sm:$0xf] %vm4051, %v3956
      %4053 = vst.msk [vmem:[#allocation4 + $0x4] sm:$0xf] %vm4051, %v3958
      %4054 = vst.msk [vmem:[#allocation4 + $0x8] sm:$0xf] %vm4051, %v3960
      %4055 = vst.msk [vmem:[#allocation4 + $0xc] sm:$0xf] %vm4051, %v3962
      %4056 = vst.msk [vmem:[#allocation4 + $0x10] sm:$0xf] %vm4051, %v3964
      %4057 = vst.msk [vmem:[#allocation4 + $0x14] sm:$0xf] %vm4051, %v3966
      %4058 = vst.msk [vmem:[#allocation4 + $0x18] sm:$0xf] %vm4051, %v3968
      %4059 = vst.msk [vmem:[#allocation4 + $0x1c] sm:$0xf] %vm4051, %v3970
      %4060 = vst.msk [vmem:[#allocation4 + $0x20] sm:$0xf] %vm4051, %v3972
      %4061 = vst.msk [vmem:[#allocation4 + $0x24] sm:$0xf] %vm4051, %v3974
      %4062 = vst.msk [vmem:[#allocation4 + $0x28] sm:$0xf] %vm4051, %v3976
      %4063 = vst.msk [vmem:[#allocation4 + $0x2c] sm:$0xf] %vm4051, %v3978
      %4064 = vst.msk [vmem:[#allocation4 + $0x30] sm:$0xf] %vm4051, %v3980
      %4065 = vst.msk [vmem:[#allocation4 + $0x34] sm:$0xf] %vm4051, %v3982
      %4066 = vst.msk [vmem:[#allocation4 + $0x38] sm:$0xf] %vm4051, %v3984
      %4067 = vst.msk [vmem:[#allocation4 + $0x3c] sm:$0xf] %vm4051, %v3986
      %4068 = vst.msk [vmem:[#allocation4 + $0x40] sm:$0xf] %vm4051, %v3988
      %4069 = vst.msk [vmem:[#allocation4 + $0x44] sm:$0xf] %vm4051, %v3990
      %4070 = vst.msk [vmem:[#allocation4 + $0x48] sm:$0xf] %vm4051, %v3992
      %4071 = vst.msk [vmem:[#allocation4 + $0x4c] sm:$0xf] %vm4051, %v3994
      %4072 = vst.msk [vmem:[#allocation4 + $0x50] sm:$0xf] %vm4051, %v3996
      %4073 = vst.msk [vmem:[#allocation4 + $0x54] sm:$0xf] %vm4051, %v3998
      %4074 = vst.msk [vmem:[#allocation4 + $0x58] sm:$0xf] %vm4051, %v4000
      %4075 = vst.msk [vmem:[#allocation4 + $0x5c] sm:$0xf] %vm4051, %v4002
      %4076 = vst.msk [vmem:[#allocation4 + $0x60] sm:$0xf] %vm4051, %v4004
      %4077 = vst.msk [vmem:[#allocation4 + $0x64] sm:$0xf] %vm4051, %v4006
      %4078 = vst.msk [vmem:[#allocation4 + $0x68] sm:$0xf] %vm4051, %v4008
      %4079 = vst.msk [vmem:[#allocation4 + $0x6c] sm:$0xf] %vm4051, %v4010
      %4080 = vst.msk [vmem:[#allocation4 + $0x70] sm:$0xf] %vm4051, %v4012
      %4081 = vst.msk [vmem:[#allocation4 + $0x74] sm:$0xf] %vm4051, %v4014
      %4082 = vst.msk [vmem:[#allocation4 + $0x78] sm:$0xf] %vm4051, %v4016
      %4083 = vst.msk [vmem:[#allocation4 + $0x7c] sm:$0xf] %vm4051, %v4018
      %s4084 = scalar_lea.vmem [#allocation3], 48
      %v4085 = vld [vmem:[%s4084] sm:$0xff]
      %v4086 = vld [vmem:[%s4084 + $0x8] sm:$0xff]
      %v4087 = vld [vmem:[%s4084 + $0x18] sm:$0xff]
      %v4088 = vld [vmem:[%s4084 + $0x20] sm:$0xff]
      %v4089 = vld [vmem:[%s4084 + $0x30] sm:$0xff]
      %v4090 = vld [vmem:[%s4084 + $0x38] sm:$0xff]
      %v4091 = vld [vmem:[%s4084 + $0x48] sm:$0xff]
      %v4092 = vld [vmem:[%s4084 + $0x50] sm:$0xff]
      %v4093 = vld [vmem:[%s4084 + $0x60] sm:$0xff]
      %v4094 = vld [vmem:[%s4084 + $0x68] sm:$0xff]
      %v4095 = vld [vmem:[%s4084 + $0x78] sm:$0xff]
      %v4096 = vld [vmem:[%s4084 + $0x80] sm:$0xff]
      %v4097 = vld [vmem:[%s4084 + $0x90] sm:$0xff]
      %v4098 = vld [vmem:[%s4084 + $0x98] sm:$0xff]
      %v4099 = vld [vmem:[%s4084 + $0xa8] sm:$0xff]
      %v4100 = vld [vmem:[%s4084 + $0xb0] sm:$0xff]
      %v4101 = vld [vmem:[%s4084 + $0xc0] sm:$0xff]
      %v4102 = vld [vmem:[%s4084 + $0xc8] sm:$0xff]
      %v4103 = vld [vmem:[%s4084 + $0xd8] sm:$0xff]
      %v4104 = vld [vmem:[%s4084 + $0xe0] sm:$0xff]
      %v4105 = vld [vmem:[%s4084 + $0xf0] sm:$0xff]
      %v4106 = vld [vmem:[%s4084 + $0xf8] sm:$0xff]
      %v4107 = vld [vmem:[%s4084 + $0x108] sm:$0xff]
      %v4108 = vld [vmem:[%s4084 + $0x110] sm:$0xff]
      %v4109 = vld [vmem:[%s4084 + $0x120] sm:$0xff]
      %v4110 = vld [vmem:[%s4084 + $0x128] sm:$0xff]
      %v4111 = vld [vmem:[%s4084 + $0x138] sm:$0xff]
      %v4112 = vld [vmem:[%s4084 + $0x140] sm:$0xff]
      %v4113 = vld [vmem:[%s4084 + $0x150] sm:$0xff]
      %v4114 = vld [vmem:[%s4084 + $0x158] sm:$0xff]
      %v4115 = vld [vmem:[%s4084 + $0x168] sm:$0xff]
      %v4116 = vld [vmem:[%s4084 + $0x170] sm:$0xff]
      %v4117 = vpack.c.bf16 %v4085, %v4085
      %v4118 = vpack.c.bf16 %v4086, %v4086
      %v4119 = vpack.c.bf16 %v4087, %v4087
      %v4120 = vpack.c.bf16 %v4088, %v4088
      %v4121 = vpack.c.bf16 %v4089, %v4089
      %v4122 = vpack.c.bf16 %v4090, %v4090
      %v4123 = vpack.c.bf16 %v4091, %v4091
      %v4124 = vpack.c.bf16 %v4092, %v4092
      %v4125 = vpack.c.bf16 %v4093, %v4093
      %v4126 = vpack.c.bf16 %v4094, %v4094
      %v4127 = vpack.c.bf16 %v4095, %v4095
      %v4128 = vpack.c.bf16 %v4096, %v4096
      %v4129 = vpack.c.bf16 %v4097, %v4097
      %v4130 = vpack.c.bf16 %v4098, %v4098
      %v4131 = vpack.c.bf16 %v4099, %v4099
      %v4132 = vpack.c.bf16 %v4100, %v4100
      %v4133 = vpack.c.bf16 %v4101, %v4101
      %v4134 = vpack.c.bf16 %v4102, %v4102
      %v4135 = vpack.c.bf16 %v4103, %v4103
      %v4136 = vpack.c.bf16 %v4104, %v4104
      %v4137 = vpack.c.bf16 %v4105, %v4105
      %v4138 = vpack.c.bf16 %v4106, %v4106
      %v4139 = vpack.c.bf16 %v4107, %v4107
      %v4140 = vpack.c.bf16 %v4108, %v4108
      %v4141 = vpack.c.bf16 %v4109, %v4109
      %v4142 = vpack.c.bf16 %v4110, %v4110
      %v4143 = vpack.c.bf16 %v4111, %v4111
      %v4144 = vpack.c.bf16 %v4112, %v4112
      %v4145 = vpack.c.bf16 %v4113, %v4113
      %v4146 = vpack.c.bf16 %v4114, %v4114
      %v4147 = vpack.c.bf16 %v4115, %v4115
      %v4148 = vpack.c.bf16 %v4116, %v4116
      %4181 = vrot.lane.b32.xlu0 %v4117, 60
      %v4182 = vpop.permute.xlu0 %4181
      %4183 = vrot.lane.b32.xlu0 %v4118, 60
      %v4184 = vpop.permute.xlu0 %4183
      %4185 = vrot.lane.b32.xlu0 %v4119, 60
      %v4186 = vpop.permute.xlu0 %4185
      %4187 = vrot.lane.b32.xlu0 %v4120, 60
      %v4188 = vpop.permute.xlu0 %4187
      %4189 = vrot.lane.b32.xlu0 %v4121, 60
      %v4190 = vpop.permute.xlu0 %4189
      %4191 = vrot.lane.b32.xlu0 %v4122, 60
      %v4192 = vpop.permute.xlu0 %4191
      %4193 = vrot.lane.b32.xlu0 %v4123, 60
      %v4194 = vpop.permute.xlu0 %4193
      %4195 = vrot.lane.b32.xlu0 %v4124, 60
      %v4196 = vpop.permute.xlu0 %4195
      %4197 = vrot.lane.b32.xlu0 %v4125, 60
      %v4198 = vpop.permute.xlu0 %4197
      %4199 = vrot.lane.b32.xlu0 %v4126, 60
      %v4200 = vpop.permute.xlu0 %4199
      %4201 = vrot.lane.b32.xlu0 %v4127, 60
      %v4202 = vpop.permute.xlu0 %4201
      %4203 = vrot.lane.b32.xlu0 %v4128, 60
      %v4204 = vpop.permute.xlu0 %4203
      %4205 = vrot.lane.b32.xlu0 %v4129, 60
      %v4206 = vpop.permute.xlu0 %4205
      %4207 = vrot.lane.b32.xlu0 %v4130, 60
      %v4208 = vpop.permute.xlu0 %4207
      %4209 = vrot.lane.b32.xlu0 %v4131, 60
      %v4210 = vpop.permute.xlu0 %4209
      %4211 = vrot.lane.b32.xlu0 %v4132, 60
      %v4212 = vpop.permute.xlu0 %4211
      %4213 = vrot.lane.b32.xlu0 %v4133, 60
      %v4214 = vpop.permute.xlu0 %4213
      %4215 = vrot.lane.b32.xlu0 %v4134, 60
      %v4216 = vpop.permute.xlu0 %4215
      %4217 = vrot.lane.b32.xlu0 %v4135, 60
      %v4218 = vpop.permute.xlu0 %4217
      %4219 = vrot.lane.b32.xlu0 %v4136, 60
      %v4220 = vpop.permute.xlu0 %4219
      %4221 = vrot.lane.b32.xlu0 %v4137, 60
      %v4222 = vpop.permute.xlu0 %4221
      %4223 = vrot.lane.b32.xlu0 %v4138, 60
      %v4224 = vpop.permute.xlu0 %4223
      %4225 = vrot.lane.b32.xlu0 %v4139, 60
      %v4226 = vpop.permute.xlu0 %4225
      %4227 = vrot.lane.b32.xlu0 %v4140, 60
      %v4228 = vpop.permute.xlu0 %4227
      %4229 = vrot.lane.b32.xlu0 %v4141, 60
      %v4230 = vpop.permute.xlu0 %4229
      %4231 = vrot.lane.b32.xlu0 %v4142, 60
      %v4232 = vpop.permute.xlu0 %4231
      %4233 = vrot.lane.b32.xlu0 %v4143, 60
      %v4234 = vpop.permute.xlu0 %4233
      %4235 = vrot.lane.b32.xlu0 %v4144, 60
      %v4236 = vpop.permute.xlu0 %4235
      %4237 = vrot.lane.b32.xlu0 %v4145, 60
      %v4238 = vpop.permute.xlu0 %4237
      %4239 = vrot.lane.b32.xlu0 %v4146, 60
      %v4240 = vpop.permute.xlu0 %4239
      %4241 = vrot.lane.b32.xlu0 %v4147, 60
      %v4242 = vpop.permute.xlu0 %4241
      %4243 = vrot.lane.b32.xlu0 %v4148, 60
      %v4244 = vpop.permute.xlu0 %4243
      %vm4277 = vcmask 519648
      %4278 = vst.msk [vmem:[#allocation4] sm:$0xf] %vm4277, %v4182
      %4279 = vst.msk [vmem:[#allocation4 + $0x4] sm:$0xf] %vm4277, %v4184
      %4280 = vst.msk [vmem:[#allocation4 + $0x8] sm:$0xf] %vm4277, %v4186
      %4281 = vst.msk [vmem:[#allocation4 + $0xc] sm:$0xf] %vm4277, %v4188
      %4282 = vst.msk [vmem:[#allocation4 + $0x10] sm:$0xf] %vm4277, %v4190
      %4283 = vst.msk [vmem:[#allocation4 + $0x14] sm:$0xf] %vm4277, %v4192
      %4284 = vst.msk [vmem:[#allocation4 + $0x18] sm:$0xf] %vm4277, %v4194
      %4285 = vst.msk [vmem:[#allocation4 + $0x1c] sm:$0xf] %vm4277, %v4196
      %4286 = vst.msk [vmem:[#allocation4 + $0x20] sm:$0xf] %vm4277, %v4198
      %4287 = vst.msk [vmem:[#allocation4 + $0x24] sm:$0xf] %vm4277, %v4200
      %4288 = vst.msk [vmem:[#allocation4 + $0x28] sm:$0xf] %vm4277, %v4202
      %4289 = vst.msk [vmem:[#allocation4 + $0x2c] sm:$0xf] %vm4277, %v4204
      %4290 = vst.msk [vmem:[#allocation4 + $0x30] sm:$0xf] %vm4277, %v4206
      %4291 = vst.msk [vmem:[#allocation4 + $0x34] sm:$0xf] %vm4277, %v4208
      %4292 = vst.msk [vmem:[#allocation4 + $0x38] sm:$0xf] %vm4277, %v4210
      %4293 = vst.msk [vmem:[#allocation4 + $0x3c] sm:$0xf] %vm4277, %v4212
      %4294 = vst.msk [vmem:[#allocation4 + $0x40] sm:$0xf] %vm4277, %v4214
      %4295 = vst.msk [vmem:[#allocation4 + $0x44] sm:$0xf] %vm4277, %v4216
      %4296 = vst.msk [vmem:[#allocation4 + $0x48] sm:$0xf] %vm4277, %v4218
      %4297 = vst.msk [vmem:[#allocation4 + $0x4c] sm:$0xf] %vm4277, %v4220
      %4298 = vst.msk [vmem:[#allocation4 + $0x50] sm:$0xf] %vm4277, %v4222
      %4299 = vst.msk [vmem:[#allocation4 + $0x54] sm:$0xf] %vm4277, %v4224
      %4300 = vst.msk [vmem:[#allocation4 + $0x58] sm:$0xf] %vm4277, %v4226
      %4301 = vst.msk [vmem:[#allocation4 + $0x5c] sm:$0xf] %vm4277, %v4228
      %4302 = vst.msk [vmem:[#allocation4 + $0x60] sm:$0xf] %vm4277, %v4230
      %4303 = vst.msk [vmem:[#allocation4 + $0x64] sm:$0xf] %vm4277, %v4232
      %4304 = vst.msk [vmem:[#allocation4 + $0x68] sm:$0xf] %vm4277, %v4234
      %4305 = vst.msk [vmem:[#allocation4 + $0x6c] sm:$0xf] %vm4277, %v4236
      %4306 = vst.msk [vmem:[#allocation4 + $0x70] sm:$0xf] %vm4277, %v4238
      %4307 = vst.msk [vmem:[#allocation4 + $0x74] sm:$0xf] %vm4277, %v4240
      %4308 = vst.msk [vmem:[#allocation4 + $0x78] sm:$0xf] %vm4277, %v4242
      %4309 = vst.msk [vmem:[#allocation4 + $0x7c] sm:$0xf] %vm4277, %v4244
      %v4310 = vld [vmem:[%s4084 + $0x1] sm:$0xff]
      %v4311 = vld [vmem:[%s4084 + $0x9] sm:$0xff]
      %v4312 = vld [vmem:[%s4084 + $0x19] sm:$0xff]
      %v4313 = vld [vmem:[%s4084 + $0x21] sm:$0xff]
      %v4314 = vld [vmem:[%s4084 + $0x31] sm:$0xff]
      %v4315 = vld [vmem:[%s4084 + $0x39] sm:$0xff]
      %v4316 = vld [vmem:[%s4084 + $0x49] sm:$0xff]
      %v4317 = vld [vmem:[%s4084 + $0x51] sm:$0xff]
      %v4318 = vld [vmem:[%s4084 + $0x61] sm:$0xff]
      %v4319 = vld [vmem:[%s4084 + $0x69] sm:$0xff]
      %v4320 = vld [vmem:[%s4084 + $0x79] sm:$0xff]
      %v4321 = vld [vmem:[%s4084 + $0x81] sm:$0xff]
      %v4322 = vld [vmem:[%s4084 + $0x91] sm:$0xff]
      %v4323 = vld [vmem:[%s4084 + $0x99] sm:$0xff]
      %v4324 = vld [vmem:[%s4084 + $0xa9] sm:$0xff]
      %v4325 = vld [vmem:[%s4084 + $0xb1] sm:$0xff]
      %v4326 = vld [vmem:[%s4084 + $0xc1] sm:$0xff]
      %v4327 = vld [vmem:[%s4084 + $0xc9] sm:$0xff]
      %v4328 = vld [vmem:[%s4084 + $0xd9] sm:$0xff]
      %v4329 = vld [vmem:[%s4084 + $0xe1] sm:$0xff]
      %v4330 = vld [vmem:[%s4084 + $0xf1] sm:$0xff]
      %v4331 = vld [vmem:[%s4084 + $0xf9] sm:$0xff]
      %v4332 = vld [vmem:[%s4084 + $0x109] sm:$0xff]
      %v4333 = vld [vmem:[%s4084 + $0x111] sm:$0xff]
      %v4334 = vld [vmem:[%s4084 + $0x121] sm:$0xff]
      %v4335 = vld [vmem:[%s4084 + $0x129] sm:$0xff]
      %v4336 = vld [vmem:[%s4084 + $0x139] sm:$0xff]
      %v4337 = vld [vmem:[%s4084 + $0x141] sm:$0xff]
      %v4338 = vld [vmem:[%s4084 + $0x151] sm:$0xff]
      %v4339 = vld [vmem:[%s4084 + $0x159] sm:$0xff]
      %v4340 = vld [vmem:[%s4084 + $0x169] sm:$0xff]
      %v4341 = vld [vmem:[%s4084 + $0x171] sm:$0xff]
      %v4342 = vpack.c.bf16 %v4310, %v4310
      %v4343 = vpack.c.bf16 %v4311, %v4311
      %v4344 = vpack.c.bf16 %v4312, %v4312
      %v4345 = vpack.c.bf16 %v4313, %v4313
      %v4346 = vpack.c.bf16 %v4314, %v4314
      %v4347 = vpack.c.bf16 %v4315, %v4315
      %v4348 = vpack.c.bf16 %v4316, %v4316
      %v4349 = vpack.c.bf16 %v4317, %v4317
      %v4350 = vpack.c.bf16 %v4318, %v4318
      %v4351 = vpack.c.bf16 %v4319, %v4319
      %v4352 = vpack.c.bf16 %v4320, %v4320
      %v4353 = vpack.c.bf16 %v4321, %v4321
      %v4354 = vpack.c.bf16 %v4322, %v4322
      %v4355 = vpack.c.bf16 %v4323, %v4323
      %v4356 = vpack.c.bf16 %v4324, %v4324
      %v4357 = vpack.c.bf16 %v4325, %v4325
      %v4358 = vpack.c.bf16 %v4326, %v4326
      %v4359 = vpack.c.bf16 %v4327, %v4327
      %v4360 = vpack.c.bf16 %v4328, %v4328
      %v4361 = vpack.c.bf16 %v4329, %v4329
      %v4362 = vpack.c.bf16 %v4330, %v4330
      %v4363 = vpack.c.bf16 %v4331, %v4331
      %v4364 = vpack.c.bf16 %v4332, %v4332
      %v4365 = vpack.c.bf16 %v4333, %v4333
      %v4366 = vpack.c.bf16 %v4334, %v4334
      %v4367 = vpack.c.bf16 %v4335, %v4335
      %v4368 = vpack.c.bf16 %v4336, %v4336
      %v4369 = vpack.c.bf16 %v4337, %v4337
      %v4370 = vpack.c.bf16 %v4338, %v4338
      %v4371 = vpack.c.bf16 %v4339, %v4339
      %v4372 = vpack.c.bf16 %v4340, %v4340
      %v4373 = vpack.c.bf16 %v4341, %v4341
      %4406 = vrot.lane.b32.xlu0 %v4342, 64
      %v4407 = vpop.permute.xlu0 %4406
      %4408 = vrot.lane.b32.xlu0 %v4343, 64
      %v4409 = vpop.permute.xlu0 %4408
      %4410 = vrot.lane.b32.xlu0 %v4344, 64
      %v4411 = vpop.permute.xlu0 %4410
      %4412 = vrot.lane.b32.xlu0 %v4345, 64
      %v4413 = vpop.permute.xlu0 %4412
      %4414 = vrot.lane.b32.xlu0 %v4346, 64
      %v4415 = vpop.permute.xlu0 %4414
      %4416 = vrot.lane.b32.xlu0 %v4347, 64
      %v4417 = vpop.permute.xlu0 %4416
      %4418 = vrot.lane.b32.xlu0 %v4348, 64
      %v4419 = vpop.permute.xlu0 %4418
      %4420 = vrot.lane.b32.xlu0 %v4349, 64
      %v4421 = vpop.permute.xlu0 %4420
      %4422 = vrot.lane.b32.xlu0 %v4350, 64
      %v4423 = vpop.permute.xlu0 %4422
      %4424 = vrot.lane.b32.xlu0 %v4351, 64
      %v4425 = vpop.permute.xlu0 %4424
      %4426 = vrot.lane.b32.xlu0 %v4352, 64
      %v4427 = vpop.permute.xlu0 %4426
      %4428 = vrot.lane.b32.xlu0 %v4353, 64
      %v4429 = vpop.permute.xlu0 %4428
      %4430 = vrot.lane.b32.xlu0 %v4354, 64
      %v4431 = vpop.permute.xlu0 %4430
      %4432 = vrot.lane.b32.xlu0 %v4355, 64
      %v4433 = vpop.permute.xlu0 %4432
      %4434 = vrot.lane.b32.xlu0 %v4356, 64
      %v4435 = vpop.permute.xlu0 %4434
      %4436 = vrot.lane.b32.xlu0 %v4357, 64
      %v4437 = vpop.permute.xlu0 %4436
      %4438 = vrot.lane.b32.xlu0 %v4358, 64
      %v4439 = vpop.permute.xlu0 %4438
      %4440 = vrot.lane.b32.xlu0 %v4359, 64
      %v4441 = vpop.permute.xlu0 %4440
      %4442 = vrot.lane.b32.xlu0 %v4360, 64
      %v4443 = vpop.permute.xlu0 %4442
      %4444 = vrot.lane.b32.xlu0 %v4361, 64
      %v4445 = vpop.permute.xlu0 %4444
      %4446 = vrot.lane.b32.xlu0 %v4362, 64
      %v4447 = vpop.permute.xlu0 %4446
      %4448 = vrot.lane.b32.xlu0 %v4363, 64
      %v4449 = vpop.permute.xlu0 %4448
      %4450 = vrot.lane.b32.xlu0 %v4364, 64
      %v4451 = vpop.permute.xlu0 %4450
      %4452 = vrot.lane.b32.xlu0 %v4365, 64
      %v4453 = vpop.permute.xlu0 %4452
      %4454 = vrot.lane.b32.xlu0 %v4366, 64
      %v4455 = vpop.permute.xlu0 %4454
      %4456 = vrot.lane.b32.xlu0 %v4367, 64
      %v4457 = vpop.permute.xlu0 %4456
      %4458 = vrot.lane.b32.xlu0 %v4368, 64
      %v4459 = vpop.permute.xlu0 %4458
      %4460 = vrot.lane.b32.xlu0 %v4369, 64
      %v4461 = vpop.permute.xlu0 %4460
      %4462 = vrot.lane.b32.xlu0 %v4370, 64
      %v4463 = vpop.permute.xlu0 %4462
      %4464 = vrot.lane.b32.xlu0 %v4371, 64
      %v4465 = vpop.permute.xlu0 %4464
      %4466 = vrot.lane.b32.xlu0 %v4372, 64
      %v4467 = vpop.permute.xlu0 %4466
      %4468 = vrot.lane.b32.xlu0 %v4373, 64
      %v4469 = vpop.permute.xlu0 %4468
      %vm4502 = vcmask 552448
      %4503 = vst.msk [vmem:[#allocation4] sm:$0xf] %vm4502, %v4407
      %4504 = vst.msk [vmem:[#allocation4 + $0x4] sm:$0xf] %vm4502, %v4409
      %4505 = vst.msk [vmem:[#allocation4 + $0x8] sm:$0xf] %vm4502, %v4411
      %4506 = vst.msk [vmem:[#allocation4 + $0xc] sm:$0xf] %vm4502, %v4413
      %4507 = vst.msk [vmem:[#allocation4 + $0x10] sm:$0xf] %vm4502, %v4415
      %4508 = vst.msk [vmem:[#allocation4 + $0x14] sm:$0xf] %vm4502, %v4417
      %4509 = vst.msk [vmem:[#allocation4 + $0x18] sm:$0xf] %vm4502, %v4419
      %4510 = vst.msk [vmem:[#allocation4 + $0x1c] sm:$0xf] %vm4502, %v4421
      %4511 = vst.msk [vmem:[#allocation4 + $0x20] sm:$0xf] %vm4502, %v4423
      %4512 = vst.msk [vmem:[#allocation4 + $0x24] sm:$0xf] %vm4502, %v4425
      %4513 = vst.msk [vmem:[#allocation4 + $0x28] sm:$0xf] %vm4502, %v4427
      %4514 = vst.msk [vmem:[#allocation4 + $0x2c] sm:$0xf] %vm4502, %v4429
      %4515 = vst.msk [vmem:[#allocation4 + $0x30] sm:$0xf] %vm4502, %v4431
      %4516 = vst.msk [vmem:[#allocation4 + $0x34] sm:$0xf] %vm4502, %v4433
      %4517 = vst.msk [vmem:[#allocation4 + $0x38] sm:$0xf] %vm4502, %v4435
      %4518 = vst.msk [vmem:[#allocation4 + $0x3c] sm:$0xf] %vm4502, %v4437
      %4519 = vst.msk [vmem:[#allocation4 + $0x40] sm:$0xf] %vm4502, %v4439
      %4520 = vst.msk [vmem:[#allocation4 + $0x44] sm:$0xf] %vm4502, %v4441
      %4521 = vst.msk [vmem:[#allocation4 + $0x48] sm:$0xf] %vm4502, %v4443
      %4522 = vst.msk [vmem:[#allocation4 + $0x4c] sm:$0xf] %vm4502, %v4445
      %4523 = vst.msk [vmem:[#allocation4 + $0x50] sm:$0xf] %vm4502, %v4447
      %4524 = vst.msk [vmem:[#allocation4 + $0x54] sm:$0xf] %vm4502, %v4449
      %4525 = vst.msk [vmem:[#allocation4 + $0x58] sm:$0xf] %vm4502, %v4451
      %4526 = vst.msk [vmem:[#allocation4 + $0x5c] sm:$0xf] %vm4502, %v4453
      %4527 = vst.msk [vmem:[#allocation4 + $0x60] sm:$0xf] %vm4502, %v4455
      %4528 = vst.msk [vmem:[#allocation4 + $0x64] sm:$0xf] %vm4502, %v4457
      %4529 = vst.msk [vmem:[#allocation4 + $0x68] sm:$0xf] %vm4502, %v4459
      %4530 = vst.msk [vmem:[#allocation4 + $0x6c] sm:$0xf] %vm4502, %v4461
      %4531 = vst.msk [vmem:[#allocation4 + $0x70] sm:$0xf] %vm4502, %v4463
      %4532 = vst.msk [vmem:[#allocation4 + $0x74] sm:$0xf] %vm4502, %v4465
      %4533 = vst.msk [vmem:[#allocation4 + $0x78] sm:$0xf] %vm4502, %v4467
      %4534 = vst.msk [vmem:[#allocation4 + $0x7c] sm:$0xf] %vm4502, %v4469
      %v4535 = vld [vmem:[%s4084 + $0x2] sm:$0xff]
      %v4536 = vld [vmem:[%s4084 + $0xa] sm:$0xff]
      %v4537 = vld [vmem:[%s4084 + $0x1a] sm:$0xff]
      %v4538 = vld [vmem:[%s4084 + $0x22] sm:$0xff]
      %v4539 = vld [vmem:[%s4084 + $0x32] sm:$0xff]
      %v4540 = vld [vmem:[%s4084 + $0x3a] sm:$0xff]
      %v4541 = vld [vmem:[%s4084 + $0x4a] sm:$0xff]
      %v4542 = vld [vmem:[%s4084 + $0x52] sm:$0xff]
      %v4543 = vld [vmem:[%s4084 + $0x62] sm:$0xff]
      %v4544 = vld [vmem:[%s4084 + $0x6a] sm:$0xff]
      %v4545 = vld [vmem:[%s4084 + $0x7a] sm:$0xff]
      %v4546 = vld [vmem:[%s4084 + $0x82] sm:$0xff]
      %v4547 = vld [vmem:[%s4084 + $0x92] sm:$0xff]
      %v4548 = vld [vmem:[%s4084 + $0x9a] sm:$0xff]
      %v4549 = vld [vmem:[%s4084 + $0xaa] sm:$0xff]
      %v4550 = vld [vmem:[%s4084 + $0xb2] sm:$0xff]
      %v4551 = vld [vmem:[%s4084 + $0xc2] sm:$0xff]
      %v4552 = vld [vmem:[%s4084 + $0xca] sm:$0xff]
      %v4553 = vld [vmem:[%s4084 + $0xda] sm:$0xff]
      %v4554 = vld [vmem:[%s4084 + $0xe2] sm:$0xff]
      %v4555 = vld [vmem:[%s4084 + $0xf2] sm:$0xff]
      %v4556 = vld [vmem:[%s4084 + $0xfa] sm:$0xff]
      %v4557 = vld [vmem:[%s4084 + $0x10a] sm:$0xff]
      %v4558 = vld [vmem:[%s4084 + $0x112] sm:$0xff]
      %v4559 = vld [vmem:[%s4084 + $0x122] sm:$0xff]
      %v4560 = vld [vmem:[%s4084 + $0x12a] sm:$0xff]
      %v4561 = vld [vmem:[%s4084 + $0x13a] sm:$0xff]
      %v4562 = vld [vmem:[%s4084 + $0x142] sm:$0xff]
      %v4563 = vld [vmem:[%s4084 + $0x152] sm:$0xff]
      %v4564 = vld [vmem:[%s4084 + $0x15a] sm:$0xff]
      %v4565 = vld [vmem:[%s4084 + $0x16a] sm:$0xff]
      %v4566 = vld [vmem:[%s4084 + $0x172] sm:$0xff]
      %v4567 = vpack.c.bf16 %v4535, %v4535
      %v4568 = vpack.c.bf16 %v4536, %v4536
      %v4569 = vpack.c.bf16 %v4537, %v4537
      %v4570 = vpack.c.bf16 %v4538, %v4538
      %v4571 = vpack.c.bf16 %v4539, %v4539
      %v4572 = vpack.c.bf16 %v4540, %v4540
      %v4573 = vpack.c.bf16 %v4541, %v4541
      %v4574 = vpack.c.bf16 %v4542, %v4542
      %v4575 = vpack.c.bf16 %v4543, %v4543
      %v4576 = vpack.c.bf16 %v4544, %v4544
      %v4577 = vpack.c.bf16 %v4545, %v4545
      %v4578 = vpack.c.bf16 %v4546, %v4546
      %v4579 = vpack.c.bf16 %v4547, %v4547
      %v4580 = vpack.c.bf16 %v4548, %v4548
      %v4581 = vpack.c.bf16 %v4549, %v4549
      %v4582 = vpack.c.bf16 %v4550, %v4550
      %v4583 = vpack.c.bf16 %v4551, %v4551
      %v4584 = vpack.c.bf16 %v4552, %v4552
      %v4585 = vpack.c.bf16 %v4553, %v4553
      %v4586 = vpack.c.bf16 %v4554, %v4554
      %v4587 = vpack.c.bf16 %v4555, %v4555
      %v4588 = vpack.c.bf16 %v4556, %v4556
      %v4589 = vpack.c.bf16 %v4557, %v4557
      %v4590 = vpack.c.bf16 %v4558, %v4558
      %v4591 = vpack.c.bf16 %v4559, %v4559
      %v4592 = vpack.c.bf16 %v4560, %v4560
      %v4593 = vpack.c.bf16 %v4561, %v4561
      %v4594 = vpack.c.bf16 %v4562, %v4562
      %v4595 = vpack.c.bf16 %v4563, %v4563
      %v4596 = vpack.c.bf16 %v4564, %v4564
      %v4597 = vpack.c.bf16 %v4565, %v4565
      %v4598 = vpack.c.bf16 %v4566, %v4566
      %4631 = vrot.lane.b32.xlu0 %v4567, 68
      %v4632 = vpop.permute.xlu0 %4631
      %4633 = vrot.lane.b32.xlu0 %v4568, 68
      %v4634 = vpop.permute.xlu0 %4633
      %4635 = vrot.lane.b32.xlu0 %v4569, 68
      %v4636 = vpop.permute.xlu0 %4635
      %4637 = vrot.lane.b32.xlu0 %v4570, 68
      %v4638 = vpop.permute.xlu0 %4637
      %4639 = vrot.lane.b32.xlu0 %v4571, 68
      %v4640 = vpop.permute.xlu0 %4639
      %4641 = vrot.lane.b32.xlu0 %v4572, 68
      %v4642 = vpop.permute.xlu0 %4641
      %4643 = vrot.lane.b32.xlu0 %v4573, 68
      %v4644 = vpop.permute.xlu0 %4643
      %4645 = vrot.lane.b32.xlu0 %v4574, 68
      %v4646 = vpop.permute.xlu0 %4645
      %4647 = vrot.lane.b32.xlu0 %v4575, 68
      %v4648 = vpop.permute.xlu0 %4647
      %4649 = vrot.lane.b32.xlu0 %v4576, 68
      %v4650 = vpop.permute.xlu0 %4649
      %4651 = vrot.lane.b32.xlu0 %v4577, 68
      %v4652 = vpop.permute.xlu0 %4651
      %4653 = vrot.lane.b32.xlu0 %v4578, 68
      %v4654 = vpop.permute.xlu0 %4653
      %4655 = vrot.lane.b32.xlu0 %v4579, 68
      %v4656 = vpop.permute.xlu0 %4655
      %4657 = vrot.lane.b32.xlu0 %v4580, 68
      %v4658 = vpop.permute.xlu0 %4657
      %4659 = vrot.lane.b32.xlu0 %v4581, 68
      %v4660 = vpop.permute.xlu0 %4659
      %4661 = vrot.lane.b32.xlu0 %v4582, 68
      %v4662 = vpop.permute.xlu0 %4661
      %4663 = vrot.lane.b32.xlu0 %v4583, 68
      %v4664 = vpop.permute.xlu0 %4663
      %4665 = vrot.lane.b32.xlu0 %v4584, 68
      %v4666 = vpop.permute.xlu0 %4665
      %4667 = vrot.lane.b32.xlu0 %v4585, 68
      %v4668 = vpop.permute.xlu0 %4667
      %4669 = vrot.lane.b32.xlu0 %v4586, 68
      %v4670 = vpop.permute.xlu0 %4669
      %4671 = vrot.lane.b32.xlu0 %v4587, 68
      %v4672 = vpop.permute.xlu0 %4671
      %4673 = vrot.lane.b32.xlu0 %v4588, 68
      %v4674 = vpop.permute.xlu0 %4673
      %4675 = vrot.lane.b32.xlu0 %v4589, 68
      %v4676 = vpop.permute.xlu0 %4675
      %4677 = vrot.lane.b32.xlu0 %v4590, 68
      %v4678 = vpop.permute.xlu0 %4677
      %4679 = vrot.lane.b32.xlu0 %v4591, 68
      %v4680 = vpop.permute.xlu0 %4679
      %4681 = vrot.lane.b32.xlu0 %v4592, 68
      %v4682 = vpop.permute.xlu0 %4681
      %4683 = vrot.lane.b32.xlu0 %v4593, 68
      %v4684 = vpop.permute.xlu0 %4683
      %4685 = vrot.lane.b32.xlu0 %v4594, 68
      %v4686 = vpop.permute.xlu0 %4685
      %4687 = vrot.lane.b32.xlu0 %v4595, 68
      %v4688 = vpop.permute.xlu0 %4687
      %4689 = vrot.lane.b32.xlu0 %v4596, 68
      %v4690 = vpop.permute.xlu0 %4689
      %4691 = vrot.lane.b32.xlu0 %v4597, 68
      %v4692 = vpop.permute.xlu0 %4691
      %4693 = vrot.lane.b32.xlu0 %v4598, 68
      %v4694 = vpop.permute.xlu0 %4693
      %vm4727 = vcmask 585248
      %4728 = vst.msk [vmem:[#allocation4] sm:$0xf] %vm4727, %v4632
      %4729 = vst.msk [vmem:[#allocation4 + $0x4] sm:$0xf] %vm4727, %v4634
      %4730 = vst.msk [vmem:[#allocation4 + $0x8] sm:$0xf] %vm4727, %v4636
      %4731 = vst.msk [vmem:[#allocation4 + $0xc] sm:$0xf] %vm4727, %v4638
      %4732 = vst.msk [vmem:[#allocation4 + $0x10] sm:$0xf] %vm4727, %v4640
      %4733 = vst.msk [vmem:[#allocation4 + $0x14] sm:$0xf] %vm4727, %v4642
      %4734 = vst.msk [vmem:[#allocation4 + $0x18] sm:$0xf] %vm4727, %v4644
      %4735 = vst.msk [vmem:[#allocation4 + $0x1c] sm:$0xf] %vm4727, %v4646
      %4736 = vst.msk [vmem:[#allocation4 + $0x20] sm:$0xf] %vm4727, %v4648
      %4737 = vst.msk [vmem:[#allocation4 + $0x24] sm:$0xf] %vm4727, %v4650
      %4738 = vst.msk [vmem:[#allocation4 + $0x28] sm:$0xf] %vm4727, %v4652
      %4739 = vst.msk [vmem:[#allocation4 + $0x2c] sm:$0xf] %vm4727, %v4654
      %4740 = vst.msk [vmem:[#allocation4 + $0x30] sm:$0xf] %vm4727, %v4656
      %4741 = vst.msk [vmem:[#allocation4 + $0x34] sm:$0xf] %vm4727, %v4658
      %4742 = vst.msk [vmem:[#allocation4 + $0x38] sm:$0xf] %vm4727, %v4660
      %4743 = vst.msk [vmem:[#allocation4 + $0x3c] sm:$0xf] %vm4727, %v4662
      %4744 = vst.msk [vmem:[#allocation4 + $0x40] sm:$0xf] %vm4727, %v4664
      %4745 = vst.msk [vmem:[#allocation4 + $0x44] sm:$0xf] %vm4727, %v4666
      %4746 = vst.msk [vmem:[#allocation4 + $0x48] sm:$0xf] %vm4727, %v4668
      %4747 = vst.msk [vmem:[#allocation4 + $0x4c] sm:$0xf] %vm4727, %v4670
      %4748 = vst.msk [vmem:[#allocation4 + $0x50] sm:$0xf] %vm4727, %v4672
      %4749 = vst.msk [vmem:[#allocation4 + $0x54] sm:$0xf] %vm4727, %v4674
      %4750 = vst.msk [vmem:[#allocation4 + $0x58] sm:$0xf] %vm4727, %v4676
      %4751 = vst.msk [vmem:[#allocation4 + $0x5c] sm:$0xf] %vm4727, %v4678
      %4752 = vst.msk [vmem:[#allocation4 + $0x60] sm:$0xf] %vm4727, %v4680
      %4753 = vst.msk [vmem:[#allocation4 + $0x64] sm:$0xf] %vm4727, %v4682
      %4754 = vst.msk [vmem:[#allocation4 + $0x68] sm:$0xf] %vm4727, %v4684
      %4755 = vst.msk [vmem:[#allocation4 + $0x6c] sm:$0xf] %vm4727, %v4686
      %4756 = vst.msk [vmem:[#allocation4 + $0x70] sm:$0xf] %vm4727, %v4688
      %4757 = vst.msk [vmem:[#allocation4 + $0x74] sm:$0xf] %vm4727, %v4690
      %4758 = vst.msk [vmem:[#allocation4 + $0x78] sm:$0xf] %vm4727, %v4692
      %4759 = vst.msk [vmem:[#allocation4 + $0x7c] sm:$0xf] %vm4727, %v4694
      %v4760 = vld [vmem:[#allocation4] sm:$0xf]
      %v4761 = vld [vmem:[#allocation4 + $0x4] sm:$0xf]
      %v4762 = vld [vmem:[#allocation4 + $0x8] sm:$0xf]
      %v4763 = vld [vmem:[#allocation4 + $0xc] sm:$0xf]
      %v4764 = vld [vmem:[#allocation4 + $0x10] sm:$0xf]
      %v4765 = vld [vmem:[#allocation4 + $0x14] sm:$0xf]
      %v4766 = vld [vmem:[#allocation4 + $0x18] sm:$0xf]
      %v4767 = vld [vmem:[#allocation4 + $0x1c] sm:$0xf]
      %v4768 = vld [vmem:[#allocation4 + $0x20] sm:$0xf]
      %v4769 = vld [vmem:[#allocation4 + $0x24] sm:$0xf]
      %v4770 = vld [vmem:[#allocation4 + $0x28] sm:$0xf]
      %v4771 = vld [vmem:[#allocation4 + $0x2c] sm:$0xf]
      %v4772 = vld [vmem:[#allocation4 + $0x30] sm:$0xf]
      %v4773 = vld [vmem:[#allocation4 + $0x34] sm:$0xf]
      %v4774 = vld [vmem:[#allocation4 + $0x38] sm:$0xf]
      %v4775 = vld [vmem:[#allocation4 + $0x3c] sm:$0xf]
      %v4776 = vld [vmem:[#allocation4 + $0x40] sm:$0xf]
      %v4777 = vld [vmem:[#allocation4 + $0x44] sm:$0xf]
      %v4778 = vld [vmem:[#allocation4 + $0x48] sm:$0xf]
      %v4779 = vld [vmem:[#allocation4 + $0x4c] sm:$0xf]
      %v4780 = vld [vmem:[#allocation4 + $0x50] sm:$0xf]
      %v4781 = vld [vmem:[#allocation4 + $0x54] sm:$0xf]
      %v4782 = vld [vmem:[#allocation4 + $0x58] sm:$0xf]
      %v4783 = vld [vmem:[#allocation4 + $0x5c] sm:$0xf]
      %v4784 = vld [vmem:[#allocation4 + $0x60] sm:$0xf]
      %v4785 = vld [vmem:[#allocation4 + $0x64] sm:$0xf]
      %v4786 = vld [vmem:[#allocation4 + $0x68] sm:$0xf]
      %v4787 = vld [vmem:[#allocation4 + $0x6c] sm:$0xf]
      %v4788 = vld [vmem:[#allocation4 + $0x70] sm:$0xf]
      %v4789 = vld [vmem:[#allocation4 + $0x74] sm:$0xf]
      %v4790 = vld [vmem:[#allocation4 + $0x78] sm:$0xf]
      %v4791 = vld [vmem:[#allocation4 + $0x7c] sm:$0xf]
      %v4792 = vld [vmem:[%s2] sm:$0xf]
      %v4793 = vld [vmem:[%s2 + $0x4] sm:$0xf]
      %v4794 = vld [vmem:[%s2 + $0x8] sm:$0xf]
      %v4795 = vld [vmem:[%s2 + $0xc] sm:$0xf]
      %v4796 = vld [vmem:[%s2 + $0x10] sm:$0xf]
      %v4797 = vld [vmem:[%s2 + $0x14] sm:$0xf]
      %v4798 = vld [vmem:[%s2 + $0x18] sm:$0xf]
      %v4799 = vld [vmem:[%s2 + $0x1c] sm:$0xf]
      %v4800 = vld [vmem:[%s2 + $0x20] sm:$0xf]
      %v4801 = vld [vmem:[%s3] sm:$0x1]
      %v4803 = vperm.slane %v4801, 0
      %v4837 = vunpack.c.l.b16 %v4760
      %v4838 = vunpack.c.l.b16 %v4761
      %v4839 = vunpack.c.l.b16 %v4762
      %v4840 = vunpack.c.l.b16 %v4763
      %v4841 = vunpack.c.l.b16 %v4764
      %v4842 = vunpack.c.l.b16 %v4765
      %v4843 = vunpack.c.l.b16 %v4766
      %v4844 = vunpack.c.l.b16 %v4767
      %v4845 = vunpack.c.l.b16 %v4768
      %v4846 = vunpack.c.l.b16 %v4769
      %v4847 = vunpack.c.l.b16 %v4770
      %v4848 = vunpack.c.l.b16 %v4771
      %v4849 = vunpack.c.l.b16 %v4772
      %v4850 = vunpack.c.l.b16 %v4773
      %v4851 = vunpack.c.l.b16 %v4774
      %v4852 = vunpack.c.l.b16 %v4775
      %v4853 = vunpack.c.l.b16 %v4776
      %v4854 = vunpack.c.l.b16 %v4777
      %v4855 = vunpack.c.l.b16 %v4778
      %v4856 = vunpack.c.l.b16 %v4779
      %v4857 = vunpack.c.l.b16 %v4780
      %v4858 = vunpack.c.l.b16 %v4781
      %v4859 = vunpack.c.l.b16 %v4782
      %v4860 = vunpack.c.l.b16 %v4783
      %v4861 = vunpack.c.l.b16 %v4784
      %v4862 = vunpack.c.l.b16 %v4785
      %v4863 = vunpack.c.l.b16 %v4786
      %v4864 = vunpack.c.l.b16 %v4787
      %v4865 = vunpack.c.l.b16 %v4788
      %v4866 = vunpack.c.l.b16 %v4789
      %v4867 = vunpack.c.l.b16 %v4790
      %v4868 = vunpack.c.l.b16 %v4791
      %v4869 = vpack.c.b16 %v4838, %v4837
      %v4870 = vpack.c.b16 %v4840, %v4839
      %v4871 = vpack.c.b16 %v4842, %v4841
      %v4872 = vpack.c.b16 %v4844, %v4843
      %v4873 = vpack.c.b16 %v4846, %v4845
      %v4874 = vpack.c.b16 %v4848, %v4847
      %v4875 = vpack.c.b16 %v4850, %v4849
      %v4876 = vpack.c.b16 %v4852, %v4851
      %v4877 = vpack.c.b16 %v4854, %v4853
      %v4878 = vpack.c.b16 %v4856, %v4855
      %v4879 = vpack.c.b16 %v4858, %v4857
      %v4880 = vpack.c.b16 %v4860, %v4859
      %v4881 = vpack.c.b16 %v4862, %v4861
      %v4882 = vpack.c.b16 %v4864, %v4863
      %v4883 = vpack.c.b16 %v4866, %v4865
      %v4884 = vpack.c.b16 %v4868, %v4867
      %v4894 = vunpack.c.l.b16 %v4792
      %v4895 = vunpack.c.l.b16 %v4793
      %v4896 = vunpack.c.l.b16 %v4794
      %v4897 = vunpack.c.l.b16 %v4795
      %v4898 = vunpack.c.l.b16 %v4796
      %v4899 = vunpack.c.l.b16 %v4797
      %v4900 = vunpack.c.l.b16 %v4798
      %v4901 = vunpack.c.l.b16 %v4799
      %v4902 = vunpack.c.l.b16 %v4800
      %v4903 = vpack.c.b16 %v4895, %v4894
      %v4904 = vpack.c.b16 %v4897, %v4896
      %v4905 = vpack.c.b16 %v4899, %v4898
      %v4906 = vpack.c.b16 %v4901, %v4900
      %v4907 = vpack.c.b16 %v4902, %v4902
      %vm4912 = vcmask 588800
      %v4914 = vsel %vm4912, %v4869, 0
      %v4917 = vsel %vm4912, %v4870, 0
      %v4920 = vsel %vm4912, %v4871, 0
      %v4923 = vsel %vm4912, %v4872, 0
      %v4926 = vsel %vm4912, %v4873, 0
      %v4929 = vsel %vm4912, %v4874, 0
      %v4932 = vsel %vm4912, %v4875, 0
      %v4935 = vsel %vm4912, %v4876, 0
      %v4938 = vsel %vm4912, %v4877, 0
      %v4941 = vsel %vm4912, %v4878, 0
      %v4944 = vsel %vm4912, %v4879, 0
      %v4947 = vsel %vm4912, %v4880, 0
      %v4950 = vsel %vm4912, %v4881, 0
      %v4953 = vsel %vm4912, %v4882, 0
      %v4956 = vsel %vm4912, %v4883, 0
      %v4959 = vsel %vm4912, %v4884, 0
      %vm4961 = vcmask 1043456
      %v4963 = vsel %vm4961, %v4907, 0
      %4965 = vmatpush.bf16.msra.mxu0 0
      %4966 = vmatpush.bf16.msra.mxu0 0
      %4967 = vmatpush.bf16.msra.mxu0 0
      %4968 = vmatpush.bf16.msra.mxu0 %v4963
      %4969 = vmatpush.bf16.msra.mxu0 %v4906
      %4970 = vmatpush.bf16.msra.mxu0 %v4905
      %4971 = vmatpush.bf16.msra.mxu0 %v4904
      %4972 = vmatpush.bf16.msra.mxu0 %v4903
      %4973 = vmatmul.bf16.gmra.mxu0 %v4914
      %v4974 = vpop.f32.mrf.mxu0
      %v4975 = vadd.f32 %v4803, %v4974
      %v4976 = vpop.f32.mrf.mxu0
      %v4977 = vadd.f32 %v4803, %v4976
      %4978 = vmatmul.bf16.gmra.mxu0 %v4917
      %v4979 = vpop.f32.mrf.mxu0
      %v4980 = vadd.f32 %v4803, %v4979
      %v4981 = vpop.f32.mrf.mxu0
      %v4982 = vadd.f32 %v4803, %v4981
      %4983 = vmatmul.bf16.gmra.mxu0 %v4920
      %v4984 = vpop.f32.mrf.mxu0
      %v4985 = vadd.f32 %v4803, %v4984
      %v4986 = vpop.f32.mrf.mxu0
      %v4987 = vadd.f32 %v4803, %v4986
      %4988 = vmatmul.bf16.gmra.mxu0 %v4923
      %v4989 = vpop.f32.mrf.mxu0
      %v4990 = vadd.f32 %v4803, %v4989
      %v4991 = vpop.f32.mrf.mxu0
      %v4992 = vadd.f32 %v4803, %v4991
      %4993 = vmatmul.bf16.gmra.mxu0 %v4926
      %v4994 = vpop.f32.mrf.mxu0
      %v4995 = vadd.f32 %v4803, %v4994
      %v4996 = vpop.f32.mrf.mxu0
      %v4997 = vadd.f32 %v4803, %v4996
      %4998 = vmatmul.bf16.gmra.mxu0 %v4929
      %v4999 = vpop.f32.mrf.mxu0
      %v5000 = vadd.f32 %v4803, %v4999
      %v5001 = vpop.f32.mrf.mxu0
      %v5002 = vadd.f32 %v4803, %v5001
      %5003 = vmatmul.bf16.gmra.mxu0 %v4932
      %v5004 = vpop.f32.mrf.mxu0
      %v5005 = vadd.f32 %v4803, %v5004
      %v5006 = vpop.f32.mrf.mxu0
      %v5007 = vadd.f32 %v4803, %v5006
      %5008 = vmatmul.bf16.gmra.mxu0 %v4935
      %v5009 = vpop.f32.mrf.mxu0
      %v5010 = vadd.f32 %v4803, %v5009
      %v5011 = vpop.f32.mrf.mxu0
      %v5012 = vadd.f32 %v4803, %v5011
      %5013 = vmatmul.bf16.gmra.mxu0 %v4938
      %v5014 = vpop.f32.mrf.mxu0
      %v5015 = vadd.f32 %v4803, %v5014
      %v5016 = vpop.f32.mrf.mxu0
      %v5017 = vadd.f32 %v4803, %v5016
      %5018 = vmatmul.bf16.gmra.mxu0 %v4941
      %v5019 = vpop.f32.mrf.mxu0
      %v5020 = vadd.f32 %v4803, %v5019
      %v5021 = vpop.f32.mrf.mxu0
      %v5022 = vadd.f32 %v4803, %v5021
      %5023 = vmatmul.bf16.gmra.mxu0 %v4944
      %v5024 = vpop.f32.mrf.mxu0
      %v5025 = vadd.f32 %v4803, %v5024
      %v5026 = vpop.f32.mrf.mxu0
      %v5027 = vadd.f32 %v4803, %v5026
      %5028 = vmatmul.bf16.gmra.mxu0 %v4947
      %v5029 = vpop.f32.mrf.mxu0
      %v5030 = vadd.f32 %v4803, %v5029
      %v5031 = vpop.f32.mrf.mxu0
      %v5032 = vadd.f32 %v4803, %v5031
      %5033 = vmatmul.bf16.gmra.mxu0 %v4950
      %v5034 = vpop.f32.mrf.mxu0
      %v5035 = vadd.f32 %v4803, %v5034
      %v5036 = vpop.f32.mrf.mxu0
      %v5037 = vadd.f32 %v4803, %v5036
      %5038 = vmatmul.bf16.gmra.mxu0 %v4953
      %v5039 = vpop.f32.mrf.mxu0
      %v5040 = vadd.f32 %v4803, %v5039
      %v5041 = vpop.f32.mrf.mxu0
      %v5042 = vadd.f32 %v4803, %v5041
      %5043 = vmatmul.bf16.gmra.mxu0 %v4956
      %v5044 = vpop.f32.mrf.mxu0
      %v5045 = vadd.f32 %v4803, %v5044
      %v5046 = vpop.f32.mrf.mxu0
      %v5047 = vadd.f32 %v4803, %v5046
      %5048 = vmatmul.bf16.gmra.mxu0 %v4959
      %v5049 = vpop.f32.mrf.mxu0
      %v5050 = vadd.f32 %v4803, %v5049
      %v5051 = vpop.f32.mrf.mxu0
      %v5052 = vadd.f32 %v4803, %v5051
      %5053 = vdwg.mxu0
      %v5054 = vmax.f32 %v4975, 0.0
      %v5055 = vmax.f32 %v4977, 0.0
      %v5056 = vmax.f32 %v4980, 0.0
      %v5057 = vmax.f32 %v4982, 0.0
      %v5058 = vmax.f32 %v4985, 0.0
      %v5059 = vmax.f32 %v4987, 0.0
      %v5060 = vmax.f32 %v4990, 0.0
      %v5061 = vmax.f32 %v4992, 0.0
      %v5062 = vmax.f32 %v4995, 0.0
      %v5063 = vmax.f32 %v4997, 0.0
      %v5064 = vmax.f32 %v5000, 0.0
      %v5065 = vmax.f32 %v5002, 0.0
      %v5066 = vmax.f32 %v5005, 0.0
      %v5067 = vmax.f32 %v5007, 0.0
      %v5068 = vmax.f32 %v5010, 0.0
      %v5069 = vmax.f32 %v5012, 0.0
      %v5070 = vmax.f32 %v5015, 0.0
      %v5071 = vmax.f32 %v5017, 0.0
      %v5072 = vmax.f32 %v5020, 0.0
      %v5073 = vmax.f32 %v5022, 0.0
      %v5074 = vmax.f32 %v5025, 0.0
      %v5075 = vmax.f32 %v5027, 0.0
      %v5076 = vmax.f32 %v5030, 0.0
      %v5077 = vmax.f32 %v5032, 0.0
      %v5078 = vmax.f32 %v5035, 0.0
      %v5079 = vmax.f32 %v5037, 0.0
      %v5080 = vmax.f32 %v5040, 0.0
      %v5081 = vmax.f32 %v5042, 0.0
      %v5082 = vmax.f32 %v5045, 0.0
      %v5083 = vmax.f32 %v5047, 0.0
      %v5084 = vmax.f32 %v5050, 0.0
      %v5085 = vmax.f32 %v5052, 0.0
      %vm5086 = vcmask 64512
      %5087 = vst.msk [vmem:[#allocation5] sm:$0xff] %vm5086, 0.0
      %5088 = vst.msk [vmem:[#allocation5 + $0x8] sm:$0xff] %vm5086, 0.0
      %vm5089 = vcmask 58368
      %5090 = vst.msk [vmem:[#allocation5 + $0x10] sm:$0x3] %vm5089, 0.0
      %s5091 = scalar_lea.vmem [#allocation5], 408
      %5092 = vst.msk [vmem:[%s5091] sm:$0xff] %vm5086, 0.0
      %5093 = vst.msk [vmem:[%s5091 + $0x8] sm:$0xff] %vm5086, 0.0
      %5094 = vst.msk [vmem:[%s5091 + $0x10] sm:$0x3] %vm5089, 0.0
      %v5127 = vrot.slane %v5054, 7
      %v5128 = vrot.slane %v5055, 7
      %v5129 = vsel %vm378, %v5127, %v5128
      %v5130 = vrot.slane %v5056, 7
      %v5131 = vrot.slane %v5057, 7
      %v5132 = vsel %vm378, %v5130, %v5131
      %v5133 = vrot.slane %v5058, 7
      %v5134 = vrot.slane %v5059, 7
      %v5135 = vsel %vm378, %v5133, %v5134
      %v5136 = vrot.slane %v5060, 7
      %v5137 = vrot.slane %v5061, 7
      %v5138 = vsel %vm378, %v5136, %v5137
      %v5139 = vrot.slane %v5062, 7
      %v5140 = vrot.slane %v5063, 7
      %v5141 = vsel %vm378, %v5139, %v5140
      %v5142 = vrot.slane %v5064, 7
      %v5143 = vrot.slane %v5065, 7
      %v5144 = vsel %vm378, %v5142, %v5143
      %v5145 = vrot.slane %v5066, 7
      %v5146 = vrot.slane %v5067, 7
      %v5147 = vsel %vm378, %v5145, %v5146
      %v5148 = vrot.slane %v5068, 7
      %v5149 = vrot.slane %v5069, 7
      %v5150 = vsel %vm378, %v5148, %v5149
      %v5151 = vrot.slane %v5070, 7
      %v5152 = vrot.slane %v5071, 7
      %v5153 = vsel %vm378, %v5151, %v5152
      %v5154 = vrot.slane %v5072, 7
      %v5155 = vrot.slane %v5073, 7
      %v5156 = vsel %vm378, %v5154, %v5155
      %v5157 = vrot.slane %v5074, 7
      %v5158 = vrot.slane %v5075, 7
      %v5159 = vsel %vm378, %v5157, %v5158
      %v5160 = vrot.slane %v5076, 7
      %v5161 = vrot.slane %v5077, 7
      %v5162 = vsel %vm378, %v5160, %v5161
      %v5163 = vrot.slane %v5078, 7
      %v5164 = vrot.slane %v5079, 7
      %v5165 = vsel %vm378, %v5163, %v5164
      %v5166 = vrot.slane %v5080, 7
      %v5167 = vrot.slane %v5081, 7
      %v5168 = vsel %vm378, %v5166, %v5167
      %v5169 = vrot.slane %v5082, 7
      %v5170 = vrot.slane %v5083, 7
      %v5171 = vsel %vm378, %v5169, %v5170
      %v5172 = vrot.slane %v5084, 7
      %v5173 = vrot.slane %v5085, 7
      %v5174 = vsel %vm378, %v5172, %v5173
      %v5223 = vsel %vm378, 0.0, %v5127
      %v5224 = vsel %vm378, 0.0, %v5130
      %v5225 = vsel %vm378, 0.0, %v5133
      %v5226 = vsel %vm378, 0.0, %v5136
      %v5227 = vsel %vm378, 0.0, %v5139
      %v5228 = vsel %vm378, 0.0, %v5142
      %v5229 = vsel %vm378, 0.0, %v5145
      %v5230 = vsel %vm378, 0.0, %v5148
      %v5231 = vsel %vm378, 0.0, %v5151
      %v5232 = vsel %vm378, 0.0, %v5154
      %v5233 = vsel %vm378, 0.0, %v5157
      %v5234 = vsel %vm378, 0.0, %v5160
      %v5235 = vsel %vm378, 0.0, %v5163
      %v5236 = vsel %vm378, 0.0, %v5166
      %v5237 = vsel %vm378, 0.0, %v5169
      %v5238 = vsel %vm378, 0.0, %v5172
      %v5239 = vsel %vm378, %v5128, 0.0
      %v5240 = vsel %vm378, %v5131, 0.0
      %v5241 = vsel %vm378, %v5134, 0.0
      %v5242 = vsel %vm378, %v5137, 0.0
      %v5243 = vsel %vm378, %v5140, 0.0
      %v5244 = vsel %vm378, %v5143, 0.0
      %v5245 = vsel %vm378, %v5146, 0.0
      %v5246 = vsel %vm378, %v5149, 0.0
      %v5247 = vsel %vm378, %v5152, 0.0
      %v5248 = vsel %vm378, %v5155, 0.0
      %v5249 = vsel %vm378, %v5158, 0.0
      %v5250 = vsel %vm378, %v5161, 0.0
      %v5251 = vsel %vm378, %v5164, 0.0
      %v5252 = vsel %vm378, %v5167, 0.0
      %v5253 = vsel %vm378, %v5170, 0.0
      %v5254 = vsel %vm378, %v5173, 0.0
      %s5255 = scalar_lea.vmem [#allocation5], 24
      %5256 = vst.msk [vmem:[%s5255] sm:$0xff] %vm5086, %v5223
      %5257 = vst.msk [vmem:[%s5255 + $0x8] sm:$0xff] %vm5086, %v5129
      %5258 = vst.msk [vmem:[%s5255 + $0x10] sm:$0x3] %vm5089, %v5239
      %5259 = vst.msk [vmem:[%s5255 + $0x18] sm:$0xff] %vm5086, %v5224
      %5260 = vst.msk [vmem:[%s5255 + $0x20] sm:$0xff] %vm5086, %v5132
      %5261 = vst.msk [vmem:[%s5255 + $0x28] sm:$0x3] %vm5089, %v5240
      %5262 = vst.msk [vmem:[%s5255 + $0x30] sm:$0xff] %vm5086, %v5225
      %5263 = vst.msk [vmem:[%s5255 + $0x38] sm:$0xff] %vm5086, %v5135
      %5264 = vst.msk [vmem:[%s5255 + $0x40] sm:$0x3] %vm5089, %v5241
      %5265 = vst.msk [vmem:[%s5255 + $0x48] sm:$0xff] %vm5086, %v5226
      %5266 = vst.msk [vmem:[%s5255 + $0x50] sm:$0xff] %vm5086, %v5138
      %5267 = vst.msk [vmem:[%s5255 + $0x58] sm:$0x3] %vm5089, %v5242
      %5268 = vst.msk [vmem:[%s5255 + $0x60] sm:$0xff] %vm5086, %v5227
      %5269 = vst.msk [vmem:[%s5255 + $0x68] sm:$0xff] %vm5086, %v5141
      %5270 = vst.msk [vmem:[%s5255 + $0x70] sm:$0x3] %vm5089, %v5243
      %5271 = vst.msk [vmem:[%s5255 + $0x78] sm:$0xff] %vm5086, %v5228
      %5272 = vst.msk [vmem:[%s5255 + $0x80] sm:$0xff] %vm5086, %v5144
      %5273 = vst.msk [vmem:[%s5255 + $0x88] sm:$0x3] %vm5089, %v5244
      %5274 = vst.msk [vmem:[%s5255 + $0x90] sm:$0xff] %vm5086, %v5229
      %5275 = vst.msk [vmem:[%s5255 + $0x98] sm:$0xff] %vm5086, %v5147
      %5276 = vst.msk [vmem:[%s5255 + $0xa0] sm:$0x3] %vm5089, %v5245
      %5277 = vst.msk [vmem:[%s5255 + $0xa8] sm:$0xff] %vm5086, %v5230
      %5278 = vst.msk [vmem:[%s5255 + $0xb0] sm:$0xff] %vm5086, %v5150
      %5279 = vst.msk [vmem:[%s5255 + $0xb8] sm:$0x3] %vm5089, %v5246
      %5280 = vst.msk [vmem:[%s5255 + $0xc0] sm:$0xff] %vm5086, %v5231
      %5281 = vst.msk [vmem:[%s5255 + $0xc8] sm:$0xff] %vm5086, %v5153
      %5282 = vst.msk [vmem:[%s5255 + $0xd0] sm:$0x3] %vm5089, %v5247
      %5283 = vst.msk [vmem:[%s5255 + $0xd8] sm:$0xff] %vm5086, %v5232
      %5284 = vst.msk [vmem:[%s5255 + $0xe0] sm:$0xff] %vm5086, %v5156
      %5285 = vst.msk [vmem:[%s5255 + $0xe8] sm:$0x3] %vm5089, %v5248
      %5286 = vst.msk [vmem:[%s5255 + $0xf0] sm:$0xff] %vm5086, %v5233
      %5287 = vst.msk [vmem:[%s5255 + $0xf8] sm:$0xff] %vm5086, %v5159
      %5288 = vst.msk [vmem:[%s5255 + $0x100] sm:$0x3] %vm5089, %v5249
      %5289 = vst.msk [vmem:[%s5255 + $0x108] sm:$0xff] %vm5086, %v5234
      %5290 = vst.msk [vmem:[%s5255 + $0x110] sm:$0xff] %vm5086, %v5162
      %5291 = vst.msk [vmem:[%s5255 + $0x118] sm:$0x3] %vm5089, %v5250
      %5292 = vst.msk [vmem:[%s5255 + $0x120] sm:$0xff] %vm5086, %v5235
      %5293 = vst.msk [vmem:[%s5255 + $0x128] sm:$0xff] %vm5086, %v5165
      %5294 = vst.msk [vmem:[%s5255 + $0x130] sm:$0x3] %vm5089, %v5251
      %5295 = vst.msk [vmem:[%s5255 + $0x138] sm:$0xff] %vm5086, %v5236
      %5296 = vst.msk [vmem:[%s5255 + $0x140] sm:$0xff] %vm5086, %v5168
      %5297 = vst.msk [vmem:[%s5255 + $0x148] sm:$0x3] %vm5089, %v5252
      %5298 = vst.msk [vmem:[%s5255 + $0x150] sm:$0xff] %vm5086, %v5237
      %5299 = vst.msk [vmem:[%s5255 + $0x158] sm:$0xff] %vm5086, %v5171
      %5300 = vst.msk [vmem:[%s5255 + $0x160] sm:$0x3] %vm5089, %v5253
      %5301 = vst.msk [vmem:[%s5255 + $0x168] sm:$0xff] %vm5086, %v5238
      %5302 = vst.msk [vmem:[%s5255 + $0x170] sm:$0xff] %vm5086, %v5174
      %5303 = vst.msk [vmem:[%s5255 + $0x178] sm:$0x3] %vm5089, %v5254
      %v5304 = vld [vmem:[#allocation5] sm:$0xff]
      %v5305 = vld [vmem:[#allocation5 + $0x8] sm:$0xff]
      %v5306 = vld [vmem:[#allocation5 + $0x18] sm:$0xff]
      %v5307 = vld [vmem:[#allocation5 + $0x20] sm:$0xff]
      %v5308 = vld [vmem:[#allocation5 + $0x30] sm:$0xff]
      %v5309 = vld [vmem:[#allocation5 + $0x38] sm:$0xff]
      %v5310 = vld [vmem:[#allocation5 + $0x48] sm:$0xff]
      %v5311 = vld [vmem:[#allocation5 + $0x50] sm:$0xff]
      %v5312 = vld [vmem:[#allocation5 + $0x60] sm:$0xff]
      %v5313 = vld [vmem:[#allocation5 + $0x68] sm:$0xff]
      %v5314 = vld [vmem:[#allocation5 + $0x78] sm:$0xff]
      %v5315 = vld [vmem:[#allocation5 + $0x80] sm:$0xff]
      %v5316 = vld [vmem:[#allocation5 + $0x90] sm:$0xff]
      %v5317 = vld [vmem:[#allocation5 + $0x98] sm:$0xff]
      %v5318 = vld [vmem:[#allocation5 + $0xa8] sm:$0xff]
      %v5319 = vld [vmem:[#allocation5 + $0xb0] sm:$0xff]
      %v5320 = vld [vmem:[#allocation5 + $0xc0] sm:$0xff]
      %v5321 = vld [vmem:[#allocation5 + $0xc8] sm:$0xff]
      %v5322 = vld [vmem:[#allocation5 + $0xd8] sm:$0xff]
      %v5323 = vld [vmem:[#allocation5 + $0xe0] sm:$0xff]
      %v5324 = vld [vmem:[#allocation5 + $0xf0] sm:$0xff]
      %v5325 = vld [vmem:[#allocation5 + $0xf8] sm:$0xff]
      %v5326 = vld [vmem:[#allocation5 + $0x108] sm:$0xff]
      %v5327 = vld [vmem:[#allocation5 + $0x110] sm:$0xff]
      %v5328 = vld [vmem:[#allocation5 + $0x120] sm:$0xff]
      %v5329 = vld [vmem:[#allocation5 + $0x128] sm:$0xff]
      %v5330 = vld [vmem:[#allocation5 + $0x138] sm:$0xff]
      %v5331 = vld [vmem:[#allocation5 + $0x140] sm:$0xff]
      %v5332 = vld [vmem:[#allocation5 + $0x150] sm:$0xff]
      %v5333 = vld [vmem:[#allocation5 + $0x158] sm:$0xff]
      %v5334 = vld [vmem:[#allocation5 + $0x168] sm:$0xff]
      %v5335 = vld [vmem:[#allocation5 + $0x170] sm:$0xff]
      %v5336 = vpack.c.bf16 %v5304, %v5304
      %v5337 = vpack.c.bf16 %v5305, %v5305
      %v5338 = vpack.c.bf16 %v5306, %v5306
      %v5339 = vpack.c.bf16 %v5307, %v5307
      %v5340 = vpack.c.bf16 %v5308, %v5308
      %v5341 = vpack.c.bf16 %v5309, %v5309
      %v5342 = vpack.c.bf16 %v5310, %v5310
      %v5343 = vpack.c.bf16 %v5311, %v5311
      %v5344 = vpack.c.bf16 %v5312, %v5312
      %v5345 = vpack.c.bf16 %v5313, %v5313
      %v5346 = vpack.c.bf16 %v5314, %v5314
      %v5347 = vpack.c.bf16 %v5315, %v5315
      %v5348 = vpack.c.bf16 %v5316, %v5316
      %v5349 = vpack.c.bf16 %v5317, %v5317
      %v5350 = vpack.c.bf16 %v5318, %v5318
      %v5351 = vpack.c.bf16 %v5319, %v5319
      %v5352 = vpack.c.bf16 %v5320, %v5320
      %v5353 = vpack.c.bf16 %v5321, %v5321
      %v5354 = vpack.c.bf16 %v5322, %v5322
      %v5355 = vpack.c.bf16 %v5323, %v5323
      %v5356 = vpack.c.bf16 %v5324, %v5324
      %v5357 = vpack.c.bf16 %v5325, %v5325
      %v5358 = vpack.c.bf16 %v5326, %v5326
      %v5359 = vpack.c.bf16 %v5327, %v5327
      %v5360 = vpack.c.bf16 %v5328, %v5328
      %v5361 = vpack.c.bf16 %v5329, %v5329
      %v5362 = vpack.c.bf16 %v5330, %v5330
      %v5363 = vpack.c.bf16 %v5331, %v5331
      %v5364 = vpack.c.bf16 %v5332, %v5332
      %v5365 = vpack.c.bf16 %v5333, %v5333
      %v5366 = vpack.c.bf16 %v5334, %v5334
      %v5367 = vpack.c.bf16 %v5335, %v5335
      %vm5368 = vcmask 60416
      %5369 = vst.msk [vmem:[#allocation6] sm:$0xf] %vm5368, %v5336
      %5370 = vst.msk [vmem:[#allocation6 + $0x4] sm:$0xf] %vm5368, %v5337
      %5371 = vst.msk [vmem:[#allocation6 + $0x8] sm:$0xf] %vm5368, %v5338
      %5372 = vst.msk [vmem:[#allocation6 + $0xc] sm:$0xf] %vm5368, %v5339
      %5373 = vst.msk [vmem:[#allocation6 + $0x10] sm:$0xf] %vm5368, %v5340
      %5374 = vst.msk [vmem:[#allocation6 + $0x14] sm:$0xf] %vm5368, %v5341
      %5375 = vst.msk [vmem:[#allocation6 + $0x18] sm:$0xf] %vm5368, %v5342
      %5376 = vst.msk [vmem:[#allocation6 + $0x1c] sm:$0xf] %vm5368, %v5343
      %5377 = vst.msk [vmem:[#allocation6 + $0x20] sm:$0xf] %vm5368, %v5344
      %5378 = vst.msk [vmem:[#allocation6 + $0x24] sm:$0xf] %vm5368, %v5345
      %5379 = vst.msk [vmem:[#allocation6 + $0x28] sm:$0xf] %vm5368, %v5346
      %5380 = vst.msk [vmem:[#allocation6 + $0x2c] sm:$0xf] %vm5368, %v5347
      %5381 = vst.msk [vmem:[#allocation6 + $0x30] sm:$0xf] %vm5368, %v5348
      %5382 = vst.msk [vmem:[#allocation6 + $0x34] sm:$0xf] %vm5368, %v5349
      %5383 = vst.msk [vmem:[#allocation6 + $0x38] sm:$0xf] %vm5368, %v5350
      %5384 = vst.msk [vmem:[#allocation6 + $0x3c] sm:$0xf] %vm5368, %v5351
      %5385 = vst.msk [vmem:[#allocation6 + $0x40] sm:$0xf] %vm5368, %v5352
      %5386 = vst.msk [vmem:[#allocation6 + $0x44] sm:$0xf] %vm5368, %v5353
      %5387 = vst.msk [vmem:[#allocation6 + $0x48] sm:$0xf] %vm5368, %v5354
      %5388 = vst.msk [vmem:[#allocation6 + $0x4c] sm:$0xf] %vm5368, %v5355
      %5389 = vst.msk [vmem:[#allocation6 + $0x50] sm:$0xf] %vm5368, %v5356
      %5390 = vst.msk [vmem:[#allocation6 + $0x54] sm:$0xf] %vm5368, %v5357
      %5391 = vst.msk [vmem:[#allocation6 + $0x58] sm:$0xf] %vm5368, %v5358
      %5392 = vst.msk [vmem:[#allocation6 + $0x5c] sm:$0xf] %vm5368, %v5359
      %5393 = vst.msk [vmem:[#allocation6 + $0x60] sm:$0xf] %vm5368, %v5360
      %5394 = vst.msk [vmem:[#allocation6 + $0x64] sm:$0xf] %vm5368, %v5361
      %5395 = vst.msk [vmem:[#allocation6 + $0x68] sm:$0xf] %vm5368, %v5362
      %5396 = vst.msk [vmem:[#allocation6 + $0x6c] sm:$0xf] %vm5368, %v5363
      %5397 = vst.msk [vmem:[#allocation6 + $0x70] sm:$0xf] %vm5368, %v5364
      %5398 = vst.msk [vmem:[#allocation6 + $0x74] sm:$0xf] %vm5368, %v5365
      %5399 = vst.msk [vmem:[#allocation6 + $0x78] sm:$0xf] %vm5368, %v5366
      %5400 = vst.msk [vmem:[#allocation6 + $0x7c] sm:$0xf] %vm5368, %v5367
      %v5401 = vld [vmem:[#allocation5 + $0x1] sm:$0xff]
      %v5402 = vld [vmem:[#allocation5 + $0x9] sm:$0xff]
      %v5403 = vld [vmem:[#allocation5 + $0x19] sm:$0xff]
      %v5404 = vld [vmem:[#allocation5 + $0x21] sm:$0xff]
      %v5405 = vld [vmem:[#allocation5 + $0x31] sm:$0xff]
      %v5406 = vld [vmem:[#allocation5 + $0x39] sm:$0xff]
      %v5407 = vld [vmem:[#allocation5 + $0x49] sm:$0xff]
      %v5408 = vld [vmem:[#allocation5 + $0x51] sm:$0xff]
      %v5409 = vld [vmem:[#allocation5 + $0x61] sm:$0xff]
      %v5410 = vld [vmem:[#allocation5 + $0x69] sm:$0xff]
      %v5411 = vld [vmem:[#allocation5 + $0x79] sm:$0xff]
      %v5412 = vld [vmem:[#allocation5 + $0x81] sm:$0xff]
      %v5413 = vld [vmem:[#allocation5 + $0x91] sm:$0xff]
      %v5414 = vld [vmem:[#allocation5 + $0x99] sm:$0xff]
      %v5415 = vld [vmem:[#allocation5 + $0xa9] sm:$0xff]
      %v5416 = vld [vmem:[#allocation5 + $0xb1] sm:$0xff]
      %v5417 = vld [vmem:[#allocation5 + $0xc1] sm:$0xff]
      %v5418 = vld [vmem:[#allocation5 + $0xc9] sm:$0xff]
      %v5419 = vld [vmem:[#allocation5 + $0xd9] sm:$0xff]
      %v5420 = vld [vmem:[#allocation5 + $0xe1] sm:$0xff]
      %v5421 = vld [vmem:[#allocation5 + $0xf1] sm:$0xff]
      %v5422 = vld [vmem:[#allocation5 + $0xf9] sm:$0xff]
      %v5423 = vld [vmem:[#allocation5 + $0x109] sm:$0xff]
      %v5424 = vld [vmem:[#allocation5 + $0x111] sm:$0xff]
      %v5425 = vld [vmem:[#allocation5 + $0x121] sm:$0xff]
      %v5426 = vld [vmem:[#allocation5 + $0x129] sm:$0xff]
      %v5427 = vld [vmem:[#allocation5 + $0x139] sm:$0xff]
      %v5428 = vld [vmem:[#allocation5 + $0x141] sm:$0xff]
      %v5429 = vld [vmem:[#allocation5 + $0x151] sm:$0xff]
      %v5430 = vld [vmem:[#allocation5 + $0x159] sm:$0xff]
      %v5431 = vld [vmem:[#allocation5 + $0x169] sm:$0xff]
      %v5432 = vld [vmem:[#allocation5 + $0x171] sm:$0xff]
      %v5433 = vpack.c.bf16 %v5401, %v5401
      %v5434 = vpack.c.bf16 %v5402, %v5402
      %v5435 = vpack.c.bf16 %v5403, %v5403
      %v5436 = vpack.c.bf16 %v5404, %v5404
      %v5437 = vpack.c.bf16 %v5405, %v5405
      %v5438 = vpack.c.bf16 %v5406, %v5406
      %v5439 = vpack.c.bf16 %v5407, %v5407
      %v5440 = vpack.c.bf16 %v5408, %v5408
      %v5441 = vpack.c.bf16 %v5409, %v5409
      %v5442 = vpack.c.bf16 %v5410, %v5410
      %v5443 = vpack.c.bf16 %v5411, %v5411
      %v5444 = vpack.c.bf16 %v5412, %v5412
      %v5445 = vpack.c.bf16 %v5413, %v5413
      %v5446 = vpack.c.bf16 %v5414, %v5414
      %v5447 = vpack.c.bf16 %v5415, %v5415
      %v5448 = vpack.c.bf16 %v5416, %v5416
      %v5449 = vpack.c.bf16 %v5417, %v5417
      %v5450 = vpack.c.bf16 %v5418, %v5418
      %v5451 = vpack.c.bf16 %v5419, %v5419
      %v5452 = vpack.c.bf16 %v5420, %v5420
      %v5453 = vpack.c.bf16 %v5421, %v5421
      %v5454 = vpack.c.bf16 %v5422, %v5422
      %v5455 = vpack.c.bf16 %v5423, %v5423
      %v5456 = vpack.c.bf16 %v5424, %v5424
      %v5457 = vpack.c.bf16 %v5425, %v5425
      %v5458 = vpack.c.bf16 %v5426, %v5426
      %v5459 = vpack.c.bf16 %v5427, %v5427
      %v5460 = vpack.c.bf16 %v5428, %v5428
      %v5461 = vpack.c.bf16 %v5429, %v5429
      %v5462 = vpack.c.bf16 %v5430, %v5430
      %v5463 = vpack.c.bf16 %v5431, %v5431
      %v5464 = vpack.c.bf16 %v5432, %v5432
      %5497 = vrot.lane.b32.xlu0 %v5433, 8
      %v5498 = vpop.permute.xlu0 %5497
      %5499 = vrot.lane.b32.xlu0 %v5434, 8
      %v5500 = vpop.permute.xlu0 %5499
      %5501 = vrot.lane.b32.xlu0 %v5435, 8
      %v5502 = vpop.permute.xlu0 %5501
      %5503 = vrot.lane.b32.xlu0 %v5436, 8
      %v5504 = vpop.permute.xlu0 %5503
      %5505 = vrot.lane.b32.xlu0 %v5437, 8
      %v5506 = vpop.permute.xlu0 %5505
      %5507 = vrot.lane.b32.xlu0 %v5438, 8
      %v5508 = vpop.permute.xlu0 %5507
      %5509 = vrot.lane.b32.xlu0 %v5439, 8
      %v5510 = vpop.permute.xlu0 %5509
      %5511 = vrot.lane.b32.xlu0 %v5440, 8
      %v5512 = vpop.permute.xlu0 %5511
      %5513 = vrot.lane.b32.xlu0 %v5441, 8
      %v5514 = vpop.permute.xlu0 %5513
      %5515 = vrot.lane.b32.xlu0 %v5442, 8
      %v5516 = vpop.permute.xlu0 %5515
      %5517 = vrot.lane.b32.xlu0 %v5443, 8
      %v5518 = vpop.permute.xlu0 %5517
      %5519 = vrot.lane.b32.xlu0 %v5444, 8
      %v5520 = vpop.permute.xlu0 %5519
      %5521 = vrot.lane.b32.xlu0 %v5445, 8
      %v5522 = vpop.permute.xlu0 %5521
      %5523 = vrot.lane.b32.xlu0 %v5446, 8
      %v5524 = vpop.permute.xlu0 %5523
      %5525 = vrot.lane.b32.xlu0 %v5447, 8
      %v5526 = vpop.permute.xlu0 %5525
      %5527 = vrot.lane.b32.xlu0 %v5448, 8
      %v5528 = vpop.permute.xlu0 %5527
      %5529 = vrot.lane.b32.xlu0 %v5449, 8
      %v5530 = vpop.permute.xlu0 %5529
      %5531 = vrot.lane.b32.xlu0 %v5450, 8
      %v5532 = vpop.permute.xlu0 %5531
      %5533 = vrot.lane.b32.xlu0 %v5451, 8
      %v5534 = vpop.permute.xlu0 %5533
      %5535 = vrot.lane.b32.xlu0 %v5452, 8
      %v5536 = vpop.permute.xlu0 %5535
      %5537 = vrot.lane.b32.xlu0 %v5453, 8
      %v5538 = vpop.permute.xlu0 %5537
      %5539 = vrot.lane.b32.xlu0 %v5454, 8
      %v5540 = vpop.permute.xlu0 %5539
      %5541 = vrot.lane.b32.xlu0 %v5455, 8
      %v5542 = vpop.permute.xlu0 %5541
      %5543 = vrot.lane.b32.xlu0 %v5456, 8
      %v5544 = vpop.permute.xlu0 %5543
      %5545 = vrot.lane.b32.xlu0 %v5457, 8
      %v5546 = vpop.permute.xlu0 %5545
      %5547 = vrot.lane.b32.xlu0 %v5458, 8
      %v5548 = vpop.permute.xlu0 %5547
      %5549 = vrot.lane.b32.xlu0 %v5459, 8
      %v5550 = vpop.permute.xlu0 %5549
      %5551 = vrot.lane.b32.xlu0 %v5460, 8
      %v5552 = vpop.permute.xlu0 %5551
      %5553 = vrot.lane.b32.xlu0 %v5461, 8
      %v5554 = vpop.permute.xlu0 %5553
      %5555 = vrot.lane.b32.xlu0 %v5462, 8
      %v5556 = vpop.permute.xlu0 %5555
      %5557 = vrot.lane.b32.xlu0 %v5463, 8
      %v5558 = vpop.permute.xlu0 %5557
      %5559 = vrot.lane.b32.xlu0 %v5464, 8
      %v5560 = vpop.permute.xlu0 %5559
      %vm5593 = vcmask 126016
      %5594 = vst.msk [vmem:[#allocation6] sm:$0xf] %vm5593, %v5498
      %5595 = vst.msk [vmem:[#allocation6 + $0x4] sm:$0xf] %vm5593, %v5500
      %5596 = vst.msk [vmem:[#allocation6 + $0x8] sm:$0xf] %vm5593, %v5502
      %5597 = vst.msk [vmem:[#allocation6 + $0xc] sm:$0xf] %vm5593, %v5504
      %5598 = vst.msk [vmem:[#allocation6 + $0x10] sm:$0xf] %vm5593, %v5506
      %5599 = vst.msk [vmem:[#allocation6 + $0x14] sm:$0xf] %vm5593, %v5508
      %5600 = vst.msk [vmem:[#allocation6 + $0x18] sm:$0xf] %vm5593, %v5510
      %5601 = vst.msk [vmem:[#allocation6 + $0x1c] sm:$0xf] %vm5593, %v5512
      %5602 = vst.msk [vmem:[#allocation6 + $0x20] sm:$0xf] %vm5593, %v5514
      %5603 = vst.msk [vmem:[#allocation6 + $0x24] sm:$0xf] %vm5593, %v5516
      %5604 = vst.msk [vmem:[#allocation6 + $0x28] sm:$0xf] %vm5593, %v5518
      %5605 = vst.msk [vmem:[#allocation6 + $0x2c] sm:$0xf] %vm5593, %v5520
      %5606 = vst.msk [vmem:[#allocation6 + $0x30] sm:$0xf] %vm5593, %v5522
      %5607 = vst.msk [vmem:[#allocation6 + $0x34] sm:$0xf] %vm5593, %v5524
      %5608 = vst.msk [vmem:[#allocation6 + $0x38] sm:$0xf] %vm5593, %v5526
      %5609 = vst.msk [vmem:[#allocation6 + $0x3c] sm:$0xf] %vm5593, %v5528
      %5610 = vst.msk [vmem:[#allocation6 + $0x40] sm:$0xf] %vm5593, %v5530
      %5611 = vst.msk [vmem:[#allocation6 + $0x44] sm:$0xf] %vm5593, %v5532
      %5612 = vst.msk [vmem:[#allocation6 + $0x48] sm:$0xf] %vm5593, %v5534
      %5613 = vst.msk [vmem:[#allocation6 + $0x4c] sm:$0xf] %vm5593, %v5536
      %5614 = vst.msk [vmem:[#allocation6 + $0x50] sm:$0xf] %vm5593, %v5538
      %5615 = vst.msk [vmem:[#allocation6 + $0x54] sm:$0xf] %vm5593, %v5540
      %5616 = vst.msk [vmem:[#allocation6 + $0x58] sm:$0xf] %vm5593, %v5542
      %5617 = vst.msk [vmem:[#allocation6 + $0x5c] sm:$0xf] %vm5593, %v5544
      %5618 = vst.msk [vmem:[#allocation6 + $0x60] sm:$0xf] %vm5593, %v5546
      %5619 = vst.msk [vmem:[#allocation6 + $0x64] sm:$0xf] %vm5593, %v5548
      %5620 = vst.msk [vmem:[#allocation6 + $0x68] sm:$0xf] %vm5593, %v5550
      %5621 = vst.msk [vmem:[#allocation6 + $0x6c] sm:$0xf] %vm5593, %v5552
      %5622 = vst.msk [vmem:[#allocation6 + $0x70] sm:$0xf] %vm5593, %v5554
      %5623 = vst.msk [vmem:[#allocation6 + $0x74] sm:$0xf] %vm5593, %v5556
      %5624 = vst.msk [vmem:[#allocation6 + $0x78] sm:$0xf] %vm5593, %v5558
      %5625 = vst.msk [vmem:[#allocation6 + $0x7c] sm:$0xf] %vm5593, %v5560
      %v5626 = vld [vmem:[#allocation5 + $0x2] sm:$0xff]
      %v5627 = vld [vmem:[#allocation5 + $0xa] sm:$0xff]
      %v5628 = vld [vmem:[#allocation5 + $0x1a] sm:$0xff]
      %v5629 = vld [vmem:[#allocation5 + $0x22] sm:$0xff]
      %v5630 = vld [vmem:[#allocation5 + $0x32] sm:$0xff]
      %v5631 = vld [vmem:[#allocation5 + $0x3a] sm:$0xff]
      %v5632 = vld [vmem:[#allocation5 + $0x4a] sm:$0xff]
      %v5633 = vld [vmem:[#allocation5 + $0x52] sm:$0xff]
      %v5634 = vld [vmem:[#allocation5 + $0x62] sm:$0xff]
      %v5635 = vld [vmem:[#allocation5 + $0x6a] sm:$0xff]
      %v5636 = vld [vmem:[#allocation5 + $0x7a] sm:$0xff]
      %v5637 = vld [vmem:[#allocation5 + $0x82] sm:$0xff]
      %v5638 = vld [vmem:[#allocation5 + $0x92] sm:$0xff]
      %v5639 = vld [vmem:[#allocation5 + $0x9a] sm:$0xff]
      %v5640 = vld [vmem:[#allocation5 + $0xaa] sm:$0xff]
      %v5641 = vld [vmem:[#allocation5 + $0xb2] sm:$0xff]
      %v5642 = vld [vmem:[#allocation5 + $0xc2] sm:$0xff]
      %v5643 = vld [vmem:[#allocation5 + $0xca] sm:$0xff]
      %v5644 = vld [vmem:[#allocation5 + $0xda] sm:$0xff]
      %v5645 = vld [vmem:[#allocation5 + $0xe2] sm:$0xff]
      %v5646 = vld [vmem:[#allocation5 + $0xf2] sm:$0xff]
      %v5647 = vld [vmem:[#allocation5 + $0xfa] sm:$0xff]
      %v5648 = vld [vmem:[#allocation5 + $0x10a] sm:$0xff]
      %v5649 = vld [vmem:[#allocation5 + $0x112] sm:$0xff]
      %v5650 = vld [vmem:[#allocation5 + $0x122] sm:$0xff]
      %v5651 = vld [vmem:[#allocation5 + $0x12a] sm:$0xff]
      %v5652 = vld [vmem:[#allocation5 + $0x13a] sm:$0xff]
      %v5653 = vld [vmem:[#allocation5 + $0x142] sm:$0xff]
      %v5654 = vld [vmem:[#allocation5 + $0x152] sm:$0xff]
      %v5655 = vld [vmem:[#allocation5 + $0x15a] sm:$0xff]
      %v5656 = vld [vmem:[#allocation5 + $0x16a] sm:$0xff]
      %v5657 = vld [vmem:[#allocation5 + $0x172] sm:$0xff]
      %v5658 = vpack.c.bf16 %v5626, %v5626
      %v5659 = vpack.c.bf16 %v5627, %v5627
      %v5660 = vpack.c.bf16 %v5628, %v5628
      %v5661 = vpack.c.bf16 %v5629, %v5629
      %v5662 = vpack.c.bf16 %v5630, %v5630
      %v5663 = vpack.c.bf16 %v5631, %v5631
      %v5664 = vpack.c.bf16 %v5632, %v5632
      %v5665 = vpack.c.bf16 %v5633, %v5633
      %v5666 = vpack.c.bf16 %v5634, %v5634
      %v5667 = vpack.c.bf16 %v5635, %v5635
      %v5668 = vpack.c.bf16 %v5636, %v5636
      %v5669 = vpack.c.bf16 %v5637, %v5637
      %v5670 = vpack.c.bf16 %v5638, %v5638
      %v5671 = vpack.c.bf16 %v5639, %v5639
      %v5672 = vpack.c.bf16 %v5640, %v5640
      %v5673 = vpack.c.bf16 %v5641, %v5641
      %v5674 = vpack.c.bf16 %v5642, %v5642
      %v5675 = vpack.c.bf16 %v5643, %v5643
      %v5676 = vpack.c.bf16 %v5644, %v5644
      %v5677 = vpack.c.bf16 %v5645, %v5645
      %v5678 = vpack.c.bf16 %v5646, %v5646
      %v5679 = vpack.c.bf16 %v5647, %v5647
      %v5680 = vpack.c.bf16 %v5648, %v5648
      %v5681 = vpack.c.bf16 %v5649, %v5649
      %v5682 = vpack.c.bf16 %v5650, %v5650
      %v5683 = vpack.c.bf16 %v5651, %v5651
      %v5684 = vpack.c.bf16 %v5652, %v5652
      %v5685 = vpack.c.bf16 %v5653, %v5653
      %v5686 = vpack.c.bf16 %v5654, %v5654
      %v5687 = vpack.c.bf16 %v5655, %v5655
      %v5688 = vpack.c.bf16 %v5656, %v5656
      %v5689 = vpack.c.bf16 %v5657, %v5657
      %5722 = vrot.lane.b32.xlu0 %v5658, 16
      %v5723 = vpop.permute.xlu0 %5722
      %5724 = vrot.lane.b32.xlu0 %v5659, 16
      %v5725 = vpop.permute.xlu0 %5724
      %5726 = vrot.lane.b32.xlu0 %v5660, 16
      %v5727 = vpop.permute.xlu0 %5726
      %5728 = vrot.lane.b32.xlu0 %v5661, 16
      %v5729 = vpop.permute.xlu0 %5728
      %5730 = vrot.lane.b32.xlu0 %v5662, 16
      %v5731 = vpop.permute.xlu0 %5730
      %5732 = vrot.lane.b32.xlu0 %v5663, 16
      %v5733 = vpop.permute.xlu0 %5732
      %5734 = vrot.lane.b32.xlu0 %v5664, 16
      %v5735 = vpop.permute.xlu0 %5734
      %5736 = vrot.lane.b32.xlu0 %v5665, 16
      %v5737 = vpop.permute.xlu0 %5736
      %5738 = vrot.lane.b32.xlu0 %v5666, 16
      %v5739 = vpop.permute.xlu0 %5738
      %5740 = vrot.lane.b32.xlu0 %v5667, 16
      %v5741 = vpop.permute.xlu0 %5740
      %5742 = vrot.lane.b32.xlu0 %v5668, 16
      %v5743 = vpop.permute.xlu0 %5742
      %5744 = vrot.lane.b32.xlu0 %v5669, 16
      %v5745 = vpop.permute.xlu0 %5744
      %5746 = vrot.lane.b32.xlu0 %v5670, 16
      %v5747 = vpop.permute.xlu0 %5746
      %5748 = vrot.lane.b32.xlu0 %v5671, 16
      %v5749 = vpop.permute.xlu0 %5748
      %5750 = vrot.lane.b32.xlu0 %v5672, 16
      %v5751 = vpop.permute.xlu0 %5750
      %5752 = vrot.lane.b32.xlu0 %v5673, 16
      %v5753 = vpop.permute.xlu0 %5752
      %5754 = vrot.lane.b32.xlu0 %v5674, 16
      %v5755 = vpop.permute.xlu0 %5754
      %5756 = vrot.lane.b32.xlu0 %v5675, 16
      %v5757 = vpop.permute.xlu0 %5756
      %5758 = vrot.lane.b32.xlu0 %v5676, 16
      %v5759 = vpop.permute.xlu0 %5758
      %5760 = vrot.lane.b32.xlu0 %v5677, 16
      %v5761 = vpop.permute.xlu0 %5760
      %5762 = vrot.lane.b32.xlu0 %v5678, 16
      %v5763 = vpop.permute.xlu0 %5762
      %5764 = vrot.lane.b32.xlu0 %v5679, 16
      %v5765 = vpop.permute.xlu0 %5764
      %5766 = vrot.lane.b32.xlu0 %v5680, 16
      %v5767 = vpop.permute.xlu0 %5766
      %5768 = vrot.lane.b32.xlu0 %v5681, 16
      %v5769 = vpop.permute.xlu0 %5768
      %5770 = vrot.lane.b32.xlu0 %v5682, 16
      %v5771 = vpop.permute.xlu0 %5770
      %5772 = vrot.lane.b32.xlu0 %v5683, 16
      %v5773 = vpop.permute.xlu0 %5772
      %5774 = vrot.lane.b32.xlu0 %v5684, 16
      %v5775 = vpop.permute.xlu0 %5774
      %5776 = vrot.lane.b32.xlu0 %v5685, 16
      %v5777 = vpop.permute.xlu0 %5776
      %5778 = vrot.lane.b32.xlu0 %v5686, 16
      %v5779 = vpop.permute.xlu0 %5778
      %5780 = vrot.lane.b32.xlu0 %v5687, 16
      %v5781 = vpop.permute.xlu0 %5780
      %5782 = vrot.lane.b32.xlu0 %v5688, 16
      %v5783 = vpop.permute.xlu0 %5782
      %5784 = vrot.lane.b32.xlu0 %v5689, 16
      %v5785 = vpop.permute.xlu0 %5784
      %vm5818 = vcmask 191616
      %5819 = vst.msk [vmem:[#allocation6] sm:$0xf] %vm5818, %v5723
      %5820 = vst.msk [vmem:[#allocation6 + $0x4] sm:$0xf] %vm5818, %v5725
      %5821 = vst.msk [vmem:[#allocation6 + $0x8] sm:$0xf] %vm5818, %v5727
      %5822 = vst.msk [vmem:[#allocation6 + $0xc] sm:$0xf] %vm5818, %v5729
      %5823 = vst.msk [vmem:[#allocation6 + $0x10] sm:$0xf] %vm5818, %v5731
      %5824 = vst.msk [vmem:[#allocation6 + $0x14] sm:$0xf] %vm5818, %v5733
      %5825 = vst.msk [vmem:[#allocation6 + $0x18] sm:$0xf] %vm5818, %v5735
      %5826 = vst.msk [vmem:[#allocation6 + $0x1c] sm:$0xf] %vm5818, %v5737
      %5827 = vst.msk [vmem:[#allocation6 + $0x20] sm:$0xf] %vm5818, %v5739
      %5828 = vst.msk [vmem:[#allocation6 + $0x24] sm:$0xf] %vm5818, %v5741
      %5829 = vst.msk [vmem:[#allocation6 + $0x28] sm:$0xf] %vm5818, %v5743
      %5830 = vst.msk [vmem:[#allocation6 + $0x2c] sm:$0xf] %vm5818, %v5745
      %5831 = vst.msk [vmem:[#allocation6 + $0x30] sm:$0xf] %vm5818, %v5747
      %5832 = vst.msk [vmem:[#allocation6 + $0x34] sm:$0xf] %vm5818, %v5749
      %5833 = vst.msk [vmem:[#allocation6 + $0x38] sm:$0xf] %vm5818, %v5751
      %5834 = vst.msk [vmem:[#allocation6 + $0x3c] sm:$0xf] %vm5818, %v5753
      %5835 = vst.msk [vmem:[#allocation6 + $0x40] sm:$0xf] %vm5818, %v5755
      %5836 = vst.msk [vmem:[#allocation6 + $0x44] sm:$0xf] %vm5818, %v5757
      %5837 = vst.msk [vmem:[#allocation6 + $0x48] sm:$0xf] %vm5818, %v5759
      %5838 = vst.msk [vmem:[#allocation6 + $0x4c] sm:$0xf] %vm5818, %v5761
      %5839 = vst.msk [vmem:[#allocation6 + $0x50] sm:$0xf] %vm5818, %v5763
      %5840 = vst.msk [vmem:[#allocation6 + $0x54] sm:$0xf] %vm5818, %v5765
      %5841 = vst.msk [vmem:[#allocation6 + $0x58] sm:$0xf] %vm5818, %v5767
      %5842 = vst.msk [vmem:[#allocation6 + $0x5c] sm:$0xf] %vm5818, %v5769
      %5843 = vst.msk [vmem:[#allocation6 + $0x60] sm:$0xf] %vm5818, %v5771
      %5844 = vst.msk [vmem:[#allocation6 + $0x64] sm:$0xf] %vm5818, %v5773
      %5845 = vst.msk [vmem:[#allocation6 + $0x68] sm:$0xf] %vm5818, %v5775
      %5846 = vst.msk [vmem:[#allocation6 + $0x6c] sm:$0xf] %vm5818, %v5777
      %5847 = vst.msk [vmem:[#allocation6 + $0x70] sm:$0xf] %vm5818, %v5779
      %5848 = vst.msk [vmem:[#allocation6 + $0x74] sm:$0xf] %vm5818, %v5781
      %5849 = vst.msk [vmem:[#allocation6 + $0x78] sm:$0xf] %vm5818, %v5783
      %5850 = vst.msk [vmem:[#allocation6 + $0x7c] sm:$0xf] %vm5818, %v5785
      %v5851 = vld [vmem:[%s5255] sm:$0xff]
      %v5852 = vld [vmem:[%s5255 + $0x8] sm:$0xff]
      %v5853 = vld [vmem:[%s5255 + $0x18] sm:$0xff]
      %v5854 = vld [vmem:[%s5255 + $0x20] sm:$0xff]
      %v5855 = vld [vmem:[%s5255 + $0x30] sm:$0xff]
      %v5856 = vld [vmem:[%s5255 + $0x38] sm:$0xff]
      %v5857 = vld [vmem:[%s5255 + $0x48] sm:$0xff]
      %v5858 = vld [vmem:[%s5255 + $0x50] sm:$0xff]
      %v5859 = vld [vmem:[%s5255 + $0x60] sm:$0xff]
      %v5860 = vld [vmem:[%s5255 + $0x68] sm:$0xff]
      %v5861 = vld [vmem:[%s5255 + $0x78] sm:$0xff]
      %v5862 = vld [vmem:[%s5255 + $0x80] sm:$0xff]
      %v5863 = vld [vmem:[%s5255 + $0x90] sm:$0xff]
      %v5864 = vld [vmem:[%s5255 + $0x98] sm:$0xff]
      %v5865 = vld [vmem:[%s5255 + $0xa8] sm:$0xff]
      %v5866 = vld [vmem:[%s5255 + $0xb0] sm:$0xff]
      %v5867 = vld [vmem:[%s5255 + $0xc0] sm:$0xff]
      %v5868 = vld [vmem:[%s5255 + $0xc8] sm:$0xff]
      %v5869 = vld [vmem:[%s5255 + $0xd8] sm:$0xff]
      %v5870 = vld [vmem:[%s5255 + $0xe0] sm:$0xff]
      %v5871 = vld [vmem:[%s5255 + $0xf0] sm:$0xff]
      %v5872 = vld [vmem:[%s5255 + $0xf8] sm:$0xff]
      %v5873 = vld [vmem:[%s5255 + $0x108] sm:$0xff]
      %v5874 = vld [vmem:[%s5255 + $0x110] sm:$0xff]
      %v5875 = vld [vmem:[%s5255 + $0x120] sm:$0xff]
      %v5876 = vld [vmem:[%s5255 + $0x128] sm:$0xff]
      %v5877 = vld [vmem:[%s5255 + $0x138] sm:$0xff]
      %v5878 = vld [vmem:[%s5255 + $0x140] sm:$0xff]
      %v5879 = vld [vmem:[%s5255 + $0x150] sm:$0xff]
      %v5880 = vld [vmem:[%s5255 + $0x158] sm:$0xff]
      %v5881 = vld [vmem:[%s5255 + $0x168] sm:$0xff]
      %v5882 = vld [vmem:[%s5255 + $0x170] sm:$0xff]
      %v5883 = vpack.c.bf16 %v5851, %v5851
      %v5884 = vpack.c.bf16 %v5852, %v5852
      %v5885 = vpack.c.bf16 %v5853, %v5853
      %v5886 = vpack.c.bf16 %v5854, %v5854
      %v5887 = vpack.c.bf16 %v5855, %v5855
      %v5888 = vpack.c.bf16 %v5856, %v5856
      %v5889 = vpack.c.bf16 %v5857, %v5857
      %v5890 = vpack.c.bf16 %v5858, %v5858
      %v5891 = vpack.c.bf16 %v5859, %v5859
      %v5892 = vpack.c.bf16 %v5860, %v5860
      %v5893 = vpack.c.bf16 %v5861, %v5861
      %v5894 = vpack.c.bf16 %v5862, %v5862
      %v5895 = vpack.c.bf16 %v5863, %v5863
      %v5896 = vpack.c.bf16 %v5864, %v5864
      %v5897 = vpack.c.bf16 %v5865, %v5865
      %v5898 = vpack.c.bf16 %v5866, %v5866
      %v5899 = vpack.c.bf16 %v5867, %v5867
      %v5900 = vpack.c.bf16 %v5868, %v5868
      %v5901 = vpack.c.bf16 %v5869, %v5869
      %v5902 = vpack.c.bf16 %v5870, %v5870
      %v5903 = vpack.c.bf16 %v5871, %v5871
      %v5904 = vpack.c.bf16 %v5872, %v5872
      %v5905 = vpack.c.bf16 %v5873, %v5873
      %v5906 = vpack.c.bf16 %v5874, %v5874
      %v5907 = vpack.c.bf16 %v5875, %v5875
      %v5908 = vpack.c.bf16 %v5876, %v5876
      %v5909 = vpack.c.bf16 %v5877, %v5877
      %v5910 = vpack.c.bf16 %v5878, %v5878
      %v5911 = vpack.c.bf16 %v5879, %v5879
      %v5912 = vpack.c.bf16 %v5880, %v5880
      %v5913 = vpack.c.bf16 %v5881, %v5881
      %v5914 = vpack.c.bf16 %v5882, %v5882
      %5947 = vrot.lane.b32.xlu0 %v5883, 24
      %v5948 = vpop.permute.xlu0 %5947
      %5949 = vrot.lane.b32.xlu0 %v5884, 24
      %v5950 = vpop.permute.xlu0 %5949
      %5951 = vrot.lane.b32.xlu0 %v5885, 24
      %v5952 = vpop.permute.xlu0 %5951
      %5953 = vrot.lane.b32.xlu0 %v5886, 24
      %v5954 = vpop.permute.xlu0 %5953
      %5955 = vrot.lane.b32.xlu0 %v5887, 24
      %v5956 = vpop.permute.xlu0 %5955
      %5957 = vrot.lane.b32.xlu0 %v5888, 24
      %v5958 = vpop.permute.xlu0 %5957
      %5959 = vrot.lane.b32.xlu0 %v5889, 24
      %v5960 = vpop.permute.xlu0 %5959
      %5961 = vrot.lane.b32.xlu0 %v5890, 24
      %v5962 = vpop.permute.xlu0 %5961
      %5963 = vrot.lane.b32.xlu0 %v5891, 24
      %v5964 = vpop.permute.xlu0 %5963
      %5965 = vrot.lane.b32.xlu0 %v5892, 24
      %v5966 = vpop.permute.xlu0 %5965
      %5967 = vrot.lane.b32.xlu0 %v5893, 24
      %v5968 = vpop.permute.xlu0 %5967
      %5969 = vrot.lane.b32.xlu0 %v5894, 24
      %v5970 = vpop.permute.xlu0 %5969
      %5971 = vrot.lane.b32.xlu0 %v5895, 24
      %v5972 = vpop.permute.xlu0 %5971
      %5973 = vrot.lane.b32.xlu0 %v5896, 24
      %v5974 = vpop.permute.xlu0 %5973
      %5975 = vrot.lane.b32.xlu0 %v5897, 24
      %v5976 = vpop.permute.xlu0 %5975
      %5977 = vrot.lane.b32.xlu0 %v5898, 24
      %v5978 = vpop.permute.xlu0 %5977
      %5979 = vrot.lane.b32.xlu0 %v5899, 24
      %v5980 = vpop.permute.xlu0 %5979
      %5981 = vrot.lane.b32.xlu0 %v5900, 24
      %v5982 = vpop.permute.xlu0 %5981
      %5983 = vrot.lane.b32.xlu0 %v5901, 24
      %v5984 = vpop.permute.xlu0 %5983
      %5985 = vrot.lane.b32.xlu0 %v5902, 24
      %v5986 = vpop.permute.xlu0 %5985
      %5987 = vrot.lane.b32.xlu0 %v5903, 24
      %v5988 = vpop.permute.xlu0 %5987
      %5989 = vrot.lane.b32.xlu0 %v5904, 24
      %v5990 = vpop.permute.xlu0 %5989
      %5991 = vrot.lane.b32.xlu0 %v5905, 24
      %v5992 = vpop.permute.xlu0 %5991
      %5993 = vrot.lane.b32.xlu0 %v5906, 24
      %v5994 = vpop.permute.xlu0 %5993
      %5995 = vrot.lane.b32.xlu0 %v5907, 24
      %v5996 = vpop.permute.xlu0 %5995
      %5997 = vrot.lane.b32.xlu0 %v5908, 24
      %v5998 = vpop.permute.xlu0 %5997
      %5999 = vrot.lane.b32.xlu0 %v5909, 24
      %v6000 = vpop.permute.xlu0 %5999
      %6001 = vrot.lane.b32.xlu0 %v5910, 24
      %v6002 = vpop.permute.xlu0 %6001
      %6003 = vrot.lane.b32.xlu0 %v5911, 24
      %v6004 = vpop.permute.xlu0 %6003
      %6005 = vrot.lane.b32.xlu0 %v5912, 24
      %v6006 = vpop.permute.xlu0 %6005
      %6007 = vrot.lane.b32.xlu0 %v5913, 24
      %v6008 = vpop.permute.xlu0 %6007
      %6009 = vrot.lane.b32.xlu0 %v5914, 24
      %v6010 = vpop.permute.xlu0 %6009
      %vm6043 = vcmask 257216
      %6044 = vst.msk [vmem:[#allocation6] sm:$0xf] %vm6043, %v5948
      %6045 = vst.msk [vmem:[#allocation6 + $0x4] sm:$0xf] %vm6043, %v5950
      %6046 = vst.msk [vmem:[#allocation6 + $0x8] sm:$0xf] %vm6043, %v5952
      %6047 = vst.msk [vmem:[#allocation6 + $0xc] sm:$0xf] %vm6043, %v5954
      %6048 = vst.msk [vmem:[#allocation6 + $0x10] sm:$0xf] %vm6043, %v5956
      %6049 = vst.msk [vmem:[#allocation6 + $0x14] sm:$0xf] %vm6043, %v5958
      %6050 = vst.msk [vmem:[#allocation6 + $0x18] sm:$0xf] %vm6043, %v5960
      %6051 = vst.msk [vmem:[#allocation6 + $0x1c] sm:$0xf] %vm6043, %v5962
      %6052 = vst.msk [vmem:[#allocation6 + $0x20] sm:$0xf] %vm6043, %v5964
      %6053 = vst.msk [vmem:[#allocation6 + $0x24] sm:$0xf] %vm6043, %v5966
      %6054 = vst.msk [vmem:[#allocation6 + $0x28] sm:$0xf] %vm6043, %v5968
      %6055 = vst.msk [vmem:[#allocation6 + $0x2c] sm:$0xf] %vm6043, %v5970
      %6056 = vst.msk [vmem:[#allocation6 + $0x30] sm:$0xf] %vm6043, %v5972
      %6057 = vst.msk [vmem:[#allocation6 + $0x34] sm:$0xf] %vm6043, %v5974
      %6058 = vst.msk [vmem:[#allocation6 + $0x38] sm:$0xf] %vm6043, %v5976
      %6059 = vst.msk [vmem:[#allocation6 + $0x3c] sm:$0xf] %vm6043, %v5978
      %6060 = vst.msk [vmem:[#allocation6 + $0x40] sm:$0xf] %vm6043, %v5980
      %6061 = vst.msk [vmem:[#allocation6 + $0x44] sm:$0xf] %vm6043, %v5982
      %6062 = vst.msk [vmem:[#allocation6 + $0x48] sm:$0xf] %vm6043, %v5984
      %6063 = vst.msk [vmem:[#allocation6 + $0x4c] sm:$0xf] %vm6043, %v5986
      %6064 = vst.msk [vmem:[#allocation6 + $0x50] sm:$0xf] %vm6043, %v5988
      %6065 = vst.msk [vmem:[#allocation6 + $0x54] sm:$0xf] %vm6043, %v5990
      %6066 = vst.msk [vmem:[#allocation6 + $0x58] sm:$0xf] %vm6043, %v5992
      %6067 = vst.msk [vmem:[#allocation6 + $0x5c] sm:$0xf] %vm6043, %v5994
      %6068 = vst.msk [vmem:[#allocation6 + $0x60] sm:$0xf] %vm6043, %v5996
      %6069 = vst.msk [vmem:[#allocation6 + $0x64] sm:$0xf] %vm6043, %v5998
      %6070 = vst.msk [vmem:[#allocation6 + $0x68] sm:$0xf] %vm6043, %v6000
      %6071 = vst.msk [vmem:[#allocation6 + $0x6c] sm:$0xf] %vm6043, %v6002
      %6072 = vst.msk [vmem:[#allocation6 + $0x70] sm:$0xf] %vm6043, %v6004
      %6073 = vst.msk [vmem:[#allocation6 + $0x74] sm:$0xf] %vm6043, %v6006
      %6074 = vst.msk [vmem:[#allocation6 + $0x78] sm:$0xf] %vm6043, %v6008
      %6075 = vst.msk [vmem:[#allocation6 + $0x7c] sm:$0xf] %vm6043, %v6010
      %v6076 = vld [vmem:[%s5255 + $0x1] sm:$0xff]
      %v6077 = vld [vmem:[%s5255 + $0x9] sm:$0xff]
      %v6078 = vld [vmem:[%s5255 + $0x19] sm:$0xff]
      %v6079 = vld [vmem:[%s5255 + $0x21] sm:$0xff]
      %v6080 = vld [vmem:[%s5255 + $0x31] sm:$0xff]
      %v6081 = vld [vmem:[%s5255 + $0x39] sm:$0xff]
      %v6082 = vld [vmem:[%s5255 + $0x49] sm:$0xff]
      %v6083 = vld [vmem:[%s5255 + $0x51] sm:$0xff]
      %v6084 = vld [vmem:[%s5255 + $0x61] sm:$0xff]
      %v6085 = vld [vmem:[%s5255 + $0x69] sm:$0xff]
      %v6086 = vld [vmem:[%s5255 + $0x79] sm:$0xff]
      %v6087 = vld [vmem:[%s5255 + $0x81] sm:$0xff]
      %v6088 = vld [vmem:[%s5255 + $0x91] sm:$0xff]
      %v6089 = vld [vmem:[%s5255 + $0x99] sm:$0xff]
      %v6090 = vld [vmem:[%s5255 + $0xa9] sm:$0xff]
      %v6091 = vld [vmem:[%s5255 + $0xb1] sm:$0xff]
      %v6092 = vld [vmem:[%s5255 + $0xc1] sm:$0xff]
      %v6093 = vld [vmem:[%s5255 + $0xc9] sm:$0xff]
      %v6094 = vld [vmem:[%s5255 + $0xd9] sm:$0xff]
      %v6095 = vld [vmem:[%s5255 + $0xe1] sm:$0xff]
      %v6096 = vld [vmem:[%s5255 + $0xf1] sm:$0xff]
      %v6097 = vld [vmem:[%s5255 + $0xf9] sm:$0xff]
      %v6098 = vld [vmem:[%s5255 + $0x109] sm:$0xff]
      %v6099 = vld [vmem:[%s5255 + $0x111] sm:$0xff]
      %v6100 = vld [vmem:[%s5255 + $0x121] sm:$0xff]
      %v6101 = vld [vmem:[%s5255 + $0x129] sm:$0xff]
      %v6102 = vld [vmem:[%s5255 + $0x139] sm:$0xff]
      %v6103 = vld [vmem:[%s5255 + $0x141] sm:$0xff]
      %v6104 = vld [vmem:[%s5255 + $0x151] sm:$0xff]
      %v6105 = vld [vmem:[%s5255 + $0x159] sm:$0xff]
      %v6106 = vld [vmem:[%s5255 + $0x169] sm:$0xff]
      %v6107 = vld [vmem:[%s5255 + $0x171] sm:$0xff]
      %v6108 = vpack.c.bf16 %v6076, %v6076
      %v6109 = vpack.c.bf16 %v6077, %v6077
      %v6110 = vpack.c.bf16 %v6078, %v6078
      %v6111 = vpack.c.bf16 %v6079, %v6079
      %v6112 = vpack.c.bf16 %v6080, %v6080
      %v6113 = vpack.c.bf16 %v6081, %v6081
      %v6114 = vpack.c.bf16 %v6082, %v6082
      %v6115 = vpack.c.bf16 %v6083, %v6083
      %v6116 = vpack.c.bf16 %v6084, %v6084
      %v6117 = vpack.c.bf16 %v6085, %v6085
      %v6118 = vpack.c.bf16 %v6086, %v6086
      %v6119 = vpack.c.bf16 %v6087, %v6087
      %v6120 = vpack.c.bf16 %v6088, %v6088
      %v6121 = vpack.c.bf16 %v6089, %v6089
      %v6122 = vpack.c.bf16 %v6090, %v6090
      %v6123 = vpack.c.bf16 %v6091, %v6091
      %v6124 = vpack.c.bf16 %v6092, %v6092
      %v6125 = vpack.c.bf16 %v6093, %v6093
      %v6126 = vpack.c.bf16 %v6094, %v6094
      %v6127 = vpack.c.bf16 %v6095, %v6095
      %v6128 = vpack.c.bf16 %v6096, %v6096
      %v6129 = vpack.c.bf16 %v6097, %v6097
      %v6130 = vpack.c.bf16 %v6098, %v6098
      %v6131 = vpack.c.bf16 %v6099, %v6099
      %v6132 = vpack.c.bf16 %v6100, %v6100
      %v6133 = vpack.c.bf16 %v6101, %v6101
      %v6134 = vpack.c.bf16 %v6102, %v6102
      %v6135 = vpack.c.bf16 %v6103, %v6103
      %v6136 = vpack.c.bf16 %v6104, %v6104
      %v6137 = vpack.c.bf16 %v6105, %v6105
      %v6138 = vpack.c.bf16 %v6106, %v6106
      %v6139 = vpack.c.bf16 %v6107, %v6107
      %6172 = vrot.lane.b32.xlu0 %v6108, 32
      %v6173 = vpop.permute.xlu0 %6172
      %6174 = vrot.lane.b32.xlu0 %v6109, 32
      %v6175 = vpop.permute.xlu0 %6174
      %6176 = vrot.lane.b32.xlu0 %v6110, 32
      %v6177 = vpop.permute.xlu0 %6176
      %6178 = vrot.lane.b32.xlu0 %v6111, 32
      %v6179 = vpop.permute.xlu0 %6178
      %6180 = vrot.lane.b32.xlu0 %v6112, 32
      %v6181 = vpop.permute.xlu0 %6180
      %6182 = vrot.lane.b32.xlu0 %v6113, 32
      %v6183 = vpop.permute.xlu0 %6182
      %6184 = vrot.lane.b32.xlu0 %v6114, 32
      %v6185 = vpop.permute.xlu0 %6184
      %6186 = vrot.lane.b32.xlu0 %v6115, 32
      %v6187 = vpop.permute.xlu0 %6186
      %6188 = vrot.lane.b32.xlu0 %v6116, 32
      %v6189 = vpop.permute.xlu0 %6188
      %6190 = vrot.lane.b32.xlu0 %v6117, 32
      %v6191 = vpop.permute.xlu0 %6190
      %6192 = vrot.lane.b32.xlu0 %v6118, 32
      %v6193 = vpop.permute.xlu0 %6192
      %6194 = vrot.lane.b32.xlu0 %v6119, 32
      %v6195 = vpop.permute.xlu0 %6194
      %6196 = vrot.lane.b32.xlu0 %v6120, 32
      %v6197 = vpop.permute.xlu0 %6196
      %6198 = vrot.lane.b32.xlu0 %v6121, 32
      %v6199 = vpop.permute.xlu0 %6198
      %6200 = vrot.lane.b32.xlu0 %v6122, 32
      %v6201 = vpop.permute.xlu0 %6200
      %6202 = vrot.lane.b32.xlu0 %v6123, 32
      %v6203 = vpop.permute.xlu0 %6202
      %6204 = vrot.lane.b32.xlu0 %v6124, 32
      %v6205 = vpop.permute.xlu0 %6204
      %6206 = vrot.lane.b32.xlu0 %v6125, 32
      %v6207 = vpop.permute.xlu0 %6206
      %6208 = vrot.lane.b32.xlu0 %v6126, 32
      %v6209 = vpop.permute.xlu0 %6208
      %6210 = vrot.lane.b32.xlu0 %v6127, 32
      %v6211 = vpop.permute.xlu0 %6210
      %6212 = vrot.lane.b32.xlu0 %v6128, 32
      %v6213 = vpop.permute.xlu0 %6212
      %6214 = vrot.lane.b32.xlu0 %v6129, 32
      %v6215 = vpop.permute.xlu0 %6214
      %6216 = vrot.lane.b32.xlu0 %v6130, 32
      %v6217 = vpop.permute.xlu0 %6216
      %6218 = vrot.lane.b32.xlu0 %v6131, 32
      %v6219 = vpop.permute.xlu0 %6218
      %6220 = vrot.lane.b32.xlu0 %v6132, 32
      %v6221 = vpop.permute.xlu0 %6220
      %6222 = vrot.lane.b32.xlu0 %v6133, 32
      %v6223 = vpop.permute.xlu0 %6222
      %6224 = vrot.lane.b32.xlu0 %v6134, 32
      %v6225 = vpop.permute.xlu0 %6224
      %6226 = vrot.lane.b32.xlu0 %v6135, 32
      %v6227 = vpop.permute.xlu0 %6226
      %6228 = vrot.lane.b32.xlu0 %v6136, 32
      %v6229 = vpop.permute.xlu0 %6228
      %6230 = vrot.lane.b32.xlu0 %v6137, 32
      %v6231 = vpop.permute.xlu0 %6230
      %6232 = vrot.lane.b32.xlu0 %v6138, 32
      %v6233 = vpop.permute.xlu0 %6232
      %6234 = vrot.lane.b32.xlu0 %v6139, 32
      %v6235 = vpop.permute.xlu0 %6234
      %vm6268 = vcmask 322816
      %6269 = vst.msk [vmem:[#allocation6] sm:$0xf] %vm6268, %v6173
      %6270 = vst.msk [vmem:[#allocation6 + $0x4] sm:$0xf] %vm6268, %v6175
      %6271 = vst.msk [vmem:[#allocation6 + $0x8] sm:$0xf] %vm6268, %v6177
      %6272 = vst.msk [vmem:[#allocation6 + $0xc] sm:$0xf] %vm6268, %v6179
      %6273 = vst.msk [vmem:[#allocation6 + $0x10] sm:$0xf] %vm6268, %v6181
      %6274 = vst.msk [vmem:[#allocation6 + $0x14] sm:$0xf] %vm6268, %v6183
      %6275 = vst.msk [vmem:[#allocation6 + $0x18] sm:$0xf] %vm6268, %v6185
      %6276 = vst.msk [vmem:[#allocation6 + $0x1c] sm:$0xf] %vm6268, %v6187
      %6277 = vst.msk [vmem:[#allocation6 + $0x20] sm:$0xf] %vm6268, %v6189
      %6278 = vst.msk [vmem:[#allocation6 + $0x24] sm:$0xf] %vm6268, %v6191
      %6279 = vst.msk [vmem:[#allocation6 + $0x28] sm:$0xf] %vm6268, %v6193
      %6280 = vst.msk [vmem:[#allocation6 + $0x2c] sm:$0xf] %vm6268, %v6195
      %6281 = vst.msk [vmem:[#allocation6 + $0x30] sm:$0xf] %vm6268, %v6197
      %6282 = vst.msk [vmem:[#allocation6 + $0x34] sm:$0xf] %vm6268, %v6199
      %6283 = vst.msk [vmem:[#allocation6 + $0x38] sm:$0xf] %vm6268, %v6201
      %6284 = vst.msk [vmem:[#allocation6 + $0x3c] sm:$0xf] %vm6268, %v6203
      %6285 = vst.msk [vmem:[#allocation6 + $0x40] sm:$0xf] %vm6268, %v6205
      %6286 = vst.msk [vmem:[#allocation6 + $0x44] sm:$0xf] %vm6268, %v6207
      %6287 = vst.msk [vmem:[#allocation6 + $0x48] sm:$0xf] %vm6268, %v6209
      %6288 = vst.msk [vmem:[#allocation6 + $0x4c] sm:$0xf] %vm6268, %v6211
      %6289 = vst.msk [vmem:[#allocation6 + $0x50] sm:$0xf] %vm6268, %v6213
      %6290 = vst.msk [vmem:[#allocation6 + $0x54] sm:$0xf] %vm6268, %v6215
      %6291 = vst.msk [vmem:[#allocation6 + $0x58] sm:$0xf] %vm6268, %v6217
      %6292 = vst.msk [vmem:[#allocation6 + $0x5c] sm:$0xf] %vm6268, %v6219
      %6293 = vst.msk [vmem:[#allocation6 + $0x60] sm:$0xf] %vm6268, %v6221
      %6294 = vst.msk [vmem:[#allocation6 + $0x64] sm:$0xf] %vm6268, %v6223
      %6295 = vst.msk [vmem:[#allocation6 + $0x68] sm:$0xf] %vm6268, %v6225
      %6296 = vst.msk [vmem:[#allocation6 + $0x6c] sm:$0xf] %vm6268, %v6227
      %6297 = vst.msk [vmem:[#allocation6 + $0x70] sm:$0xf] %vm6268, %v6229
      %6298 = vst.msk [vmem:[#allocation6 + $0x74] sm:$0xf] %vm6268, %v6231
      %6299 = vst.msk [vmem:[#allocation6 + $0x78] sm:$0xf] %vm6268, %v6233
      %6300 = vst.msk [vmem:[#allocation6 + $0x7c] sm:$0xf] %vm6268, %v6235
      %v6301 = vld [vmem:[%s5255 + $0x2] sm:$0xff]
      %v6302 = vld [vmem:[%s5255 + $0xa] sm:$0xff]
      %v6303 = vld [vmem:[%s5255 + $0x1a] sm:$0xff]
      %v6304 = vld [vmem:[%s5255 + $0x22] sm:$0xff]
      %v6305 = vld [vmem:[%s5255 + $0x32] sm:$0xff]
      %v6306 = vld [vmem:[%s5255 + $0x3a] sm:$0xff]
      %v6307 = vld [vmem:[%s5255 + $0x4a] sm:$0xff]
      %v6308 = vld [vmem:[%s5255 + $0x52] sm:$0xff]
      %v6309 = vld [vmem:[%s5255 + $0x62] sm:$0xff]
      %v6310 = vld [vmem:[%s5255 + $0x6a] sm:$0xff]
      %v6311 = vld [vmem:[%s5255 + $0x7a] sm:$0xff]
      %v6312 = vld [vmem:[%s5255 + $0x82] sm:$0xff]
      %v6313 = vld [vmem:[%s5255 + $0x92] sm:$0xff]
      %v6314 = vld [vmem:[%s5255 + $0x9a] sm:$0xff]
      %v6315 = vld [vmem:[%s5255 + $0xaa] sm:$0xff]
      %v6316 = vld [vmem:[%s5255 + $0xb2] sm:$0xff]
      %v6317 = vld [vmem:[%s5255 + $0xc2] sm:$0xff]
      %v6318 = vld [vmem:[%s5255 + $0xca] sm:$0xff]
      %v6319 = vld [vmem:[%s5255 + $0xda] sm:$0xff]
      %v6320 = vld [vmem:[%s5255 + $0xe2] sm:$0xff]
      %v6321 = vld [vmem:[%s5255 + $0xf2] sm:$0xff]
      %v6322 = vld [vmem:[%s5255 + $0xfa] sm:$0xff]
      %v6323 = vld [vmem:[%s5255 + $0x10a] sm:$0xff]
      %v6324 = vld [vmem:[%s5255 + $0x112] sm:$0xff]
      %v6325 = vld [vmem:[%s5255 + $0x122] sm:$0xff]
      %v6326 = vld [vmem:[%s5255 + $0x12a] sm:$0xff]
      %v6327 = vld [vmem:[%s5255 + $0x13a] sm:$0xff]
      %v6328 = vld [vmem:[%s5255 + $0x142] sm:$0xff]
      %v6329 = vld [vmem:[%s5255 + $0x152] sm:$0xff]
      %v6330 = vld [vmem:[%s5255 + $0x15a] sm:$0xff]
      %v6331 = vld [vmem:[%s5255 + $0x16a] sm:$0xff]
      %v6332 = vld [vmem:[%s5255 + $0x172] sm:$0xff]
      %v6333 = vpack.c.bf16 %v6301, %v6301
      %v6334 = vpack.c.bf16 %v6302, %v6302
      %v6335 = vpack.c.bf16 %v6303, %v6303
      %v6336 = vpack.c.bf16 %v6304, %v6304
      %v6337 = vpack.c.bf16 %v6305, %v6305
      %v6338 = vpack.c.bf16 %v6306, %v6306
      %v6339 = vpack.c.bf16 %v6307, %v6307
      %v6340 = vpack.c.bf16 %v6308, %v6308
      %v6341 = vpack.c.bf16 %v6309, %v6309
      %v6342 = vpack.c.bf16 %v6310, %v6310
      %v6343 = vpack.c.bf16 %v6311, %v6311
      %v6344 = vpack.c.bf16 %v6312, %v6312
      %v6345 = vpack.c.bf16 %v6313, %v6313
      %v6346 = vpack.c.bf16 %v6314, %v6314
      %v6347 = vpack.c.bf16 %v6315, %v6315
      %v6348 = vpack.c.bf16 %v6316, %v6316
      %v6349 = vpack.c.bf16 %v6317, %v6317
      %v6350 = vpack.c.bf16 %v6318, %v6318
      %v6351 = vpack.c.bf16 %v6319, %v6319
      %v6352 = vpack.c.bf16 %v6320, %v6320
      %v6353 = vpack.c.bf16 %v6321, %v6321
      %v6354 = vpack.c.bf16 %v6322, %v6322
      %v6355 = vpack.c.bf16 %v6323, %v6323
      %v6356 = vpack.c.bf16 %v6324, %v6324
      %v6357 = vpack.c.bf16 %v6325, %v6325
      %v6358 = vpack.c.bf16 %v6326, %v6326
      %v6359 = vpack.c.bf16 %v6327, %v6327
      %v6360 = vpack.c.bf16 %v6328, %v6328
      %v6361 = vpack.c.bf16 %v6329, %v6329
      %v6362 = vpack.c.bf16 %v6330, %v6330
      %v6363 = vpack.c.bf16 %v6331, %v6331
      %v6364 = vpack.c.bf16 %v6332, %v6332
      %6397 = vrot.lane.b32.xlu0 %v6333, 40
      %v6398 = vpop.permute.xlu0 %6397
      %6399 = vrot.lane.b32.xlu0 %v6334, 40
      %v6400 = vpop.permute.xlu0 %6399
      %6401 = vrot.lane.b32.xlu0 %v6335, 40
      %v6402 = vpop.permute.xlu0 %6401
      %6403 = vrot.lane.b32.xlu0 %v6336, 40
      %v6404 = vpop.permute.xlu0 %6403
      %6405 = vrot.lane.b32.xlu0 %v6337, 40
      %v6406 = vpop.permute.xlu0 %6405
      %6407 = vrot.lane.b32.xlu0 %v6338, 40
      %v6408 = vpop.permute.xlu0 %6407
      %6409 = vrot.lane.b32.xlu0 %v6339, 40
      %v6410 = vpop.permute.xlu0 %6409
      %6411 = vrot.lane.b32.xlu0 %v6340, 40
      %v6412 = vpop.permute.xlu0 %6411
      %6413 = vrot.lane.b32.xlu0 %v6341, 40
      %v6414 = vpop.permute.xlu0 %6413
      %6415 = vrot.lane.b32.xlu0 %v6342, 40
      %v6416 = vpop.permute.xlu0 %6415
      %6417 = vrot.lane.b32.xlu0 %v6343, 40
      %v6418 = vpop.permute.xlu0 %6417
      %6419 = vrot.lane.b32.xlu0 %v6344, 40
      %v6420 = vpop.permute.xlu0 %6419
      %6421 = vrot.lane.b32.xlu0 %v6345, 40
      %v6422 = vpop.permute.xlu0 %6421
      %6423 = vrot.lane.b32.xlu0 %v6346, 40
      %v6424 = vpop.permute.xlu0 %6423
      %6425 = vrot.lane.b32.xlu0 %v6347, 40
      %v6426 = vpop.permute.xlu0 %6425
      %6427 = vrot.lane.b32.xlu0 %v6348, 40
      %v6428 = vpop.permute.xlu0 %6427
      %6429 = vrot.lane.b32.xlu0 %v6349, 40
      %v6430 = vpop.permute.xlu0 %6429
      %6431 = vrot.lane.b32.xlu0 %v6350, 40
      %v6432 = vpop.permute.xlu0 %6431
      %6433 = vrot.lane.b32.xlu0 %v6351, 40
      %v6434 = vpop.permute.xlu0 %6433
      %6435 = vrot.lane.b32.xlu0 %v6352, 40
      %v6436 = vpop.permute.xlu0 %6435
      %6437 = vrot.lane.b32.xlu0 %v6353, 40
      %v6438 = vpop.permute.xlu0 %6437
      %6439 = vrot.lane.b32.xlu0 %v6354, 40
      %v6440 = vpop.permute.xlu0 %6439
      %6441 = vrot.lane.b32.xlu0 %v6355, 40
      %v6442 = vpop.permute.xlu0 %6441
      %6443 = vrot.lane.b32.xlu0 %v6356, 40
      %v6444 = vpop.permute.xlu0 %6443
      %6445 = vrot.lane.b32.xlu0 %v6357, 40
      %v6446 = vpop.permute.xlu0 %6445
      %6447 = vrot.lane.b32.xlu0 %v6358, 40
      %v6448 = vpop.permute.xlu0 %6447
      %6449 = vrot.lane.b32.xlu0 %v6359, 40
      %v6450 = vpop.permute.xlu0 %6449
      %6451 = vrot.lane.b32.xlu0 %v6360, 40
      %v6452 = vpop.permute.xlu0 %6451
      %6453 = vrot.lane.b32.xlu0 %v6361, 40
      %v6454 = vpop.permute.xlu0 %6453
      %6455 = vrot.lane.b32.xlu0 %v6362, 40
      %v6456 = vpop.permute.xlu0 %6455
      %6457 = vrot.lane.b32.xlu0 %v6363, 40
      %v6458 = vpop.permute.xlu0 %6457
      %6459 = vrot.lane.b32.xlu0 %v6364, 40
      %v6460 = vpop.permute.xlu0 %6459
      %vm6493 = vcmask 388416
      %6494 = vst.msk [vmem:[#allocation6] sm:$0xf] %vm6493, %v6398
      %6495 = vst.msk [vmem:[#allocation6 + $0x4] sm:$0xf] %vm6493, %v6400
      %6496 = vst.msk [vmem:[#allocation6 + $0x8] sm:$0xf] %vm6493, %v6402
      %6497 = vst.msk [vmem:[#allocation6 + $0xc] sm:$0xf] %vm6493, %v6404
      %6498 = vst.msk [vmem:[#allocation6 + $0x10] sm:$0xf] %vm6493, %v6406
      %6499 = vst.msk [vmem:[#allocation6 + $0x14] sm:$0xf] %vm6493, %v6408
      %6500 = vst.msk [vmem:[#allocation6 + $0x18] sm:$0xf] %vm6493, %v6410
      %6501 = vst.msk [vmem:[#allocation6 + $0x1c] sm:$0xf] %vm6493, %v6412
      %6502 = vst.msk [vmem:[#allocation6 + $0x20] sm:$0xf] %vm6493, %v6414
      %6503 = vst.msk [vmem:[#allocation6 + $0x24] sm:$0xf] %vm6493, %v6416
      %6504 = vst.msk [vmem:[#allocation6 + $0x28] sm:$0xf] %vm6493, %v6418
      %6505 = vst.msk [vmem:[#allocation6 + $0x2c] sm:$0xf] %vm6493, %v6420
      %6506 = vst.msk [vmem:[#allocation6 + $0x30] sm:$0xf] %vm6493, %v6422
      %6507 = vst.msk [vmem:[#allocation6 + $0x34] sm:$0xf] %vm6493, %v6424
      %6508 = vst.msk [vmem:[#allocation6 + $0x38] sm:$0xf] %vm6493, %v6426
      %6509 = vst.msk [vmem:[#allocation6 + $0x3c] sm:$0xf] %vm6493, %v6428
      %6510 = vst.msk [vmem:[#allocation6 + $0x40] sm:$0xf] %vm6493, %v6430
      %6511 = vst.msk [vmem:[#allocation6 + $0x44] sm:$0xf] %vm6493, %v6432
      %6512 = vst.msk [vmem:[#allocation6 + $0x48] sm:$0xf] %vm6493, %v6434
      %6513 = vst.msk [vmem:[#allocation6 + $0x4c] sm:$0xf] %vm6493, %v6436
      %6514 = vst.msk [vmem:[#allocation6 + $0x50] sm:$0xf] %vm6493, %v6438
      %6515 = vst.msk [vmem:[#allocation6 + $0x54] sm:$0xf] %vm6493, %v6440
      %6516 = vst.msk [vmem:[#allocation6 + $0x58] sm:$0xf] %vm6493, %v6442
      %6517 = vst.msk [vmem:[#allocation6 + $0x5c] sm:$0xf] %vm6493, %v6444
      %6518 = vst.msk [vmem:[#allocation6 + $0x60] sm:$0xf] %vm6493, %v6446
      %6519 = vst.msk [vmem:[#allocation6 + $0x64] sm:$0xf] %vm6493, %v6448
      %6520 = vst.msk [vmem:[#allocation6 + $0x68] sm:$0xf] %vm6493, %v6450
      %6521 = vst.msk [vmem:[#allocation6 + $0x6c] sm:$0xf] %vm6493, %v6452
      %6522 = vst.msk [vmem:[#allocation6 + $0x70] sm:$0xf] %vm6493, %v6454
      %6523 = vst.msk [vmem:[#allocation6 + $0x74] sm:$0xf] %vm6493, %v6456
      %6524 = vst.msk [vmem:[#allocation6 + $0x78] sm:$0xf] %vm6493, %v6458
      %6525 = vst.msk [vmem:[#allocation6 + $0x7c] sm:$0xf] %vm6493, %v6460
      %s6526 = scalar_lea.vmem [#allocation5], 48
      %v6527 = vld [vmem:[%s6526] sm:$0xff]
      %v6528 = vld [vmem:[%s6526 + $0x8] sm:$0xff]
      %v6529 = vld [vmem:[%s6526 + $0x18] sm:$0xff]
      %v6530 = vld [vmem:[%s6526 + $0x20] sm:$0xff]
      %v6531 = vld [vmem:[%s6526 + $0x30] sm:$0xff]
      %v6532 = vld [vmem:[%s6526 + $0x38] sm:$0xff]
      %v6533 = vld [vmem:[%s6526 + $0x48] sm:$0xff]
      %v6534 = vld [vmem:[%s6526 + $0x50] sm:$0xff]
      %v6535 = vld [vmem:[%s6526 + $0x60] sm:$0xff]
      %v6536 = vld [vmem:[%s6526 + $0x68] sm:$0xff]
      %v6537 = vld [vmem:[%s6526 + $0x78] sm:$0xff]
      %v6538 = vld [vmem:[%s6526 + $0x80] sm:$0xff]
      %v6539 = vld [vmem:[%s6526 + $0x90] sm:$0xff]
      %v6540 = vld [vmem:[%s6526 + $0x98] sm:$0xff]
      %v6541 = vld [vmem:[%s6526 + $0xa8] sm:$0xff]
      %v6542 = vld [vmem:[%s6526 + $0xb0] sm:$0xff]
      %v6543 = vld [vmem:[%s6526 + $0xc0] sm:$0xff]
      %v6544 = vld [vmem:[%s6526 + $0xc8] sm:$0xff]
      %v6545 = vld [vmem:[%s6526 + $0xd8] sm:$0xff]
      %v6546 = vld [vmem:[%s6526 + $0xe0] sm:$0xff]
      %v6547 = vld [vmem:[%s6526 + $0xf0] sm:$0xff]
      %v6548 = vld [vmem:[%s6526 + $0xf8] sm:$0xff]
      %v6549 = vld [vmem:[%s6526 + $0x108] sm:$0xff]
      %v6550 = vld [vmem:[%s6526 + $0x110] sm:$0xff]
      %v6551 = vld [vmem:[%s6526 + $0x120] sm:$0xff]
      %v6552 = vld [vmem:[%s6526 + $0x128] sm:$0xff]
      %v6553 = vld [vmem:[%s6526 + $0x138] sm:$0xff]
      %v6554 = vld [vmem:[%s6526 + $0x140] sm:$0xff]
      %v6555 = vld [vmem:[%s6526 + $0x150] sm:$0xff]
      %v6556 = vld [vmem:[%s6526 + $0x158] sm:$0xff]
      %v6557 = vld [vmem:[%s6526 + $0x168] sm:$0xff]
      %v6558 = vld [vmem:[%s6526 + $0x170] sm:$0xff]
      %v6559 = vpack.c.bf16 %v6527, %v6527
      %v6560 = vpack.c.bf16 %v6528, %v6528
      %v6561 = vpack.c.bf16 %v6529, %v6529
      %v6562 = vpack.c.bf16 %v6530, %v6530
      %v6563 = vpack.c.bf16 %v6531, %v6531
      %v6564 = vpack.c.bf16 %v6532, %v6532
      %v6565 = vpack.c.bf16 %v6533, %v6533
      %v6566 = vpack.c.bf16 %v6534, %v6534
      %v6567 = vpack.c.bf16 %v6535, %v6535
      %v6568 = vpack.c.bf16 %v6536, %v6536
      %v6569 = vpack.c.bf16 %v6537, %v6537
      %v6570 = vpack.c.bf16 %v6538, %v6538
      %v6571 = vpack.c.bf16 %v6539, %v6539
      %v6572 = vpack.c.bf16 %v6540, %v6540
      %v6573 = vpack.c.bf16 %v6541, %v6541
      %v6574 = vpack.c.bf16 %v6542, %v6542
      %v6575 = vpack.c.bf16 %v6543, %v6543
      %v6576 = vpack.c.bf16 %v6544, %v6544
      %v6577 = vpack.c.bf16 %v6545, %v6545
      %v6578 = vpack.c.bf16 %v6546, %v6546
      %v6579 = vpack.c.bf16 %v6547, %v6547
      %v6580 = vpack.c.bf16 %v6548, %v6548
      %v6581 = vpack.c.bf16 %v6549, %v6549
      %v6582 = vpack.c.bf16 %v6550, %v6550
      %v6583 = vpack.c.bf16 %v6551, %v6551
      %v6584 = vpack.c.bf16 %v6552, %v6552
      %v6585 = vpack.c.bf16 %v6553, %v6553
      %v6586 = vpack.c.bf16 %v6554, %v6554
      %v6587 = vpack.c.bf16 %v6555, %v6555
      %v6588 = vpack.c.bf16 %v6556, %v6556
      %v6589 = vpack.c.bf16 %v6557, %v6557
      %v6590 = vpack.c.bf16 %v6558, %v6558
      %6623 = vrot.lane.b32.xlu0 %v6559, 48
      %v6624 = vpop.permute.xlu0 %6623
      %6625 = vrot.lane.b32.xlu0 %v6560, 48
      %v6626 = vpop.permute.xlu0 %6625
      %6627 = vrot.lane.b32.xlu0 %v6561, 48
      %v6628 = vpop.permute.xlu0 %6627
      %6629 = vrot.lane.b32.xlu0 %v6562, 48
      %v6630 = vpop.permute.xlu0 %6629
      %6631 = vrot.lane.b32.xlu0 %v6563, 48
      %v6632 = vpop.permute.xlu0 %6631
      %6633 = vrot.lane.b32.xlu0 %v6564, 48
      %v6634 = vpop.permute.xlu0 %6633
      %6635 = vrot.lane.b32.xlu0 %v6565, 48
      %v6636 = vpop.permute.xlu0 %6635
      %6637 = vrot.lane.b32.xlu0 %v6566, 48
      %v6638 = vpop.permute.xlu0 %6637
      %6639 = vrot.lane.b32.xlu0 %v6567, 48
      %v6640 = vpop.permute.xlu0 %6639
      %6641 = vrot.lane.b32.xlu0 %v6568, 48
      %v6642 = vpop.permute.xlu0 %6641
      %6643 = vrot.lane.b32.xlu0 %v6569, 48
      %v6644 = vpop.permute.xlu0 %6643
      %6645 = vrot.lane.b32.xlu0 %v6570, 48
      %v6646 = vpop.permute.xlu0 %6645
      %6647 = vrot.lane.b32.xlu0 %v6571, 48
      %v6648 = vpop.permute.xlu0 %6647
      %6649 = vrot.lane.b32.xlu0 %v6572, 48
      %v6650 = vpop.permute.xlu0 %6649
      %6651 = vrot.lane.b32.xlu0 %v6573, 48
      %v6652 = vpop.permute.xlu0 %6651
      %6653 = vrot.lane.b32.xlu0 %v6574, 48
      %v6654 = vpop.permute.xlu0 %6653
      %6655 = vrot.lane.b32.xlu0 %v6575, 48
      %v6656 = vpop.permute.xlu0 %6655
      %6657 = vrot.lane.b32.xlu0 %v6576, 48
      %v6658 = vpop.permute.xlu0 %6657
      %6659 = vrot.lane.b32.xlu0 %v6577, 48
      %v6660 = vpop.permute.xlu0 %6659
      %6661 = vrot.lane.b32.xlu0 %v6578, 48
      %v6662 = vpop.permute.xlu0 %6661
      %6663 = vrot.lane.b32.xlu0 %v6579, 48
      %v6664 = vpop.permute.xlu0 %6663
      %6665 = vrot.lane.b32.xlu0 %v6580, 48
      %v6666 = vpop.permute.xlu0 %6665
      %6667 = vrot.lane.b32.xlu0 %v6581, 48
      %v6668 = vpop.permute.xlu0 %6667
      %6669 = vrot.lane.b32.xlu0 %v6582, 48
      %v6670 = vpop.permute.xlu0 %6669
      %6671 = vrot.lane.b32.xlu0 %v6583, 48
      %v6672 = vpop.permute.xlu0 %6671
      %6673 = vrot.lane.b32.xlu0 %v6584, 48
      %v6674 = vpop.permute.xlu0 %6673
      %6675 = vrot.lane.b32.xlu0 %v6585, 48
      %v6676 = vpop.permute.xlu0 %6675
      %6677 = vrot.lane.b32.xlu0 %v6586, 48
      %v6678 = vpop.permute.xlu0 %6677
      %6679 = vrot.lane.b32.xlu0 %v6587, 48
      %v6680 = vpop.permute.xlu0 %6679
      %6681 = vrot.lane.b32.xlu0 %v6588, 48
      %v6682 = vpop.permute.xlu0 %6681
      %6683 = vrot.lane.b32.xlu0 %v6589, 48
      %v6684 = vpop.permute.xlu0 %6683
      %6685 = vrot.lane.b32.xlu0 %v6590, 48
      %v6686 = vpop.permute.xlu0 %6685
      %vm6719 = vcmask 454016
      %6720 = vst.msk [vmem:[#allocation6] sm:$0xf] %vm6719, %v6624
      %6721 = vst.msk [vmem:[#allocation6 + $0x4] sm:$0xf] %vm6719, %v6626
      %6722 = vst.msk [vmem:[#allocation6 + $0x8] sm:$0xf] %vm6719, %v6628
      %6723 = vst.msk [vmem:[#allocation6 + $0xc] sm:$0xf] %vm6719, %v6630
      %6724 = vst.msk [vmem:[#allocation6 + $0x10] sm:$0xf] %vm6719, %v6632
      %6725 = vst.msk [vmem:[#allocation6 + $0x14] sm:$0xf] %vm6719, %v6634
      %6726 = vst.msk [vmem:[#allocation6 + $0x18] sm:$0xf] %vm6719, %v6636
      %6727 = vst.msk [vmem:[#allocation6 + $0x1c] sm:$0xf] %vm6719, %v6638
      %6728 = vst.msk [vmem:[#allocation6 + $0x20] sm:$0xf] %vm6719, %v6640
      %6729 = vst.msk [vmem:[#allocation6 + $0x24] sm:$0xf] %vm6719, %v6642
      %6730 = vst.msk [vmem:[#allocation6 + $0x28] sm:$0xf] %vm6719, %v6644
      %6731 = vst.msk [vmem:[#allocation6 + $0x2c] sm:$0xf] %vm6719, %v6646
      %6732 = vst.msk [vmem:[#allocation6 + $0x30] sm:$0xf] %vm6719, %v6648
      %6733 = vst.msk [vmem:[#allocation6 + $0x34] sm:$0xf] %vm6719, %v6650
      %6734 = vst.msk [vmem:[#allocation6 + $0x38] sm:$0xf] %vm6719, %v6652
      %6735 = vst.msk [vmem:[#allocation6 + $0x3c] sm:$0xf] %vm6719, %v6654
      %6736 = vst.msk [vmem:[#allocation6 + $0x40] sm:$0xf] %vm6719, %v6656
      %6737 = vst.msk [vmem:[#allocation6 + $0x44] sm:$0xf] %vm6719, %v6658
      %6738 = vst.msk [vmem:[#allocation6 + $0x48] sm:$0xf] %vm6719, %v6660
      %6739 = vst.msk [vmem:[#allocation6 + $0x4c] sm:$0xf] %vm6719, %v6662
      %6740 = vst.msk [vmem:[#allocation6 + $0x50] sm:$0xf] %vm6719, %v6664
      %6741 = vst.msk [vmem:[#allocation6 + $0x54] sm:$0xf] %vm6719, %v6666
      %6742 = vst.msk [vmem:[#allocation6 + $0x58] sm:$0xf] %vm6719, %v6668
      %6743 = vst.msk [vmem:[#allocation6 + $0x5c] sm:$0xf] %vm6719, %v6670
      %6744 = vst.msk [vmem:[#allocation6 + $0x60] sm:$0xf] %vm6719, %v6672
      %6745 = vst.msk [vmem:[#allocation6 + $0x64] sm:$0xf] %vm6719, %v6674
      %6746 = vst.msk [vmem:[#allocation6 + $0x68] sm:$0xf] %vm6719, %v6676
      %6747 = vst.msk [vmem:[#allocation6 + $0x6c] sm:$0xf] %vm6719, %v6678
      %6748 = vst.msk [vmem:[#allocation6 + $0x70] sm:$0xf] %vm6719, %v6680
      %6749 = vst.msk [vmem:[#allocation6 + $0x74] sm:$0xf] %vm6719, %v6682
      %6750 = vst.msk [vmem:[#allocation6 + $0x78] sm:$0xf] %vm6719, %v6684
      %6751 = vst.msk [vmem:[#allocation6 + $0x7c] sm:$0xf] %vm6719, %v6686
      %v6752 = vld [vmem:[%s6526 + $0x1] sm:$0xff]
      %v6753 = vld [vmem:[%s6526 + $0x9] sm:$0xff]
      %v6754 = vld [vmem:[%s6526 + $0x19] sm:$0xff]
      %v6755 = vld [vmem:[%s6526 + $0x21] sm:$0xff]
      %v6756 = vld [vmem:[%s6526 + $0x31] sm:$0xff]
      %v6757 = vld [vmem:[%s6526 + $0x39] sm:$0xff]
      %v6758 = vld [vmem:[%s6526 + $0x49] sm:$0xff]
      %v6759 = vld [vmem:[%s6526 + $0x51] sm:$0xff]
      %v6760 = vld [vmem:[%s6526 + $0x61] sm:$0xff]
      %v6761 = vld [vmem:[%s6526 + $0x69] sm:$0xff]
      %v6762 = vld [vmem:[%s6526 + $0x79] sm:$0xff]
      %v6763 = vld [vmem:[%s6526 + $0x81] sm:$0xff]
      %v6764 = vld [vmem:[%s6526 + $0x91] sm:$0xff]
      %v6765 = vld [vmem:[%s6526 + $0x99] sm:$0xff]
      %v6766 = vld [vmem:[%s6526 + $0xa9] sm:$0xff]
      %v6767 = vld [vmem:[%s6526 + $0xb1] sm:$0xff]
      %v6768 = vld [vmem:[%s6526 + $0xc1] sm:$0xff]
      %v6769 = vld [vmem:[%s6526 + $0xc9] sm:$0xff]
      %v6770 = vld [vmem:[%s6526 + $0xd9] sm:$0xff]
      %v6771 = vld [vmem:[%s6526 + $0xe1] sm:$0xff]
      %v6772 = vld [vmem:[%s6526 + $0xf1] sm:$0xff]
      %v6773 = vld [vmem:[%s6526 + $0xf9] sm:$0xff]
      %v6774 = vld [vmem:[%s6526 + $0x109] sm:$0xff]
      %v6775 = vld [vmem:[%s6526 + $0x111] sm:$0xff]
      %v6776 = vld [vmem:[%s6526 + $0x121] sm:$0xff]
      %v6777 = vld [vmem:[%s6526 + $0x129] sm:$0xff]
      %v6778 = vld [vmem:[%s6526 + $0x139] sm:$0xff]
      %v6779 = vld [vmem:[%s6526 + $0x141] sm:$0xff]
      %v6780 = vld [vmem:[%s6526 + $0x151] sm:$0xff]
      %v6781 = vld [vmem:[%s6526 + $0x159] sm:$0xff]
      %v6782 = vld [vmem:[%s6526 + $0x169] sm:$0xff]
      %v6783 = vld [vmem:[%s6526 + $0x171] sm:$0xff]
      %v6784 = vpack.c.bf16 %v6752, %v6752
      %v6785 = vpack.c.bf16 %v6753, %v6753
      %v6786 = vpack.c.bf16 %v6754, %v6754
      %v6787 = vpack.c.bf16 %v6755, %v6755
      %v6788 = vpack.c.bf16 %v6756, %v6756
      %v6789 = vpack.c.bf16 %v6757, %v6757
      %v6790 = vpack.c.bf16 %v6758, %v6758
      %v6791 = vpack.c.bf16 %v6759, %v6759
      %v6792 = vpack.c.bf16 %v6760, %v6760
      %v6793 = vpack.c.bf16 %v6761, %v6761
      %v6794 = vpack.c.bf16 %v6762, %v6762
      %v6795 = vpack.c.bf16 %v6763, %v6763
      %v6796 = vpack.c.bf16 %v6764, %v6764
      %v6797 = vpack.c.bf16 %v6765, %v6765
      %v6798 = vpack.c.bf16 %v6766, %v6766
      %v6799 = vpack.c.bf16 %v6767, %v6767
      %v6800 = vpack.c.bf16 %v6768, %v6768
      %v6801 = vpack.c.bf16 %v6769, %v6769
      %v6802 = vpack.c.bf16 %v6770, %v6770
      %v6803 = vpack.c.bf16 %v6771, %v6771
      %v6804 = vpack.c.bf16 %v6772, %v6772
      %v6805 = vpack.c.bf16 %v6773, %v6773
      %v6806 = vpack.c.bf16 %v6774, %v6774
      %v6807 = vpack.c.bf16 %v6775, %v6775
      %v6808 = vpack.c.bf16 %v6776, %v6776
      %v6809 = vpack.c.bf16 %v6777, %v6777
      %v6810 = vpack.c.bf16 %v6778, %v6778
      %v6811 = vpack.c.bf16 %v6779, %v6779
      %v6812 = vpack.c.bf16 %v6780, %v6780
      %v6813 = vpack.c.bf16 %v6781, %v6781
      %v6814 = vpack.c.bf16 %v6782, %v6782
      %v6815 = vpack.c.bf16 %v6783, %v6783
      %6848 = vrot.lane.b32.xlu0 %v6784, 56
      %v6849 = vpop.permute.xlu0 %6848
      %6850 = vrot.lane.b32.xlu0 %v6785, 56
      %v6851 = vpop.permute.xlu0 %6850
      %6852 = vrot.lane.b32.xlu0 %v6786, 56
      %v6853 = vpop.permute.xlu0 %6852
      %6854 = vrot.lane.b32.xlu0 %v6787, 56
      %v6855 = vpop.permute.xlu0 %6854
      %6856 = vrot.lane.b32.xlu0 %v6788, 56
      %v6857 = vpop.permute.xlu0 %6856
      %6858 = vrot.lane.b32.xlu0 %v6789, 56
      %v6859 = vpop.permute.xlu0 %6858
      %6860 = vrot.lane.b32.xlu0 %v6790, 56
      %v6861 = vpop.permute.xlu0 %6860
      %6862 = vrot.lane.b32.xlu0 %v6791, 56
      %v6863 = vpop.permute.xlu0 %6862
      %6864 = vrot.lane.b32.xlu0 %v6792, 56
      %v6865 = vpop.permute.xlu0 %6864
      %6866 = vrot.lane.b32.xlu0 %v6793, 56
      %v6867 = vpop.permute.xlu0 %6866
      %6868 = vrot.lane.b32.xlu0 %v6794, 56
      %v6869 = vpop.permute.xlu0 %6868
      %6870 = vrot.lane.b32.xlu0 %v6795, 56
      %v6871 = vpop.permute.xlu0 %6870
      %6872 = vrot.lane.b32.xlu0 %v6796, 56
      %v6873 = vpop.permute.xlu0 %6872
      %6874 = vrot.lane.b32.xlu0 %v6797, 56
      %v6875 = vpop.permute.xlu0 %6874
      %6876 = vrot.lane.b32.xlu0 %v6798, 56
      %v6877 = vpop.permute.xlu0 %6876
      %6878 = vrot.lane.b32.xlu0 %v6799, 56
      %v6879 = vpop.permute.xlu0 %6878
      %6880 = vrot.lane.b32.xlu0 %v6800, 56
      %v6881 = vpop.permute.xlu0 %6880
      %6882 = vrot.lane.b32.xlu0 %v6801, 56
      %v6883 = vpop.permute.xlu0 %6882
      %6884 = vrot.lane.b32.xlu0 %v6802, 56
      %v6885 = vpop.permute.xlu0 %6884
      %6886 = vrot.lane.b32.xlu0 %v6803, 56
      %v6887 = vpop.permute.xlu0 %6886
      %6888 = vrot.lane.b32.xlu0 %v6804, 56
      %v6889 = vpop.permute.xlu0 %6888
      %6890 = vrot.lane.b32.xlu0 %v6805, 56
      %v6891 = vpop.permute.xlu0 %6890
      %6892 = vrot.lane.b32.xlu0 %v6806, 56
      %v6893 = vpop.permute.xlu0 %6892
      %6894 = vrot.lane.b32.xlu0 %v6807, 56
      %v6895 = vpop.permute.xlu0 %6894
      %6896 = vrot.lane.b32.xlu0 %v6808, 56
      %v6897 = vpop.permute.xlu0 %6896
      %6898 = vrot.lane.b32.xlu0 %v6809, 56
      %v6899 = vpop.permute.xlu0 %6898
      %6900 = vrot.lane.b32.xlu0 %v6810, 56
      %v6901 = vpop.permute.xlu0 %6900
      %6902 = vrot.lane.b32.xlu0 %v6811, 56
      %v6903 = vpop.permute.xlu0 %6902
      %6904 = vrot.lane.b32.xlu0 %v6812, 56
      %v6905 = vpop.permute.xlu0 %6904
      %6906 = vrot.lane.b32.xlu0 %v6813, 56
      %v6907 = vpop.permute.xlu0 %6906
      %6908 = vrot.lane.b32.xlu0 %v6814, 56
      %v6909 = vpop.permute.xlu0 %6908
      %6910 = vrot.lane.b32.xlu0 %v6815, 56
      %v6911 = vpop.permute.xlu0 %6910
      %vm6944 = vcmask 519616
      %6945 = vst.msk [vmem:[#allocation6] sm:$0xf] %vm6944, %v6849
      %6946 = vst.msk [vmem:[#allocation6 + $0x4] sm:$0xf] %vm6944, %v6851
      %6947 = vst.msk [vmem:[#allocation6 + $0x8] sm:$0xf] %vm6944, %v6853
      %6948 = vst.msk [vmem:[#allocation6 + $0xc] sm:$0xf] %vm6944, %v6855
      %6949 = vst.msk [vmem:[#allocation6 + $0x10] sm:$0xf] %vm6944, %v6857
      %6950 = vst.msk [vmem:[#allocation6 + $0x14] sm:$0xf] %vm6944, %v6859
      %6951 = vst.msk [vmem:[#allocation6 + $0x18] sm:$0xf] %vm6944, %v6861
      %6952 = vst.msk [vmem:[#allocation6 + $0x1c] sm:$0xf] %vm6944, %v6863
      %6953 = vst.msk [vmem:[#allocation6 + $0x20] sm:$0xf] %vm6944, %v6865
      %6954 = vst.msk [vmem:[#allocation6 + $0x24] sm:$0xf] %vm6944, %v6867
      %6955 = vst.msk [vmem:[#allocation6 + $0x28] sm:$0xf] %vm6944, %v6869
      %6956 = vst.msk [vmem:[#allocation6 + $0x2c] sm:$0xf] %vm6944, %v6871
      %6957 = vst.msk [vmem:[#allocation6 + $0x30] sm:$0xf] %vm6944, %v6873
      %6958 = vst.msk [vmem:[#allocation6 + $0x34] sm:$0xf] %vm6944, %v6875
      %6959 = vst.msk [vmem:[#allocation6 + $0x38] sm:$0xf] %vm6944, %v6877
      %6960 = vst.msk [vmem:[#allocation6 + $0x3c] sm:$0xf] %vm6944, %v6879
      %6961 = vst.msk [vmem:[#allocation6 + $0x40] sm:$0xf] %vm6944, %v6881
      %6962 = vst.msk [vmem:[#allocation6 + $0x44] sm:$0xf] %vm6944, %v6883
      %6963 = vst.msk [vmem:[#allocation6 + $0x48] sm:$0xf] %vm6944, %v6885
      %6964 = vst.msk [vmem:[#allocation6 + $0x4c] sm:$0xf] %vm6944, %v6887
      %6965 = vst.msk [vmem:[#allocation6 + $0x50] sm:$0xf] %vm6944, %v6889
      %6966 = vst.msk [vmem:[#allocation6 + $0x54] sm:$0xf] %vm6944, %v6891
      %6967 = vst.msk [vmem:[#allocation6 + $0x58] sm:$0xf] %vm6944, %v6893
      %6968 = vst.msk [vmem:[#allocation6 + $0x5c] sm:$0xf] %vm6944, %v6895
      %6969 = vst.msk [vmem:[#allocation6 + $0x60] sm:$0xf] %vm6944, %v6897
      %6970 = vst.msk [vmem:[#allocation6 + $0x64] sm:$0xf] %vm6944, %v6899
      %6971 = vst.msk [vmem:[#allocation6 + $0x68] sm:$0xf] %vm6944, %v6901
      %6972 = vst.msk [vmem:[#allocation6 + $0x6c] sm:$0xf] %vm6944, %v6903
      %6973 = vst.msk [vmem:[#allocation6 + $0x70] sm:$0xf] %vm6944, %v6905
      %6974 = vst.msk [vmem:[#allocation6 + $0x74] sm:$0xf] %vm6944, %v6907
      %6975 = vst.msk [vmem:[#allocation6 + $0x78] sm:$0xf] %vm6944, %v6909
      %6976 = vst.msk [vmem:[#allocation6 + $0x7c] sm:$0xf] %vm6944, %v6911
      %v6977 = vld [vmem:[%s6526 + $0x2] sm:$0xff]
      %v6978 = vld [vmem:[%s6526 + $0xa] sm:$0xff]
      %v6979 = vld [vmem:[%s6526 + $0x1a] sm:$0xff]
      %v6980 = vld [vmem:[%s6526 + $0x22] sm:$0xff]
      %v6981 = vld [vmem:[%s6526 + $0x32] sm:$0xff]
      %v6982 = vld [vmem:[%s6526 + $0x3a] sm:$0xff]
      %v6983 = vld [vmem:[%s6526 + $0x4a] sm:$0xff]
      %v6984 = vld [vmem:[%s6526 + $0x52] sm:$0xff]
      %v6985 = vld [vmem:[%s6526 + $0x62] sm:$0xff]
      %v6986 = vld [vmem:[%s6526 + $0x6a] sm:$0xff]
      %v6987 = vld [vmem:[%s6526 + $0x7a] sm:$0xff]
      %v6988 = vld [vmem:[%s6526 + $0x82] sm:$0xff]
      %v6989 = vld [vmem:[%s6526 + $0x92] sm:$0xff]
      %v6990 = vld [vmem:[%s6526 + $0x9a] sm:$0xff]
      %v6991 = vld [vmem:[%s6526 + $0xaa] sm:$0xff]
      %v6992 = vld [vmem:[%s6526 + $0xb2] sm:$0xff]
      %v6993 = vld [vmem:[%s6526 + $0xc2] sm:$0xff]
      %v6994 = vld [vmem:[%s6526 + $0xca] sm:$0xff]
      %v6995 = vld [vmem:[%s6526 + $0xda] sm:$0xff]
      %v6996 = vld [vmem:[%s6526 + $0xe2] sm:$0xff]
      %v6997 = vld [vmem:[%s6526 + $0xf2] sm:$0xff]
      %v6998 = vld [vmem:[%s6526 + $0xfa] sm:$0xff]
      %v6999 = vld [vmem:[%s6526 + $0x10a] sm:$0xff]
      %v7000 = vld [vmem:[%s6526 + $0x112] sm:$0xff]
      %v7001 = vld [vmem:[%s6526 + $0x122] sm:$0xff]
      %v7002 = vld [vmem:[%s6526 + $0x12a] sm:$0xff]
      %v7003 = vld [vmem:[%s6526 + $0x13a] sm:$0xff]
      %v7004 = vld [vmem:[%s6526 + $0x142] sm:$0xff]
      %v7005 = vld [vmem:[%s6526 + $0x152] sm:$0xff]
      %v7006 = vld [vmem:[%s6526 + $0x15a] sm:$0xff]
      %v7007 = vld [vmem:[%s6526 + $0x16a] sm:$0xff]
      %v7008 = vld [vmem:[%s6526 + $0x172] sm:$0xff]
      %v7009 = vpack.c.bf16 %v6977, %v6977
      %v7010 = vpack.c.bf16 %v6978, %v6978
      %v7011 = vpack.c.bf16 %v6979, %v6979
      %v7012 = vpack.c.bf16 %v6980, %v6980
      %v7013 = vpack.c.bf16 %v6981, %v6981
      %v7014 = vpack.c.bf16 %v6982, %v6982
      %v7015 = vpack.c.bf16 %v6983, %v6983
      %v7016 = vpack.c.bf16 %v6984, %v6984
      %v7017 = vpack.c.bf16 %v6985, %v6985
      %v7018 = vpack.c.bf16 %v6986, %v6986
      %v7019 = vpack.c.bf16 %v6987, %v6987
      %v7020 = vpack.c.bf16 %v6988, %v6988
      %v7021 = vpack.c.bf16 %v6989, %v6989
      %v7022 = vpack.c.bf16 %v6990, %v6990
      %v7023 = vpack.c.bf16 %v6991, %v6991
      %v7024 = vpack.c.bf16 %v6992, %v6992
      %v7025 = vpack.c.bf16 %v6993, %v6993
      %v7026 = vpack.c.bf16 %v6994, %v6994
      %v7027 = vpack.c.bf16 %v6995, %v6995
      %v7028 = vpack.c.bf16 %v6996, %v6996
      %v7029 = vpack.c.bf16 %v6997, %v6997
      %v7030 = vpack.c.bf16 %v6998, %v6998
      %v7031 = vpack.c.bf16 %v6999, %v6999
      %v7032 = vpack.c.bf16 %v7000, %v7000
      %v7033 = vpack.c.bf16 %v7001, %v7001
      %v7034 = vpack.c.bf16 %v7002, %v7002
      %v7035 = vpack.c.bf16 %v7003, %v7003
      %v7036 = vpack.c.bf16 %v7004, %v7004
      %v7037 = vpack.c.bf16 %v7005, %v7005
      %v7038 = vpack.c.bf16 %v7006, %v7006
      %v7039 = vpack.c.bf16 %v7007, %v7007
      %v7040 = vpack.c.bf16 %v7008, %v7008
      %7073 = vrot.lane.b32.xlu0 %v7009, 64
      %v7074 = vpop.permute.xlu0 %7073
      %7075 = vrot.lane.b32.xlu0 %v7010, 64
      %v7076 = vpop.permute.xlu0 %7075
      %7077 = vrot.lane.b32.xlu0 %v7011, 64
      %v7078 = vpop.permute.xlu0 %7077
      %7079 = vrot.lane.b32.xlu0 %v7012, 64
      %v7080 = vpop.permute.xlu0 %7079
      %7081 = vrot.lane.b32.xlu0 %v7013, 64
      %v7082 = vpop.permute.xlu0 %7081
      %7083 = vrot.lane.b32.xlu0 %v7014, 64
      %v7084 = vpop.permute.xlu0 %7083
      %7085 = vrot.lane.b32.xlu0 %v7015, 64
      %v7086 = vpop.permute.xlu0 %7085
      %7087 = vrot.lane.b32.xlu0 %v7016, 64
      %v7088 = vpop.permute.xlu0 %7087
      %7089 = vrot.lane.b32.xlu0 %v7017, 64
      %v7090 = vpop.permute.xlu0 %7089
      %7091 = vrot.lane.b32.xlu0 %v7018, 64
      %v7092 = vpop.permute.xlu0 %7091
      %7093 = vrot.lane.b32.xlu0 %v7019, 64
      %v7094 = vpop.permute.xlu0 %7093
      %7095 = vrot.lane.b32.xlu0 %v7020, 64
      %v7096 = vpop.permute.xlu0 %7095
      %7097 = vrot.lane.b32.xlu0 %v7021, 64
      %v7098 = vpop.permute.xlu0 %7097
      %7099 = vrot.lane.b32.xlu0 %v7022, 64
      %v7100 = vpop.permute.xlu0 %7099
      %7101 = vrot.lane.b32.xlu0 %v7023, 64
      %v7102 = vpop.permute.xlu0 %7101
      %7103 = vrot.lane.b32.xlu0 %v7024, 64
      %v7104 = vpop.permute.xlu0 %7103
      %7105 = vrot.lane.b32.xlu0 %v7025, 64
      %v7106 = vpop.permute.xlu0 %7105
      %7107 = vrot.lane.b32.xlu0 %v7026, 64
      %v7108 = vpop.permute.xlu0 %7107
      %7109 = vrot.lane.b32.xlu0 %v7027, 64
      %v7110 = vpop.permute.xlu0 %7109
      %7111 = vrot.lane.b32.xlu0 %v7028, 64
      %v7112 = vpop.permute.xlu0 %7111
      %7113 = vrot.lane.b32.xlu0 %v7029, 64
      %v7114 = vpop.permute.xlu0 %7113
      %7115 = vrot.lane.b32.xlu0 %v7030, 64
      %v7116 = vpop.permute.xlu0 %7115
      %7117 = vrot.lane.b32.xlu0 %v7031, 64
      %v7118 = vpop.permute.xlu0 %7117
      %7119 = vrot.lane.b32.xlu0 %v7032, 64
      %v7120 = vpop.permute.xlu0 %7119
      %7121 = vrot.lane.b32.xlu0 %v7033, 64
      %v7122 = vpop.permute.xlu0 %7121
      %7123 = vrot.lane.b32.xlu0 %v7034, 64
      %v7124 = vpop.permute.xlu0 %7123
      %7125 = vrot.lane.b32.xlu0 %v7035, 64
      %v7126 = vpop.permute.xlu0 %7125
      %7127 = vrot.lane.b32.xlu0 %v7036, 64
      %v7128 = vpop.permute.xlu0 %7127
      %7129 = vrot.lane.b32.xlu0 %v7037, 64
      %v7130 = vpop.permute.xlu0 %7129
      %7131 = vrot.lane.b32.xlu0 %v7038, 64
      %v7132 = vpop.permute.xlu0 %7131
      %7133 = vrot.lane.b32.xlu0 %v7039, 64
      %v7134 = vpop.permute.xlu0 %7133
      %7135 = vrot.lane.b32.xlu0 %v7040, 64
      %v7136 = vpop.permute.xlu0 %7135
      %vm7169 = vcmask 585216
      %7170 = vst.msk [vmem:[#allocation6] sm:$0xf] %vm7169, %v7074
      %7171 = vst.msk [vmem:[#allocation6 + $0x4] sm:$0xf] %vm7169, %v7076
      %7172 = vst.msk [vmem:[#allocation6 + $0x8] sm:$0xf] %vm7169, %v7078
      %7173 = vst.msk [vmem:[#allocation6 + $0xc] sm:$0xf] %vm7169, %v7080
      %7174 = vst.msk [vmem:[#allocation6 + $0x10] sm:$0xf] %vm7169, %v7082
      %7175 = vst.msk [vmem:[#allocation6 + $0x14] sm:$0xf] %vm7169, %v7084
      %7176 = vst.msk [vmem:[#allocation6 + $0x18] sm:$0xf] %vm7169, %v7086
      %7177 = vst.msk [vmem:[#allocation6 + $0x1c] sm:$0xf] %vm7169, %v7088
      %7178 = vst.msk [vmem:[#allocation6 + $0x20] sm:$0xf] %vm7169, %v7090
      %7179 = vst.msk [vmem:[#allocation6 + $0x24] sm:$0xf] %vm7169, %v7092
      %7180 = vst.msk [vmem:[#allocation6 + $0x28] sm:$0xf] %vm7169, %v7094
      %7181 = vst.msk [vmem:[#allocation6 + $0x2c] sm:$0xf] %vm7169, %v7096
      %7182 = vst.msk [vmem:[#allocation6 + $0x30] sm:$0xf] %vm7169, %v7098
      %7183 = vst.msk [vmem:[#allocation6 + $0x34] sm:$0xf] %vm7169, %v7100
      %7184 = vst.msk [vmem:[#allocation6 + $0x38] sm:$0xf] %vm7169, %v7102
      %7185 = vst.msk [vmem:[#allocation6 + $0x3c] sm:$0xf] %vm7169, %v7104
      %7186 = vst.msk [vmem:[#allocation6 + $0x40] sm:$0xf] %vm7169, %v7106
      %7187 = vst.msk [vmem:[#allocation6 + $0x44] sm:$0xf] %vm7169, %v7108
      %7188 = vst.msk [vmem:[#allocation6 + $0x48] sm:$0xf] %vm7169, %v7110
      %7189 = vst.msk [vmem:[#allocation6 + $0x4c] sm:$0xf] %vm7169, %v7112
      %7190 = vst.msk [vmem:[#allocation6 + $0x50] sm:$0xf] %vm7169, %v7114
      %7191 = vst.msk [vmem:[#allocation6 + $0x54] sm:$0xf] %vm7169, %v7116
      %7192 = vst.msk [vmem:[#allocation6 + $0x58] sm:$0xf] %vm7169, %v7118
      %7193 = vst.msk [vmem:[#allocation6 + $0x5c] sm:$0xf] %vm7169, %v7120
      %7194 = vst.msk [vmem:[#allocation6 + $0x60] sm:$0xf] %vm7169, %v7122
      %7195 = vst.msk [vmem:[#allocation6 + $0x64] sm:$0xf] %vm7169, %v7124
      %7196 = vst.msk [vmem:[#allocation6 + $0x68] sm:$0xf] %vm7169, %v7126
      %7197 = vst.msk [vmem:[#allocation6 + $0x6c] sm:$0xf] %vm7169, %v7128
      %7198 = vst.msk [vmem:[#allocation6 + $0x70] sm:$0xf] %vm7169, %v7130
      %7199 = vst.msk [vmem:[#allocation6 + $0x74] sm:$0xf] %vm7169, %v7132
      %7200 = vst.msk [vmem:[#allocation6 + $0x78] sm:$0xf] %vm7169, %v7134
      %7201 = vst.msk [vmem:[#allocation6 + $0x7c] sm:$0xf] %vm7169, %v7136
      %v7202 = vld [vmem:[#allocation6] sm:$0xf]
      %v7203 = vld [vmem:[#allocation6 + $0x4] sm:$0xf]
      %v7204 = vld [vmem:[#allocation6 + $0x8] sm:$0xf]
      %v7205 = vld [vmem:[#allocation6 + $0xc] sm:$0xf]
      %v7206 = vld [vmem:[#allocation6 + $0x10] sm:$0xf]
      %v7207 = vld [vmem:[#allocation6 + $0x14] sm:$0xf]
      %v7208 = vld [vmem:[#allocation6 + $0x18] sm:$0xf]
      %v7209 = vld [vmem:[#allocation6 + $0x1c] sm:$0xf]
      %v7210 = vld [vmem:[#allocation6 + $0x20] sm:$0xf]
      %v7211 = vld [vmem:[#allocation6 + $0x24] sm:$0xf]
      %v7212 = vld [vmem:[#allocation6 + $0x28] sm:$0xf]
      %v7213 = vld [vmem:[#allocation6 + $0x2c] sm:$0xf]
      %v7214 = vld [vmem:[#allocation6 + $0x30] sm:$0xf]
      %v7215 = vld [vmem:[#allocation6 + $0x34] sm:$0xf]
      %v7216 = vld [vmem:[#allocation6 + $0x38] sm:$0xf]
      %v7217 = vld [vmem:[#allocation6 + $0x3c] sm:$0xf]
      %v7218 = vld [vmem:[#allocation6 + $0x40] sm:$0xf]
      %v7219 = vld [vmem:[#allocation6 + $0x44] sm:$0xf]
      %v7220 = vld [vmem:[#allocation6 + $0x48] sm:$0xf]
      %v7221 = vld [vmem:[#allocation6 + $0x4c] sm:$0xf]
      %v7222 = vld [vmem:[#allocation6 + $0x50] sm:$0xf]
      %v7223 = vld [vmem:[#allocation6 + $0x54] sm:$0xf]
      %v7224 = vld [vmem:[#allocation6 + $0x58] sm:$0xf]
      %v7225 = vld [vmem:[#allocation6 + $0x5c] sm:$0xf]
      %v7226 = vld [vmem:[#allocation6 + $0x60] sm:$0xf]
      %v7227 = vld [vmem:[#allocation6 + $0x64] sm:$0xf]
      %v7228 = vld [vmem:[#allocation6 + $0x68] sm:$0xf]
      %v7229 = vld [vmem:[#allocation6 + $0x6c] sm:$0xf]
      %v7230 = vld [vmem:[#allocation6 + $0x70] sm:$0xf]
      %v7231 = vld [vmem:[#allocation6 + $0x74] sm:$0xf]
      %v7232 = vld [vmem:[#allocation6 + $0x78] sm:$0xf]
      %v7233 = vld [vmem:[#allocation6 + $0x7c] sm:$0xf]
      %v7234 = vld [vmem:[%s4] sm:$0xf]
      %v7235 = vld [vmem:[%s4 + $0x4] sm:$0xf]
      %v7236 = vld [vmem:[%s4 + $0x8] sm:$0xf]
      %v7237 = vld [vmem:[%s4 + $0xc] sm:$0xf]
      %v7238 = vld [vmem:[%s4 + $0x10] sm:$0xf]
      %v7239 = vld [vmem:[%s4 + $0x14] sm:$0xf]
      %v7240 = vld [vmem:[%s4 + $0x18] sm:$0xf]
      %v7241 = vld [vmem:[%s4 + $0x1c] sm:$0xf]
      %v7242 = vld [vmem:[%s4 + $0x20] sm:$0xf]
      %v7243 = vld [vmem:[%s5] sm:$0x1]
      %v7245 = vperm.slane %v7243, 0
      %v7279 = vunpack.c.l.b16 %v7202
      %v7280 = vunpack.c.l.b16 %v7203
      %v7281 = vunpack.c.l.b16 %v7204
      %v7282 = vunpack.c.l.b16 %v7205
      %v7283 = vunpack.c.l.b16 %v7206
      %v7284 = vunpack.c.l.b16 %v7207
      %v7285 = vunpack.c.l.b16 %v7208
      %v7286 = vunpack.c.l.b16 %v7209
      %v7287 = vunpack.c.l.b16 %v7210
      %v7288 = vunpack.c.l.b16 %v7211
      %v7289 = vunpack.c.l.b16 %v7212
      %v7290 = vunpack.c.l.b16 %v7213
      %v7291 = vunpack.c.l.b16 %v7214
      %v7292 = vunpack.c.l.b16 %v7215
      %v7293 = vunpack.c.l.b16 %v7216
      %v7294 = vunpack.c.l.b16 %v7217
      %v7295 = vunpack.c.l.b16 %v7218
      %v7296 = vunpack.c.l.b16 %v7219
      %v7297 = vunpack.c.l.b16 %v7220
      %v7298 = vunpack.c.l.b16 %v7221
      %v7299 = vunpack.c.l.b16 %v7222
      %v7300 = vunpack.c.l.b16 %v7223
      %v7301 = vunpack.c.l.b16 %v7224
      %v7302 = vunpack.c.l.b16 %v7225
      %v7303 = vunpack.c.l.b16 %v7226
      %v7304 = vunpack.c.l.b16 %v7227
      %v7305 = vunpack.c.l.b16 %v7228
      %v7306 = vunpack.c.l.b16 %v7229
      %v7307 = vunpack.c.l.b16 %v7230
      %v7308 = vunpack.c.l.b16 %v7231
      %v7309 = vunpack.c.l.b16 %v7232
      %v7310 = vunpack.c.l.b16 %v7233
      %v7311 = vpack.c.b16 %v7280, %v7279
      %v7312 = vpack.c.b16 %v7282, %v7281
      %v7313 = vpack.c.b16 %v7284, %v7283
      %v7314 = vpack.c.b16 %v7286, %v7285
      %v7315 = vpack.c.b16 %v7288, %v7287
      %v7316 = vpack.c.b16 %v7290, %v7289
      %v7317 = vpack.c.b16 %v7292, %v7291
      %v7318 = vpack.c.b16 %v7294, %v7293
      %v7319 = vpack.c.b16 %v7296, %v7295
      %v7320 = vpack.c.b16 %v7298, %v7297
      %v7321 = vpack.c.b16 %v7300, %v7299
      %v7322 = vpack.c.b16 %v7302, %v7301
      %v7323 = vpack.c.b16 %v7304, %v7303
      %v7324 = vpack.c.b16 %v7306, %v7305
      %v7325 = vpack.c.b16 %v7308, %v7307
      %v7326 = vpack.c.b16 %v7310, %v7309
      %v7336 = vunpack.c.l.b16 %v7234
      %v7337 = vunpack.c.l.b16 %v7235
      %v7338 = vunpack.c.l.b16 %v7236
      %v7339 = vunpack.c.l.b16 %v7237
      %v7340 = vunpack.c.l.b16 %v7238
      %v7341 = vunpack.c.l.b16 %v7239
      %v7342 = vunpack.c.l.b16 %v7240
      %v7343 = vunpack.c.l.b16 %v7241
      %v7344 = vunpack.c.l.b16 %v7242
      %v7345 = vpack.c.b16 %v7337, %v7336
      %v7346 = vpack.c.b16 %v7339, %v7338
      %v7347 = vpack.c.b16 %v7341, %v7340
      %v7348 = vpack.c.b16 %v7343, %v7342
      %v7349 = vpack.c.b16 %v7344, %v7344
      %v7355 = vsel %vm4912, %v7311, 0
      %v7358 = vsel %vm4912, %v7312, 0
      %v7361 = vsel %vm4912, %v7313, 0
      %v7364 = vsel %vm4912, %v7314, 0
      %v7367 = vsel %vm4912, %v7315, 0
      %v7370 = vsel %vm4912, %v7316, 0
      %v7373 = vsel %vm4912, %v7317, 0
      %v7376 = vsel %vm4912, %v7318, 0
      %v7379 = vsel %vm4912, %v7319, 0
      %v7382 = vsel %vm4912, %v7320, 0
      %v7385 = vsel %vm4912, %v7321, 0
      %v7388 = vsel %vm4912, %v7322, 0
      %v7391 = vsel %vm4912, %v7323, 0
      %v7394 = vsel %vm4912, %v7324, 0
      %v7397 = vsel %vm4912, %v7325, 0
      %v7400 = vsel %vm4912, %v7326, 0
      %v7403 = vsel %vm4961, %v7349, 0
      %7405 = vmatpush.bf16.msra.mxu0 0
      %7406 = vmatpush.bf16.msra.mxu0 0
      %7407 = vmatpush.bf16.msra.mxu0 0
      %7408 = vmatpush.bf16.msra.mxu0 %v7403
      %7409 = vmatpush.bf16.msra.mxu0 %v7348
      %7410 = vmatpush.bf16.msra.mxu0 %v7347
      %7411 = vmatpush.bf16.msra.mxu0 %v7346
      %7412 = vmatpush.bf16.msra.mxu0 %v7345
      %7413 = vmatmul.bf16.gmra.mxu0 %v7355
      %v7414 = vpop.f32.mrf.mxu0
      %v7415 = vadd.f32 %v7245, %v7414
      %v7416 = vpop.f32.mrf.mxu0
      %v7417 = vadd.f32 %v7245, %v7416
      %7418 = vmatmul.bf16.gmra.mxu0 %v7358
      %v7419 = vpop.f32.mrf.mxu0
      %v7420 = vadd.f32 %v7245, %v7419
      %v7421 = vpop.f32.mrf.mxu0
      %v7422 = vadd.f32 %v7245, %v7421
      %7423 = vmatmul.bf16.gmra.mxu0 %v7361
      %v7424 = vpop.f32.mrf.mxu0
      %v7425 = vadd.f32 %v7245, %v7424
      %v7426 = vpop.f32.mrf.mxu0
      %v7427 = vadd.f32 %v7245, %v7426
      %7428 = vmatmul.bf16.gmra.mxu0 %v7364
      %v7429 = vpop.f32.mrf.mxu0
      %v7430 = vadd.f32 %v7245, %v7429
      %v7431 = vpop.f32.mrf.mxu0
      %v7432 = vadd.f32 %v7245, %v7431
      %7433 = vmatmul.bf16.gmra.mxu0 %v7367
      %v7434 = vpop.f32.mrf.mxu0
      %v7435 = vadd.f32 %v7245, %v7434
      %v7436 = vpop.f32.mrf.mxu0
      %v7437 = vadd.f32 %v7245, %v7436
      %7438 = vmatmul.bf16.gmra.mxu0 %v7370
      %v7439 = vpop.f32.mrf.mxu0
      %v7440 = vadd.f32 %v7245, %v7439
      %v7441 = vpop.f32.mrf.mxu0
      %v7442 = vadd.f32 %v7245, %v7441
      %7443 = vmatmul.bf16.gmra.mxu0 %v7373
      %v7444 = vpop.f32.mrf.mxu0
      %v7445 = vadd.f32 %v7245, %v7444
      %v7446 = vpop.f32.mrf.mxu0
      %v7447 = vadd.f32 %v7245, %v7446
      %7448 = vmatmul.bf16.gmra.mxu0 %v7376
      %v7449 = vpop.f32.mrf.mxu0
      %v7450 = vadd.f32 %v7245, %v7449
      %v7451 = vpop.f32.mrf.mxu0
      %v7452 = vadd.f32 %v7245, %v7451
      %7453 = vmatmul.bf16.gmra.mxu0 %v7379
      %v7454 = vpop.f32.mrf.mxu0
      %v7455 = vadd.f32 %v7245, %v7454
      %v7456 = vpop.f32.mrf.mxu0
      %v7457 = vadd.f32 %v7245, %v7456
      %7458 = vmatmul.bf16.gmra.mxu0 %v7382
      %v7459 = vpop.f32.mrf.mxu0
      %v7460 = vadd.f32 %v7245, %v7459
      %v7461 = vpop.f32.mrf.mxu0
      %v7462 = vadd.f32 %v7245, %v7461
      %7463 = vmatmul.bf16.gmra.mxu0 %v7385
      %v7464 = vpop.f32.mrf.mxu0
      %v7465 = vadd.f32 %v7245, %v7464
      %v7466 = vpop.f32.mrf.mxu0
      %v7467 = vadd.f32 %v7245, %v7466
      %7468 = vmatmul.bf16.gmra.mxu0 %v7388
      %v7469 = vpop.f32.mrf.mxu0
      %v7470 = vadd.f32 %v7245, %v7469
      %v7471 = vpop.f32.mrf.mxu0
      %v7472 = vadd.f32 %v7245, %v7471
      %7473 = vmatmul.bf16.gmra.mxu0 %v7391
      %v7474 = vpop.f32.mrf.mxu0
      %v7475 = vadd.f32 %v7245, %v7474
      %v7476 = vpop.f32.mrf.mxu0
      %v7477 = vadd.f32 %v7245, %v7476
      %7478 = vmatmul.bf16.gmra.mxu0 %v7394
      %v7479 = vpop.f32.mrf.mxu0
      %v7480 = vadd.f32 %v7245, %v7479
      %v7481 = vpop.f32.mrf.mxu0
      %v7482 = vadd.f32 %v7245, %v7481
      %7483 = vmatmul.bf16.gmra.mxu0 %v7397
      %v7484 = vpop.f32.mrf.mxu0
      %v7485 = vadd.f32 %v7245, %v7484
      %v7486 = vpop.f32.mrf.mxu0
      %v7487 = vadd.f32 %v7245, %v7486
      %7488 = vmatmul.bf16.gmra.mxu0 %v7400
      %v7489 = vpop.f32.mrf.mxu0
      %v7490 = vadd.f32 %v7245, %v7489
      %v7491 = vpop.f32.mrf.mxu0
      %v7492 = vadd.f32 %v7245, %v7491
      %7493 = vdwg.mxu0
      %v7494 = vmax.f32 %v7415, 0.0
      %v7495 = vmax.f32 %v7417, 0.0
      %v7496 = vmax.f32 %v7420, 0.0
      %v7497 = vmax.f32 %v7422, 0.0
      %v7498 = vmax.f32 %v7425, 0.0
      %v7499 = vmax.f32 %v7427, 0.0
      %v7500 = vmax.f32 %v7430, 0.0
      %v7501 = vmax.f32 %v7432, 0.0
      %v7502 = vmax.f32 %v7435, 0.0
      %v7503 = vmax.f32 %v7437, 0.0
      %v7504 = vmax.f32 %v7440, 0.0
      %v7505 = vmax.f32 %v7442, 0.0
      %v7506 = vmax.f32 %v7445, 0.0
      %v7507 = vmax.f32 %v7447, 0.0
      %v7508 = vmax.f32 %v7450, 0.0
      %v7509 = vmax.f32 %v7452, 0.0
      %v7510 = vmax.f32 %v7455, 0.0
      %v7511 = vmax.f32 %v7457, 0.0
      %v7512 = vmax.f32 %v7460, 0.0
      %v7513 = vmax.f32 %v7462, 0.0
      %v7514 = vmax.f32 %v7465, 0.0
      %v7515 = vmax.f32 %v7467, 0.0
      %v7516 = vmax.f32 %v7470, 0.0
      %v7517 = vmax.f32 %v7472, 0.0
      %v7518 = vmax.f32 %v7475, 0.0
      %v7519 = vmax.f32 %v7477, 0.0
      %v7520 = vmax.f32 %v7480, 0.0
      %v7521 = vmax.f32 %v7482, 0.0
      %v7522 = vmax.f32 %v7485, 0.0
      %v7523 = vmax.f32 %v7487, 0.0
      %v7524 = vmax.f32 %v7490, 0.0
      %v7525 = vmax.f32 %v7492, 0.0
      %7526 = vst.msk [vmem:[%s271] sm:$0xff] %vm5086, %v7494
      %7527 = vst.msk [vmem:[%s271 + $0x8] sm:$0xff] %vm5086, %v7495
      %7528 = vst.msk [vmem:[%s271 + $0x10] sm:$0xff] %vm5086, %v7496
      %7529 = vst.msk [vmem:[%s271 + $0x18] sm:$0xff] %vm5086, %v7497
      %7530 = vst.msk [vmem:[%s271 + $0x20] sm:$0xff] %vm5086, %v7498
      %7531 = vst.msk [vmem:[%s271 + $0x28] sm:$0xff] %vm5086, %v7499
      %7532 = vst.msk [vmem:[%s271 + $0x30] sm:$0xff] %vm5086, %v7500
      %7533 = vst.msk [vmem:[%s271 + $0x38] sm:$0xff] %vm5086, %v7501
      %7534 = vst.msk [vmem:[%s271 + $0x40] sm:$0xff] %vm5086, %v7502
      %7535 = vst.msk [vmem:[%s271 + $0x48] sm:$0xff] %vm5086, %v7503
      %7536 = vst.msk [vmem:[%s271 + $0x50] sm:$0xff] %vm5086, %v7504
      %7537 = vst.msk [vmem:[%s271 + $0x58] sm:$0xff] %vm5086, %v7505
      %7538 = vst.msk [vmem:[%s271 + $0x60] sm:$0xff] %vm5086, %v7506
      %7539 = vst.msk [vmem:[%s271 + $0x68] sm:$0xff] %vm5086, %v7507
      %7540 = vst.msk [vmem:[%s271 + $0x70] sm:$0xff] %vm5086, %v7508
      %7541 = vst.msk [vmem:[%s271 + $0x78] sm:$0xff] %vm5086, %v7509
      %7542 = vst.msk [vmem:[%s271 + $0x80] sm:$0xff] %vm5086, %v7510
      %7543 = vst.msk [vmem:[%s271 + $0x88] sm:$0xff] %vm5086, %v7511
      %7544 = vst.msk [vmem:[%s271 + $0x90] sm:$0xff] %vm5086, %v7512
      %7545 = vst.msk [vmem:[%s271 + $0x98] sm:$0xff] %vm5086, %v7513
      %7546 = vst.msk [vmem:[%s271 + $0xa0] sm:$0xff] %vm5086, %v7514
      %7547 = vst.msk [vmem:[%s271 + $0xa8] sm:$0xff] %vm5086, %v7515
      %7548 = vst.msk [vmem:[%s271 + $0xb0] sm:$0xff] %vm5086, %v7516
      %7549 = vst.msk [vmem:[%s271 + $0xb8] sm:$0xff] %vm5086, %v7517
      %7550 = vst.msk [vmem:[%s271 + $0xc0] sm:$0xff] %vm5086, %v7518
      %7551 = vst.msk [vmem:[%s271 + $0xc8] sm:$0xff] %vm5086, %v7519
      %7552 = vst.msk [vmem:[%s271 + $0xd0] sm:$0xff] %vm5086, %v7520
      %7553 = vst.msk [vmem:[%s271 + $0xd8] sm:$0xff] %vm5086, %v7521
      %7554 = vst.msk [vmem:[%s271 + $0xe0] sm:$0xff] %vm5086, %v7522
      %7555 = vst.msk [vmem:[%s271 + $0xe8] sm:$0xff] %vm5086, %v7523
      %7556 = vst.msk [vmem:[%s271 + $0xf0] sm:$0xff] %vm5086, %v7524
      %7557 = vst.msk [vmem:[%s271 + $0xf8] sm:$0xff] %vm5086, %v7525
      %p7558 = scmp.lt.s32.totalorder %s17, 1
      %s7559 = scalar_select %p7558, %s17, 1
      %s7560 = smul.addr %s7559, 32
      %s7561 = smul.addr %s7560, 8
      %s7562 = scalar_lea.vmem %s6, %s7561
      // Predicated region
      $region45: #{tpu_custom_call.1} parent=43 // pred_check
        %p7563 = pneg %p171
      $region46: #{tpu_custom_call.1} parent=43 // pred_check_branch
        %7565 = sbr.rel (%p7563) target = $region48
      $region47: #{tpu_custom_call.1} parent=43 // pred_region
        _
      $region48: #{tpu_custom_call.1} parent=43 // pred_fallthru
        _
    $region44: #{tpu_custom_call.1} parent=5 // pred_fallthru
      _
    %p7566 = scmp.le.s32.totalorder 2, %s12
    // Predicated region
    $region49: #{tpu_custom_call.1} parent=5 // pred_check
      %p7567 = pneg %p7566
    $region50: #{tpu_custom_call.1} parent=5 // pred_check_branch
      %7569 = sbr.rel (%p7567) target = $region52
    $region51: #{tpu_custom_call.1} parent=5 // pred_region
      %s7570 = ssub.s32 %s12, 2
      // Predicated region
      $region53: #{tpu_custom_call.1} parent=51 // pred_check
        %p7571 = pneg %p177
      $region54: #{tpu_custom_call.1} parent=51 // pred_check_branch
        %7573 = sbr.rel (%p7571) target = $region56
      $region55: #{tpu_custom_call.1} parent=51 // pred_region
        %p7574 = scmp.lt.s32.totalorder %s18, 1
        %s7575 = scalar_select %p7574, %s18, 1
        %s7576 = smul.addr %s7575, 32
        %s7577 = smul.addr %s7576, 8
        %s7578 = scalar_lea.vmem %s6, %s7577
      $region56: #{tpu_custom_call.1} parent=51 // pred_fallthru
        _
    $region52: #{tpu_custom_call.1} parent=5 // pred_fallthru
      _
  $region6: #{tpu_custom_call.1} parent=0 // loop_footer
    %s16 = sadd.s32 1, %s12
  $region7: #{tpu_custom_call.1} parent=0 // loop_footer_branch
    %11 = sbr.rel target = $region3
  $region8: #{tpu_custom_call.1} parent=0 // loop_exit
    _

</llo_original>
